<compile_context>
chip_gen: v5e
topology: v5e:2x2
jax: 0.10.0
libtpu: 0.0.40
codegen_flags: <defaults>
</compile_context>

<pallas_src>
import functools

import jax
import jax.numpy as jnp
from jax.experimental import pallas as pl
from jax.experimental.pallas import tpu as pltpu


# ---------------------------------------------------------------------------
# In-kernel helper: 3x3 "valid" conv over an already zero-padded slab.
#   xpad_ref: VMEM ref (rows+2, W+2, C)  (borders already zero / halo filled)
#   wcat_ref: VMEM ref (3, 3*C, Cout)    (dx taps fused along K)
#   b_ref:    VMEM ref (1, Cout)
# Returns (rows, W, Cout) f32 = conv + bias.
# ---------------------------------------------------------------------------
def _conv3x3_from_padded(xpad_ref, wcat_ref, b_ref):
    rows = xpad_ref.shape[0] - 2
    W = xpad_ref.shape[1] - 2
    C = xpad_ref.shape[2]
    Cout = wcat_ref.shape[2]

    # dx-im2col along channels: (rows+2, W, 3*C)
    xcat = jnp.concatenate(
        [xpad_ref[:, 0:W, :], xpad_ref[:, 1:W + 1, :], xpad_ref[:, 2:W + 2, :]],
        axis=-1)

    acc = jnp.zeros((rows * W, Cout), jnp.float32)
    for dy in range(3):
        lhs = xcat[dy:dy + rows].reshape(rows * W, 3 * C)   # M = rows*W, K = 3C
        acc = acc + jnp.dot(lhs, wcat_ref[dy],
                            preferred_element_type=jnp.float32)
    acc = acc + b_ref[...].astype(jnp.float32)
    return acc.reshape(rows, W, Cout)


# ---------------------------------------------------------------------------
# Kernel 1: input conv (3x3, pad 1) + LeakyReLU(0.1), row-tiled with 1-row halo
# ---------------------------------------------------------------------------
def _input_conv_kernel(xc_ref, xu_ref, xd_ref, w_ref, b_ref, o_ref, xpad):
    i = pl.program_id(1)
    ni = pl.num_programs(1)
    TH, W = xc_ref.shape[1], xc_ref.shape[2]

    # Zero-padded slab: rows <-> image rows [r0-1, r0+TH+1)
    xpad[...] = jnp.zeros_like(xpad)
    xpad[1:TH + 1, 1:W + 1, :] = xc_ref[0]

    @pl.when(i > 0)
    def _():
        xpad[0:1, 1:W + 1, :] = xu_ref[0]          # image row r0-1

    @pl.when(i < ni - 1)
    def _():
        xpad[TH + 1:TH + 2, 1:W + 1, :] = xd_ref[0]  # image row r0+TH

    y = _conv3x3_from_padded(xpad, w_ref, b_ref)     # (TH, W, Cout) f32
    y = jnp.where(y >= 0, y, 0.1 * y)                # LeakyReLU(0.1)
    o_ref[0] = y.astype(o_ref.dtype)


# ---------------------------------------------------------------------------
# Kernel 2: fused ResidualBlockNoBN: x + conv2(relu(conv1(x))), 2-row halo
# ---------------------------------------------------------------------------
def _res_block_kernel(xc_ref, xua_ref, xub_ref, xda_ref, xdb_ref,
                      w1_ref, b1_ref, w2_ref, b2_ref, o_ref, xpad, hpad):
    i = pl.program_id(1)
    ni = pl.num_programs(1)
    TH, W, C = xc_ref.shape[1], xc_ref.shape[2], xc_ref.shape[3]

    # Zero-padded x slab: rows <-> image rows [r0-2, r0+TH+2)
    xpad[...] = jnp.zeros_like(xpad)
    xpad[2:TH + 2, 1:W + 1, :] = xc_ref[0]

    @pl.when(i > 0)
    def _():
        xpad[0:1, 1:W + 1, :] = xua_ref[0]           # image row r0-2
        xpad[1:2, 1:W + 1, :] = xub_ref[0]           # image row r0-1

    @pl.when(i < ni - 1)
    def _():
        xpad[TH + 2:TH + 3, 1:W + 1, :] = xda_ref[0]  # image row r0+TH
        xpad[TH + 3:TH + 4, 1:W + 1, :] = xdb_ref[0]  # image row r0+TH+1

    # conv1 + ReLU on TH+2 rows (1-row halo each side for conv2); h stays in VMEM.
    h = _conv3x3_from_padded(xpad, w1_ref, b1_ref)   # (TH+2, W, C) f32
    h = jnp.maximum(h, 0.0)

    hpad[...] = jnp.zeros_like(hpad)
    hpad[:, 1:W + 1, :] = h.astype(hpad.dtype)

    # conv2 zero-pads at the image top/bottom: zero out-of-image halo rows of h.
    @pl.when(i == 0)
    def _():
        hpad[0:1, :, :] = jnp.zeros((1, W + 2, C), hpad.dtype)

    @pl.when(i == ni - 1)
    def _():
        hpad[TH + 1:TH + 2, :, :] = jnp.zeros((1, W + 2, C), hpad.dtype)

    out = _conv3x3_from_padded(hpad, w2_ref, b2_ref)  # (TH, W, C) f32
    o_ref[0] = (xc_ref[0].astype(jnp.float32) + out).astype(o_ref.dtype)


# ---------------------------------------------------------------------------
# Wrappers around pallas_call
# ---------------------------------------------------------------------------
def _pick_row_tile(h, target=32):
    """Largest divisor of h that is <= target (>=4); falls back to h."""
    if h <= target:
        return h
    best = h
    for t in range(4, target + 1):
        if h % t == 0:
            best = t
    return best


def _input_conv_lrelu(x, wcat, b, row_tile):
    N, H, W, Cin = x.shape
    Cout = wcat.shape[-1]
    TH = row_tile
    nI = H // TH
    isz = x.dtype.itemsize
    flops = 2 * N * H * W * 9 * Cin * Cout
    bytes_accessed = isz * (N * H * W * (Cin + Cout) + wcat.size + b.size)

    return pl.pallas_call(
        _input_conv_kernel,
        out_shape=jax.ShapeDtypeStruct((N, H, W, Cout), x.dtype),
        grid=(N, nI),
        in_specs=[
            pl.BlockSpec((1, TH, W, Cin), lambda n, i: (n, i, 0, 0)),
            pl.BlockSpec((1, 1, W, Cin),
                         lambda n, i: (n, jnp.maximum(i * TH - 1, 0), 0, 0)),
            pl.BlockSpec((1, 1, W, Cin),
                         lambda n, i: (n, jnp.minimum((i + 1) * TH, H - 1), 0, 0)),
            pl.BlockSpec((3, 3 * Cin, Cout), lambda n, i: (0, 0, 0)),
            pl.BlockSpec((1, Cout), lambda n, i: (0, 0)),
        ],
        out_specs=pl.BlockSpec((1, TH, W, Cout), lambda n, i: (n, i, 0, 0)),
        scratch_shapes=[pltpu.VMEM((TH + 2, W + 2, Cin), x.dtype)],
        compiler_params=pltpu.CompilerParams(
            dimension_semantics=("parallel", "parallel")),
        cost_estimate=pl.CostEstimate(flops=flops, transcendentals=0,
                                      bytes_accessed=bytes_accessed),
    )(x, x, x, wcat, b)


def _residual_block(x, w1c, b1, w2c, b2, row_tile):
    N, H, W, C = x.shape
    TH = row_tile
    nI = H // TH
    isz = x.dtype.itemsize
    flops = 2 * 2 * N * H * W * 9 * C * C
    bytes_accessed = isz * (2 * N * H * W * C
                            + w1c.size + w2c.size + b1.size + b2.size)

    return pl.pallas_call(
        _res_block_kernel,
        out_shape=jax.ShapeDtypeStruct((N, H, W, C), x.dtype),
        grid=(N, nI),
        in_specs=[
            pl.BlockSpec((1, TH, W, C), lambda n, i: (n, i, 0, 0)),
            pl.BlockSpec((1, 1, W, C),
                         lambda n, i: (n, jnp.maximum(i * TH - 2, 0), 0, 0)),
            pl.BlockSpec((1, 1, W, C),
                         lambda n, i: (n, jnp.maximum(i * TH - 1, 0), 0, 0)),
            pl.BlockSpec((1, 1, W, C),
                         lambda n, i: (n, jnp.minimum((i + 1) * TH, H - 1), 0, 0)),
            pl.BlockSpec((1, 1, W, C),
                         lambda n, i: (n, jnp.minimum((i + 1) * TH + 1, H - 1), 0, 0)),
            pl.BlockSpec((3, 3 * C, C), lambda n, i: (0, 0, 0)),
            pl.BlockSpec((1, C), lambda n, i: (0, 0)),
            pl.BlockSpec((3, 3 * C, C), lambda n, i: (0, 0, 0)),
            pl.BlockSpec((1, C), lambda n, i: (0, 0)),
        ],
        out_specs=pl.BlockSpec((1, TH, W, C), lambda n, i: (n, i, 0, 0)),
        scratch_shapes=[pltpu.VMEM((TH + 4, W + 2, C), x.dtype),
                        pltpu.VMEM((TH + 2, W + 2, C), x.dtype)],
        compiler_params=pltpu.CompilerParams(
            dimension_semantics=("parallel", "parallel")),
        cost_estimate=pl.CostEstimate(flops=flops, transcendentals=0,
                                      bytes_accessed=bytes_accessed),
    )(x, x, x, x, x, w1c, b1, w2c, b2)


# ---------------------------------------------------------------------------
# Module forward (glue in plain JAX, hot path in Pallas kernels)
# ---------------------------------------------------------------------------
def residual_blocks_with_input_conv(feat_nchw, params, row_tile=None):
    """feat_nchw: (N, in_channels, H, W) -> (N, out_channels, H, W)."""
    x = jnp.transpose(feat_nchw, (0, 2, 3, 1))          # NCHW -> NHWC
    N, H, W, Cin = x.shape
    TH = row_tile if row_tile is not None else _pick_row_tile(H)
    assert H % TH == 0, "row tile must divide H"
    assert TH == H or TH >= 2

    # Pre-reshape weights once to the dx-fused im2col layout (3, 3*Cin, Cout).
    w_in = params["conv_in_w"].reshape(3, 3 * Cin, -1)
    b_in = params["conv_in_b"].reshape(1, -1)

    # Input conv + LeakyReLU(0.1)
    x = _input_conv_lrelu(x, w_in, b_in, TH)
    C = x.shape[-1]

    # Residual blocks (no BN), res_scale = 1.0 — each block is ONE fused kernel.
    for blk in params["blocks"]:
        x = _residual_block(
            x,
            blk["w1"].reshape(3, 3 * C, C), blk["b1"].reshape(1, C),
            blk["w2"].reshape(3, 3 * C, C), blk["b2"].reshape(1, C),
            TH)

    return jnp.transpose(x, (0, 3, 1, 2))               # NHWC -> NCHW


# ---------------------------------------------------------------------------
# Deterministic parameter init (shapes follow the PyTorch __init__).
# Kaiming-normal-like (fan_in, relu gain); residual-block convs scaled by 0.1
# as in default_init_weights(m, 0.1).
# ---------------------------------------------------------------------------
def init_params(key, in_channels, out_channels, num_blocks):
    def conv_w(key, cin, cout, scale=1.0):
        fan_in = cin * 3 * 3
        std = scale * (2.0 / fan_in) ** 0.5
        return jax.random.normal(key, (3, 3, cin, cout), jnp.float32) * std

    keys = jax.random.split(key, 1 + 2 * num_blocks)
    params = {
        "conv_in_w": conv_w(keys[0], in_channels, out_channels),
        "conv_in_b": jnp.zeros((out_channels,), jnp.float32),
        "blocks": [],
    }
    for i in range(num_blocks):
        params["blocks"].append({
            "w1": conv_w(keys[1 + 2 * i], out_channels, out_channels, scale=0.1),
            "b1": jnp.zeros((out_channels,), jnp.float32),
            "w2": conv_w(keys[2 + 2 * i], out_channels, out_channels, scale=0.1),
            "b2": jnp.zeros((out_channels,), jnp.float32),
        })
    return params


# ---------------------------------------------------------------------------
# Pure-JAX reference (for correctness check only)
# ---------------------------------------------------------------------------
def _conv_ref(x, w, b):
    y = jax.lax.conv_general_dilated(
        x, w, window_strides=(1, 1), padding="SAME",
        dimension_numbers=("NHWC", "HWIO", "NHWC"))
    return y + b[None, None, None, :]


def _forward_ref(feat_nchw, params):
    x = jnp.transpose(feat_nchw, (0, 2, 3, 1))
    x = _conv_ref(x, params["conv_in_w"], params["conv_in_b"])
    x = jnp.where(x >= 0, x, 0.1 * x)
    for blk in params["blocks"]:
        identity = x
        h = jnp.maximum(_conv_ref(x, blk["w1"], blk["b1"]), 0.0)
        x = identity + _conv_ref(h, blk["w2"], blk["b2"])
    return jnp.transpose(x, (0, 3, 1, 2))


if __name__ == "__main__":
    # Small shapes consistent with the module:
    # feat: (n=2, in_channels=4, h=16, w=16), out_channels=32, num_blocks=2
    N, CIN, H, W = 2, 4, 16, 16
    COUT, NUM_BLOCKS = 32, 2

    key = jax.random.PRNGKey(0)
    k_x, k_p = jax.random.split(key)
    feat = jax.random.normal(k_x, (N, CIN, H, W), jnp.float32)
    params = init_params(k_p, CIN, COUT, NUM_BLOCKS)

    ref = _forward_ref(feat, params)

    # Row-tiled path (exercises the halo logic: 2 row tiles of 8 rows each).
    fwd_tiled = jax.jit(functools.partial(residual_blocks_with_input_conv,
                                          row_tile=8))
    out = jax.block_until_ready(fwd_tiled(feat, params))
    assert out.shape == (N, COUT, H, W)
    assert jnp.allclose(out, ref, atol=1e-3, rtol=1e-3), \
        "mismatch vs reference (row-tiled)"

    # Default (single row tile) path.
    fwd_full = jax.jit(residual_blocks_with_input_conv)
    out_full = jax.block_until_ready(fwd_full(feat, params))
    assert jnp.allclose(out_full, ref, atol=1e-3, rtol=1e-3), \
        "mismatch vs reference (single tile)"

    print("KERNEL_OK")
</pallas_src>

<mosaic_0001>
module attributes {stable_mosaic.version = 11 : i64} {
  func.func @_res_block_kernel(%arg0: i32, %arg1: i32, %arg2: memref<1x8x16x32xf32, #tpu.memory_space<vmem>>, %arg3: memref<1x1x16x32xf32, #tpu.memory_space<vmem>>, %arg4: memref<1x1x16x32xf32, #tpu.memory_space<vmem>>, %arg5: memref<1x1x16x32xf32, #tpu.memory_space<vmem>>, %arg6: memref<1x1x16x32xf32, #tpu.memory_space<vmem>>, %arg7: memref<3x96x32xf32, #tpu.memory_space<vmem>>, %arg8: memref<1x32xf32, #tpu.memory_space<vmem>>, %arg9: memref<3x96x32xf32, #tpu.memory_space<vmem>>, %arg10: memref<1x32xf32, #tpu.memory_space<vmem>>, %arg11: memref<1x8x16x32xf32, #tpu.memory_space<vmem>>, %arg12: memref<12x18x32xf32, #tpu.memory_space<vmem>>, %arg13: memref<10x18x32xf32, #tpu.memory_space<vmem>>) attributes {dimension_semantics = [#tpu.dimension_semantics<parallel>, #tpu.dimension_semantics<parallel>], iteration_bounds = array<i64: 2, 2>, scalar_prefetch = 0 : i64, scratch_operands = 2 : i64, tpu.core_type = #tpu.core_type<tc>, window_params = [{transform_indices = @transform_0, window_bounds = array<i64: 1, 8, 16, 32>}, {transform_indices = @transform_1, window_bounds = array<i64: 1, 1, 16, 32>}, {transform_indices = @transform_2, window_bounds = array<i64: 1, 1, 16, 32>}, {transform_indices = @transform_3, window_bounds = array<i64: 1, 1, 16, 32>}, {transform_indices = @transform_4, window_bounds = array<i64: 1, 1, 16, 32>}, {pipeline_mode = #tpu.pipeline_mode<synchronous>, transform_indices = @transform_5, window_bounds = array<i64: 3, 96, 32>}, {pipeline_mode = #tpu.pipeline_mode<synchronous>, transform_indices = @transform_6, window_bounds = array<i64: 1, 32>}, {pipeline_mode = #tpu.pipeline_mode<synchronous>, transform_indices = @transform_7, window_bounds = array<i64: 3, 96, 32>}, {pipeline_mode = #tpu.pipeline_mode<synchronous>, transform_indices = @transform_8, window_bounds = array<i64: 1, 32>}, {transform_indices = @transform_9, window_bounds = array<i64: 1, 8, 16, 32>}]} {
    %cst = arith.constant 0.000000e+00 : f32
    %0 = vector.broadcast %cst : f32 to vector<12x18x32xf32>
    %c0 = arith.constant 0 : index
    %c0_0 = arith.constant 0 : index
    %c0_1 = arith.constant 0 : index
    %1 = vector.load %arg12[%c0, %c0_0, %c0_1] : memref<12x18x32xf32, #tpu.memory_space<vmem>>, vector<12x18x32xf32>
    tpu.vector_store %arg12[%c0, %c0_0, %c0_1], %0 {strides = array<i32>} : memref<12x18x32xf32, #tpu.memory_space<vmem>>, vector<12x18x32xf32>,
    %c0_2 = arith.constant 0 : index
    %c0_3 = arith.constant 0 : index
    %c0_4 = arith.constant 0 : index
    %c0_5 = arith.constant 0 : index
    %2 = vector.load %arg2[%c0_2, %c0_3, %c0_4, %c0_5] : memref<1x8x16x32xf32, #tpu.memory_space<vmem>>, vector<1x8x16x32xf32>
    %3 = vector.shape_cast %2 : vector<1x8x16x32xf32> to vector<8x16x32xf32>
    %c2 = arith.constant 2 : index
    %c1 = arith.constant 1 : index
    %c0_6 = arith.constant 0 : index
    %4 = vector.load %arg12[%c2, %c1, %c0_6] : memref<12x18x32xf32, #tpu.memory_space<vmem>>, vector<8x16x32xf32>
    tpu.vector_store %arg12[%c2, %c1, %c0_6], %3 {strides = array<i32>} : memref<12x18x32xf32, #tpu.memory_space<vmem>>, vector<8x16x32xf32>,
    %c0_i32 = arith.constant 0 : i32
    %5 = arith.cmpi sgt, %arg1, %c0_i32 : i32
    %6 = arith.extui %5 : i1 to i32
    %c0_i32_7 = arith.constant 0 : i32
    %7 = arith.cmpi ne, %6, %c0_i32_7 : i32
    scf.if %7 {
      %c0_77 = arith.constant 0 : index
      %c0_78 = arith.constant 0 : index
      %c0_79 = arith.constant 0 : index
      %c0_80 = arith.constant 0 : index
      %82 = vector.load %arg3[%c0_77, %c0_78, %c0_79, %c0_80] : memref<1x1x16x32xf32, #tpu.memory_space<vmem>>, vector<1x1x16x32xf32>
      %83 = vector.shape_cast %82 : vector<1x1x16x32xf32> to vector<1x16x32xf32>
      %c0_81 = arith.constant 0 : index
      %c1_82 = arith.constant 1 : index
      %c0_83 = arith.constant 0 : index
      %84 = vector.load %arg12[%c0_81, %c1_82, %c0_83] : memref<12x18x32xf32, #tpu.memory_space<vmem>>, vector<1x16x32xf32>
      tpu.vector_store %arg12[%c0_81, %c1_82, %c0_83], %83 {strides = array<i32>} : memref<12x18x32xf32, #tpu.memory_space<vmem>>, vector<1x16x32xf32>,
      %c0_84 = arith.constant 0 : index
      %c0_85 = arith.constant 0 : index
      %c0_86 = arith.constant 0 : index
      %c0_87 = arith.constant 0 : index
      %85 = vector.load %arg4[%c0_84, %c0_85, %c0_86, %c0_87] : memref<1x1x16x32xf32, #tpu.memory_space<vmem>>, vector<1x1x16x32xf32>
      %86 = vector.shape_cast %85 : vector<1x1x16x32xf32> to vector<1x16x32xf32>
      %c1_88 = arith.constant 1 : index
      %c1_89 = arith.constant 1 : index
      %c0_90 = arith.constant 0 : index
      %87 = vector.load %arg12[%c1_88, %c1_89, %c0_90] : memref<12x18x32xf32, #tpu.memory_space<vmem>>, vector<1x16x32xf32>
      tpu.vector_store %arg12[%c1_88, %c1_89, %c0_90], %86 {strides = array<i32>} : memref<12x18x32xf32, #tpu.memory_space<vmem>>, vector<1x16x32xf32>,
    } else {
    }
    %c1_i32 = arith.constant 1 : i32
    %8 = arith.cmpi slt, %arg1, %c1_i32 : i32
    %9 = arith.extui %8 : i1 to i32
    %c0_i32_8 = arith.constant 0 : i32
    %10 = arith.cmpi ne, %9, %c0_i32_8 : i32
    scf.if %10 {
      %c0_77 = arith.constant 0 : index
      %c0_78 = arith.constant 0 : index
      %c0_79 = arith.constant 0 : index
      %c0_80 = arith.constant 0 : index
      %82 = vector.load %arg5[%c0_77, %c0_78, %c0_79, %c0_80] : memref<1x1x16x32xf32, #tpu.memory_space<vmem>>, vector<1x1x16x32xf32>
      %83 = vector.shape_cast %82 : vector<1x1x16x32xf32> to vector<1x16x32xf32>
      %c10 = arith.constant 10 : index
      %c1_81 = arith.constant 1 : index
      %c0_82 = arith.constant 0 : index
      %84 = vector.load %arg12[%c10, %c1_81, %c0_82] : memref<12x18x32xf32, #tpu.memory_space<vmem>>, vector<1x16x32xf32>
      tpu.vector_store %arg12[%c10, %c1_81, %c0_82], %83 {strides = array<i32>} : memref<12x18x32xf32, #tpu.memory_space<vmem>>, vector<1x16x32xf32>,
      %c0_83 = arith.constant 0 : index
      %c0_84 = arith.constant 0 : index
      %c0_85 = arith.constant 0 : index
      %c0_86 = arith.constant 0 : index
      %85 = vector.load %arg6[%c0_83, %c0_84, %c0_85, %c0_86] : memref<1x1x16x32xf32, #tpu.memory_space<vmem>>, vector<1x1x16x32xf32>
      %86 = vector.shape_cast %85 : vector<1x1x16x32xf32> to vector<1x16x32xf32>
      %c11 = arith.constant 11 : index
      %c1_87 = arith.constant 1 : index
      %c0_88 = arith.constant 0 : index
      %87 = vector.load %arg12[%c11, %c1_87, %c0_88] : memref<12x18x32xf32, #tpu.memory_space<vmem>>, vector<1x16x32xf32>
      tpu.vector_store %arg12[%c11, %c1_87, %c0_88], %86 {strides = array<i32>} : memref<12x18x32xf32, #tpu.memory_space<vmem>>, vector<1x16x32xf32>,
    } else {
    }
    %c0_9 = arith.constant 0 : index
    %c0_10 = arith.constant 0 : index
    %c0_11 = arith.constant 0 : index
    %11 = vector.load %arg12[%c0_9, %c0_10, %c0_11] : memref<12x18x32xf32, #tpu.memory_space<vmem>>, vector<12x16x32xf32>
    %c0_12 = arith.constant 0 : index
    %c1_13 = arith.constant 1 : index
    %c0_14 = arith.constant 0 : index
    %12 = vector.load %arg12[%c0_12, %c1_13, %c0_14] : memref<12x18x32xf32, #tpu.memory_space<vmem>>, vector<12x16x32xf32>
    %c0_15 = arith.constant 0 : index
    %c2_16 = arith.constant 2 : index
    %c0_17 = arith.constant 0 : index
    %13 = vector.load %arg12[%c0_15, %c2_16, %c0_17] : memref<12x18x32xf32, #tpu.memory_space<vmem>>, vector<12x16x32xf32>
    %14 = tpu.concatenate %11, %12, %13 in 2 : vector<12x16x32xf32>, vector<12x16x32xf32>, vector<12x16x32xf32> -> vector<12x16x96xf32>
    %cst_18 = arith.constant 0.000000e+00 : f32
    %15 = vector.broadcast %cst_18 : f32 to vector<160x32xf32>
    %16 = vector.extract_strided_slice %14 {offsets = [0, 0, 0], sizes = [10, 16, 96], strides = [1, 1, 1]} : vector<12x16x96xf32> to vector<10x16x96xf32>
    %17 = vector.shape_cast %16 : vector<10x16x96xf32> to vector<160x96xf32>
    %c0_19 = arith.constant 0 : index
    %c0_20 = arith.constant 0 : index
    %c0_21 = arith.constant 0 : index
    %18 = vector.load %arg7[%c0_19, %c0_20, %c0_21] : memref<3x96x32xf32, #tpu.memory_space<vmem>>, vector<1x96x32xf32>
    %19 = vector.shape_cast %18 : vector<1x96x32xf32> to vector<96x32xf32>
    %cst_22 = arith.constant dense<0.000000e+00> : vector<160x32xf32>
    %20 = tpu.matmul %17, %19, %cst_22 {dimension_numbers = #tpu.dot_dimension_numbers<[1], [0], [0], [1], [0, 0, 1, 1], [], []>} : vector<160x96xf32>, vector<96x32xf32>, vector<160x32xf32> -> vector<160x32xf32>
    %21 = arith.addf %15, %20 : vector<160x32xf32>
    %22 = vector.extract_strided_slice %14 {offsets = [1, 0, 0], sizes = [10, 16, 96], strides = [1, 1, 1]} : vector<12x16x96xf32> to vector<10x16x96xf32>
    %23 = vector.shape_cast %22 : vector<10x16x96xf32> to vector<160x96xf32>
    %c1_23 = arith.constant 1 : index
    %c0_24 = arith.constant 0 : index
    %c0_25 = arith.constant 0 : index
    %24 = vector.load %arg7[%c1_23, %c0_24, %c0_25] : memref<3x96x32xf32, #tpu.memory_space<vmem>>, vector<1x96x32xf32>
    %25 = vector.shape_cast %24 : vector<1x96x32xf32> to vector<96x32xf32>
    %cst_26 = arith.constant dense<0.000000e+00> : vector<160x32xf32>
    %26 = tpu.matmul %23, %25, %cst_26 {dimension_numbers = #tpu.dot_dimension_numbers<[1], [0], [0], [1], [0, 0, 1, 1], [], []>} : vector<160x96xf32>, vector<96x32xf32>, vector<160x32xf32> -> vector<160x32xf32>
    %27 = arith.addf %21, %26 : vector<160x32xf32>
    %28 = vector.extract_strided_slice %14 {offsets = [2, 0, 0], sizes = [10, 16, 96], strides = [1, 1, 1]} : vector<12x16x96xf32> to vector<10x16x96xf32>
    %29 = vector.shape_cast %28 : vector<10x16x96xf32> to vector<160x96xf32>
    %c2_27 = arith.constant 2 : index
    %c0_28 = arith.constant 0 : index
    %c0_29 = arith.constant 0 : index
    %30 = vector.load %arg7[%c2_27, %c0_28, %c0_29] : memref<3x96x32xf32, #tpu.memory_space<vmem>>, vector<1x96x32xf32>
    %31 = vector.shape_cast %30 : vector<1x96x32xf32> to vector<96x32xf32>
    %cst_30 = arith.constant dense<0.000000e+00> : vector<160x32xf32>
    %32 = tpu.matmul %29, %31, %cst_30 {dimension_numbers = #tpu.dot_dimension_numbers<[1], [0], [0], [1], [0, 0, 1, 1], [], []>} : vector<160x96xf32>, vector<96x32xf32>, vector<160x32xf32> -> vector<160x32xf32>
    %33 = arith.addf %27, %32 : vector<160x32xf32>
    %c0_31 = arith.constant 0 : index
    %c0_32 = arith.constant 0 : index
    %34 = vector.load %arg8[%c0_31, %c0_32] : memref<1x32xf32, #tpu.memory_space<vmem>>, vector<1x32xf32>
    %35 = vector.broadcast %34 : vector<1x32xf32> to vector<160x32xf32>
    %36 = arith.addf %33, %35 : vector<160x32xf32>
    %37 = vector.shape_cast %36 : vector<160x32xf32> to vector<10x16x32xf32>
    %cst_33 = arith.constant 0.000000e+00 : f32
    %38 = vector.broadcast %cst_33 : f32 to vector<10x16x32xf32>
    %39 = arith.maximumf %37, %38 : vector<10x16x32xf32>
    %cst_34 = arith.constant 0.000000e+00 : f32
    %40 = vector.broadcast %cst_34 : f32 to vector<10x18x32xf32>
    %c0_35 = arith.constant 0 : index
    %c0_36 = arith.constant 0 : index
    %c0_37 = arith.constant 0 : index
    %41 = vector.load %arg13[%c0_35, %c0_36, %c0_37] : memref<10x18x32xf32, #tpu.memory_space<vmem>>, vector<10x18x32xf32>
    tpu.vector_store %arg13[%c0_35, %c0_36, %c0_37], %40 {strides = array<i32>} : memref<10x18x32xf32, #tpu.memory_space<vmem>>, vector<10x18x32xf32>,
    %c0_38 = arith.constant 0 : index
    %c1_39 = arith.constant 1 : index
    %c0_40 = arith.constant 0 : index
    %42 = vector.load %arg13[%c0_38, %c1_39, %c0_40] : memref<10x18x32xf32, #tpu.memory_space<vmem>>, vector<10x16x32xf32>
    tpu.vector_store %arg13[%c0_38, %c1_39, %c0_40], %39 {strides = array<i32>} : memref<10x18x32xf32, #tpu.memory_space<vmem>>, vector<10x16x32xf32>,
    %c0_i32_41 = arith.constant 0 : i32
    %43 = arith.cmpi eq, %arg1, %c0_i32_41 : i32
    %44 = arith.extui %43 : i1 to i32
    %c0_i32_42 = arith.constant 0 : i32
    %45 = arith.cmpi ne, %44, %c0_i32_42 : i32
    scf.if %45 {
      %cst_77 = arith.constant 0.000000e+00 : f32
      %82 = vector.broadcast %cst_77 : f32 to vector<1x18x32xf32>
      %c0_78 = arith.constant 0 : index
      %c0_79 = arith.constant 0 : index
      %c0_80 = arith.constant 0 : index
      %83 = vector.load %arg13[%c0_78, %c0_79, %c0_80] : memref<10x18x32xf32, #tpu.memory_space<vmem>>, vector<1x18x32xf32>
      tpu.vector_store %arg13[%c0_78, %c0_79, %c0_80], %82 {strides = array<i32>} : memref<10x18x32xf32, #tpu.memory_space<vmem>>, vector<1x18x32xf32>,
    } else {
    }
    %c1_i32_43 = arith.constant 1 : i32
    %46 = arith.cmpi eq, %arg1, %c1_i32_43 : i32
    %47 = arith.extui %46 : i1 to i32
    %c0_i32_44 = arith.constant 0 : i32
    %48 = arith.cmpi ne, %47, %c0_i32_44 : i32
    scf.if %48 {
      %cst_77 = arith.constant 0.000000e+00 : f32
      %82 = vector.broadcast %cst_77 : f32 to vector<1x18x32xf32>
      %c9 = arith.constant 9 : index
      %c0_78 = arith.constant 0 : index
      %c0_79 = arith.constant 0 : index
      %83 = vector.load %arg13[%c9, %c0_78, %c0_79] : memref<10x18x32xf32, #tpu.memory_space<vmem>>, vector<1x18x32xf32>
      tpu.vector_store %arg13[%c9, %c0_78, %c0_79], %82 {strides = array<i32>} : memref<10x18x32xf32, #tpu.memory_space<vmem>>, vector<1x18x32xf32>,
    } else {
    }
    %c0_45 = arith.constant 0 : index
    %c0_46 = arith.constant 0 : index
    %c0_47 = arith.constant 0 : index
    %49 = vector.load %arg13[%c0_45, %c0_46, %c0_47] : memref<10x18x32xf32, #tpu.memory_space<vmem>>, vector<10x16x32xf32>
    %c0_48 = arith.constant 0 : index
    %c1_49 = arith.constant 1 : index
    %c0_50 = arith.constant 0 : index
    %50 = vector.load %arg13[%c0_48, %c1_49, %c0_50] : memref<10x18x32xf32, #tpu.memory_space<vmem>>, vector<10x16x32xf32>
    %c0_51 = arith.constant 0 : index
    %c2_52 = arith.constant 2 : index
    %c0_53 = arith.constant 0 : index
    %51 = vector.load %arg13[%c0_51, %c2_52, %c0_53] : memref<10x18x32xf32, #tpu.memory_space<vmem>>, vector<10x16x32xf32>
    %52 = tpu.concatenate %49, %50, %51 in 2 : vector<10x16x32xf32>, vector<10x16x32xf32>, vector<10x16x32xf32> -> vector<10x16x96xf32>
    %cst_54 = arith.constant 0.000000e+00 : f32
    %53 = vector.broadcast %cst_54 : f32 to vector<128x32xf32>
    %54 = vector.extract_strided_slice %52 {offsets = [0, 0, 0], sizes = [8, 16, 96], strides = [1, 1, 1]} : vector<10x16x96xf32> to vector<8x16x96xf32>
    %55 = vector.shape_cast %54 : vector<8x16x96xf32> to vector<128x96xf32>
    %c0_55 = arith.constant 0 : index
    %c0_56 = arith.constant 0 : index
    %c0_57 = arith.constant 0 : index
    %56 = vector.load %arg9[%c0_55, %c0_56, %c0_57] : memref<3x96x32xf32, #tpu.memory_space<vmem>>, vector<1x96x32xf32>
    %57 = vector.shape_cast %56 : vector<1x96x32xf32> to vector<96x32xf32>
    %cst_58 = arith.constant dense<0.000000e+00> : vector<128x32xf32>
    %58 = tpu.matmul %55, %57, %cst_58 {dimension_numbers = #tpu.dot_dimension_numbers<[1], [0], [0], [1], [0, 0, 1, 1], [], []>} : vector<128x96xf32>, vector<96x32xf32>, vector<128x32xf32> -> vector<128x32xf32>
    %59 = arith.addf %53, %58 : vector<128x32xf32>
    %60 = vector.extract_strided_slice %52 {offsets = [1, 0, 0], sizes = [8, 16, 96], strides = [1, 1, 1]} : vector<10x16x96xf32> to vector<8x16x96xf32>
    %61 = vector.shape_cast %60 : vector<8x16x96xf32> to vector<128x96xf32>
    %c1_59 = arith.constant 1 : index
    %c0_60 = arith.constant 0 : index
    %c0_61 = arith.constant 0 : index
    %62 = vector.load %arg9[%c1_59, %c0_60, %c0_61] : memref<3x96x32xf32, #tpu.memory_space<vmem>>, vector<1x96x32xf32>
    %63 = vector.shape_cast %62 : vector<1x96x32xf32> to vector<96x32xf32>
    %cst_62 = arith.constant dense<0.000000e+00> : vector<128x32xf32>
    %64 = tpu.matmul %61, %63, %cst_62 {dimension_numbers = #tpu.dot_dimension_numbers<[1], [0], [0], [1], [0, 0, 1, 1], [], []>} : vector<128x96xf32>, vector<96x32xf32>, vector<128x32xf32> -> vector<128x32xf32>
    %65 = arith.addf %59, %64 : vector<128x32xf32>
    %66 = vector.extract_strided_slice %52 {offsets = [2, 0, 0], sizes = [8, 16, 96], strides = [1, 1, 1]} : vector<10x16x96xf32> to vector<8x16x96xf32>
    %67 = vector.shape_cast %66 : vector<8x16x96xf32> to vector<128x96xf32>
    %c2_63 = arith.constant 2 : index
    %c0_64 = arith.constant 0 : index
    %c0_65 = arith.constant 0 : index
    %68 = vector.load %arg9[%c2_63, %c0_64, %c0_65] : memref<3x96x32xf32, #tpu.memory_space<vmem>>, vector<1x96x32xf32>
    %69 = vector.shape_cast %68 : vector<1x96x32xf32> to vector<96x32xf32>
    %cst_66 = arith.constant dense<0.000000e+00> : vector<128x32xf32>
    %70 = tpu.matmul %67, %69, %cst_66 {dimension_numbers = #tpu.dot_dimension_numbers<[1], [0], [0], [1], [0, 0, 1, 1], [], []>} : vector<128x96xf32>, vector<96x32xf32>, vector<128x32xf32> -> vector<128x32xf32>
    %71 = arith.addf %65, %70 : vector<128x32xf32>
    %c0_67 = arith.constant 0 : index
    %c0_68 = arith.constant 0 : index
    %72 = vector.load %arg10[%c0_67, %c0_68] : memref<1x32xf32, #tpu.memory_space<vmem>>, vector<1x32xf32>
    %73 = vector.broadcast %72 : vector<1x32xf32> to vector<128x32xf32>
    %74 = arith.addf %71, %73 : vector<128x32xf32>
    %75 = vector.shape_cast %74 : vector<128x32xf32> to vector<8x16x32xf32>
    %c0_69 = arith.constant 0 : index
    %c0_70 = arith.constant 0 : index
    %c0_71 = arith.constant 0 : index
    %c0_72 = arith.constant 0 : index
    %76 = vector.load %arg2[%c0_69, %c0_70, %c0_71, %c0_72] : memref<1x8x16x32xf32, #tpu.memory_space<vmem>>, vector<1x8x16x32xf32>
    %77 = vector.shape_cast %76 : vector<1x8x16x32xf32> to vector<8x16x32xf32>
    %78 = arith.addf %77, %75 : vector<8x16x32xf32>
    %c0_73 = arith.constant 0 : index
    %c0_74 = arith.constant 0 : index
    %c0_75 = arith.constant 0 : index
    %c0_76 = arith.constant 0 : index
    %79 = vector.load %arg11[%c0_73, %c0_74, %c0_75, %c0_76] : memref<1x8x16x32xf32, #tpu.memory_space<vmem>>, vector<1x8x16x32xf32>
    %80 = vector.shape_cast %79 : vector<1x8x16x32xf32> to vector<8x16x32xf32>
    %81 = vector.shape_cast %78 : vector<8x16x32xf32> to vector<1x8x16x32xf32>
    tpu.vector_store %arg11[%c0_73, %c0_74, %c0_75, %c0_76], %81 {strides = array<i32>} : memref<1x8x16x32xf32, #tpu.memory_space<vmem>>, vector<1x8x16x32xf32>,
    return
  }
  func.func @transform_0(%arg0: i32, %arg1: i32) -> (i32, i32, i32, i32) {
    %c0_i32 = arith.constant 0 : i32
    %c0_i32_0 = arith.constant 0 : i32
    %c0_i32_1 = arith.constant 0 : i32
    return %arg0, %arg1, %c0_i32, %c0_i32_0 : i32, i32, i32, i32
  }
  func.func @transform_1(%arg0: i32, %arg1: i32) -> (i32, i32, i32, i32) {
    %c8_i32 = arith.constant 8 : i32
    %0 = arith.muli %arg1, %c8_i32 : i32
    %c2_i32 = arith.constant 2 : i32
    %1 = arith.subi %0, %c2_i32 : i32
    %c0_i32 = arith.constant 0 : i32
    %2 = arith.maxsi %1, %c0_i32 : i32
    %c0_i32_0 = arith.constant 0 : i32
    %c0_i32_1 = arith.constant 0 : i32
    %c0_i32_2 = arith.constant 0 : i32
    return %arg0, %2, %c0_i32_0, %c0_i32_1 : i32, i32, i32, i32
  }
  func.func @transform_2(%arg0: i32, %arg1: i32) -> (i32, i32, i32, i32) {
    %c8_i32 = arith.constant 8 : i32
    %0 = arith.muli %arg1, %c8_i32 : i32
    %c1_i32 = arith.constant 1 : i32
    %1 = arith.subi %0, %c1_i32 : i32
    %c0_i32 = arith.constant 0 : i32
    %2 = arith.maxsi %1, %c0_i32 : i32
    %c0_i32_0 = arith.constant 0 : i32
    %c0_i32_1 = arith.constant 0 : i32
    %c0_i32_2 = arith.constant 0 : i32
    return %arg0, %2, %c0_i32_0, %c0_i32_1 : i32, i32, i32, i32
  }
  func.func @transform_3(%arg0: i32, %arg1: i32) -> (i32, i32, i32, i32) {
    %c1_i32 = arith.constant 1 : i32
    %0 = arith.addi %arg1, %c1_i32 : i32
    %c8_i32 = arith.constant 8 : i32
    %1 = arith.muli %0, %c8_i32 : i32
    %c15_i32 = arith.constant 15 : i32
    %2 = arith.minsi %1, %c15_i32 : i32
    %c0_i32 = arith.constant 0 : i32
    %c0_i32_0 = arith.constant 0 : i32
    %c0_i32_1 = arith.constant 0 : i32
    return %arg0, %2, %c0_i32, %c0_i32_0 : i32, i32, i32, i32
  }
  func.func @transform_4(%arg0: i32, %arg1: i32) -> (i32, i32, i32, i32) {
    %c1_i32 = arith.constant 1 : i32
    %0 = arith.addi %arg1, %c1_i32 : i32
    %c8_i32 = arith.constant 8 : i32
    %1 = arith.muli %0, %c8_i32 : i32
    %c1_i32_0 = arith.constant 1 : i32
    %2 = arith.addi %1, %c1_i32_0 : i32
    %c15_i32 = arith.constant 15 : i32
    %3 = arith.minsi %2, %c15_i32 : i32
    %c0_i32 = arith.constant 0 : i32
    %c0_i32_1 = arith.constant 0 : i32
    %c0_i32_2 = arith.constant 0 : i32
    return %arg0, %3, %c0_i32, %c0_i32_1 : i32, i32, i32, i32
  }
  func.func @transform_5(%arg0: i32, %arg1: i32) -> (i32, i32, i32) {
    %c0_i32 = arith.constant 0 : i32
    %c0_i32_0 = arith.constant 0 : i32
    %c0_i32_1 = arith.constant 0 : i32
    %c0_i32_2 = arith.constant 0 : i32
    return %c0_i32, %c0_i32_0, %c0_i32_1 : i32, i32, i32
  }
  func.func @transform_6(%arg0: i32, %arg1: i32) -> (i32, i32) {
    %c0_i32 = arith.constant 0 : i32
    %c0_i32_0 = arith.constant 0 : i32
    %c0_i32_1 = arith.constant 0 : i32
    return %c0_i32, %c0_i32_0 : i32, i32
  }
  func.func @transform_7(%arg0: i32, %arg1: i32) -> (i32, i32, i32) {
    %c0_i32 = arith.constant 0 : i32
    %c0_i32_0 = arith.constant 0 : i32
    %c0_i32_1 = arith.constant 0 : i32
    %c0_i32_2 = arith.constant 0 : i32
    return %c0_i32, %c0_i32_0, %c0_i32_1 : i32, i32, i32
  }
  func.func @transform_8(%arg0: i32, %arg1: i32) -> (i32, i32) {
    %c0_i32 = arith.constant 0 : i32
    %c0_i32_0 = arith.constant 0 : i32
    %c0_i32_1 = arith.constant 0 : i32
    return %c0_i32, %c0_i32_0 : i32, i32
  }
  func.func @transform_9(%arg0: i32, %arg1: i32) -> (i32, i32, i32, i32) {
    %c0_i32 = arith.constant 0 : i32
    %c0_i32_0 = arith.constant 0 : i32
    %c0_i32_1 = arith.constant 0 : i32
    return %arg0, %arg1, %c0_i32, %c0_i32_0 : i32, i32, i32, i32
  }
}

module attributes {stable_mosaic.version = 11 : i64} {
  func.func @_input_conv_kernel(%arg0: i32, %arg1: i32, %arg2: memref<1x8x16x4xf32, #tpu.memory_space<vmem>>, %arg3: memref<1x1x16x4xf32, #tpu.memory_space<vmem>>, %arg4: memref<1x1x16x4xf32, #tpu.memory_space<vmem>>, %arg5: memref<3x12x32xf32, #tpu.memory_space<vmem>>, %arg6: memref<1x32xf32, #tpu.memory_space<vmem>>, %arg7: memref<1x8x16x32xf32, #tpu.memory_space<vmem>>, %arg8: memref<10x18x4xf32, #tpu.memory_space<vmem>>) attributes {dimension_semantics = [#tpu.dimension_semantics<parallel>, #tpu.dimension_semantics<parallel>], iteration_bounds = array<i64: 2, 2>, scalar_prefetch = 0 : i64, scratch_operands = 1 : i64, tpu.core_type = #tpu.core_type<tc>, window_params = [{transform_indices = @transform_0, window_bounds = array<i64: 1, 8, 16, 4>}, {transform_indices = @transform_1, window_bounds = array<i64: 1, 1, 16, 4>}, {transform_indices = @transform_2, window_bounds = array<i64: 1, 1, 16, 4>}, {pipeline_mode = #tpu.pipeline_mode<synchronous>, transform_indices = @transform_3, window_bounds = array<i64: 3, 12, 32>}, {pipeline_mode = #tpu.pipeline_mode<synchronous>, transform_indices = @transform_4, window_bounds = array<i64: 1, 32>}, {transform_indices = @transform_5, window_bounds = array<i64: 1, 8, 16, 32>}]} {
    %cst = arith.constant 0.000000e+00 : f32
    %0 = vector.broadcast %cst : f32 to vector<10x18x4xf32>
    %c0 = arith.constant 0 : index
    %c0_0 = arith.constant 0 : index
    %c0_1 = arith.constant 0 : index
    %1 = vector.load %arg8[%c0, %c0_0, %c0_1] : memref<10x18x4xf32, #tpu.memory_space<vmem>>, vector<10x18x4xf32>
    tpu.vector_store %arg8[%c0, %c0_0, %c0_1], %0 {strides = array<i32>} : memref<10x18x4xf32, #tpu.memory_space<vmem>>, vector<10x18x4xf32>,
    %c0_2 = arith.constant 0 : index
    %c0_3 = arith.constant 0 : index
    %c0_4 = arith.constant 0 : index
    %c0_5 = arith.constant 0 : index
    %2 = vector.load %arg2[%c0_2, %c0_3, %c0_4, %c0_5] : memref<1x8x16x4xf32, #tpu.memory_space<vmem>>, vector<1x8x16x4xf32>
    %3 = vector.shape_cast %2 : vector<1x8x16x4xf32> to vector<8x16x4xf32>
    %c1 = arith.constant 1 : index
    %c1_6 = arith.constant 1 : index
    %c0_7 = arith.constant 0 : index
    %4 = vector.load %arg8[%c1, %c1_6, %c0_7] : memref<10x18x4xf32, #tpu.memory_space<vmem>>, vector<8x16x4xf32>
    tpu.vector_store %arg8[%c1, %c1_6, %c0_7], %3 {strides = array<i32>} : memref<10x18x4xf32, #tpu.memory_space<vmem>>, vector<8x16x4xf32>,
    %c0_i32 = arith.constant 0 : i32
    %5 = arith.cmpi sgt, %arg1, %c0_i32 : i32
    %6 = arith.extui %5 : i1 to i32
    %c0_i32_8 = arith.constant 0 : i32
    %7 = arith.cmpi ne, %6, %c0_i32_8 : i32
    scf.if %7 {
      %c0_39 = arith.constant 0 : index
      %c0_40 = arith.constant 0 : index
      %c0_41 = arith.constant 0 : index
      %c0_42 = arith.constant 0 : index
      %46 = vector.load %arg3[%c0_39, %c0_40, %c0_41, %c0_42] : memref<1x1x16x4xf32, #tpu.memory_space<vmem>>, vector<1x1x16x4xf32>
      %47 = vector.shape_cast %46 : vector<1x1x16x4xf32> to vector<1x16x4xf32>
      %c0_43 = arith.constant 0 : index
      %c1_44 = arith.constant 1 : index
      %c0_45 = arith.constant 0 : index
      %48 = vector.load %arg8[%c0_43, %c1_44, %c0_45] : memref<10x18x4xf32, #tpu.memory_space<vmem>>, vector<1x16x4xf32>
      tpu.vector_store %arg8[%c0_43, %c1_44, %c0_45], %47 {strides = array<i32>} : memref<10x18x4xf32, #tpu.memory_space<vmem>>, vector<1x16x4xf32>,
    } else {
    }
    %c1_i32 = arith.constant 1 : i32
    %8 = arith.cmpi slt, %arg1, %c1_i32 : i32
    %9 = arith.extui %8 : i1 to i32
    %c0_i32_9 = arith.constant 0 : i32
    %10 = arith.cmpi ne, %9, %c0_i32_9 : i32
    scf.if %10 {
      %c0_39 = arith.constant 0 : index
      %c0_40 = arith.constant 0 : index
      %c0_41 = arith.constant 0 : index
      %c0_42 = arith.constant 0 : index
      %46 = vector.load %arg4[%c0_39, %c0_40, %c0_41, %c0_42] : memref<1x1x16x4xf32, #tpu.memory_space<vmem>>, vector<1x1x16x4xf32>
      %47 = vector.shape_cast %46 : vector<1x1x16x4xf32> to vector<1x16x4xf32>
      %c9 = arith.constant 9 : index
      %c1_43 = arith.constant 1 : index
      %c0_44 = arith.constant 0 : index
      %48 = vector.load %arg8[%c9, %c1_43, %c0_44] : memref<10x18x4xf32, #tpu.memory_space<vmem>>, vector<1x16x4xf32>
      tpu.vector_store %arg8[%c9, %c1_43, %c0_44], %47 {strides = array<i32>} : memref<10x18x4xf32, #tpu.memory_space<vmem>>, vector<1x16x4xf32>,
    } else {
    }
    %c0_10 = arith.constant 0 : index
    %c0_11 = arith.constant 0 : index
    %c0_12 = arith.constant 0 : index
    %11 = vector.load %arg8[%c0_10, %c0_11, %c0_12] : memref<10x18x4xf32, #tpu.memory_space<vmem>>, vector<10x16x4xf32>
    %c0_13 = arith.constant 0 : index
    %c1_14 = arith.constant 1 : index
    %c0_15 = arith.constant 0 : index
    %12 = vector.load %arg8[%c0_13, %c1_14, %c0_15] : memref<10x18x4xf32, #tpu.memory_space<vmem>>, vector<10x16x4xf32>
    %c0_16 = arith.constant 0 : index
    %c2 = arith.constant 2 : index
    %c0_17 = arith.constant 0 : index
    %13 = vector.load %arg8[%c0_16, %c2, %c0_17] : memref<10x18x4xf32, #tpu.memory_space<vmem>>, vector<10x16x4xf32>
    %14 = tpu.concatenate %11, %12, %13 in 2 : vector<10x16x4xf32>, vector<10x16x4xf32>, vector<10x16x4xf32> -> vector<10x16x12xf32>
    %cst_18 = arith.constant 0.000000e+00 : f32
    %15 = vector.broadcast %cst_18 : f32 to vector<128x32xf32>
    %16 = vector.extract_strided_slice %14 {offsets = [0, 0, 0], sizes = [8, 16, 12], strides = [1, 1, 1]} : vector<10x16x12xf32> to vector<8x16x12xf32>
    %17 = vector.shape_cast %16 : vector<8x16x12xf32> to vector<128x12xf32>
    %c0_19 = arith.constant 0 : index
    %c0_20 = arith.constant 0 : index
    %c0_21 = arith.constant 0 : index
    %18 = vector.load %arg5[%c0_19, %c0_20, %c0_21] : memref<3x12x32xf32, #tpu.memory_space<vmem>>, vector<1x12x32xf32>
    %19 = vector.shape_cast %18 : vector<1x12x32xf32> to vector<12x32xf32>
    %cst_22 = arith.constant dense<0.000000e+00> : vector<128x32xf32>
    %20 = tpu.matmul %17, %19, %cst_22 {dimension_numbers = #tpu.dot_dimension_numbers<[1], [0], [0], [1], [0, 0, 1, 1], [], []>} : vector<128x12xf32>, vector<12x32xf32>, vector<128x32xf32> -> vector<128x32xf32>
    %21 = arith.addf %15, %20 : vector<128x32xf32>
    %22 = vector.extract_strided_slice %14 {offsets = [1, 0, 0], sizes = [8, 16, 12], strides = [1, 1, 1]} : vector<10x16x12xf32> to vector<8x16x12xf32>
    %23 = vector.shape_cast %22 : vector<8x16x12xf32> to vector<128x12xf32>
    %c1_23 = arith.constant 1 : index
    %c0_24 = arith.constant 0 : index
    %c0_25 = arith.constant 0 : index
    %24 = vector.load %arg5[%c1_23, %c0_24, %c0_25] : memref<3x12x32xf32, #tpu.memory_space<vmem>>, vector<1x12x32xf32>
    %25 = vector.shape_cast %24 : vector<1x12x32xf32> to vector<12x32xf32>
    %cst_26 = arith.constant dense<0.000000e+00> : vector<128x32xf32>
    %26 = tpu.matmul %23, %25, %cst_26 {dimension_numbers = #tpu.dot_dimension_numbers<[1], [0], [0], [1], [0, 0, 1, 1], [], []>} : vector<128x12xf32>, vector<12x32xf32>, vector<128x32xf32> -> vector<128x32xf32>
    %27 = arith.addf %21, %26 : vector<128x32xf32>
    %28 = vector.extract_strided_slice %14 {offsets = [2, 0, 0], sizes = [8, 16, 12], strides = [1, 1, 1]} : vector<10x16x12xf32> to vector<8x16x12xf32>
    %29 = vector.shape_cast %28 : vector<8x16x12xf32> to vector<128x12xf32>
    %c2_27 = arith.constant 2 : index
    %c0_28 = arith.constant 0 : index
    %c0_29 = arith.constant 0 : index
    %30 = vector.load %arg5[%c2_27, %c0_28, %c0_29] : memref<3x12x32xf32, #tpu.memory_space<vmem>>, vector<1x12x32xf32>
    %31 = vector.shape_cast %30 : vector<1x12x32xf32> to vector<12x32xf32>
    %cst_30 = arith.constant dense<0.000000e+00> : vector<128x32xf32>
    %32 = tpu.matmul %29, %31, %cst_30 {dimension_numbers = #tpu.dot_dimension_numbers<[1], [0], [0], [1], [0, 0, 1, 1], [], []>} : vector<128x12xf32>, vector<12x32xf32>, vector<128x32xf32> -> vector<128x32xf32>
    %33 = arith.addf %27, %32 : vector<128x32xf32>
    %c0_31 = arith.constant 0 : index
    %c0_32 = arith.constant 0 : index
    %34 = vector.load %arg6[%c0_31, %c0_32] : memref<1x32xf32, #tpu.memory_space<vmem>>, vector<1x32xf32>
    %35 = vector.broadcast %34 : vector<1x32xf32> to vector<128x32xf32>
    %36 = arith.addf %33, %35 : vector<128x32xf32>
    %37 = vector.shape_cast %36 : vector<128x32xf32> to vector<8x16x32xf32>
    %cst_33 = arith.constant 0.000000e+00 : f32
    %38 = vector.broadcast %cst_33 : f32 to vector<8x16x32xf32>
    %39 = arith.cmpf oge, %37, %38 : vector<8x16x32xf32>
    %cst_34 = arith.constant 1.000000e-01 : f32
    %40 = vector.broadcast %cst_34 : f32 to vector<8x16x32xf32>
    %41 = arith.mulf %40, %37 : vector<8x16x32xf32>
    %42 = arith.select %39, %37, %41 : vector<8x16x32xi1>, vector<8x16x32xf32>
    %c0_35 = arith.constant 0 : index
    %c0_36 = arith.constant 0 : index
    %c0_37 = arith.constant 0 : index
    %c0_38 = arith.constant 0 : index
    %43 = vector.load %arg7[%c0_35, %c0_36, %c0_37, %c0_38] : memref<1x8x16x32xf32, #tpu.memory_space<vmem>>, vector<1x8x16x32xf32>
    %44 = vector.shape_cast %43 : vector<1x8x16x32xf32> to vector<8x16x32xf32>
    %45 = vector.shape_cast %42 : vector<8x16x32xf32> to vector<1x8x16x32xf32>
    tpu.vector_store %arg7[%c0_35, %c0_36, %c0_37, %c0_38], %45 {strides = array<i32>} : memref<1x8x16x32xf32, #tpu.memory_space<vmem>>, vector<1x8x16x32xf32>,
    return
  }
  func.func @transform_0(%arg0: i32, %arg1: i32) -> (i32, i32, i32, i32) {
    %c0_i32 = arith.constant 0 : i32
    %c0_i32_0 = arith.constant 0 : i32
    %c0_i32_1 = arith.constant 0 : i32
    return %arg0, %arg1, %c0_i32, %c0_i32_0 : i32, i32, i32, i32
  }
  func.func @transform_1(%arg0: i32, %arg1: i32) -> (i32, i32, i32, i32) {
    %c8_i32 = arith.constant 8 : i32
    %0 = arith.muli %arg1, %c8_i32 : i32
    %c1_i32 = arith.constant 1 : i32
    %1 = arith.subi %0, %c1_i32 : i32
    %c0_i32 = arith.constant 0 : i32
    %2 = arith.maxsi %1, %c0_i32 : i32
    %c0_i32_0 = arith.constant 0 : i32
    %c0_i32_1 = arith.constant 0 : i32
    %c0_i32_2 = arith.constant 0 : i32
    return %arg0, %2, %c0_i32_0, %c0_i32_1 : i32, i32, i32, i32
  }
  func.func @transform_2(%arg0: i32, %arg1: i32) -> (i32, i32, i32, i32) {
    %c1_i32 = arith.constant 1 : i32
    %0 = arith.addi %arg1, %c1_i32 : i32
    %c8_i32 = arith.constant 8 : i32
    %1 = arith.muli %0, %c8_i32 : i32
    %c15_i32 = arith.constant 15 : i32
    %2 = arith.minsi %1, %c15_i32 : i32
    %c0_i32 = arith.constant 0 : i32
    %c0_i32_0 = arith.constant 0 : i32
    %c0_i32_1 = arith.constant 0 : i32
    return %arg0, %2, %c0_i32, %c0_i32_0 : i32, i32, i32, i32
  }
  func.func @transform_3(%arg0: i32, %arg1: i32) -> (i32, i32, i32) {
    %c0_i32 = arith.constant 0 : i32
    %c0_i32_0 = arith.constant 0 : i32
    %c0_i32_1 = arith.constant 0 : i32
    %c0_i32_2 = arith.constant 0 : i32
    return %c0_i32, %c0_i32_0, %c0_i32_1 : i32, i32, i32
  }
  func.func @transform_4(%arg0: i32, %arg1: i32) -> (i32, i32) {
    %c0_i32 = arith.constant 0 : i32
    %c0_i32_0 = arith.constant 0 : i32
    %c0_i32_1 = arith.constant 0 : i32
    return %c0_i32, %c0_i32_0 : i32, i32
  }
  func.func @transform_5(%arg0: i32, %arg1: i32) -> (i32, i32, i32, i32) {
    %c0_i32 = arith.constant 0 : i32
    %c0_i32_0 = arith.constant 0 : i32
    %c0_i32_1 = arith.constant 0 : i32
    return %arg0, %arg1, %c0_i32, %c0_i32_0 : i32, i32, i32, i32
  }
}

module attributes {stable_mosaic.version = 11 : i64} {
  func.func @_res_block_kernel(%arg0: i32, %arg1: i32, %arg2: memref<1x8x16x32xf32, #tpu.memory_space<vmem>>, %arg3: memref<1x1x16x32xf32, #tpu.memory_space<vmem>>, %arg4: memref<1x1x16x32xf32, #tpu.memory_space<vmem>>, %arg5: memref<1x1x16x32xf32, #tpu.memory_space<vmem>>, %arg6: memref<1x1x16x32xf32, #tpu.memory_space<vmem>>, %arg7: memref<3x96x32xf32, #tpu.memory_space<vmem>>, %arg8: memref<1x32xf32, #tpu.memory_space<vmem>>, %arg9: memref<3x96x32xf32, #tpu.memory_space<vmem>>, %arg10: memref<1x32xf32, #tpu.memory_space<vmem>>, %arg11: memref<1x8x16x32xf32, #tpu.memory_space<vmem>>, %arg12: memref<12x18x32xf32, #tpu.memory_space<vmem>>, %arg13: memref<10x18x32xf32, #tpu.memory_space<vmem>>) attributes {dimension_semantics = [#tpu.dimension_semantics<parallel>, #tpu.dimension_semantics<parallel>], iteration_bounds = array<i64: 2, 2>, scalar_prefetch = 0 : i64, scratch_operands = 2 : i64, tpu.core_type = #tpu.core_type<tc>, window_params = [{transform_indices = @transform_0, window_bounds = array<i64: 1, 8, 16, 32>}, {transform_indices = @transform_1, window_bounds = array<i64: 1, 1, 16, 32>}, {transform_indices = @transform_2, window_bounds = array<i64: 1, 1, 16, 32>}, {transform_indices = @transform_3, window_bounds = array<i64: 1, 1, 16, 32>}, {transform_indices = @transform_4, window_bounds = array<i64: 1, 1, 16, 32>}, {pipeline_mode = #tpu.pipeline_mode<synchronous>, transform_indices = @transform_5, window_bounds = array<i64: 3, 96, 32>}, {pipeline_mode = #tpu.pipeline_mode<synchronous>, transform_indices = @transform_6, window_bounds = array<i64: 1, 32>}, {pipeline_mode = #tpu.pipeline_mode<synchronous>, transform_indices = @transform_7, window_bounds = array<i64: 3, 96, 32>}, {pipeline_mode = #tpu.pipeline_mode<synchronous>, transform_indices = @transform_8, window_bounds = array<i64: 1, 32>}, {transform_indices = @transform_9, window_bounds = array<i64: 1, 8, 16, 32>}]} {
    %cst = arith.constant 0.000000e+00 : f32
    %0 = vector.broadcast %cst : f32 to vector<12x18x32xf32>
    %c0 = arith.constant 0 : index
    %c0_0 = arith.constant 0 : index
    %c0_1 = arith.constant 0 : index
    %1 = vector.load %arg12[%c0, %c0_0, %c0_1] : memref<12x18x32xf32, #tpu.memory_space<vmem>>, vector<12x18x32xf32>
    tpu.vector_store %arg12[%c0, %c0_0, %c0_1], %0 {strides = array<i32>} : memref<12x18x32xf32, #tpu.memory_space<vmem>>, vector<12x18x32xf32>,
    %c0_2 = arith.constant 0 : index
    %c0_3 = arith.constant 0 : index
    %c0_4 = arith.constant 0 : index
    %c0_5 = arith.constant 0 : index
    %2 = vector.load %arg2[%c0_2, %c0_3, %c0_4, %c0_5] : memref<1x8x16x32xf32, #tpu.memory_space<vmem>>, vector<1x8x16x32xf32>
    %3 = vector.shape_cast %2 : vector<1x8x16x32xf32> to vector<8x16x32xf32>
    %c2 = arith.constant 2 : index
    %c1 = arith.constant 1 : index
    %c0_6 = arith.constant 0 : index
    %4 = vector.load %arg12[%c2, %c1, %c0_6] : memref<12x18x32xf32, #tpu.memory_space<vmem>>, vector<8x16x32xf32>
    tpu.vector_store %arg12[%c2, %c1, %c0_6], %3 {strides = array<i32>} : memref<12x18x32xf32, #tpu.memory_space<vmem>>, vector<8x16x32xf32>,
    %c0_i32 = arith.constant 0 : i32
    %5 = arith.cmpi sgt, %arg1, %c0_i32 : i32
    %6 = arith.extui %5 : i1 to i32
    %c0_i32_7 = arith.constant 0 : i32
    %7 = arith.cmpi ne, %6, %c0_i32_7 : i32
    scf.if %7 {
      %c0_77 = arith.constant 0 : index
      %c0_78 = arith.constant 0 : index
      %c0_79 = arith.constant 0 : index
      %c0_80 = arith.constant 0 : index
      %82 = vector.load %arg3[%c0_77, %c0_78, %c0_79, %c0_80] : memref<1x1x16x32xf32, #tpu.memory_space<vmem>>, vector<1x1x16x32xf32>
      %83 = vector.shape_cast %82 : vector<1x1x16x32xf32> to vector<1x16x32xf32>
      %c0_81 = arith.constant 0 : index
      %c1_82 = arith.constant 1 : index
      %c0_83 = arith.constant 0 : index
      %84 = vector.load %arg12[%c0_81, %c1_82, %c0_83] : memref<12x18x32xf32, #tpu.memory_space<vmem>>, vector<1x16x32xf32>
      tpu.vector_store %arg12[%c0_81, %c1_82, %c0_83], %83 {strides = array<i32>} : memref<12x18x32xf32, #tpu.memory_space<vmem>>, vector<1x16x32xf32>,
      %c0_84 = arith.constant 0 : index
      %c0_85 = arith.constant 0 : index
      %c0_86 = arith.constant 0 : index
      %c0_87 = arith.constant 0 : index
      %85 = vector.load %arg4[%c0_84, %c0_85, %c0_86, %c0_87] : memref<1x1x16x32xf32, #tpu.memory_space<vmem>>, vector<1x1x16x32xf32>
      %86 = vector.shape_cast %85 : vector<1x1x16x32xf32> to vector<1x16x32xf32>
      %c1_88 = arith.constant 1 : index
      %c1_89 = arith.constant 1 : index
      %c0_90 = arith.constant 0 : index
      %87 = vector.load %arg12[%c1_88, %c1_89, %c0_90] : memref<12x18x32xf32, #tpu.memory_space<vmem>>, vector<1x16x32xf32>
      tpu.vector_store %arg12[%c1_88, %c1_89, %c0_90], %86 {strides = array<i32>} : memref<12x18x32xf32, #tpu.memory_space<vmem>>, vector<1x16x32xf32>,
    } else {
    }
    %c1_i32 = arith.constant 1 : i32
    %8 = arith.cmpi slt, %arg1, %c1_i32 : i32
    %9 = arith.extui %8 : i1 to i32
    %c0_i32_8 = arith.constant 0 : i32
    %10 = arith.cmpi ne, %9, %c0_i32_8 : i32
    scf.if %10 {
      %c0_77 = arith.constant 0 : index
      %c0_78 = arith.constant 0 : index
      %c0_79 = arith.constant 0 : index
      %c0_80 = arith.constant 0 : index
      %82 = vector.load %arg5[%c0_77, %c0_78, %c0_79, %c0_80] : memref<1x1x16x32xf32, #tpu.memory_space<vmem>>, vector<1x1x16x32xf32>
      %83 = vector.shape_cast %82 : vector<1x1x16x32xf32> to vector<1x16x32xf32>
      %c10 = arith.constant 10 : index
      %c1_81 = arith.constant 1 : index
      %c0_82 = arith.constant 0 : index
      %84 = vector.load %arg12[%c10, %c1_81, %c0_82] : memref<12x18x32xf32, #tpu.memory_space<vmem>>, vector<1x16x32xf32>
      tpu.vector_store %arg12[%c10, %c1_81, %c0_82], %83 {strides = array<i32>} : memref<12x18x32xf32, #tpu.memory_space<vmem>>, vector<1x16x32xf32>,
      %c0_83 = arith.constant 0 : index
      %c0_84 = arith.constant 0 : index
      %c0_85 = arith.constant 0 : index
      %c0_86 = arith.constant 0 : index
      %85 = vector.load %arg6[%c0_83, %c0_84, %c0_85, %c0_86] : memref<1x1x16x32xf32, #tpu.memory_space<vmem>>, vector<1x1x16x32xf32>
      %86 = vector.shape_cast %85 : vector<1x1x16x32xf32> to vector<1x16x32xf32>
      %c11 = arith.constant 11 : index
      %c1_87 = arith.constant 1 : index
      %c0_88 = arith.constant 0 : index
      %87 = vector.load %arg12[%c11, %c1_87, %c0_88] : memref<12x18x32xf32, #tpu.memory_space<vmem>>, vector<1x16x32xf32>
      tpu.vector_store %arg12[%c11, %c1_87, %c0_88], %86 {strides = array<i32>} : memref<12x18x32xf32, #tpu.memory_space<vmem>>, vector<1x16x32xf32>,
    } else {
    }
    %c0_9 = arith.constant 0 : index
    %c0_10 = arith.constant 0 : index
    %c0_11 = arith.constant 0 : index
    %11 = vector.load %arg12[%c0_9, %c0_10, %c0_11] : memref<12x18x32xf32, #tpu.memory_space<vmem>>, vector<12x16x32xf32>
    %c0_12 = arith.constant 0 : index
    %c1_13 = arith.constant 1 : index
    %c0_14 = arith.constant 0 : index
    %12 = vector.load %arg12[%c0_12, %c1_13, %c0_14] : memref<12x18x32xf32, #tpu.memory_space<vmem>>, vector<12x16x32xf32>
    %c0_15 = arith.constant 0 : index
    %c2_16 = arith.constant 2 : index
    %c0_17 = arith.constant 0 : index
    %13 = vector.load %arg12[%c0_15, %c2_16, %c0_17] : memref<12x18x32xf32, #tpu.memory_space<vmem>>, vector<12x16x32xf32>
    %14 = tpu.concatenate %11, %12, %13 in 2 : vector<12x16x32xf32>, vector<12x16x32xf32>, vector<12x16x32xf32> -> vector<12x16x96xf32>
    %cst_18 = arith.constant 0.000000e+00 : f32
    %15 = vector.broadcast %cst_18 : f32 to vector<160x32xf32>
    %16 = vector.extract_strided_slice %14 {offsets = [0, 0, 0], sizes = [10, 16, 96], strides = [1, 1, 1]} : vector<12x16x96xf32> to vector<10x16x96xf32>
    %17 = vector.shape_cast %16 : vector<10x16x96xf32> to vector<160x96xf32>
    %c0_19 = arith.constant 0 : index
    %c0_20 = arith.constant 0 : index
    %c0_21 = arith.constant 0 : index
    %18 = vector.load %arg7[%c0_19, %c0_20, %c0_21] : memref<3x96x32xf32, #tpu.memory_space<vmem>>, vector<1x96x32xf32>
    %19 = vector.shape_cast %18 : vector<1x96x32xf32> to vector<96x32xf32>
    %cst_22 = arith.constant dense<0.000000e+00> : vector<160x32xf32>
    %20 = tpu.matmul %17, %19, %cst_22 {dimension_numbers = #tpu.dot_dimension_numbers<[1], [0], [0], [1], [0, 0, 1, 1], [], []>} : vector<160x96xf32>, vector<96x32xf32>, vector<160x32xf32> -> vector<160x32xf32>
    %21 = arith.addf %15, %20 : vector<160x32xf32>
    %22 = vector.extract_strided_slice %14 {offsets = [1, 0, 0], sizes = [10, 16, 96], strides = [1, 1, 1]} : vector<12x16x96xf32> to vector<10x16x96xf32>
    %23 = vector.shape_cast %22 : vector<10x16x96xf32> to vector<160x96xf32>
    %c1_23 = arith.constant 1 : index
    %c0_24 = arith.constant 0 : index
    %c0_25 = arith.constant 0 : index
    %24 = vector.load %arg7[%c1_23, %c0_24, %c0_25] : memref<3x96x32xf32, #tpu.memory_space<vmem>>, vector<1x96x32xf32>
    %25 = vector.shape_cast %24 : vector<1x96x32xf32> to vector<96x32xf32>
    %cst_26 = arith.constant dense<0.000000e+00> : vector<160x32xf32>
    %26 = tpu.matmul %23, %25, %cst_26 {dimension_numbers = #tpu.dot_dimension_numbers<[1], [0], [0], [1], [0, 0, 1, 1], [], []>} : vector<160x96xf32>, vector<96x32xf32>, vector<160x32xf32> -> vector<160x32xf32>
    %27 = arith.addf %21, %26 : vector<160x32xf32>
    %28 = vector.extract_strided_slice %14 {offsets = [2, 0, 0], sizes = [10, 16, 96], strides = [1, 1, 1]} : vector<12x16x96xf32> to vector<10x16x96xf32>
    %29 = vector.shape_cast %28 : vector<10x16x96xf32> to vector<160x96xf32>
    %c2_27 = arith.constant 2 : index
    %c0_28 = arith.constant 0 : index
    %c0_29 = arith.constant 0 : index
    %30 = vector.load %arg7[%c2_27, %c0_28, %c0_29] : memref<3x96x32xf32, #tpu.memory_space<vmem>>, vector<1x96x32xf32>
    %31 = vector.shape_cast %30 : vector<1x96x32xf32> to vector<96x32xf32>
    %cst_30 = arith.constant dense<0.000000e+00> : vector<160x32xf32>
    %32 = tpu.matmul %29, %31, %cst_30 {dimension_numbers = #tpu.dot_dimension_numbers<[1], [0], [0], [1], [0, 0, 1, 1], [], []>} : vector<160x96xf32>, vector<96x32xf32>, vector<160x32xf32> -> vector<160x32xf32>
    %33 = arith.addf %27, %32 : vector<160x32xf32>
    %c0_31 = arith.constant 0 : index
    %c0_32 = arith.constant 0 : index
    %34 = vector.load %arg8[%c0_31, %c0_32] : memref<1x32xf32, #tpu.memory_space<vmem>>, vector<1x32xf32>
    %35 = vector.broadcast %34 : vector<1x32xf32> to vector<160x32xf32>
    %36 = arith.addf %33, %35 : vector<160x32xf32>
    %37 = vector.shape_cast %36 : vector<160x32xf32> to vector<10x16x32xf32>
    %cst_33 = arith.constant 0.000000e+00 : f32
    %38 = vector.broadcast %cst_33 : f32 to vector<10x16x32xf32>
    %39 = arith.maximumf %37, %38 : vector<10x16x32xf32>
    %cst_34 = arith.constant 0.000000e+00 : f32
    %40 = vector.broadcast %cst_34 : f32 to vector<10x18x32xf32>
    %c0_35 = arith.constant 0 : index
    %c0_36 = arith.constant 0 : index
    %c0_37 = arith.constant 0 : index
    %41 = vector.load %arg13[%c0_35, %c0_36, %c0_37] : memref<10x18x32xf32, #tpu.memory_space<vmem>>, vector<10x18x32xf32>
    tpu.vector_store %arg13[%c0_35, %c0_36, %c0_37], %40 {strides = array<i32>} : memref<10x18x32xf32, #tpu.memory_space<vmem>>, vector<10x18x32xf32>,
    %c0_38 = arith.constant 0 : index
    %c1_39 = arith.constant 1 : index
    %c0_40 = arith.constant 0 : index
    %42 = vector.load %arg13[%c0_38, %c1_39, %c0_40] : memref<10x18x32xf32, #tpu.memory_space<vmem>>, vector<10x16x32xf32>
    tpu.vector_store %arg13[%c0_38, %c1_39, %c0_40], %39 {strides = array<i32>} : memref<10x18x32xf32, #tpu.memory_space<vmem>>, vector<10x16x32xf32>,
    %c0_i32_41 = arith.constant 0 : i32
    %43 = arith.cmpi eq, %arg1, %c0_i32_41 : i32
    %44 = arith.extui %43 : i1 to i32
    %c0_i32_42 = arith.constant 0 : i32
    %45 = arith.cmpi ne, %44, %c0_i32_42 : i32
    scf.if %45 {
      %cst_77 = arith.constant 0.000000e+00 : f32
      %82 = vector.broadcast %cst_77 : f32 to vector<1x18x32xf32>
      %c0_78 = arith.constant 0 : index
      %c0_79 = arith.constant 0 : index
      %c0_80 = arith.constant 0 : index
      %83 = vector.load %arg13[%c0_78, %c0_79, %c0_80] : memref<10x18x32xf32, #tpu.memory_space<vmem>>, vector<1x18x32xf32>
      tpu.vector_store %arg13[%c0_78, %c0_79, %c0_80], %82 {strides = array<i32>} : memref<10x18x32xf32, #tpu.memory_space<vmem>>, vector<1x18x32xf32>,
    } else {
    }
    %c1_i32_43 = arith.constant 1 : i32
    %46 = arith.cmpi eq, %arg1, %c1_i32_43 : i32
    %47 = arith.extui %46 : i1 to i32
    %c0_i32_44 = arith.constant 0 : i32
    %48 = arith.cmpi ne, %47, %c0_i32_44 : i32
    scf.if %48 {
      %cst_77 = arith.constant 0.000000e+00 : f32
      %82 = vector.broadcast %cst_77 : f32 to vector<1x18x32xf32>
      %c9 = arith.constant 9 : index
      %c0_78 = arith.constant 0 : index
      %c0_79 = arith.constant 0 : index
      %83 = vector.load %arg13[%c9, %c0_78, %c0_79] : memref<10x18x32xf32, #tpu.memory_space<vmem>>, vector<1x18x32xf32>
      tpu.vector_store %arg13[%c9, %c0_78, %c0_79], %82 {strides = array<i32>} : memref<10x18x32xf32, #tpu.memory_space<vmem>>, vector<1x18x32xf32>,
    } else {
    }
    %c0_45 = arith.constant 0 : index
    %c0_46 = arith.constant 0 : index
    %c0_47 = arith.constant 0 : index
    %49 = vector.load %arg13[%c0_45, %c0_46, %c0_47] : memref<10x18x32xf32, #tpu.memory_space<vmem>>, vector<10x16x32xf32>
    %c0_48 = arith.constant 0 : index
    %c1_49 = arith.constant 1 : index
    %c0_50 = arith.constant 0 : index
    %50 = vector.load %arg13[%c0_48, %c1_49, %c0_50] : memref<10x18x32xf32, #tpu.memory_space<vmem>>, vector<10x16x32xf32>
    %c0_51 = arith.constant 0 : index
    %c2_52 = arith.constant 2 : index
    %c0_53 = arith.constant 0 : index
    %51 = vector.load %arg13[%c0_51, %c2_52, %c0_53] : memref<10x18x32xf32, #tpu.memory_space<vmem>>, vector<10x16x32xf32>
    %52 = tpu.concatenate %49, %50, %51 in 2 : vector<10x16x32xf32>, vector<10x16x32xf32>, vector<10x16x32xf32> -> vector<10x16x96xf32>
    %cst_54 = arith.constant 0.000000e+00 : f32
    %53 = vector.broadcast %cst_54 : f32 to vector<128x32xf32>
    %54 = vector.extract_strided_slice %52 {offsets = [0, 0, 0], sizes = [8, 16, 96], strides = [1, 1, 1]} : vector<10x16x96xf32> to vector<8x16x96xf32>
    %55 = vector.shape_cast %54 : vector<8x16x96xf32> to vector<128x96xf32>
    %c0_55 = arith.constant 0 : index
    %c0_56 = arith.constant 0 : index
    %c0_57 = arith.constant 0 : index
    %56 = vector.load %arg9[%c0_55, %c0_56, %c0_57] : memref<3x96x32xf32, #tpu.memory_space<vmem>>, vector<1x96x32xf32>
    %57 = vector.shape_cast %56 : vector<1x96x32xf32> to vector<96x32xf32>
    %cst_58 = arith.constant dense<0.000000e+00> : vector<128x32xf32>
    %58 = tpu.matmul %55, %57, %cst_58 {dimension_numbers = #tpu.dot_dimension_numbers<[1], [0], [0], [1], [0, 0, 1, 1], [], []>} : vector<128x96xf32>, vector<96x32xf32>, vector<128x32xf32> -> vector<128x32xf32>
    %59 = arith.addf %53, %58 : vector<128x32xf32>
    %60 = vector.extract_strided_slice %52 {offsets = [1, 0, 0], sizes = [8, 16, 96], strides = [1, 1, 1]} : vector<10x16x96xf32> to vector<8x16x96xf32>
    %61 = vector.shape_cast %60 : vector<8x16x96xf32> to vector<128x96xf32>
    %c1_59 = arith.constant 1 : index
    %c0_60 = arith.constant 0 : index
    %c0_61 = arith.constant 0 : index
    %62 = vector.load %arg9[%c1_59, %c0_60, %c0_61] : memref<3x96x32xf32, #tpu.memory_space<vmem>>, vector<1x96x32xf32>
    %63 = vector.shape_cast %62 : vector<1x96x32xf32> to vector<96x32xf32>
    %cst_62 = arith.constant dense<0.000000e+00> : vector<128x32xf32>
    %64 = tpu.matmul %61, %63, %cst_62 {dimension_numbers = #tpu.dot_dimension_numbers<[1], [0], [0], [1], [0, 0, 1, 1], [], []>} : vector<128x96xf32>, vector<96x32xf32>, vector<128x32xf32> -> vector<128x32xf32>
    %65 = arith.addf %59, %64 : vector<128x32xf32>
    %66 = vector.extract_strided_slice %52 {offsets = [2, 0, 0], sizes = [8, 16, 96], strides = [1, 1, 1]} : vector<10x16x96xf32> to vector<8x16x96xf32>
    %67 = vector.shape_cast %66 : vector<8x16x96xf32> to vector<128x96xf32>
    %c2_63 = arith.constant 2 : index
    %c0_64 = arith.constant 0 : index
    %c0_65 = arith.constant 0 : index
    %68 = vector.load %arg9[%c2_63, %c0_64, %c0_65] : memref<3x96x32xf32, #tpu.memory_space<vmem>>, vector<1x96x32xf32>
    %69 = vector.shape_cast %68 : vector<1x96x32xf32> to vector<96x32xf32>
    %cst_66 = arith.constant dense<0.000000e+00> : vector<128x32xf32>
    %70 = tpu.matmul %67, %69, %cst_66 {dimension_numbers = #tpu.dot_dimension_numbers<[1], [0], [0], [1], [0, 0, 1, 1], [], []>} : vector<128x96xf32>, vector<96x32xf32>, vector<128x32xf32> -> vector<128x32xf32>
    %71 = arith.addf %65, %70 : vector<128x32xf32>
    %c0_67 = arith.constant 0 : index
    %c0_68 = arith.constant 0 : index
    %72 = vector.load %arg10[%c0_67, %c0_68] : memref<1x32xf32, #tpu.memory_space<vmem>>, vector<1x32xf32>
    %73 = vector.broadcast %72 : vector<1x32xf32> to vector<128x32xf32>
    %74 = arith.addf %71, %73 : vector<128x32xf32>
    %75 = vector.shape_cast %74 : vector<128x32xf32> to vector<8x16x32xf32>
    %c0_69 = arith.constant 0 : index
    %c0_70 = arith.constant 0 : index
    %c0_71 = arith.constant 0 : index
    %c0_72 = arith.constant 0 : index
    %76 = vector.load %arg2[%c0_69, %c0_70, %c0_71, %c0_72] : memref<1x8x16x32xf32, #tpu.memory_space<vmem>>, vector<1x8x16x32xf32>
    %77 = vector.shape_cast %76 : vector<1x8x16x32xf32> to vector<8x16x32xf32>
    %78 = arith.addf %77, %75 : vector<8x16x32xf32>
    %c0_73 = arith.constant 0 : index
    %c0_74 = arith.constant 0 : index
    %c0_75 = arith.constant 0 : index
    %c0_76 = arith.constant 0 : index
    %79 = vector.load %arg11[%c0_73, %c0_74, %c0_75, %c0_76] : memref<1x8x16x32xf32, #tpu.memory_space<vmem>>, vector<1x8x16x32xf32>
    %80 = vector.shape_cast %79 : vector<1x8x16x32xf32> to vector<8x16x32xf32>
    %81 = vector.shape_cast %78 : vector<8x16x32xf32> to vector<1x8x16x32xf32>
    tpu.vector_store %arg11[%c0_73, %c0_74, %c0_75, %c0_76], %81 {strides = array<i32>} : memref<1x8x16x32xf32, #tpu.memory_space<vmem>>, vector<1x8x16x32xf32>,
    return
  }
  func.func @transform_0(%arg0: i32, %arg1: i32) -> (i32, i32, i32, i32) {
    %c0_i32 = arith.constant 0 : i32
    %c0_i32_0 = arith.constant 0 : i32
    %c0_i32_1 = arith.constant 0 : i32
    return %arg0, %arg1, %c0_i32, %c0_i32_0 : i32, i32, i32, i32
  }
  func.func @transform_1(%arg0: i32, %arg1: i32) -> (i32, i32, i32, i32) {
    %c8_i32 = arith.constant 8 : i32
    %0 = arith.muli %arg1, %c8_i32 : i32
    %c2_i32 = arith.constant 2 : i32
    %1 = arith.subi %0, %c2_i32 : i32
    %c0_i32 = arith.constant 0 : i32
    %2 = arith.maxsi %1, %c0_i32 : i32
    %c0_i32_0 = arith.constant 0 : i32
    %c0_i32_1 = arith.constant 0 : i32
    %c0_i32_2 = arith.constant 0 : i32
    return %arg0, %2, %c0_i32_0, %c0_i32_1 : i32, i32, i32, i32
  }
  func.func @transform_2(%arg0: i32, %arg1: i32) -> (i32, i32, i32, i32) {
    %c8_i32 = arith.constant 8 : i32
    %0 = arith.muli %arg1, %c8_i32 : i32
    %c1_i32 = arith.constant 1 : i32
    %1 = arith.subi %0, %c1_i32 : i32
    %c0_i32 = arith.constant 0 : i32
    %2 = arith.maxsi %1, %c0_i32 : i32
    %c0_i32_0 = arith.constant 0 : i32
    %c0_i32_1 = arith.constant 0 : i32
    %c0_i32_2 = arith.constant 0 : i32
    return %arg0, %2, %c0_i32_0, %c0_i32_1 : i32, i32, i32, i32
  }
  func.func @transform_3(%arg0: i32, %arg1: i32) -> (i32, i32, i32, i32) {
    %c1_i32 = arith.constant 1 : i32
    %0 = arith.addi %arg1, %c1_i32 : i32
    %c8_i32 = arith.constant 8 : i32
    %1 = arith.muli %0, %c8_i32 : i32
    %c15_i32 = arith.constant 15 : i32
    %2 = arith.minsi %1, %c15_i32 : i32
    %c0_i32 = arith.constant 0 : i32
    %c0_i32_0 = arith.constant 0 : i32
    %c0_i32_1 = arith.constant 0 : i32
    return %arg0, %2, %c0_i32, %c0_i32_0 : i32, i32, i32, i32
  }
  func.func @transform_4(%arg0: i32, %arg1: i32) -> (i32, i32, i32, i32) {
    %c1_i32 = arith.constant 1 : i32
    %0 = arith.addi %arg1, %c1_i32 : i32
    %c8_i32 = arith.constant 8 : i32
    %1 = arith.muli %0, %c8_i32 : i32
    %c1_i32_0 = arith.constant 1 : i32
    %2 = arith.addi %1, %c1_i32_0 : i32
    %c15_i32 = arith.constant 15 : i32
    %3 = arith.minsi %2, %c15_i32 : i32
    %c0_i32 = arith.constant 0 : i32
    %c0_i32_1 = arith.constant 0 : i32
    %c0_i32_2 = arith.constant 0 : i32
    return %arg0, %3, %c0_i32, %c0_i32_1 : i32, i32, i32, i32
  }
  func.func @transform_5(%arg0: i32, %arg1: i32) -> (i32, i32, i32) {
    %c0_i32 = arith.constant 0 : i32
    %c0_i32_0 = arith.constant 0 : i32
    %c0_i32_1 = arith.constant 0 : i32
    %c0_i32_2 = arith.constant 0 : i32
    return %c0_i32, %c0_i32_0, %c0_i32_1 : i32, i32, i32
  }
  func.func @transform_6(%arg0: i32, %arg1: i32) -> (i32, i32) {
    %c0_i32 = arith.constant 0 : i32
    %c0_i32_0 = arith.constant 0 : i32
    %c0_i32_1 = arith.constant 0 : i32
    return %c0_i32, %c0_i32_0 : i32, i32
  }
  func.func @transform_7(%arg0: i32, %arg1: i32) -> (i32, i32, i32) {
    %c0_i32 = arith.constant 0 : i32
    %c0_i32_0 = arith.constant 0 : i32
    %c0_i32_1 = arith.constant 0 : i32
    %c0_i32_2 = arith.constant 0 : i32
    return %c0_i32, %c0_i32_0, %c0_i32_1 : i32, i32, i32
  }
  func.func @transform_8(%arg0: i32, %arg1: i32) -> (i32, i32) {
    %c0_i32 = arith.constant 0 : i32
    %c0_i32_0 = arith.constant 0 : i32
    %c0_i32_1 = arith.constant 0 : i32
    return %c0_i32, %c0_i32_0 : i32, i32
  }
  func.func @transform_9(%arg0: i32, %arg1: i32) -> (i32, i32, i32, i32) {
    %c0_i32 = arith.constant 0 : i32
    %c0_i32_0 = arith.constant 0 : i32
    %c0_i32_1 = arith.constant 0 : i32
    return %arg0, %arg1, %c0_i32, %c0_i32_0 : i32, i32, i32, i32
  }
}

</mosaic_0001>

<llo_original>
// kernel: residual_blocks_with_input_conv.3
$region0: #{residual_blocks_with_input_conv.3}
  #allocation0 [shape = 'u32[]', space=smem, size = 0x4, offset = 0x4, fixed_abs, tag = 'smem constant byte address 0x4 - core index']
  #allocation1 [shape = 'u32[72,128]{1,0:T(1,128)}', space=vmem, size = 0x9000, scoped, tag = 'internal scratch']
  #allocation2 [shape = 'f32[10,18,4]{2,1,0:T(8,128)}', space=vmem, size = 0x1e000, scoped, tag = 'scratch operand']
  %s0 = inlined_call_operand.vmem [shape: f32[2,16,16,4], index: 0, kind: input, shape index: {}, may-alias: {0,1,2}]
  %s1 = inlined_call_operand.vmem [shape: f32[2,16,16,4], index: 1, kind: input, shape index: {}, may-alias: {0,1,2}]
  %s2 = inlined_call_operand.vmem [shape: f32[2,16,16,4], index: 2, kind: input, shape index: {}, may-alias: {0,1,2}]
  %s3 = inlined_call_operand.vmem [shape: f32[3,12,32], index: 3, kind: input, shape index: {}]
  %s4 = inlined_call_operand.vmem [shape: f32[1,32], index: 4, kind: input, shape index: {}]
  %s5 = inlined_call_operand.vmem [shape: f32[2,16,16,32], index: 5, kind: output, shape index: {}]
  %s6 = sld [smem:[#allocation0]]
  $region61: #{residual_blocks_with_input_conv.3} parent=0
    _
  %s8 = ssub.s32 1, %s6
  %s9 = scalar_select 0, %s8, %s6
  loop: start=0, step=1, limit=6
  $region2: #{residual_blocks_with_input_conv.3} parent=0 // loop_pre_header
    _
  $region3: #{residual_blocks_with_input_conv.3} parent=0 // loop_header
    %s11 = sphi 0, %s15
    %p12 = scmp.ge.s32.totalorder %s11, 6
    %s18 = sphi 0, %s30
    %s19 = sphi 0, %s26
    %s20 = sphi 0, %s18
    %s21 = sphi 0, %s19
    %s22 = sphi 0, %s20
    %s23 = sphi 0, %s21
    %s35 = sphi 0, %s37
    %s38 = sphi 0, %s35
    %s39 = sphi 0, %s38
    %s55 = sphi 0, %s39
    %s71 = sphi 0, %s73
    %s74 = sphi 0, %s71
    %s75 = sphi 0, %s74
    %s91 = sphi 0, %s75
    %s107 = sphi 0, %s109
    %s110 = sphi 0, %s107
    %s111 = sphi 0, %s110
    %s127 = sphi 0, %s111
    %s131 = sphi 0, %s131
    %s133 = sphi 0, %s131
    %s134 = sphi 0, %s133
    %s148 = sphi 0, %s134
    %s152 = sphi 0, %s152
    %s154 = sphi 0, %s152
    %s155 = sphi 0, %s154
    %s169 = sphi 0, %s155
    %s177 = sphi 0, %s179
    %s180 = sphi 0, %s177
    %s181 = sphi 0, %s180
    %s197 = sphi 0, %s181
  $region4: #{residual_blocks_with_input_conv.3} parent=0 // loop_header_branch
    %14 = sbr.rel (%p12) target = $region8
  $region5: #{residual_blocks_with_input_conv.3} parent=0 // loop_body
    %s16 = ssub.s32 %s11, 1
    %s17 = ssub.s32 %s11, 2
    %s24 = sadd.s32 1, %s19
    %p25 = scmp.ge.s32.totalorder %s24, 2
    %s26 = scalar_select %p25, 0, %s24
    %s27 = sadd.s32 1, %s18
    %s28 = scalar_select %p25, %s27, %s18
    %p29 = scmp.ge.s32.totalorder %s28, 2
    %s30 = scalar_select %p29, 0, %s28
    %s31 = ssub.s32 %s18, %s30
    %s32 = ssub.s32 %s19, %s26
    %s33 = sor.u32 %s31, %s32
    %p34 = scmp.eq.s32.totalorder %s33, 0
    %s36 = sadd.s32 %s35, 1
    %s37 = scalar_select %p34, %s35, %s36
    %p40 = pneg %p34
    %p41 = scmp.eq.s32.totalorder %s11, 3
    %p42 = por %p40, %p41
    %p43 = scmp.ne.s32.totalorder %s35, %s38
    %p44 = scmp.eq.s32.totalorder %s11, 0
    %p45 = por %p43, %p44
    %p46 = scmp.ne.s32.totalorder %s35, %s38
    %p47 = scmp.eq.s32.totalorder %s16, 3
    %p48 = por %p46, %p47
    %p49 = scmp.ne.s32.totalorder %s38, %s39
    %p50 = scmp.eq.s32.totalorder %s16, 0
    %p51 = por %p49, %p50
    %p52 = scmp.ne.s32.totalorder %s38, %s39
    %p53 = scmp.eq.s32.totalorder %s17, 3
    %p54 = por %p52, %p53
    %p56 = scmp.ne.s32.totalorder %s39, %s55
    %p57 = scmp.eq.s32.totalorder %s17, 0
    %p58 = por %p56, %p57
    %s59 = smul.u32 %s19, 8
    %s60 = ssub.s32 %s59, 1
    %p61 = scmp.gt.s32.totalorder %s60, 0
    %s62 = scalar_select %p61, %s60, 0
    %s63 = smul.u32 %s26, 8
    %s64 = ssub.s32 %s63, 1
    %p65 = scmp.gt.s32.totalorder %s64, 0
    %s66 = scalar_select %p65, %s64, 0
    %s67 = ssub.s32 %s18, %s30
    %s68 = ssub.s32 %s62, %s66
    %s69 = sor.u32 %s67, %s68
    %p70 = scmp.eq.s32.totalorder %s69, 0
    %s72 = sadd.s32 %s71, 1
    %s73 = scalar_select %p70, %s71, %s72
    %p76 = pneg %p70
    %p77 = scmp.eq.s32.totalorder %s11, 3
    %p78 = por %p76, %p77
    %p79 = scmp.ne.s32.totalorder %s71, %s74
    %p80 = scmp.eq.s32.totalorder %s11, 0
    %p81 = por %p79, %p80
    %p82 = scmp.ne.s32.totalorder %s71, %s74
    %p83 = scmp.eq.s32.totalorder %s16, 3
    %p84 = por %p82, %p83
    %p85 = scmp.ne.s32.totalorder %s74, %s75
    %p86 = scmp.eq.s32.totalorder %s16, 0
    %p87 = por %p85, %p86
    %p88 = scmp.ne.s32.totalorder %s74, %s75
    %p89 = scmp.eq.s32.totalorder %s17, 3
    %p90 = por %p88, %p89
    %p92 = scmp.ne.s32.totalorder %s75, %s91
    %p93 = scmp.eq.s32.totalorder %s17, 0
    %p94 = por %p92, %p93
    %s95 = sadd.s32 %s19, 1
    %s96 = smul.u32 %s95, 8
    %p97 = scmp.lt.s32.totalorder %s96, 15
    %s98 = scalar_select %p97, %s96, 15
    %s99 = sadd.s32 %s26, 1
    %s100 = smul.u32 %s99, 8
    %p101 = scmp.lt.s32.totalorder %s100, 15
    %s102 = scalar_select %p101, %s100, 15
    %s103 = ssub.s32 %s18, %s30
    %s104 = ssub.s32 %s98, %s102
    %s105 = sor.u32 %s103, %s104
    %p106 = scmp.eq.s32.totalorder %s105, 0
    %s108 = sadd.s32 %s107, 1
    %s109 = scalar_select %p106, %s107, %s108
    %p112 = pneg %p106
    %p113 = scmp.eq.s32.totalorder %s11, 3
    %p114 = por %p112, %p113
    %p115 = scmp.ne.s32.totalorder %s107, %s110
    %p116 = scmp.eq.s32.totalorder %s11, 0
    %p117 = por %p115, %p116
    %p118 = scmp.ne.s32.totalorder %s107, %s110
    %p119 = scmp.eq.s32.totalorder %s16, 3
    %p120 = por %p118, %p119
    %p121 = scmp.ne.s32.totalorder %s110, %s111
    %p122 = scmp.eq.s32.totalorder %s16, 0
    %p123 = por %p121, %p122
    %p124 = scmp.ne.s32.totalorder %s110, %s111
    %p125 = scmp.eq.s32.totalorder %s17, 3
    %p126 = por %p124, %p125
    %p128 = scmp.ne.s32.totalorder %s111, %s127
    %p129 = scmp.eq.s32.totalorder %s17, 0
    %p130 = por %p128, %p129
    %s132 = sadd.s32 %s131, 1
    %p135 = scmp.eq.s32.totalorder %s11, 3
    %p136 = scmp.ne.s32.totalorder %s131, %s133
    %p137 = scmp.eq.s32.totalorder %s11, 0
    %p138 = por %p136, %p137
    %p139 = scmp.ne.s32.totalorder %s131, %s133
    %p140 = scmp.eq.s32.totalorder %s16, 3
    %p141 = por %p139, %p140
    %p142 = scmp.ne.s32.totalorder %s133, %s134
    %p143 = scmp.eq.s32.totalorder %s16, 0
    %p144 = por %p142, %p143
    %p145 = scmp.ne.s32.totalorder %s133, %s134
    %p146 = scmp.eq.s32.totalorder %s17, 3
    %p147 = por %p145, %p146
    %p149 = scmp.ne.s32.totalorder %s134, %s148
    %p150 = scmp.eq.s32.totalorder %s17, 0
    %p151 = por %p149, %p150
    %s153 = sadd.s32 %s152, 1
    %p156 = scmp.eq.s32.totalorder %s11, 3
    %p157 = scmp.ne.s32.totalorder %s152, %s154
    %p158 = scmp.eq.s32.totalorder %s11, 0
    %p159 = por %p157, %p158
    %p160 = scmp.ne.s32.totalorder %s152, %s154
    %p161 = scmp.eq.s32.totalorder %s16, 3
    %p162 = por %p160, %p161
    %p163 = scmp.ne.s32.totalorder %s154, %s155
    %p164 = scmp.eq.s32.totalorder %s16, 0
    %p165 = por %p163, %p164
    %p166 = scmp.ne.s32.totalorder %s154, %s155
    %p167 = scmp.eq.s32.totalorder %s17, 3
    %p168 = por %p166, %p167
    %p170 = scmp.ne.s32.totalorder %s155, %s169
    %p171 = scmp.eq.s32.totalorder %s17, 0
    %p172 = por %p170, %p171
    %s173 = ssub.s32 %s18, %s30
    %s174 = ssub.s32 %s19, %s26
    %s175 = sor.u32 %s173, %s174
    %p176 = scmp.eq.s32.totalorder %s175, 0
    %s178 = sadd.s32 %s177, 1
    %s179 = scalar_select %p176, %s177, %s178
    %p182 = pneg %p176
    %p183 = scmp.eq.s32.totalorder %s11, 3
    %p184 = por %p182, %p183
    %p185 = scmp.ne.s32.totalorder %s177, %s180
    %p186 = scmp.eq.s32.totalorder %s11, 0
    %p187 = por %p185, %p186
    %p188 = scmp.ne.s32.totalorder %s177, %s180
    %p189 = scmp.eq.s32.totalorder %s16, 3
    %p190 = por %p188, %p189
    %p191 = scmp.ne.s32.totalorder %s180, %s181
    %p192 = scmp.eq.s32.totalorder %s16, 0
    %p193 = por %p191, %p192
    %p194 = scmp.ne.s32.totalorder %s180, %s181
    %p195 = scmp.eq.s32.totalorder %s17, 3
    %p196 = por %p194, %p195
    %p198 = scmp.ne.s32.totalorder %s181, %s197
    %p199 = scmp.eq.s32.totalorder %s17, 0
    %p200 = por %p198, %p199
    %p201 = scmp.le.s32.totalorder 1, %s11
    %p202 = scmp.lt.s32.totalorder %s11, 5
    %p203 = pnand %p201, %p202
    %p204 = pneg %p203
    // Predicated region
    $region9: #{residual_blocks_with_input_conv.3} parent=5 // pred_check
      _
    $region10: #{residual_blocks_with_input_conv.3} parent=5 // pred_check_branch
      %206 = sbr.rel (%p203) target = $region12
    $region11: #{residual_blocks_with_input_conv.3} parent=5 // pred_region
      %s207 = ssub.s32 %s11, 1
      // Predicated region
      $region13: #{residual_blocks_with_input_conv.3} parent=11 // pred_check
        %p208 = pneg %p144
      $region14: #{residual_blocks_with_input_conv.3} parent=11 // pred_check_branch
        %210 = sbr.rel (%p208) target = $region16
      $region15: #{residual_blocks_with_input_conv.3} parent=11 // pred_region
        _
      $region16: #{residual_blocks_with_input_conv.3} parent=11 // pred_fallthru
        _
      // Predicated region
      $region17: #{residual_blocks_with_input_conv.3} parent=11 // pred_check
        %p211 = pneg %p165
      $region18: #{residual_blocks_with_input_conv.3} parent=11 // pred_check_branch
        %213 = sbr.rel (%p211) target = $region20
      $region19: #{residual_blocks_with_input_conv.3} parent=11 // pred_region
        _
      $region20: #{residual_blocks_with_input_conv.3} parent=11 // pred_fallthru
        _
    $region12: #{residual_blocks_with_input_conv.3} parent=5 // pred_fallthru
      _
    %p214 = scmp.lt.s32.totalorder %s11, 4
    // Predicated region
    $region21: #{residual_blocks_with_input_conv.3} parent=5 // pred_check
      %p215 = pneg %p214
    $region22: #{residual_blocks_with_input_conv.3} parent=5 // pred_check_branch
      %217 = sbr.rel (%p215) target = $region24
    $region23: #{residual_blocks_with_input_conv.3} parent=5 // pred_region
      // Predicated region
      $region25: #{residual_blocks_with_input_conv.3} parent=23 // pred_check
        %p218 = pneg %p45
      $region26: #{residual_blocks_with_input_conv.3} parent=23 // pred_check_branch
        %220 = sbr.rel (%p218) target = $region28
      $region27: #{residual_blocks_with_input_conv.3} parent=23 // pred_region
        %s221 = smul.u32 8, %s19
        %p222 = scmp.lt.s32.totalorder %s18, 1
        %s223 = scalar_select %p222, %s18, 1
        %p224 = scmp.lt.s32.totalorder %s221, 15
        %s225 = scalar_select %p224, %s221, 15
        %s226 = smul.addr %s225, 2
        %s227 = smul.addr %s223, 32
        %s228 = sadd.s32 %s226, %s227
        %s229 = smul.addr %s228, 8
        %s230 = scalar_lea.vmem %s0, %s229
        %s231 = smul.u32 8, %s19
      $region28: #{residual_blocks_with_input_conv.3} parent=23 // pred_fallthru
        _
      // Predicated region
      $region29: #{residual_blocks_with_input_conv.3} parent=23 // pred_check
        %p232 = pneg %p81
      $region30: #{residual_blocks_with_input_conv.3} parent=23 // pred_check_branch
        %234 = sbr.rel (%p232) target = $region32
      $region31: #{residual_blocks_with_input_conv.3} parent=23 // pred_region
        %s235 = smul.u32 %s19, 8
        %s236 = ssub.s32 %s235, 1
        %p237 = scmp.gt.s32.totalorder %s236, 0
        %s238 = scalar_select %p237, %s236, 0
        %p239 = scmp.lt.s32.totalorder %s18, 1
        %s240 = scalar_select %p239, %s18, 1
        %p241 = scmp.lt.s32.totalorder %s238, 15
        %s242 = scalar_select %p241, %s238, 15
        %s243 = smul.addr %s242, 2
        %s244 = smul.addr %s240, 32
        %s245 = sadd.s32 %s243, %s244
        %s246 = smul.addr %s245, 8
        %s247 = scalar_lea.vmem %s1, %s246
        %s248 = smul.u32 %s19, 8
        %s249 = ssub.s32 %s248, 1
        %p250 = scmp.gt.s32.totalorder %s249, 0
        %s251 = scalar_select %p250, %s249, 0
      $region32: #{residual_blocks_with_input_conv.3} parent=23 // pred_fallthru
        _
      // Predicated region
      $region33: #{residual_blocks_with_input_conv.3} parent=23 // pred_check
        %p252 = pneg %p117
      $region34: #{residual_blocks_with_input_conv.3} parent=23 // pred_check_branch
        %254 = sbr.rel (%p252) target = $region36
      $region35: #{residual_blocks_with_input_conv.3} parent=23 // pred_region
        %s255 = sadd.s32 %s19, 1
        %s256 = smul.u32 %s255, 8
        %p257 = scmp.lt.s32.totalorder %s256, 15
        %s258 = scalar_select %p257, %s256, 15
        %p259 = scmp.lt.s32.totalorder %s18, 1
        %s260 = scalar_select %p259, %s18, 1
        %p261 = scmp.lt.s32.totalorder %s258, 15
        %s262 = scalar_select %p261, %s258, 15
        %s263 = smul.addr %s262, 2
        %s264 = smul.addr %s260, 32
        %s265 = sadd.s32 %s263, %s264
        %s266 = smul.addr %s265, 8
        %s267 = scalar_lea.vmem %s2, %s266
        %s268 = sadd.s32 %s19, 1
        %s269 = smul.u32 %s268, 8
        %p270 = scmp.lt.s32.totalorder %s269, 15
        %s271 = scalar_select %p270, %s269, 15
      $region36: #{residual_blocks_with_input_conv.3} parent=23 // pred_fallthru
        _
    $region24: #{residual_blocks_with_input_conv.3} parent=5 // pred_fallthru
      _
    %p272 = scmp.le.s32.totalorder 1, %s11
    %p273 = scmp.lt.s32.totalorder %s11, 5
    %p274 = pnand %p272, %p273
    %p275 = pneg %p274
    // Predicated region
    $region37: #{residual_blocks_with_input_conv.3} parent=5 // pred_check
      _
    $region38: #{residual_blocks_with_input_conv.3} parent=5 // pred_check_branch
      %277 = sbr.rel (%p274) target = $region40
    $region39: #{residual_blocks_with_input_conv.3} parent=5 // pred_region
      %s278 = ssub.s32 %s11, 1
      %s279 = smul.u32 8, %s21
      %p280 = scmp.lt.s32.totalorder %s20, 1
      %s281 = scalar_select %p280, %s20, 1
      %p282 = scmp.lt.s32.totalorder %s279, 15
      %s283 = scalar_select %p282, %s279, 15
      %s284 = smul.addr %s283, 2
      %s285 = smul.addr %s281, 32
      %s286 = sadd.s32 %s284, %s285
      %s287 = smul.addr %s286, 8
      %s288 = scalar_lea.vmem %s0, %s287
      %p289 = pneg %p51
      %p290 = pneg %p48
      %s291 = smul.u32 %s21, 8
      %s292 = ssub.s32 %s291, 1
      %p293 = scmp.gt.s32.totalorder %s292, 0
      %s294 = scalar_select %p293, %s292, 0
      %p295 = scmp.lt.s32.totalorder %s20, 1
      %s296 = scalar_select %p295, %s20, 1
      %p297 = scmp.lt.s32.totalorder %s294, 15
      %s298 = scalar_select %p297, %s294, 15
      %s299 = smul.addr %s298, 2
      %s300 = smul.addr %s296, 32
      %s301 = sadd.s32 %s299, %s300
      %s302 = smul.addr %s301, 8
      %s303 = scalar_lea.vmem %s1, %s302
      %p304 = pneg %p87
      %p305 = pneg %p84
      %s306 = sadd.s32 %s21, 1
      %s307 = smul.u32 %s306, 8
      %p308 = scmp.lt.s32.totalorder %s307, 15
      %s309 = scalar_select %p308, %s307, 15
      %p310 = scmp.lt.s32.totalorder %s20, 1
      %s311 = scalar_select %p310, %s20, 1
      %p312 = scmp.lt.s32.totalorder %s309, 15
      %s313 = scalar_select %p312, %s309, 15
      %s314 = smul.addr %s313, 2
      %s315 = smul.addr %s311, 32
      %s316 = sadd.s32 %s314, %s315
      %s317 = smul.addr %s316, 8
      %s318 = scalar_lea.vmem %s2, %s317
      %p319 = pneg %p123
      %p320 = pneg %p120
      %p321 = pneg %p144
      %p322 = pneg %p141
      %p323 = pneg %p165
      %p324 = pneg %p162
      %p325 = pneg %p193
      %p326 = pneg %p190
      %s327 = smul.u32 8, %s21
      %p328 = scmp.lt.s32.totalorder %s20, 1
      %s329 = scalar_select %p328, %s20, 1
      %p330 = scmp.lt.s32.totalorder %s327, 15
      %s331 = scalar_select %p330, %s327, 15
      %s332 = smul.addr %s331, 2
      %s333 = smul.addr %s329, 32
      %s334 = sadd.s32 %s332, %s333
      %s335 = smul.addr %s334, 8
      %s336 = scalar_lea.vmem %s5, %s335
      %s337 = smul.u32 8, %s21
      %p338 = scmp.lt.s32.totalorder %s20, 1
      %s339 = scalar_select %p338, %s20, 1
      %p340 = scmp.lt.s32.totalorder %s337, 15
      %s341 = scalar_select %p340, %s337, 15
      %s342 = smul.addr %s341, 2
      %s343 = smul.addr %s339, 32
      %s344 = sadd.s32 %s342, %s343
      %s345 = smul.addr %s344, 8
      %s346 = scalar_lea.vmem %s0, %s345
      %s347 = smul.u32 8, %s21
      %s348 = smul.u32 %s21, 8
      %s349 = ssub.s32 %s348, 1
      %p350 = scmp.gt.s32.totalorder %s349, 0
      %s351 = scalar_select %p350, %s349, 0
      %p352 = scmp.lt.s32.totalorder %s20, 1
      %s353 = scalar_select %p352, %s20, 1
      %p354 = scmp.lt.s32.totalorder %s351, 15
      %s355 = scalar_select %p354, %s351, 15
      %s356 = smul.addr %s355, 2
      %s357 = smul.addr %s353, 32
      %s358 = sadd.s32 %s356, %s357
      %s359 = smul.addr %s358, 8
      %s360 = scalar_lea.vmem %s1, %s359
      %s361 = smul.u32 %s21, 8
      %s362 = ssub.s32 %s361, 1
      %p363 = scmp.gt.s32.totalorder %s362, 0
      %s364 = scalar_select %p363, %s362, 0
      %s365 = sadd.s32 %s21, 1
      %s366 = smul.u32 %s365, 8
      %p367 = scmp.lt.s32.totalorder %s366, 15
      %s368 = scalar_select %p367, %s366, 15
      %p369 = scmp.lt.s32.totalorder %s20, 1
      %s370 = scalar_select %p369, %s20, 1
      %p371 = scmp.lt.s32.totalorder %s368, 15
      %s372 = scalar_select %p371, %s368, 15
      %s373 = smul.addr %s372, 2
      %s374 = smul.addr %s370, 32
      %s375 = sadd.s32 %s373, %s374
      %s376 = smul.addr %s375, 8
      %s377 = scalar_lea.vmem %s2, %s376
      %s378 = sadd.s32 %s21, 1
      %s379 = smul.u32 %s378, 8
      %p380 = scmp.lt.s32.totalorder %s379, 15
      %s381 = scalar_select %p380, %s379, 15
      %s382 = smul.u32 8, %s21
      %p383 = scmp.lt.s32.totalorder %s20, 1
      %s384 = scalar_select %p383, %s20, 1
      %p385 = scmp.lt.s32.totalorder %s382, 15
      %s386 = scalar_select %p385, %s382, 15
      %s387 = smul.addr %s386, 2
      %s388 = smul.addr %s384, 32
      %s389 = sadd.s32 %s387, %s388
      %s390 = smul.addr %s389, 8
      %s391 = scalar_lea.vmem %s5, %s390
      %s392 = smul.u32 8, %s21
      %vm393 = vcmask 31744
      %394 = vst.msk [vmem:[#allocation2] sm:$0xff] %vm393, 0.0
      %395 = vst.msk [vmem:[#allocation2 + $0x8] sm:$0xff] %vm393, 0.0
      %vm396 = vcmask 25600
      %397 = vst.msk [vmem:[#allocation2 + $0x10] sm:$0x3] %vm396, 0.0
      %398 = vst.msk [vmem:[#allocation2 + $0x18] sm:$0xff] %vm393, 0.0
      %399 = vst.msk [vmem:[#allocation2 + $0x20] sm:$0xff] %vm393, 0.0
      %400 = vst.msk [vmem:[#allocation2 + $0x28] sm:$0x3] %vm396, 0.0
      %401 = vst.msk [vmem:[#allocation2 + $0x30] sm:$0xff] %vm393, 0.0
      %402 = vst.msk [vmem:[#allocation2 + $0x38] sm:$0xff] %vm393, 0.0
      %403 = vst.msk [vmem:[#allocation2 + $0x40] sm:$0x3] %vm396, 0.0
      %404 = vst.msk [vmem:[#allocation2 + $0x48] sm:$0xff] %vm393, 0.0
      %405 = vst.msk [vmem:[#allocation2 + $0x50] sm:$0xff] %vm393, 0.0
      %406 = vst.msk [vmem:[#allocation2 + $0x58] sm:$0x3] %vm396, 0.0
      %407 = vst.msk [vmem:[#allocation2 + $0x60] sm:$0xff] %vm393, 0.0
      %408 = vst.msk [vmem:[#allocation2 + $0x68] sm:$0xff] %vm393, 0.0
      %409 = vst.msk [vmem:[#allocation2 + $0x70] sm:$0x3] %vm396, 0.0
      %410 = vst.msk [vmem:[#allocation2 + $0x78] sm:$0xff] %vm393, 0.0
      %411 = vst.msk [vmem:[#allocation2 + $0x80] sm:$0xff] %vm393, 0.0
      %412 = vst.msk [vmem:[#allocation2 + $0x88] sm:$0x3] %vm396, 0.0
      %413 = vst.msk [vmem:[#allocation2 + $0x90] sm:$0xff] %vm393, 0.0
      %414 = vst.msk [vmem:[#allocation2 + $0x98] sm:$0xff] %vm393, 0.0
      %415 = vst.msk [vmem:[#allocation2 + $0xa0] sm:$0x3] %vm396, 0.0
      %416 = vst.msk [vmem:[#allocation2 + $0xa8] sm:$0xff] %vm393, 0.0
      %417 = vst.msk [vmem:[#allocation2 + $0xb0] sm:$0xff] %vm393, 0.0
      %418 = vst.msk [vmem:[#allocation2 + $0xb8] sm:$0x3] %vm396, 0.0
      %419 = vst.msk [vmem:[#allocation2 + $0xc0] sm:$0xff] %vm393, 0.0
      %420 = vst.msk [vmem:[#allocation2 + $0xc8] sm:$0xff] %vm393, 0.0
      %421 = vst.msk [vmem:[#allocation2 + $0xd0] sm:$0x3] %vm396, 0.0
      %422 = vst.msk [vmem:[#allocation2 + $0xd8] sm:$0xff] %vm393, 0.0
      %423 = vst.msk [vmem:[#allocation2 + $0xe0] sm:$0xff] %vm393, 0.0
      %424 = vst.msk [vmem:[#allocation2 + $0xe8] sm:$0x3] %vm396, 0.0
      %v425 = vld [vmem:[%s346] sm:$0xff]
      %v426 = vld [vmem:[%s346 + $0x8] sm:$0xff]
      %v427 = vld [vmem:[%s346 + $0x10] sm:$0xff]
      %v428 = vld [vmem:[%s346 + $0x18] sm:$0xff]
      %v429 = vld [vmem:[%s346 + $0x20] sm:$0xff]
      %v430 = vld [vmem:[%s346 + $0x28] sm:$0xff]
      %v431 = vld [vmem:[%s346 + $0x30] sm:$0xff]
      %v432 = vld [vmem:[%s346 + $0x38] sm:$0xff]
      %v433 = vld [vmem:[%s346 + $0x40] sm:$0xff]
      %v434 = vld [vmem:[%s346 + $0x48] sm:$0xff]
      %v435 = vld [vmem:[%s346 + $0x50] sm:$0xff]
      %v436 = vld [vmem:[%s346 + $0x58] sm:$0xff]
      %v437 = vld [vmem:[%s346 + $0x60] sm:$0xff]
      %v438 = vld [vmem:[%s346 + $0x68] sm:$0xff]
      %v439 = vld [vmem:[%s346 + $0x70] sm:$0xff]
      %v440 = vld [vmem:[%s346 + $0x78] sm:$0xff]
      %s441 = scalar_lea.vmem [#allocation2], 24
      %442 = vst.msk [vmem:[%s441 + $0x1] sm:$0xff] %vm393, %v425
      %443 = vst.msk [vmem:[%s441 + $0x9] sm:$0xff] %vm393, %v426
      %444 = vst.msk [vmem:[%s441 + $0x19] sm:$0xff] %vm393, %v427
      %445 = vst.msk [vmem:[%s441 + $0x21] sm:$0xff] %vm393, %v428
      %446 = vst.msk [vmem:[%s441 + $0x31] sm:$0xff] %vm393, %v429
      %447 = vst.msk [vmem:[%s441 + $0x39] sm:$0xff] %vm393, %v430
      %448 = vst.msk [vmem:[%s441 + $0x49] sm:$0xff] %vm393, %v431
      %449 = vst.msk [vmem:[%s441 + $0x51] sm:$0xff] %vm393, %v432
      %450 = vst.msk [vmem:[%s441 + $0x61] sm:$0xff] %vm393, %v433
      %451 = vst.msk [vmem:[%s441 + $0x69] sm:$0xff] %vm393, %v434
      %452 = vst.msk [vmem:[%s441 + $0x79] sm:$0xff] %vm393, %v435
      %453 = vst.msk [vmem:[%s441 + $0x81] sm:$0xff] %vm393, %v436
      %454 = vst.msk [vmem:[%s441 + $0x91] sm:$0xff] %vm393, %v437
      %455 = vst.msk [vmem:[%s441 + $0x99] sm:$0xff] %vm393, %v438
      %456 = vst.msk [vmem:[%s441 + $0xa9] sm:$0xff] %vm393, %v439
      %457 = vst.msk [vmem:[%s441 + $0xb1] sm:$0xff] %vm393, %v440
      %p458 = scmp.gt.s32.totalorder %s21, 0
      // Predicated region
      $region41: #{residual_blocks_with_input_conv.3} parent=39 // pred_check
        %p459 = pneg %p458
      $region42: #{residual_blocks_with_input_conv.3} parent=39 // pred_check_branch
        %461 = sbr.rel (%p459) target = $region44
      $region43: #{residual_blocks_with_input_conv.3} parent=39 // pred_region
        %v462 = vld [vmem:[%s360] sm:$0xff]
        %v463 = vld [vmem:[%s360 + $0x8] sm:$0xff]
        %464 = vst.msk [vmem:[#allocation2 + $0x1] sm:$0xff] %vm393, %v462
        %465 = vst.msk [vmem:[#allocation2 + $0x9] sm:$0xff] %vm393, %v463
      $region44: #{residual_blocks_with_input_conv.3} parent=39 // pred_fallthru
        _
      %p466 = scmp.lt.s32.totalorder %s21, 1
      // Predicated region
      $region45: #{residual_blocks_with_input_conv.3} parent=39 // pred_check
        %p467 = pneg %p466
      $region46: #{residual_blocks_with_input_conv.3} parent=39 // pred_check_branch
        %469 = sbr.rel (%p467) target = $region48
      $region47: #{residual_blocks_with_input_conv.3} parent=39 // pred_region
        %v470 = vld [vmem:[%s377] sm:$0xff]
        %v471 = vld [vmem:[%s377 + $0x8] sm:$0xff]
        %s472 = scalar_lea.vmem [#allocation2], 216
        %473 = vst.msk [vmem:[%s472 + $0x1] sm:$0xff] %vm393, %v470
        %474 = vst.msk [vmem:[%s472 + $0x9] sm:$0xff] %vm393, %v471
      $region48: #{residual_blocks_with_input_conv.3} parent=39 // pred_fallthru
        _
      %v475 = vld [vmem:[#allocation2] sm:$0xff]
      %v476 = vld [vmem:[#allocation2 + $0x8] sm:$0xff]
      %v477 = vld [vmem:[#allocation2 + $0x18] sm:$0xff]
      %v478 = vld [vmem:[#allocation2 + $0x20] sm:$0xff]
      %v479 = vld [vmem:[#allocation2 + $0x30] sm:$0xff]
      %v480 = vld [vmem:[#allocation2 + $0x38] sm:$0xff]
      %v481 = vld [vmem:[#allocation2 + $0x48] sm:$0xff]
      %v482 = vld [vmem:[#allocation2 + $0x50] sm:$0xff]
      %v483 = vld [vmem:[#allocation2 + $0x60] sm:$0xff]
      %v484 = vld [vmem:[#allocation2 + $0x68] sm:$0xff]
      %v485 = vld [vmem:[#allocation2 + $0x78] sm:$0xff]
      %v486 = vld [vmem:[#allocation2 + $0x80] sm:$0xff]
      %v487 = vld [vmem:[#allocation2 + $0x90] sm:$0xff]
      %v488 = vld [vmem:[#allocation2 + $0x98] sm:$0xff]
      %v489 = vld [vmem:[#allocation2 + $0xa8] sm:$0xff]
      %v490 = vld [vmem:[#allocation2 + $0xb0] sm:$0xff]
      %v491 = vld [vmem:[#allocation2 + $0xc0] sm:$0xff]
      %v492 = vld [vmem:[#allocation2 + $0xc8] sm:$0xff]
      %v493 = vld [vmem:[#allocation2 + $0xd8] sm:$0xff]
      %v494 = vld [vmem:[#allocation2 + $0xe0] sm:$0xff]
      %v495 = vld [vmem:[#allocation2 + $0x1] sm:$0xff]
      %v496 = vld [vmem:[#allocation2 + $0x9] sm:$0xff]
      %v497 = vld [vmem:[#allocation2 + $0x19] sm:$0xff]
      %v498 = vld [vmem:[#allocation2 + $0x21] sm:$0xff]
      %v499 = vld [vmem:[#allocation2 + $0x31] sm:$0xff]
      %v500 = vld [vmem:[#allocation2 + $0x39] sm:$0xff]
      %v501 = vld [vmem:[#allocation2 + $0x49] sm:$0xff]
      %v502 = vld [vmem:[#allocation2 + $0x51] sm:$0xff]
      %v503 = vld [vmem:[#allocation2 + $0x61] sm:$0xff]
      %v504 = vld [vmem:[#allocation2 + $0x69] sm:$0xff]
      %v505 = vld [vmem:[#allocation2 + $0x79] sm:$0xff]
      %v506 = vld [vmem:[#allocation2 + $0x81] sm:$0xff]
      %v507 = vld [vmem:[#allocation2 + $0x91] sm:$0xff]
      %v508 = vld [vmem:[#allocation2 + $0x99] sm:$0xff]
      %v509 = vld [vmem:[#allocation2 + $0xa9] sm:$0xff]
      %v510 = vld [vmem:[#allocation2 + $0xb1] sm:$0xff]
      %v511 = vld [vmem:[#allocation2 + $0xc1] sm:$0xff]
      %v512 = vld [vmem:[#allocation2 + $0xc9] sm:$0xff]
      %v513 = vld [vmem:[#allocation2 + $0xd9] sm:$0xff]
      %v514 = vld [vmem:[#allocation2 + $0xe1] sm:$0xff]
      %v515 = vld [vmem:[#allocation2 + $0x2] sm:$0xff]
      %v516 = vld [vmem:[#allocation2 + $0xa] sm:$0xff]
      %v517 = vld [vmem:[#allocation2 + $0x1a] sm:$0xff]
      %v518 = vld [vmem:[#allocation2 + $0x22] sm:$0xff]
      %v519 = vld [vmem:[#allocation2 + $0x32] sm:$0xff]
      %v520 = vld [vmem:[#allocation2 + $0x3a] sm:$0xff]
      %v521 = vld [vmem:[#allocation2 + $0x4a] sm:$0xff]
      %v522 = vld [vmem:[#allocation2 + $0x52] sm:$0xff]
      %v523 = vld [vmem:[#allocation2 + $0x62] sm:$0xff]
      %v524 = vld [vmem:[#allocation2 + $0x6a] sm:$0xff]
      %v525 = vld [vmem:[#allocation2 + $0x7a] sm:$0xff]
      %v526 = vld [vmem:[#allocation2 + $0x82] sm:$0xff]
      %v527 = vld [vmem:[#allocation2 + $0x92] sm:$0xff]
      %v528 = vld [vmem:[#allocation2 + $0x9a] sm:$0xff]
      %v529 = vld [vmem:[#allocation2 + $0xaa] sm:$0xff]
      %v530 = vld [vmem:[#allocation2 + $0xb2] sm:$0xff]
      %v531 = vld [vmem:[#allocation2 + $0xc2] sm:$0xff]
      %v532 = vld [vmem:[#allocation2 + $0xca] sm:$0xff]
      %v533 = vld [vmem:[#allocation2 + $0xda] sm:$0xff]
      %v534 = vld [vmem:[#allocation2 + $0xe2] sm:$0xff]
      %555 = vrot.lane.b32.xlu0 %v495, 4
      %v556 = vpop.permute.xlu0 %555
      %557 = vrot.lane.b32.xlu0 %v496, 4
      %v558 = vpop.permute.xlu0 %557
      %559 = vrot.lane.b32.xlu0 %v497, 4
      %v560 = vpop.permute.xlu0 %559
      %561 = vrot.lane.b32.xlu0 %v498, 4
      %v562 = vpop.permute.xlu0 %561
      %563 = vrot.lane.b32.xlu0 %v499, 4
      %v564 = vpop.permute.xlu0 %563
      %565 = vrot.lane.b32.xlu0 %v500, 4
      %v566 = vpop.permute.xlu0 %565
      %567 = vrot.lane.b32.xlu0 %v501, 4
      %v568 = vpop.permute.xlu0 %567
      %569 = vrot.lane.b32.xlu0 %v502, 4
      %v570 = vpop.permute.xlu0 %569
      %571 = vrot.lane.b32.xlu0 %v503, 4
      %v572 = vpop.permute.xlu0 %571
      %573 = vrot.lane.b32.xlu0 %v504, 4
      %v574 = vpop.permute.xlu0 %573
      %575 = vrot.lane.b32.xlu0 %v505, 4
      %v576 = vpop.permute.xlu0 %575
      %577 = vrot.lane.b32.xlu0 %v506, 4
      %v578 = vpop.permute.xlu0 %577
      %579 = vrot.lane.b32.xlu0 %v507, 4
      %v580 = vpop.permute.xlu0 %579
      %581 = vrot.lane.b32.xlu0 %v508, 4
      %v582 = vpop.permute.xlu0 %581
      %583 = vrot.lane.b32.xlu0 %v509, 4
      %v584 = vpop.permute.xlu0 %583
      %585 = vrot.lane.b32.xlu0 %v510, 4
      %v586 = vpop.permute.xlu0 %585
      %587 = vrot.lane.b32.xlu0 %v511, 4
      %v588 = vpop.permute.xlu0 %587
      %589 = vrot.lane.b32.xlu0 %v512, 4
      %v590 = vpop.permute.xlu0 %589
      %591 = vrot.lane.b32.xlu0 %v513, 4
      %v592 = vpop.permute.xlu0 %591
      %593 = vrot.lane.b32.xlu0 %v514, 4
      %v594 = vpop.permute.xlu0 %593
      %635 = vrot.lane.b32.xlu0 %v515, 8
      %v636 = vpop.permute.xlu0 %635
      %637 = vrot.lane.b32.xlu0 %v516, 8
      %v638 = vpop.permute.xlu0 %637
      %639 = vrot.lane.b32.xlu0 %v517, 8
      %v640 = vpop.permute.xlu0 %639
      %641 = vrot.lane.b32.xlu0 %v518, 8
      %v642 = vpop.permute.xlu0 %641
      %643 = vrot.lane.b32.xlu0 %v519, 8
      %v644 = vpop.permute.xlu0 %643
      %645 = vrot.lane.b32.xlu0 %v520, 8
      %v646 = vpop.permute.xlu0 %645
      %647 = vrot.lane.b32.xlu0 %v521, 8
      %v648 = vpop.permute.xlu0 %647
      %649 = vrot.lane.b32.xlu0 %v522, 8
      %v650 = vpop.permute.xlu0 %649
      %651 = vrot.lane.b32.xlu0 %v523, 8
      %v652 = vpop.permute.xlu0 %651
      %653 = vrot.lane.b32.xlu0 %v524, 8
      %v654 = vpop.permute.xlu0 %653
      %655 = vrot.lane.b32.xlu0 %v525, 8
      %v656 = vpop.permute.xlu0 %655
      %657 = vrot.lane.b32.xlu0 %v526, 8
      %v658 = vpop.permute.xlu0 %657
      %659 = vrot.lane.b32.xlu0 %v527, 8
      %v660 = vpop.permute.xlu0 %659
      %661 = vrot.lane.b32.xlu0 %v528, 8
      %v662 = vpop.permute.xlu0 %661
      %663 = vrot.lane.b32.xlu0 %v529, 8
      %v664 = vpop.permute.xlu0 %663
      %665 = vrot.lane.b32.xlu0 %v530, 8
      %v666 = vpop.permute.xlu0 %665
      %667 = vrot.lane.b32.xlu0 %v531, 8
      %v668 = vpop.permute.xlu0 %667
      %669 = vrot.lane.b32.xlu0 %v532, 8
      %v670 = vpop.permute.xlu0 %669
      %671 = vrot.lane.b32.xlu0 %v533, 8
      %v672 = vpop.permute.xlu0 %671
      %673 = vrot.lane.b32.xlu0 %v534, 8
      %v674 = vpop.permute.xlu0 %673
      %v695 = vsel %vm393, %v475, %v556
      %v696 = vsel %vm393, %v476, %v558
      %v697 = vsel %vm393, %v477, %v560
      %v698 = vsel %vm393, %v478, %v562
      %v699 = vsel %vm393, %v479, %v564
      %v700 = vsel %vm393, %v480, %v566
      %v701 = vsel %vm393, %v481, %v568
      %v702 = vsel %vm393, %v482, %v570
      %v703 = vsel %vm393, %v483, %v572
      %v704 = vsel %vm393, %v484, %v574
      %v705 = vsel %vm393, %v485, %v576
      %v706 = vsel %vm393, %v486, %v578
      %v707 = vsel %vm393, %v487, %v580
      %v708 = vsel %vm393, %v488, %v582
      %v709 = vsel %vm393, %v489, %v584
      %v710 = vsel %vm393, %v490, %v586
      %v711 = vsel %vm393, %v491, %v588
      %v712 = vsel %vm393, %v492, %v590
      %v713 = vsel %vm393, %v493, %v592
      %v714 = vsel %vm393, %v494, %v594
      %vm715 = vcmask 64512
      %v716 = vsel %vm715, %v695, %v636
      %v717 = vsel %vm715, %v696, %v638
      %v718 = vsel %vm715, %v697, %v640
      %v719 = vsel %vm715, %v698, %v642
      %v720 = vsel %vm715, %v699, %v644
      %v721 = vsel %vm715, %v700, %v646
      %v722 = vsel %vm715, %v701, %v648
      %v723 = vsel %vm715, %v702, %v650
      %v724 = vsel %vm715, %v703, %v652
      %v725 = vsel %vm715, %v704, %v654
      %v726 = vsel %vm715, %v705, %v656
      %v727 = vsel %vm715, %v706, %v658
      %v728 = vsel %vm715, %v707, %v660
      %v729 = vsel %vm715, %v708, %v662
      %v730 = vsel %vm715, %v709, %v664
      %v731 = vsel %vm715, %v710, %v666
      %v732 = vsel %vm715, %v711, %v668
      %v733 = vsel %vm715, %v712, %v670
      %v734 = vsel %vm715, %v713, %v672
      %v735 = vsel %vm715, %v714, %v674
      %v736 = vld [vmem:[%s3] sm:$0xff]
      %v737 = vld [vmem:[%s3 + $0x8] sm:$0xf]
      %s738 = scalar_lea.vmem %s3, 16
      %v739 = vld [vmem:[%s738] sm:$0xff]
      %v740 = vld [vmem:[%s738 + $0x8] sm:$0xf]
      %vm741 = vcmask 97280
      %v743 = vsel %vm741, %v718, 0
      %v746 = vsel %vm741, %v719, 0
      %v749 = vsel %vm741, %v720, 0
      %v752 = vsel %vm741, %v721, 0
      %v755 = vsel %vm741, %v722, 0
      %v758 = vsel %vm741, %v723, 0
      %v761 = vsel %vm741, %v724, 0
      %v764 = vsel %vm741, %v725, 0
      %v767 = vsel %vm741, %v726, 0
      %v770 = vsel %vm741, %v727, 0
      %v773 = vsel %vm741, %v728, 0
      %v776 = vsel %vm741, %v729, 0
      %v779 = vsel %vm741, %v730, 0
      %v782 = vsel %vm741, %v731, 0
      %v785 = vsel %vm741, %v732, 0
      %v788 = vsel %vm741, %v733, 0
      %vm790 = vcmask 1043456
      %v792 = vsel %vm790, %v740, 0
      %794 = vmatpush.msra.mxu0 0.0
      %795 = vmatpush.msra.mxu0 0.0
      %796 = vmatpush.msra.mxu0 0.0
      %797 = vmatpush.msra.mxu0 0.0
      %798 = vmatpush.msra.mxu0 0.0
      %799 = vmatpush.msra.mxu0 0.0
      %800 = vmatpush.msra.mxu0 0.0
      %801 = vmatpush.msra.mxu0 0.0
      %802 = vmatpush.msra.mxu0 0.0
      %803 = vmatpush.msra.mxu0 0.0
      %804 = vmatpush.msra.mxu0 0.0
      %805 = vmatpush.msra.mxu0 0.0
      %806 = vmatpush.msra.mxu0 0.0
      %807 = vmatpush.msra.mxu0 0.0
      %808 = vmatpush.msra.mxu0 %v792
      %809 = vmatpush.msra.mxu0 %v739
      %810 = vmatmul.f32.gmra.mxu0 %v743
      %v811 = vpop.f32.mrf.mxu0
      %v812 = vadd.f32 0.0, %v811
      %813 = vmatmul.f32.gmra.mxu0 %v746
      %v814 = vpop.f32.mrf.mxu0
      %v815 = vadd.f32 0.0, %v814
      %816 = vmatmul.f32.gmra.mxu0 %v749
      %v817 = vpop.f32.mrf.mxu0
      %v818 = vadd.f32 0.0, %v817
      %819 = vmatmul.f32.gmra.mxu0 %v752
      %v820 = vpop.f32.mrf.mxu0
      %v821 = vadd.f32 0.0, %v820
      %822 = vmatmul.f32.gmra.mxu0 %v755
      %v823 = vpop.f32.mrf.mxu0
      %v824 = vadd.f32 0.0, %v823
      %825 = vmatmul.f32.gmra.mxu0 %v758
      %v826 = vpop.f32.mrf.mxu0
      %v827 = vadd.f32 0.0, %v826
      %828 = vmatmul.f32.gmra.mxu0 %v761
      %v829 = vpop.f32.mrf.mxu0
      %v830 = vadd.f32 0.0, %v829
      %831 = vmatmul.f32.gmra.mxu0 %v764
      %v832 = vpop.f32.mrf.mxu0
      %v833 = vadd.f32 0.0, %v832
      %834 = vmatmul.f32.gmra.mxu0 %v767
      %v835 = vpop.f32.mrf.mxu0
      %v836 = vadd.f32 0.0, %v835
      %837 = vmatmul.f32.gmra.mxu0 %v770
      %v838 = vpop.f32.mrf.mxu0
      %v839 = vadd.f32 0.0, %v838
      %840 = vmatmul.f32.gmra.mxu0 %v773
      %v841 = vpop.f32.mrf.mxu0
      %v842 = vadd.f32 0.0, %v841
      %843 = vmatmul.f32.gmra.mxu0 %v776
      %v844 = vpop.f32.mrf.mxu0
      %v845 = vadd.f32 0.0, %v844
      %846 = vmatmul.f32.gmra.mxu0 %v779
      %v847 = vpop.f32.mrf.mxu0
      %v848 = vadd.f32 0.0, %v847
      %849 = vmatmul.f32.gmra.mxu0 %v782
      %v850 = vpop.f32.mrf.mxu0
      %v851 = vadd.f32 0.0, %v850
      %852 = vmatmul.f32.gmra.mxu0 %v785
      %v853 = vpop.f32.mrf.mxu0
      %v854 = vadd.f32 0.0, %v853
      %855 = vmatmul.f32.gmra.mxu0 %v788
      %v856 = vpop.f32.mrf.mxu0
      %v857 = vadd.f32 0.0, %v856
      %858 = vdwg.mxu0
      %v860 = vsel %vm741, %v716, 0
      %v863 = vsel %vm741, %v717, 0
      %v866 = vsel %vm790, %v737, 0
      %868 = vmatpush.msra.mxu0 0.0
      %869 = vmatpush.msra.mxu0 0.0
      %870 = vmatpush.msra.mxu0 0.0
      %871 = vmatpush.msra.mxu0 0.0
      %872 = vmatpush.msra.mxu0 0.0
      %873 = vmatpush.msra.mxu0 0.0
      %874 = vmatpush.msra.mxu0 0.0
      %875 = vmatpush.msra.mxu0 0.0
      %876 = vmatpush.msra.mxu0 0.0
      %877 = vmatpush.msra.mxu0 0.0
      %878 = vmatpush.msra.mxu0 0.0
      %879 = vmatpush.msra.mxu0 0.0
      %880 = vmatpush.msra.mxu0 0.0
      %881 = vmatpush.msra.mxu0 0.0
      %882 = vmatpush.msra.mxu0 %v866
      %883 = vmatpush.msra.mxu0 %v736
      %884 = vmatmul.f32.gmra.mxu0 %v860
      %v885 = vpop.f32.mrf.mxu0
      %v886 = vadd.f32 %v812, %v885
      %887 = vmatmul.f32.gmra.mxu0 %v863
      %v888 = vpop.f32.mrf.mxu0
      %v889 = vadd.f32 %v815, %v888
      %890 = vmatmul.f32.gmra.mxu0 %v743
      %v891 = vpop.f32.mrf.mxu0
      %v892 = vadd.f32 %v818, %v891
      %893 = vmatmul.f32.gmra.mxu0 %v746
      %v894 = vpop.f32.mrf.mxu0
      %v895 = vadd.f32 %v821, %v894
      %896 = vmatmul.f32.gmra.mxu0 %v749
      %v897 = vpop.f32.mrf.mxu0
      %v898 = vadd.f32 %v824, %v897
      %899 = vmatmul.f32.gmra.mxu0 %v752
      %v900 = vpop.f32.mrf.mxu0
      %v901 = vadd.f32 %v827, %v900
      %902 = vmatmul.f32.gmra.mxu0 %v755
      %v903 = vpop.f32.mrf.mxu0
      %v904 = vadd.f32 %v830, %v903
      %905 = vmatmul.f32.gmra.mxu0 %v758
      %v906 = vpop.f32.mrf.mxu0
      %v907 = vadd.f32 %v833, %v906
      %908 = vmatmul.f32.gmra.mxu0 %v761
      %v909 = vpop.f32.mrf.mxu0
      %v910 = vadd.f32 %v836, %v909
      %911 = vmatmul.f32.gmra.mxu0 %v764
      %v912 = vpop.f32.mrf.mxu0
      %v913 = vadd.f32 %v839, %v912
      %914 = vmatmul.f32.gmra.mxu0 %v767
      %v915 = vpop.f32.mrf.mxu0
      %v916 = vadd.f32 %v842, %v915
      %917 = vmatmul.f32.gmra.mxu0 %v770
      %v918 = vpop.f32.mrf.mxu0
      %v919 = vadd.f32 %v845, %v918
      %920 = vmatmul.f32.gmra.mxu0 %v773
      %v921 = vpop.f32.mrf.mxu0
      %v922 = vadd.f32 %v848, %v921
      %923 = vmatmul.f32.gmra.mxu0 %v776
      %v924 = vpop.f32.mrf.mxu0
      %v925 = vadd.f32 %v851, %v924
      %926 = vmatmul.f32.gmra.mxu0 %v779
      %v927 = vpop.f32.mrf.mxu0
      %v928 = vadd.f32 %v854, %v927
      %929 = vmatmul.f32.gmra.mxu0 %v782
      %v930 = vpop.f32.mrf.mxu0
      %v931 = vadd.f32 %v857, %v930
      %932 = vdwg.mxu0
      %s933 = scalar_lea.vmem %s3, 32
      %v934 = vld [vmem:[%s933] sm:$0xff]
      %v935 = vld [vmem:[%s933 + $0x8] sm:$0xf]
      %v937 = vsel %vm741, %v734, 0
      %v940 = vsel %vm741, %v735, 0
      %v943 = vsel %vm790, %v935, 0
      %945 = vmatpush.msra.mxu0 0.0
      %946 = vmatpush.msra.mxu0 0.0
      %947 = vmatpush.msra.mxu0 0.0
      %948 = vmatpush.msra.mxu0 0.0
      %949 = vmatpush.msra.mxu0 0.0
      %950 = vmatpush.msra.mxu0 0.0
      %951 = vmatpush.msra.mxu0 0.0
      %952 = vmatpush.msra.mxu0 0.0
      %953 = vmatpush.msra.mxu0 0.0
      %954 = vmatpush.msra.mxu0 0.0
      %955 = vmatpush.msra.mxu0 0.0
      %956 = vmatpush.msra.mxu0 0.0
      %957 = vmatpush.msra.mxu0 0.0
      %958 = vmatpush.msra.mxu0 0.0
      %959 = vmatpush.msra.mxu0 %v943
      %960 = vmatpush.msra.mxu0 %v934
      %961 = vmatmul.f32.gmra.mxu0 %v749
      %v962 = vpop.f32.mrf.mxu0
      %v963 = vadd.f32 0.0, %v962
      %964 = vmatmul.f32.gmra.mxu0 %v752
      %v965 = vpop.f32.mrf.mxu0
      %v966 = vadd.f32 0.0, %v965
      %967 = vmatmul.f32.gmra.mxu0 %v755
      %v968 = vpop.f32.mrf.mxu0
      %v969 = vadd.f32 0.0, %v968
      %970 = vmatmul.f32.gmra.mxu0 %v758
      %v971 = vpop.f32.mrf.mxu0
      %v972 = vadd.f32 0.0, %v971
      %973 = vmatmul.f32.gmra.mxu0 %v761
      %v974 = vpop.f32.mrf.mxu0
      %v975 = vadd.f32 0.0, %v974
      %976 = vmatmul.f32.gmra.mxu0 %v764
      %v977 = vpop.f32.mrf.mxu0
      %v978 = vadd.f32 0.0, %v977
      %979 = vmatmul.f32.gmra.mxu0 %v767
      %v980 = vpop.f32.mrf.mxu0
      %v981 = vadd.f32 0.0, %v980
      %982 = vmatmul.f32.gmra.mxu0 %v770
      %v983 = vpop.f32.mrf.mxu0
      %v984 = vadd.f32 0.0, %v983
      %985 = vmatmul.f32.gmra.mxu0 %v773
      %v986 = vpop.f32.mrf.mxu0
      %v987 = vadd.f32 0.0, %v986
      %988 = vmatmul.f32.gmra.mxu0 %v776
      %v989 = vpop.f32.mrf.mxu0
      %v990 = vadd.f32 0.0, %v989
      %991 = vmatmul.f32.gmra.mxu0 %v779
      %v992 = vpop.f32.mrf.mxu0
      %v993 = vadd.f32 0.0, %v992
      %994 = vmatmul.f32.gmra.mxu0 %v782
      %v995 = vpop.f32.mrf.mxu0
      %v996 = vadd.f32 0.0, %v995
      %997 = vmatmul.f32.gmra.mxu0 %v785
      %v998 = vpop.f32.mrf.mxu0
      %v999 = vadd.f32 0.0, %v998
      %1000 = vmatmul.f32.gmra.mxu0 %v788
      %v1001 = vpop.f32.mrf.mxu0
      %v1002 = vadd.f32 0.0, %v1001
      %1003 = vmatmul.f32.gmra.mxu0 %v937
      %v1004 = vpop.f32.mrf.mxu0
      %v1005 = vadd.f32 0.0, %v1004
      %1006 = vmatmul.f32.gmra.mxu0 %v940
      %v1007 = vpop.f32.mrf.mxu0
      %v1008 = vadd.f32 0.0, %v1007
      %1009 = vdwg.mxu0
      %v1010 = vadd.f32 %v886, %v963
      %v1011 = vadd.f32 %v889, %v966
      %v1012 = vadd.f32 %v892, %v969
      %v1013 = vadd.f32 %v895, %v972
      %v1014 = vadd.f32 %v898, %v975
      %v1015 = vadd.f32 %v901, %v978
      %v1016 = vadd.f32 %v904, %v981
      %v1017 = vadd.f32 %v907, %v984
      %v1018 = vadd.f32 %v910, %v987
      %v1019 = vadd.f32 %v913, %v990
      %v1020 = vadd.f32 %v916, %v993
      %v1021 = vadd.f32 %v919, %v996
      %v1022 = vadd.f32 %v922, %v999
      %v1023 = vadd.f32 %v925, %v1002
      %v1024 = vadd.f32 %v928, %v1005
      %v1025 = vadd.f32 %v931, %v1008
      %v1026 = vld [vmem:[%s4] sm:$0x1]
      %v1028 = vperm.slane %v1026, 0
      %v1030 = vadd.f32 %v1010, %v1028
      %v1031 = vadd.f32 %v1011, %v1028
      %v1032 = vadd.f32 %v1012, %v1028
      %v1033 = vadd.f32 %v1013, %v1028
      %v1034 = vadd.f32 %v1014, %v1028
      %v1035 = vadd.f32 %v1015, %v1028
      %v1036 = vadd.f32 %v1016, %v1028
      %v1037 = vadd.f32 %v1017, %v1028
      %v1038 = vadd.f32 %v1018, %v1028
      %v1039 = vadd.f32 %v1019, %v1028
      %v1040 = vadd.f32 %v1020, %v1028
      %v1041 = vadd.f32 %v1021, %v1028
      %v1042 = vadd.f32 %v1022, %v1028
      %v1043 = vadd.f32 %v1023, %v1028
      %v1044 = vadd.f32 %v1024, %v1028
      %v1045 = vadd.f32 %v1025, %v1028
      %vm1046 = vcmp.ge.f32.partialorder %v1030, 0.0
      %vm1047 = vcmp.ge.f32.partialorder %v1031, 0.0
      %vm1048 = vcmp.ge.f32.partialorder %v1032, 0.0
      %vm1049 = vcmp.ge.f32.partialorder %v1033, 0.0
      %vm1050 = vcmp.ge.f32.partialorder %v1034, 0.0
      %vm1051 = vcmp.ge.f32.partialorder %v1035, 0.0
      %vm1052 = vcmp.ge.f32.partialorder %v1036, 0.0
      %vm1053 = vcmp.ge.f32.partialorder %v1037, 0.0
      %vm1054 = vcmp.ge.f32.partialorder %v1038, 0.0
      %vm1055 = vcmp.ge.f32.partialorder %v1039, 0.0
      %vm1056 = vcmp.ge.f32.partialorder %v1040, 0.0
      %vm1057 = vcmp.ge.f32.partialorder %v1041, 0.0
      %vm1058 = vcmp.ge.f32.partialorder %v1042, 0.0
      %vm1059 = vcmp.ge.f32.partialorder %v1043, 0.0
      %vm1060 = vcmp.ge.f32.partialorder %v1044, 0.0
      %vm1061 = vcmp.ge.f32.partialorder %v1045, 0.0
      %v1062 = vmul.f32 %v1030, 0.1
      %v1063 = vmul.f32 %v1031, 0.1
      %v1064 = vmul.f32 %v1032, 0.1
      %v1065 = vmul.f32 %v1033, 0.1
      %v1066 = vmul.f32 %v1034, 0.1
      %v1067 = vmul.f32 %v1035, 0.1
      %v1068 = vmul.f32 %v1036, 0.1
      %v1069 = vmul.f32 %v1037, 0.1
      %v1070 = vmul.f32 %v1038, 0.1
      %v1071 = vmul.f32 %v1039, 0.1
      %v1072 = vmul.f32 %v1040, 0.1
      %v1073 = vmul.f32 %v1041, 0.1
      %v1074 = vmul.f32 %v1042, 0.1
      %v1075 = vmul.f32 %v1043, 0.1
      %v1076 = vmul.f32 %v1044, 0.1
      %v1077 = vmul.f32 %v1045, 0.1
      %v1078 = vsel %vm1046, %v1030, %v1062
      %v1079 = vsel %vm1047, %v1031, %v1063
      %v1080 = vsel %vm1048, %v1032, %v1064
      %v1081 = vsel %vm1049, %v1033, %v1065
      %v1082 = vsel %vm1050, %v1034, %v1066
      %v1083 = vsel %vm1051, %v1035, %v1067
      %v1084 = vsel %vm1052, %v1036, %v1068
      %v1085 = vsel %vm1053, %v1037, %v1069
      %v1086 = vsel %vm1054, %v1038, %v1070
      %v1087 = vsel %vm1055, %v1039, %v1071
      %v1088 = vsel %vm1056, %v1040, %v1072
      %v1089 = vsel %vm1057, %v1041, %v1073
      %v1090 = vsel %vm1058, %v1042, %v1074
      %v1091 = vsel %vm1059, %v1043, %v1075
      %v1092 = vsel %vm1060, %v1044, %v1076
      %v1093 = vsel %vm1061, %v1045, %v1077
      %vm1094 = vcmask 261120
      %1095 = vst.msk [vmem:[%s391] sm:$0xff] %vm1094, %v1078
      %1096 = vst.msk [vmem:[%s391 + $0x8] sm:$0xff] %vm1094, %v1079
      %1097 = vst.msk [vmem:[%s391 + $0x10] sm:$0xff] %vm1094, %v1080
      %1098 = vst.msk [vmem:[%s391 + $0x18] sm:$0xff] %vm1094, %v1081
      %1099 = vst.msk [vmem:[%s391 + $0x20] sm:$0xff] %vm1094, %v1082
      %1100 = vst.msk [vmem:[%s391 + $0x28] sm:$0xff] %vm1094, %v1083
      %1101 = vst.msk [vmem:[%s391 + $0x30] sm:$0xff] %vm1094, %v1084
      %1102 = vst.msk [vmem:[%s391 + $0x38] sm:$0xff] %vm1094, %v1085
      %1103 = vst.msk [vmem:[%s391 + $0x40] sm:$0xff] %vm1094, %v1086
      %1104 = vst.msk [vmem:[%s391 + $0x48] sm:$0xff] %vm1094, %v1087
      %1105 = vst.msk [vmem:[%s391 + $0x50] sm:$0xff] %vm1094, %v1088
      %1106 = vst.msk [vmem:[%s391 + $0x58] sm:$0xff] %vm1094, %v1089
      %1107 = vst.msk [vmem:[%s391 + $0x60] sm:$0xff] %vm1094, %v1090
      %1108 = vst.msk [vmem:[%s391 + $0x68] sm:$0xff] %vm1094, %v1091
      %1109 = vst.msk [vmem:[%s391 + $0x70] sm:$0xff] %vm1094, %v1092
      %1110 = vst.msk [vmem:[%s391 + $0x78] sm:$0xff] %vm1094, %v1093
      %s1111 = smul.u32 8, %s21
      %p1112 = scmp.lt.s32.totalorder %s20, 1
      %s1113 = scalar_select %p1112, %s20, 1
      %p1114 = scmp.lt.s32.totalorder %s1111, 15
      %s1115 = scalar_select %p1114, %s1111, 15
      %s1116 = smul.addr %s1115, 2
      %s1117 = smul.addr %s1113, 32
      %s1118 = sadd.s32 %s1116, %s1117
      %s1119 = smul.addr %s1118, 8
      %s1120 = scalar_lea.vmem %s5, %s1119
      // Predicated region
      $region49: #{residual_blocks_with_input_conv.3} parent=39 // pred_check
        %p1121 = pneg %p190
      $region50: #{residual_blocks_with_input_conv.3} parent=39 // pred_check_branch
        %1123 = sbr.rel (%p1121) target = $region52
      $region51: #{residual_blocks_with_input_conv.3} parent=39 // pred_region
        %s1124 = smul.u32 8, %s21
      $region52: #{residual_blocks_with_input_conv.3} parent=39 // pred_fallthru
        _
    $region40: #{residual_blocks_with_input_conv.3} parent=5 // pred_fallthru
      _
    %p1125 = scmp.le.s32.totalorder 2, %s11
    // Predicated region
    $region53: #{residual_blocks_with_input_conv.3} parent=5 // pred_check
      %p1126 = pneg %p1125
    $region54: #{residual_blocks_with_input_conv.3} parent=5 // pred_check_branch
      %1128 = sbr.rel (%p1126) target = $region56
    $region55: #{residual_blocks_with_input_conv.3} parent=5 // pred_region
      %s1129 = ssub.s32 %s11, 2
      // Predicated region
      $region57: #{residual_blocks_with_input_conv.3} parent=55 // pred_check
        %p1130 = pneg %p196
      $region58: #{residual_blocks_with_input_conv.3} parent=55 // pred_check_branch
        %1132 = sbr.rel (%p1130) target = $region60
      $region59: #{residual_blocks_with_input_conv.3} parent=55 // pred_region
        %s1133 = smul.u32 8, %s23
        %p1134 = scmp.lt.s32.totalorder %s22, 1
        %s1135 = scalar_select %p1134, %s22, 1
        %p1136 = scmp.lt.s32.totalorder %s1133, 15
        %s1137 = scalar_select %p1136, %s1133, 15
        %s1138 = smul.addr %s1137, 2
        %s1139 = smul.addr %s1135, 32
        %s1140 = sadd.s32 %s1138, %s1139
        %s1141 = smul.addr %s1140, 8
        %s1142 = scalar_lea.vmem %s5, %s1141
      $region60: #{residual_blocks_with_input_conv.3} parent=55 // pred_fallthru
        _
    $region56: #{residual_blocks_with_input_conv.3} parent=5 // pred_fallthru
      _
  $region6: #{residual_blocks_with_input_conv.3} parent=0 // loop_footer
    %s15 = sadd.s32 1, %s11
  $region7: #{residual_blocks_with_input_conv.3} parent=0 // loop_footer_branch
    %10 = sbr.rel target = $region3
  $region8: #{residual_blocks_with_input_conv.3} parent=0 // loop_exit
    _

// kernel: residual_blocks_with_input_conv.4
$region0: #{residual_blocks_with_input_conv.4}
  #allocation0 [shape = 'u32[]', space=smem, size = 0x4, offset = 0x4, fixed_abs, tag = 'smem constant byte address 0x4 - core index']
  #allocation1 [shape = 'u32[72,128]{1,0:T(1,128)}', space=vmem, size = 0x9000, scoped, tag = 'internal scratch']
  #allocation2 [shape = 'f32[12,18,32]{2,1,0:T(8,128)}', space=vmem, size = 0x24000, scoped, tag = 'scratch operand']
  #allocation3 [shape = 'f32[10,18,32]{2,1,0:T(8,128)}', space=vmem, size = 0x1e000, scoped, tag = 'scratch operand']
  %s0 = inlined_call_operand.vmem [shape: f32[2,16,16,32], index: 0, kind: input, shape index: {}, may-alias: {0,1,2,3,4}]
  %s1 = inlined_call_operand.vmem [shape: f32[2,16,16,32], index: 1, kind: input, shape index: {}, may-alias: {0,1,2,3,4}]
  %s2 = inlined_call_operand.vmem [shape: f32[2,16,16,32], index: 2, kind: input, shape index: {}, may-alias: {0,1,2,3,4}]
  %s3 = inlined_call_operand.vmem [shape: f32[2,16,16,32], index: 3, kind: input, shape index: {}, may-alias: {0,1,2,3,4}]
  %s4 = inlined_call_operand.vmem [shape: f32[2,16,16,32], index: 4, kind: input, shape index: {}, may-alias: {0,1,2,3,4}]
  %s5 = inlined_call_operand.vmem [shape: f32[3,96,32], index: 5, kind: input, shape index: {}]
  %s6 = inlined_call_operand.vmem [shape: f32[1,32], index: 6, kind: input, shape index: {}]
  %s7 = inlined_call_operand.vmem [shape: f32[3,96,32], index: 7, kind: input, shape index: {}]
  %s8 = inlined_call_operand.vmem [shape: f32[1,32], index: 8, kind: input, shape index: {}]
  %s9 = inlined_call_operand.vmem [shape: f32[2,16,16,32], index: 9, kind: output, shape index: {}]
  %s10 = sld [smem:[#allocation0]]
  $region85: #{residual_blocks_with_input_conv.4} parent=0
    _
  %s12 = ssub.s32 1, %s10
  %s13 = scalar_select 0, %s12, %s10
  loop: start=0, step=1, limit=6
  $region2: #{residual_blocks_with_input_conv.4} parent=0 // loop_pre_header
    _
  $region3: #{residual_blocks_with_input_conv.4} parent=0 // loop_header
    %s15 = sphi 0, %s19
    %p16 = scmp.ge.s32.totalorder %s15, 6
    %s22 = sphi 0, %s34
    %s23 = sphi 0, %s30
    %s24 = sphi 0, %s22
    %s25 = sphi 0, %s23
    %s26 = sphi 0, %s24
    %s27 = sphi 0, %s25
    %s39 = sphi 0, %s41
    %s42 = sphi 0, %s39
    %s43 = sphi 0, %s42
    %s59 = sphi 0, %s43
    %s75 = sphi 0, %s77
    %s78 = sphi 0, %s75
    %s79 = sphi 0, %s78
    %s95 = sphi 0, %s79
    %s111 = sphi 0, %s113
    %s114 = sphi 0, %s111
    %s115 = sphi 0, %s114
    %s131 = sphi 0, %s115
    %s147 = sphi 0, %s149
    %s150 = sphi 0, %s147
    %s151 = sphi 0, %s150
    %s167 = sphi 0, %s151
    %s185 = sphi 0, %s187
    %s188 = sphi 0, %s185
    %s189 = sphi 0, %s188
    %s205 = sphi 0, %s189
    %s209 = sphi 0, %s209
    %s211 = sphi 0, %s209
    %s212 = sphi 0, %s211
    %s226 = sphi 0, %s212
    %s230 = sphi 0, %s230
    %s232 = sphi 0, %s230
    %s233 = sphi 0, %s232
    %s247 = sphi 0, %s233
    %s251 = sphi 0, %s251
    %s253 = sphi 0, %s251
    %s254 = sphi 0, %s253
    %s268 = sphi 0, %s254
    %s272 = sphi 0, %s272
    %s274 = sphi 0, %s272
    %s275 = sphi 0, %s274
    %s289 = sphi 0, %s275
    %s297 = sphi 0, %s299
    %s300 = sphi 0, %s297
    %s301 = sphi 0, %s300
    %s317 = sphi 0, %s301
  $region4: #{residual_blocks_with_input_conv.4} parent=0 // loop_header_branch
    %18 = sbr.rel (%p16) target = $region8
  $region5: #{residual_blocks_with_input_conv.4} parent=0 // loop_body
    %s20 = ssub.s32 %s15, 1
    %s21 = ssub.s32 %s15, 2
    %s28 = sadd.s32 1, %s23
    %p29 = scmp.ge.s32.totalorder %s28, 2
    %s30 = scalar_select %p29, 0, %s28
    %s31 = sadd.s32 1, %s22
    %s32 = scalar_select %p29, %s31, %s22
    %p33 = scmp.ge.s32.totalorder %s32, 2
    %s34 = scalar_select %p33, 0, %s32
    %s35 = ssub.s32 %s22, %s34
    %s36 = ssub.s32 %s23, %s30
    %s37 = sor.u32 %s35, %s36
    %p38 = scmp.eq.s32.totalorder %s37, 0
    %s40 = sadd.s32 %s39, 1
    %s41 = scalar_select %p38, %s39, %s40
    %p44 = pneg %p38
    %p45 = scmp.eq.s32.totalorder %s15, 3
    %p46 = por %p44, %p45
    %p47 = scmp.ne.s32.totalorder %s39, %s42
    %p48 = scmp.eq.s32.totalorder %s15, 0
    %p49 = por %p47, %p48
    %p50 = scmp.ne.s32.totalorder %s39, %s42
    %p51 = scmp.eq.s32.totalorder %s20, 3
    %p52 = por %p50, %p51
    %p53 = scmp.ne.s32.totalorder %s42, %s43
    %p54 = scmp.eq.s32.totalorder %s20, 0
    %p55 = por %p53, %p54
    %p56 = scmp.ne.s32.totalorder %s42, %s43
    %p57 = scmp.eq.s32.totalorder %s21, 3
    %p58 = por %p56, %p57
    %p60 = scmp.ne.s32.totalorder %s43, %s59
    %p61 = scmp.eq.s32.totalorder %s21, 0
    %p62 = por %p60, %p61
    %s63 = smul.u32 %s23, 8
    %s64 = ssub.s32 %s63, 2
    %p65 = scmp.gt.s32.totalorder %s64, 0
    %s66 = scalar_select %p65, %s64, 0
    %s67 = smul.u32 %s30, 8
    %s68 = ssub.s32 %s67, 2
    %p69 = scmp.gt.s32.totalorder %s68, 0
    %s70 = scalar_select %p69, %s68, 0
    %s71 = ssub.s32 %s22, %s34
    %s72 = ssub.s32 %s66, %s70
    %s73 = sor.u32 %s71, %s72
    %p74 = scmp.eq.s32.totalorder %s73, 0
    %s76 = sadd.s32 %s75, 1
    %s77 = scalar_select %p74, %s75, %s76
    %p80 = pneg %p74
    %p81 = scmp.eq.s32.totalorder %s15, 3
    %p82 = por %p80, %p81
    %p83 = scmp.ne.s32.totalorder %s75, %s78
    %p84 = scmp.eq.s32.totalorder %s15, 0
    %p85 = por %p83, %p84
    %p86 = scmp.ne.s32.totalorder %s75, %s78
    %p87 = scmp.eq.s32.totalorder %s20, 3
    %p88 = por %p86, %p87
    %p89 = scmp.ne.s32.totalorder %s78, %s79
    %p90 = scmp.eq.s32.totalorder %s20, 0
    %p91 = por %p89, %p90
    %p92 = scmp.ne.s32.totalorder %s78, %s79
    %p93 = scmp.eq.s32.totalorder %s21, 3
    %p94 = por %p92, %p93
    %p96 = scmp.ne.s32.totalorder %s79, %s95
    %p97 = scmp.eq.s32.totalorder %s21, 0
    %p98 = por %p96, %p97
    %s99 = smul.u32 %s23, 8
    %s100 = ssub.s32 %s99, 1
    %p101 = scmp.gt.s32.totalorder %s100, 0
    %s102 = scalar_select %p101, %s100, 0
    %s103 = smul.u32 %s30, 8
    %s104 = ssub.s32 %s103, 1
    %p105 = scmp.gt.s32.totalorder %s104, 0
    %s106 = scalar_select %p105, %s104, 0
    %s107 = ssub.s32 %s22, %s34
    %s108 = ssub.s32 %s102, %s106
    %s109 = sor.u32 %s107, %s108
    %p110 = scmp.eq.s32.totalorder %s109, 0
    %s112 = sadd.s32 %s111, 1
    %s113 = scalar_select %p110, %s111, %s112
    %p116 = pneg %p110
    %p117 = scmp.eq.s32.totalorder %s15, 3
    %p118 = por %p116, %p117
    %p119 = scmp.ne.s32.totalorder %s111, %s114
    %p120 = scmp.eq.s32.totalorder %s15, 0
    %p121 = por %p119, %p120
    %p122 = scmp.ne.s32.totalorder %s111, %s114
    %p123 = scmp.eq.s32.totalorder %s20, 3
    %p124 = por %p122, %p123
    %p125 = scmp.ne.s32.totalorder %s114, %s115
    %p126 = scmp.eq.s32.totalorder %s20, 0
    %p127 = por %p125, %p126
    %p128 = scmp.ne.s32.totalorder %s114, %s115
    %p129 = scmp.eq.s32.totalorder %s21, 3
    %p130 = por %p128, %p129
    %p132 = scmp.ne.s32.totalorder %s115, %s131
    %p133 = scmp.eq.s32.totalorder %s21, 0
    %p134 = por %p132, %p133
    %s135 = sadd.s32 %s23, 1
    %s136 = smul.u32 %s135, 8
    %p137 = scmp.lt.s32.totalorder %s136, 15
    %s138 = scalar_select %p137, %s136, 15
    %s139 = sadd.s32 %s30, 1
    %s140 = smul.u32 %s139, 8
    %p141 = scmp.lt.s32.totalorder %s140, 15
    %s142 = scalar_select %p141, %s140, 15
    %s143 = ssub.s32 %s22, %s34
    %s144 = ssub.s32 %s138, %s142
    %s145 = sor.u32 %s143, %s144
    %p146 = scmp.eq.s32.totalorder %s145, 0
    %s148 = sadd.s32 %s147, 1
    %s149 = scalar_select %p146, %s147, %s148
    %p152 = pneg %p146
    %p153 = scmp.eq.s32.totalorder %s15, 3
    %p154 = por %p152, %p153
    %p155 = scmp.ne.s32.totalorder %s147, %s150
    %p156 = scmp.eq.s32.totalorder %s15, 0
    %p157 = por %p155, %p156
    %p158 = scmp.ne.s32.totalorder %s147, %s150
    %p159 = scmp.eq.s32.totalorder %s20, 3
    %p160 = por %p158, %p159
    %p161 = scmp.ne.s32.totalorder %s150, %s151
    %p162 = scmp.eq.s32.totalorder %s20, 0
    %p163 = por %p161, %p162
    %p164 = scmp.ne.s32.totalorder %s150, %s151
    %p165 = scmp.eq.s32.totalorder %s21, 3
    %p166 = por %p164, %p165
    %p168 = scmp.ne.s32.totalorder %s151, %s167
    %p169 = scmp.eq.s32.totalorder %s21, 0
    %p170 = por %p168, %p169
    %s171 = sadd.s32 %s23, 1
    %s172 = smul.u32 %s171, 8
    %s173 = sadd.s32 %s172, 1
    %p174 = scmp.lt.s32.totalorder %s173, 15
    %s175 = scalar_select %p174, %s173, 15
    %s176 = sadd.s32 %s30, 1
    %s177 = smul.u32 %s176, 8
    %s178 = sadd.s32 %s177, 1
    %p179 = scmp.lt.s32.totalorder %s178, 15
    %s180 = scalar_select %p179, %s178, 15
    %s181 = ssub.s32 %s22, %s34
    %s182 = ssub.s32 %s175, %s180
    %s183 = sor.u32 %s181, %s182
    %p184 = scmp.eq.s32.totalorder %s183, 0
    %s186 = sadd.s32 %s185, 1
    %s187 = scalar_select %p184, %s185, %s186
    %p190 = pneg %p184
    %p191 = scmp.eq.s32.totalorder %s15, 3
    %p192 = por %p190, %p191
    %p193 = scmp.ne.s32.totalorder %s185, %s188
    %p194 = scmp.eq.s32.totalorder %s15, 0
    %p195 = por %p193, %p194
    %p196 = scmp.ne.s32.totalorder %s185, %s188
    %p197 = scmp.eq.s32.totalorder %s20, 3
    %p198 = por %p196, %p197
    %p199 = scmp.ne.s32.totalorder %s188, %s189
    %p200 = scmp.eq.s32.totalorder %s20, 0
    %p201 = por %p199, %p200
    %p202 = scmp.ne.s32.totalorder %s188, %s189
    %p203 = scmp.eq.s32.totalorder %s21, 3
    %p204 = por %p202, %p203
    %p206 = scmp.ne.s32.totalorder %s189, %s205
    %p207 = scmp.eq.s32.totalorder %s21, 0
    %p208 = por %p206, %p207
    %s210 = sadd.s32 %s209, 1
    %p213 = scmp.eq.s32.totalorder %s15, 3
    %p214 = scmp.ne.s32.totalorder %s209, %s211
    %p215 = scmp.eq.s32.totalorder %s15, 0
    %p216 = por %p214, %p215
    %p217 = scmp.ne.s32.totalorder %s209, %s211
    %p218 = scmp.eq.s32.totalorder %s20, 3
    %p219 = por %p217, %p218
    %p220 = scmp.ne.s32.totalorder %s211, %s212
    %p221 = scmp.eq.s32.totalorder %s20, 0
    %p222 = por %p220, %p221
    %p223 = scmp.ne.s32.totalorder %s211, %s212
    %p224 = scmp.eq.s32.totalorder %s21, 3
    %p225 = por %p223, %p224
    %p227 = scmp.ne.s32.totalorder %s212, %s226
    %p228 = scmp.eq.s32.totalorder %s21, 0
    %p229 = por %p227, %p228
    %s231 = sadd.s32 %s230, 1
    %p234 = scmp.eq.s32.totalorder %s15, 3
    %p235 = scmp.ne.s32.totalorder %s230, %s232
    %p236 = scmp.eq.s32.totalorder %s15, 0
    %p237 = por %p235, %p236
    %p238 = scmp.ne.s32.totalorder %s230, %s232
    %p239 = scmp.eq.s32.totalorder %s20, 3
    %p240 = por %p238, %p239
    %p241 = scmp.ne.s32.totalorder %s232, %s233
    %p242 = scmp.eq.s32.totalorder %s20, 0
    %p243 = por %p241, %p242
    %p244 = scmp.ne.s32.totalorder %s232, %s233
    %p245 = scmp.eq.s32.totalorder %s21, 3
    %p246 = por %p244, %p245
    %p248 = scmp.ne.s32.totalorder %s233, %s247
    %p249 = scmp.eq.s32.totalorder %s21, 0
    %p250 = por %p248, %p249
    %s252 = sadd.s32 %s251, 1
    %p255 = scmp.eq.s32.totalorder %s15, 3
    %p256 = scmp.ne.s32.totalorder %s251, %s253
    %p257 = scmp.eq.s32.totalorder %s15, 0
    %p258 = por %p256, %p257
    %p259 = scmp.ne.s32.totalorder %s251, %s253
    %p260 = scmp.eq.s32.totalorder %s20, 3
    %p261 = por %p259, %p260
    %p262 = scmp.ne.s32.totalorder %s253, %s254
    %p263 = scmp.eq.s32.totalorder %s20, 0
    %p264 = por %p262, %p263
    %p265 = scmp.ne.s32.totalorder %s253, %s254
    %p266 = scmp.eq.s32.totalorder %s21, 3
    %p267 = por %p265, %p266
    %p269 = scmp.ne.s32.totalorder %s254, %s268
    %p270 = scmp.eq.s32.totalorder %s21, 0
    %p271 = por %p269, %p270
    %s273 = sadd.s32 %s272, 1
    %p276 = scmp.eq.s32.totalorder %s15, 3
    %p277 = scmp.ne.s32.totalorder %s272, %s274
    %p278 = scmp.eq.s32.totalorder %s15, 0
    %p279 = por %p277, %p278
    %p280 = scmp.ne.s32.totalorder %s272, %s274
    %p281 = scmp.eq.s32.totalorder %s20, 3
    %p282 = por %p280, %p281
    %p283 = scmp.ne.s32.totalorder %s274, %s275
    %p284 = scmp.eq.s32.totalorder %s20, 0
    %p285 = por %p283, %p284
    %p286 = scmp.ne.s32.totalorder %s274, %s275
    %p287 = scmp.eq.s32.totalorder %s21, 3
    %p288 = por %p286, %p287
    %p290 = scmp.ne.s32.totalorder %s275, %s289
    %p291 = scmp.eq.s32.totalorder %s21, 0
    %p292 = por %p290, %p291
    %s293 = ssub.s32 %s22, %s34
    %s294 = ssub.s32 %s23, %s30
    %s295 = sor.u32 %s293, %s294
    %p296 = scmp.eq.s32.totalorder %s295, 0
    %s298 = sadd.s32 %s297, 1
    %s299 = scalar_select %p296, %s297, %s298
    %p302 = pneg %p296
    %p303 = scmp.eq.s32.totalorder %s15, 3
    %p304 = por %p302, %p303
    %p305 = scmp.ne.s32.totalorder %s297, %s300
    %p306 = scmp.eq.s32.totalorder %s15, 0
    %p307 = por %p305, %p306
    %p308 = scmp.ne.s32.totalorder %s297, %s300
    %p309 = scmp.eq.s32.totalorder %s20, 3
    %p310 = por %p308, %p309
    %p311 = scmp.ne.s32.totalorder %s300, %s301
    %p312 = scmp.eq.s32.totalorder %s20, 0
    %p313 = por %p311, %p312
    %p314 = scmp.ne.s32.totalorder %s300, %s301
    %p315 = scmp.eq.s32.totalorder %s21, 3
    %p316 = por %p314, %p315
    %p318 = scmp.ne.s32.totalorder %s301, %s317
    %p319 = scmp.eq.s32.totalorder %s21, 0
    %p320 = por %p318, %p319
    %p321 = scmp.le.s32.totalorder 1, %s15
    %p322 = scmp.lt.s32.totalorder %s15, 5
    %p323 = pnand %p321, %p322
    %p324 = pneg %p323
    // Predicated region
    $region9: #{residual_blocks_with_input_conv.4} parent=5 // pred_check
      _
    $region10: #{residual_blocks_with_input_conv.4} parent=5 // pred_check_branch
      %326 = sbr.rel (%p323) target = $region12
    $region11: #{residual_blocks_with_input_conv.4} parent=5 // pred_region
      %s327 = ssub.s32 %s15, 1
      // Predicated region
      $region13: #{residual_blocks_with_input_conv.4} parent=11 // pred_check
        %p328 = pneg %p222
      $region14: #{residual_blocks_with_input_conv.4} parent=11 // pred_check_branch
        %330 = sbr.rel (%p328) target = $region16
      $region15: #{residual_blocks_with_input_conv.4} parent=11 // pred_region
        _
      $region16: #{residual_blocks_with_input_conv.4} parent=11 // pred_fallthru
        _
      // Predicated region
      $region17: #{residual_blocks_with_input_conv.4} parent=11 // pred_check
        %p331 = pneg %p243
      $region18: #{residual_blocks_with_input_conv.4} parent=11 // pred_check_branch
        %333 = sbr.rel (%p331) target = $region20
      $region19: #{residual_blocks_with_input_conv.4} parent=11 // pred_region
        _
      $region20: #{residual_blocks_with_input_conv.4} parent=11 // pred_fallthru
        _
      // Predicated region
      $region21: #{residual_blocks_with_input_conv.4} parent=11 // pred_check
        %p334 = pneg %p264
      $region22: #{residual_blocks_with_input_conv.4} parent=11 // pred_check_branch
        %336 = sbr.rel (%p334) target = $region24
      $region23: #{residual_blocks_with_input_conv.4} parent=11 // pred_region
        _
      $region24: #{residual_blocks_with_input_conv.4} parent=11 // pred_fallthru
        _
      // Predicated region
      $region25: #{residual_blocks_with_input_conv.4} parent=11 // pred_check
        %p337 = pneg %p285
      $region26: #{residual_blocks_with_input_conv.4} parent=11 // pred_check_branch
        %339 = sbr.rel (%p337) target = $region28
      $region27: #{residual_blocks_with_input_conv.4} parent=11 // pred_region
        _
      $region28: #{residual_blocks_with_input_conv.4} parent=11 // pred_fallthru
        _
    $region12: #{residual_blocks_with_input_conv.4} parent=5 // pred_fallthru
      _
    %p340 = scmp.lt.s32.totalorder %s15, 4
    // Predicated region
    $region29: #{residual_blocks_with_input_conv.4} parent=5 // pred_check
      %p341 = pneg %p340
    $region30: #{residual_blocks_with_input_conv.4} parent=5 // pred_check_branch
      %343 = sbr.rel (%p341) target = $region32
    $region31: #{residual_blocks_with_input_conv.4} parent=5 // pred_region
      // Predicated region
      $region33: #{residual_blocks_with_input_conv.4} parent=31 // pred_check
        %p344 = pneg %p49
      $region34: #{residual_blocks_with_input_conv.4} parent=31 // pred_check_branch
        %346 = sbr.rel (%p344) target = $region36
      $region35: #{residual_blocks_with_input_conv.4} parent=31 // pred_region
        %s347 = smul.u32 8, %s23
        %p348 = scmp.lt.s32.totalorder %s22, 1
        %s349 = scalar_select %p348, %s22, 1
        %p350 = scmp.lt.s32.totalorder %s347, 15
        %s351 = scalar_select %p350, %s347, 15
        %s352 = smul.addr %s351, 2
        %s353 = smul.addr %s349, 32
        %s354 = sadd.s32 %s352, %s353
        %s355 = smul.addr %s354, 8
        %s356 = scalar_lea.vmem %s0, %s355
        %s357 = smul.u32 8, %s23
      $region36: #{residual_blocks_with_input_conv.4} parent=31 // pred_fallthru
        _
      // Predicated region
      $region37: #{residual_blocks_with_input_conv.4} parent=31 // pred_check
        %p358 = pneg %p85
      $region38: #{residual_blocks_with_input_conv.4} parent=31 // pred_check_branch
        %360 = sbr.rel (%p358) target = $region40
      $region39: #{residual_blocks_with_input_conv.4} parent=31 // pred_region
        %s361 = smul.u32 %s23, 8
        %s362 = ssub.s32 %s361, 2
        %p363 = scmp.gt.s32.totalorder %s362, 0
        %s364 = scalar_select %p363, %s362, 0
        %p365 = scmp.lt.s32.totalorder %s22, 1
        %s366 = scalar_select %p365, %s22, 1
        %p367 = scmp.lt.s32.totalorder %s364, 15
        %s368 = scalar_select %p367, %s364, 15
        %s369 = smul.addr %s368, 2
        %s370 = smul.addr %s366, 32
        %s371 = sadd.s32 %s369, %s370
        %s372 = smul.addr %s371, 8
        %s373 = scalar_lea.vmem %s1, %s372
        %s374 = smul.u32 %s23, 8
        %s375 = ssub.s32 %s374, 2
        %p376 = scmp.gt.s32.totalorder %s375, 0
        %s377 = scalar_select %p376, %s375, 0
      $region40: #{residual_blocks_with_input_conv.4} parent=31 // pred_fallthru
        _
      // Predicated region
      $region41: #{residual_blocks_with_input_conv.4} parent=31 // pred_check
        %p378 = pneg %p121
      $region42: #{residual_blocks_with_input_conv.4} parent=31 // pred_check_branch
        %380 = sbr.rel (%p378) target = $region44
      $region43: #{residual_blocks_with_input_conv.4} parent=31 // pred_region
        %s381 = smul.u32 %s23, 8
        %s382 = ssub.s32 %s381, 1
        %p383 = scmp.gt.s32.totalorder %s382, 0
        %s384 = scalar_select %p383, %s382, 0
        %p385 = scmp.lt.s32.totalorder %s22, 1
        %s386 = scalar_select %p385, %s22, 1
        %p387 = scmp.lt.s32.totalorder %s384, 15
        %s388 = scalar_select %p387, %s384, 15
        %s389 = smul.addr %s388, 2
        %s390 = smul.addr %s386, 32
        %s391 = sadd.s32 %s389, %s390
        %s392 = smul.addr %s391, 8
        %s393 = scalar_lea.vmem %s2, %s392
        %s394 = smul.u32 %s23, 8
        %s395 = ssub.s32 %s394, 1
        %p396 = scmp.gt.s32.totalorder %s395, 0
        %s397 = scalar_select %p396, %s395, 0
      $region44: #{residual_blocks_with_input_conv.4} parent=31 // pred_fallthru
        _
      // Predicated region
      $region45: #{residual_blocks_with_input_conv.4} parent=31 // pred_check
        %p398 = pneg %p157
      $region46: #{residual_blocks_with_input_conv.4} parent=31 // pred_check_branch
        %400 = sbr.rel (%p398) target = $region48
      $region47: #{residual_blocks_with_input_conv.4} parent=31 // pred_region
        %s401 = sadd.s32 %s23, 1
        %s402 = smul.u32 %s401, 8
        %p403 = scmp.lt.s32.totalorder %s402, 15
        %s404 = scalar_select %p403, %s402, 15
        %p405 = scmp.lt.s32.totalorder %s22, 1
        %s406 = scalar_select %p405, %s22, 1
        %p407 = scmp.lt.s32.totalorder %s404, 15
        %s408 = scalar_select %p407, %s404, 15
        %s409 = smul.addr %s408, 2
        %s410 = smul.addr %s406, 32
        %s411 = sadd.s32 %s409, %s410
        %s412 = smul.addr %s411, 8
        %s413 = scalar_lea.vmem %s3, %s412
        %s414 = sadd.s32 %s23, 1
        %s415 = smul.u32 %s414, 8
        %p416 = scmp.lt.s32.totalorder %s415, 15
        %s417 = scalar_select %p416, %s415, 15
      $region48: #{residual_blocks_with_input_conv.4} parent=31 // pred_fallthru
        _
      // Predicated region
      $region49: #{residual_blocks_with_input_conv.4} parent=31 // pred_check
        %p418 = pneg %p195
      $region50: #{residual_blocks_with_input_conv.4} parent=31 // pred_check_branch
        %420 = sbr.rel (%p418) target = $region52
      $region51: #{residual_blocks_with_input_conv.4} parent=31 // pred_region
        %s421 = sadd.s32 %s23, 1
        %s422 = smul.u32 %s421, 8
        %s423 = sadd.s32 %s422, 1
        %p424 = scmp.lt.s32.totalorder %s423, 15
        %s425 = scalar_select %p424, %s423, 15
        %p426 = scmp.lt.s32.totalorder %s22, 1
        %s427 = scalar_select %p426, %s22, 1
        %p428 = scmp.lt.s32.totalorder %s425, 15
        %s429 = scalar_select %p428, %s425, 15
        %s430 = smul.addr %s429, 2
        %s431 = smul.addr %s427, 32
        %s432 = sadd.s32 %s430, %s431
        %s433 = smul.addr %s432, 8
        %s434 = scalar_lea.vmem %s4, %s433
        %s435 = sadd.s32 %s23, 1
        %s436 = smul.u32 %s435, 8
        %s437 = sadd.s32 %s436, 1
        %p438 = scmp.lt.s32.totalorder %s437, 15
        %s439 = scalar_select %p438, %s437, 15
      $region52: #{residual_blocks_with_input_conv.4} parent=31 // pred_fallthru
        _
    $region32: #{residual_blocks_with_input_conv.4} parent=5 // pred_fallthru
      _
    %p440 = scmp.le.s32.totalorder 1, %s15
    %p441 = scmp.lt.s32.totalorder %s15, 5
    %p442 = pnand %p440, %p441
    %p443 = pneg %p442
    // Predicated region
    $region53: #{residual_blocks_with_input_conv.4} parent=5 // pred_check
      _
    $region54: #{residual_blocks_with_input_conv.4} parent=5 // pred_check_branch
      %445 = sbr.rel (%p442) target = $region56
    $region55: #{residual_blocks_with_input_conv.4} parent=5 // pred_region
      %s446 = ssub.s32 %s15, 1
      %s447 = smul.u32 8, %s25
      %p448 = scmp.lt.s32.totalorder %s24, 1
      %s449 = scalar_select %p448, %s24, 1
      %p450 = scmp.lt.s32.totalorder %s447, 15
      %s451 = scalar_select %p450, %s447, 15
      %s452 = smul.addr %s451, 2
      %s453 = smul.addr %s449, 32
      %s454 = sadd.s32 %s452, %s453
      %s455 = smul.addr %s454, 8
      %s456 = scalar_lea.vmem %s0, %s455
      %p457 = pneg %p55
      %p458 = pneg %p52
      %s459 = smul.u32 %s25, 8
      %s460 = ssub.s32 %s459, 2
      %p461 = scmp.gt.s32.totalorder %s460, 0
      %s462 = scalar_select %p461, %s460, 0
      %p463 = scmp.lt.s32.totalorder %s24, 1
      %s464 = scalar_select %p463, %s24, 1
      %p465 = scmp.lt.s32.totalorder %s462, 15
      %s466 = scalar_select %p465, %s462, 15
      %s467 = smul.addr %s466, 2
      %s468 = smul.addr %s464, 32
      %s469 = sadd.s32 %s467, %s468
      %s470 = smul.addr %s469, 8
      %s471 = scalar_lea.vmem %s1, %s470
      %p472 = pneg %p91
      %p473 = pneg %p88
      %s474 = smul.u32 %s25, 8
      %s475 = ssub.s32 %s474, 1
      %p476 = scmp.gt.s32.totalorder %s475, 0
      %s477 = scalar_select %p476, %s475, 0
      %p478 = scmp.lt.s32.totalorder %s24, 1
      %s479 = scalar_select %p478, %s24, 1
      %p480 = scmp.lt.s32.totalorder %s477, 15
      %s481 = scalar_select %p480, %s477, 15
      %s482 = smul.addr %s481, 2
      %s483 = smul.addr %s479, 32
      %s484 = sadd.s32 %s482, %s483
      %s485 = smul.addr %s484, 8
      %s486 = scalar_lea.vmem %s2, %s485
      %p487 = pneg %p127
      %p488 = pneg %p124
      %s489 = sadd.s32 %s25, 1
      %s490 = smul.u32 %s489, 8
      %p491 = scmp.lt.s32.totalorder %s490, 15
      %s492 = scalar_select %p491, %s490, 15
      %p493 = scmp.lt.s32.totalorder %s24, 1
      %s494 = scalar_select %p493, %s24, 1
      %p495 = scmp.lt.s32.totalorder %s492, 15
      %s496 = scalar_select %p495, %s492, 15
      %s497 = smul.addr %s496, 2
      %s498 = smul.addr %s494, 32
      %s499 = sadd.s32 %s497, %s498
      %s500 = smul.addr %s499, 8
      %s501 = scalar_lea.vmem %s3, %s500
      %p502 = pneg %p163
      %p503 = pneg %p160
      %s504 = sadd.s32 %s25, 1
      %s505 = smul.u32 %s504, 8
      %s506 = sadd.s32 %s505, 1
      %p507 = scmp.lt.s32.totalorder %s506, 15
      %s508 = scalar_select %p507, %s506, 15
      %p509 = scmp.lt.s32.totalorder %s24, 1
      %s510 = scalar_select %p509, %s24, 1
      %p511 = scmp.lt.s32.totalorder %s508, 15
      %s512 = scalar_select %p511, %s508, 15
      %s513 = smul.addr %s512, 2
      %s514 = smul.addr %s510, 32
      %s515 = sadd.s32 %s513, %s514
      %s516 = smul.addr %s515, 8
      %s517 = scalar_lea.vmem %s4, %s516
      %p518 = pneg %p201
      %p519 = pneg %p198
      %p520 = pneg %p222
      %p521 = pneg %p219
      %p522 = pneg %p243
      %p523 = pneg %p240
      %p524 = pneg %p264
      %p525 = pneg %p261
      %p526 = pneg %p285
      %p527 = pneg %p282
      %p528 = pneg %p313
      %p529 = pneg %p310
      %s530 = smul.u32 8, %s25
      %p531 = scmp.lt.s32.totalorder %s24, 1
      %s532 = scalar_select %p531, %s24, 1
      %p533 = scmp.lt.s32.totalorder %s530, 15
      %s534 = scalar_select %p533, %s530, 15
      %s535 = smul.addr %s534, 2
      %s536 = smul.addr %s532, 32
      %s537 = sadd.s32 %s535, %s536
      %s538 = smul.addr %s537, 8
      %s539 = scalar_lea.vmem %s9, %s538
      %s540 = smul.u32 8, %s25
      %p541 = scmp.lt.s32.totalorder %s24, 1
      %s542 = scalar_select %p541, %s24, 1
      %p543 = scmp.lt.s32.totalorder %s540, 15
      %s544 = scalar_select %p543, %s540, 15
      %s545 = smul.addr %s544, 2
      %s546 = smul.addr %s542, 32
      %s547 = sadd.s32 %s545, %s546
      %s548 = smul.addr %s547, 8
      %s549 = scalar_lea.vmem %s0, %s548
      %s550 = smul.u32 8, %s25
      %s551 = smul.u32 %s25, 8
      %s552 = ssub.s32 %s551, 2
      %p553 = scmp.gt.s32.totalorder %s552, 0
      %s554 = scalar_select %p553, %s552, 0
      %p555 = scmp.lt.s32.totalorder %s24, 1
      %s556 = scalar_select %p555, %s24, 1
      %p557 = scmp.lt.s32.totalorder %s554, 15
      %s558 = scalar_select %p557, %s554, 15
      %s559 = smul.addr %s558, 2
      %s560 = smul.addr %s556, 32
      %s561 = sadd.s32 %s559, %s560
      %s562 = smul.addr %s561, 8
      %s563 = scalar_lea.vmem %s1, %s562
      %s564 = smul.u32 %s25, 8
      %s565 = ssub.s32 %s564, 2
      %p566 = scmp.gt.s32.totalorder %s565, 0
      %s567 = scalar_select %p566, %s565, 0
      %s568 = smul.u32 %s25, 8
      %s569 = ssub.s32 %s568, 1
      %p570 = scmp.gt.s32.totalorder %s569, 0
      %s571 = scalar_select %p570, %s569, 0
      %p572 = scmp.lt.s32.totalorder %s24, 1
      %s573 = scalar_select %p572, %s24, 1
      %p574 = scmp.lt.s32.totalorder %s571, 15
      %s575 = scalar_select %p574, %s571, 15
      %s576 = smul.addr %s575, 2
      %s577 = smul.addr %s573, 32
      %s578 = sadd.s32 %s576, %s577
      %s579 = smul.addr %s578, 8
      %s580 = scalar_lea.vmem %s2, %s579
      %s581 = smul.u32 %s25, 8
      %s582 = ssub.s32 %s581, 1
      %p583 = scmp.gt.s32.totalorder %s582, 0
      %s584 = scalar_select %p583, %s582, 0
      %s585 = sadd.s32 %s25, 1
      %s586 = smul.u32 %s585, 8
      %p587 = scmp.lt.s32.totalorder %s586, 15
      %s588 = scalar_select %p587, %s586, 15
      %p589 = scmp.lt.s32.totalorder %s24, 1
      %s590 = scalar_select %p589, %s24, 1
      %p591 = scmp.lt.s32.totalorder %s588, 15
      %s592 = scalar_select %p591, %s588, 15
      %s593 = smul.addr %s592, 2
      %s594 = smul.addr %s590, 32
      %s595 = sadd.s32 %s593, %s594
      %s596 = smul.addr %s595, 8
      %s597 = scalar_lea.vmem %s3, %s596
      %s598 = sadd.s32 %s25, 1
      %s599 = smul.u32 %s598, 8
      %p600 = scmp.lt.s32.totalorder %s599, 15
      %s601 = scalar_select %p600, %s599, 15
      %s602 = sadd.s32 %s25, 1
      %s603 = smul.u32 %s602, 8
      %s604 = sadd.s32 %s603, 1
      %p605 = scmp.lt.s32.totalorder %s604, 15
      %s606 = scalar_select %p605, %s604, 15
      %p607 = scmp.lt.s32.totalorder %s24, 1
      %s608 = scalar_select %p607, %s24, 1
      %p609 = scmp.lt.s32.totalorder %s606, 15
      %s610 = scalar_select %p609, %s606, 15
      %s611 = smul.addr %s610, 2
      %s612 = smul.addr %s608, 32
      %s613 = sadd.s32 %s611, %s612
      %s614 = smul.addr %s613, 8
      %s615 = scalar_lea.vmem %s4, %s614
      %s616 = sadd.s32 %s25, 1
      %s617 = smul.u32 %s616, 8
      %s618 = sadd.s32 %s617, 1
      %p619 = scmp.lt.s32.totalorder %s618, 15
      %s620 = scalar_select %p619, %s618, 15
      %s621 = smul.u32 8, %s25
      %p622 = scmp.lt.s32.totalorder %s24, 1
      %s623 = scalar_select %p622, %s24, 1
      %p624 = scmp.lt.s32.totalorder %s621, 15
      %s625 = scalar_select %p624, %s621, 15
      %s626 = smul.addr %s625, 2
      %s627 = smul.addr %s623, 32
      %s628 = sadd.s32 %s626, %s627
      %s629 = smul.addr %s628, 8
      %s630 = scalar_lea.vmem %s9, %s629
      %s631 = smul.u32 8, %s25
      %vm632 = vcmask 261120
      %633 = vst.msk [vmem:[#allocation2] sm:$0xff] %vm632, 0.0
      %634 = vst.msk [vmem:[#allocation2 + $0x8] sm:$0xff] %vm632, 0.0
      %vm635 = vcmask 254976
      %636 = vst.msk [vmem:[#allocation2 + $0x10] sm:$0x3] %vm635, 0.0
      %637 = vst.msk [vmem:[#allocation2 + $0x18] sm:$0xff] %vm632, 0.0
      %638 = vst.msk [vmem:[#allocation2 + $0x20] sm:$0xff] %vm632, 0.0
      %639 = vst.msk [vmem:[#allocation2 + $0x28] sm:$0x3] %vm635, 0.0
      %640 = vst.msk [vmem:[#allocation2 + $0x30] sm:$0xff] %vm632, 0.0
      %641 = vst.msk [vmem:[#allocation2 + $0x38] sm:$0xff] %vm632, 0.0
      %642 = vst.msk [vmem:[#allocation2 + $0x40] sm:$0x3] %vm635, 0.0
      %643 = vst.msk [vmem:[#allocation2 + $0x48] sm:$0xff] %vm632, 0.0
      %644 = vst.msk [vmem:[#allocation2 + $0x50] sm:$0xff] %vm632, 0.0
      %645 = vst.msk [vmem:[#allocation2 + $0x58] sm:$0x3] %vm635, 0.0
      %646 = vst.msk [vmem:[#allocation2 + $0x60] sm:$0xff] %vm632, 0.0
      %647 = vst.msk [vmem:[#allocation2 + $0x68] sm:$0xff] %vm632, 0.0
      %648 = vst.msk [vmem:[#allocation2 + $0x70] sm:$0x3] %vm635, 0.0
      %649 = vst.msk [vmem:[#allocation2 + $0x78] sm:$0xff] %vm632, 0.0
      %650 = vst.msk [vmem:[#allocation2 + $0x80] sm:$0xff] %vm632, 0.0
      %651 = vst.msk [vmem:[#allocation2 + $0x88] sm:$0x3] %vm635, 0.0
      %652 = vst.msk [vmem:[#allocation2 + $0x90] sm:$0xff] %vm632, 0.0
      %653 = vst.msk [vmem:[#allocation2 + $0x98] sm:$0xff] %vm632, 0.0
      %654 = vst.msk [vmem:[#allocation2 + $0xa0] sm:$0x3] %vm635, 0.0
      %655 = vst.msk [vmem:[#allocation2 + $0xa8] sm:$0xff] %vm632, 0.0
      %656 = vst.msk [vmem:[#allocation2 + $0xb0] sm:$0xff] %vm632, 0.0
      %657 = vst.msk [vmem:[#allocation2 + $0xb8] sm:$0x3] %vm635, 0.0
      %658 = vst.msk [vmem:[#allocation2 + $0xc0] sm:$0xff] %vm632, 0.0
      %659 = vst.msk [vmem:[#allocation2 + $0xc8] sm:$0xff] %vm632, 0.0
      %660 = vst.msk [vmem:[#allocation2 + $0xd0] sm:$0x3] %vm635, 0.0
      %661 = vst.msk [vmem:[#allocation2 + $0xd8] sm:$0xff] %vm632, 0.0
      %662 = vst.msk [vmem:[#allocation2 + $0xe0] sm:$0xff] %vm632, 0.0
      %663 = vst.msk [vmem:[#allocation2 + $0xe8] sm:$0x3] %vm635, 0.0
      %664 = vst.msk [vmem:[#allocation2 + $0xf0] sm:$0xff] %vm632, 0.0
      %665 = vst.msk [vmem:[#allocation2 + $0xf8] sm:$0xff] %vm632, 0.0
      %666 = vst.msk [vmem:[#allocation2 + $0x100] sm:$0x3] %vm635, 0.0
      %667 = vst.msk [vmem:[#allocation2 + $0x108] sm:$0xff] %vm632, 0.0
      %668 = vst.msk [vmem:[#allocation2 + $0x110] sm:$0xff] %vm632, 0.0
      %669 = vst.msk [vmem:[#allocation2 + $0x118] sm:$0x3] %vm635, 0.0
      %v670 = vld [vmem:[%s549] sm:$0xff]
      %v671 = vld [vmem:[%s549 + $0x8] sm:$0xff]
      %v672 = vld [vmem:[%s549 + $0x10] sm:$0xff]
      %v673 = vld [vmem:[%s549 + $0x18] sm:$0xff]
      %v674 = vld [vmem:[%s549 + $0x20] sm:$0xff]
      %v675 = vld [vmem:[%s549 + $0x28] sm:$0xff]
      %v676 = vld [vmem:[%s549 + $0x30] sm:$0xff]
      %v677 = vld [vmem:[%s549 + $0x38] sm:$0xff]
      %v678 = vld [vmem:[%s549 + $0x40] sm:$0xff]
      %v679 = vld [vmem:[%s549 + $0x48] sm:$0xff]
      %v680 = vld [vmem:[%s549 + $0x50] sm:$0xff]
      %v681 = vld [vmem:[%s549 + $0x58] sm:$0xff]
      %v682 = vld [vmem:[%s549 + $0x60] sm:$0xff]
      %v683 = vld [vmem:[%s549 + $0x68] sm:$0xff]
      %v684 = vld [vmem:[%s549 + $0x70] sm:$0xff]
      %v685 = vld [vmem:[%s549 + $0x78] sm:$0xff]
      %s686 = scalar_lea.vmem [#allocation2], 48
      %687 = vst.msk [vmem:[%s686 + $0x1] sm:$0xff] %vm632, %v670
      %688 = vst.msk [vmem:[%s686 + $0x9] sm:$0xff] %vm632, %v671
      %689 = vst.msk [vmem:[%s686 + $0x19] sm:$0xff] %vm632, %v672
      %690 = vst.msk [vmem:[%s686 + $0x21] sm:$0xff] %vm632, %v673
      %691 = vst.msk [vmem:[%s686 + $0x31] sm:$0xff] %vm632, %v674
      %692 = vst.msk [vmem:[%s686 + $0x39] sm:$0xff] %vm632, %v675
      %693 = vst.msk [vmem:[%s686 + $0x49] sm:$0xff] %vm632, %v676
      %694 = vst.msk [vmem:[%s686 + $0x51] sm:$0xff] %vm632, %v677
      %695 = vst.msk [vmem:[%s686 + $0x61] sm:$0xff] %vm632, %v678
      %696 = vst.msk [vmem:[%s686 + $0x69] sm:$0xff] %vm632, %v679
      %697 = vst.msk [vmem:[%s686 + $0x79] sm:$0xff] %vm632, %v680
      %698 = vst.msk [vmem:[%s686 + $0x81] sm:$0xff] %vm632, %v681
      %699 = vst.msk [vmem:[%s686 + $0x91] sm:$0xff] %vm632, %v682
      %700 = vst.msk [vmem:[%s686 + $0x99] sm:$0xff] %vm632, %v683
      %701 = vst.msk [vmem:[%s686 + $0xa9] sm:$0xff] %vm632, %v684
      %702 = vst.msk [vmem:[%s686 + $0xb1] sm:$0xff] %vm632, %v685
      %p703 = scmp.gt.s32.totalorder %s25, 0
      // Predicated region
      $region57: #{residual_blocks_with_input_conv.4} parent=55 // pred_check
        %p704 = pneg %p703
      $region58: #{residual_blocks_with_input_conv.4} parent=55 // pred_check_branch
        %706 = sbr.rel (%p704) target = $region60
      $region59: #{residual_blocks_with_input_conv.4} parent=55 // pred_region
        %v707 = vld [vmem:[%s563] sm:$0xff]
        %v708 = vld [vmem:[%s563 + $0x8] sm:$0xff]
        %709 = vst.msk [vmem:[#allocation2 + $0x1] sm:$0xff] %vm632, %v707
        %710 = vst.msk [vmem:[#allocation2 + $0x9] sm:$0xff] %vm632, %v708
        %v711 = vld [vmem:[%s580] sm:$0xff]
        %v712 = vld [vmem:[%s580 + $0x8] sm:$0xff]
        %s713 = scalar_lea.vmem [#allocation2], 24
        %714 = vst.msk [vmem:[%s713 + $0x1] sm:$0xff] %vm632, %v711
        %715 = vst.msk [vmem:[%s713 + $0x9] sm:$0xff] %vm632, %v712
      $region60: #{residual_blocks_with_input_conv.4} parent=55 // pred_fallthru
        _
      %p716 = scmp.lt.s32.totalorder %s25, 1
      // Predicated region
      $region61: #{residual_blocks_with_input_conv.4} parent=55 // pred_check
        %p717 = pneg %p716
      $region62: #{residual_blocks_with_input_conv.4} parent=55 // pred_check_branch
        %719 = sbr.rel (%p717) target = $region64
      $region63: #{residual_blocks_with_input_conv.4} parent=55 // pred_region
        %v720 = vld [vmem:[%s597] sm:$0xff]
        %v721 = vld [vmem:[%s597 + $0x8] sm:$0xff]
        %s722 = scalar_lea.vmem [#allocation2], 240
        %723 = vst.msk [vmem:[%s722 + $0x1] sm:$0xff] %vm632, %v720
        %724 = vst.msk [vmem:[%s722 + $0x9] sm:$0xff] %vm632, %v721
        %v725 = vld [vmem:[%s615] sm:$0xff]
        %v726 = vld [vmem:[%s615 + $0x8] sm:$0xff]
        %s727 = scalar_lea.vmem [#allocation2], 264
        %728 = vst.msk [vmem:[%s727 + $0x1] sm:$0xff] %vm632, %v725
        %729 = vst.msk [vmem:[%s727 + $0x9] sm:$0xff] %vm632, %v726
      $region64: #{residual_blocks_with_input_conv.4} parent=55 // pred_fallthru
        _
      %v730 = vld [vmem:[#allocation2] sm:$0xff]
      %v731 = vld [vmem:[#allocation2 + $0x8] sm:$0xff]
      %v732 = vld [vmem:[#allocation2 + $0x18] sm:$0xff]
      %v733 = vld [vmem:[#allocation2 + $0x20] sm:$0xff]
      %v734 = vld [vmem:[#allocation2 + $0x30] sm:$0xff]
      %v735 = vld [vmem:[#allocation2 + $0x38] sm:$0xff]
      %v736 = vld [vmem:[#allocation2 + $0x48] sm:$0xff]
      %v737 = vld [vmem:[#allocation2 + $0x50] sm:$0xff]
      %v738 = vld [vmem:[#allocation2 + $0x60] sm:$0xff]
      %v739 = vld [vmem:[#allocation2 + $0x68] sm:$0xff]
      %v740 = vld [vmem:[#allocation2 + $0x78] sm:$0xff]
      %v741 = vld [vmem:[#allocation2 + $0x80] sm:$0xff]
      %v742 = vld [vmem:[#allocation2 + $0x90] sm:$0xff]
      %v743 = vld [vmem:[#allocation2 + $0x98] sm:$0xff]
      %v744 = vld [vmem:[#allocation2 + $0xa8] sm:$0xff]
      %v745 = vld [vmem:[#allocation2 + $0xb0] sm:$0xff]
      %v746 = vld [vmem:[#allocation2 + $0xc0] sm:$0xff]
      %v747 = vld [vmem:[#allocation2 + $0xc8] sm:$0xff]
      %v748 = vld [vmem:[#allocation2 + $0xd8] sm:$0xff]
      %v749 = vld [vmem:[#allocation2 + $0xe0] sm:$0xff]
      %v750 = vld [vmem:[#allocation2 + $0xf0] sm:$0xff]
      %v751 = vld [vmem:[#allocation2 + $0xf8] sm:$0xff]
      %v752 = vld [vmem:[#allocation2 + $0x108] sm:$0xff]
      %v753 = vld [vmem:[#allocation2 + $0x110] sm:$0xff]
      %v754 = vld [vmem:[#allocation2 + $0x1] sm:$0xff]
      %v755 = vld [vmem:[#allocation2 + $0x9] sm:$0xff]
      %v756 = vld [vmem:[#allocation2 + $0x19] sm:$0xff]
      %v757 = vld [vmem:[#allocation2 + $0x21] sm:$0xff]
      %v758 = vld [vmem:[#allocation2 + $0x31] sm:$0xff]
      %v759 = vld [vmem:[#allocation2 + $0x39] sm:$0xff]
      %v760 = vld [vmem:[#allocation2 + $0x49] sm:$0xff]
      %v761 = vld [vmem:[#allocation2 + $0x51] sm:$0xff]
      %v762 = vld [vmem:[#allocation2 + $0x61] sm:$0xff]
      %v763 = vld [vmem:[#allocation2 + $0x69] sm:$0xff]
      %v764 = vld [vmem:[#allocation2 + $0x79] sm:$0xff]
      %v765 = vld [vmem:[#allocation2 + $0x81] sm:$0xff]
      %v766 = vld [vmem:[#allocation2 + $0x91] sm:$0xff]
      %v767 = vld [vmem:[#allocation2 + $0x99] sm:$0xff]
      %v768 = vld [vmem:[#allocation2 + $0xa9] sm:$0xff]
      %v769 = vld [vmem:[#allocation2 + $0xb1] sm:$0xff]
      %v770 = vld [vmem:[#allocation2 + $0xc1] sm:$0xff]
      %v771 = vld [vmem:[#allocation2 + $0xc9] sm:$0xff]
      %v772 = vld [vmem:[#allocation2 + $0xd9] sm:$0xff]
      %v773 = vld [vmem:[#allocation2 + $0xe1] sm:$0xff]
      %v774 = vld [vmem:[#allocation2 + $0xf1] sm:$0xff]
      %v775 = vld [vmem:[#allocation2 + $0xf9] sm:$0xff]
      %v776 = vld [vmem:[#allocation2 + $0x109] sm:$0xff]
      %v777 = vld [vmem:[#allocation2 + $0x111] sm:$0xff]
      %v778 = vld [vmem:[#allocation2 + $0x2] sm:$0xff]
      %v779 = vld [vmem:[#allocation2 + $0xa] sm:$0xff]
      %v780 = vld [vmem:[#allocation2 + $0x1a] sm:$0xff]
      %v781 = vld [vmem:[#allocation2 + $0x22] sm:$0xff]
      %v782 = vld [vmem:[#allocation2 + $0x32] sm:$0xff]
      %v783 = vld [vmem:[#allocation2 + $0x3a] sm:$0xff]
      %v784 = vld [vmem:[#allocation2 + $0x4a] sm:$0xff]
      %v785 = vld [vmem:[#allocation2 + $0x52] sm:$0xff]
      %v786 = vld [vmem:[#allocation2 + $0x62] sm:$0xff]
      %v787 = vld [vmem:[#allocation2 + $0x6a] sm:$0xff]
      %v788 = vld [vmem:[#allocation2 + $0x7a] sm:$0xff]
      %v789 = vld [vmem:[#allocation2 + $0x82] sm:$0xff]
      %v790 = vld [vmem:[#allocation2 + $0x92] sm:$0xff]
      %v791 = vld [vmem:[#allocation2 + $0x9a] sm:$0xff]
      %v792 = vld [vmem:[#allocation2 + $0xaa] sm:$0xff]
      %v793 = vld [vmem:[#allocation2 + $0xb2] sm:$0xff]
      %v794 = vld [vmem:[#allocation2 + $0xc2] sm:$0xff]
      %v795 = vld [vmem:[#allocation2 + $0xca] sm:$0xff]
      %v796 = vld [vmem:[#allocation2 + $0xda] sm:$0xff]
      %v797 = vld [vmem:[#allocation2 + $0xe2] sm:$0xff]
      %v798 = vld [vmem:[#allocation2 + $0xf2] sm:$0xff]
      %v799 = vld [vmem:[#allocation2 + $0xfa] sm:$0xff]
      %v800 = vld [vmem:[#allocation2 + $0x10a] sm:$0xff]
      %v801 = vld [vmem:[#allocation2 + $0x112] sm:$0xff]
      %826 = vrot.lane.b32.xlu0 %v754, 32
      %v827 = vpop.permute.xlu0 %826
      %828 = vrot.lane.b32.xlu0 %v755, 32
      %v829 = vpop.permute.xlu0 %828
      %830 = vrot.lane.b32.xlu0 %v756, 32
      %v831 = vpop.permute.xlu0 %830
      %832 = vrot.lane.b32.xlu0 %v757, 32
      %v833 = vpop.permute.xlu0 %832
      %834 = vrot.lane.b32.xlu0 %v758, 32
      %v835 = vpop.permute.xlu0 %834
      %836 = vrot.lane.b32.xlu0 %v759, 32
      %v837 = vpop.permute.xlu0 %836
      %838 = vrot.lane.b32.xlu0 %v760, 32
      %v839 = vpop.permute.xlu0 %838
      %840 = vrot.lane.b32.xlu0 %v761, 32
      %v841 = vpop.permute.xlu0 %840
      %842 = vrot.lane.b32.xlu0 %v762, 32
      %v843 = vpop.permute.xlu0 %842
      %844 = vrot.lane.b32.xlu0 %v763, 32
      %v845 = vpop.permute.xlu0 %844
      %846 = vrot.lane.b32.xlu0 %v764, 32
      %v847 = vpop.permute.xlu0 %846
      %848 = vrot.lane.b32.xlu0 %v765, 32
      %v849 = vpop.permute.xlu0 %848
      %850 = vrot.lane.b32.xlu0 %v766, 32
      %v851 = vpop.permute.xlu0 %850
      %852 = vrot.lane.b32.xlu0 %v767, 32
      %v853 = vpop.permute.xlu0 %852
      %854 = vrot.lane.b32.xlu0 %v768, 32
      %v855 = vpop.permute.xlu0 %854
      %856 = vrot.lane.b32.xlu0 %v769, 32
      %v857 = vpop.permute.xlu0 %856
      %858 = vrot.lane.b32.xlu0 %v770, 32
      %v859 = vpop.permute.xlu0 %858
      %860 = vrot.lane.b32.xlu0 %v771, 32
      %v861 = vpop.permute.xlu0 %860
      %862 = vrot.lane.b32.xlu0 %v772, 32
      %v863 = vpop.permute.xlu0 %862
      %864 = vrot.lane.b32.xlu0 %v773, 32
      %v865 = vpop.permute.xlu0 %864
      %866 = vrot.lane.b32.xlu0 %v774, 32
      %v867 = vpop.permute.xlu0 %866
      %868 = vrot.lane.b32.xlu0 %v775, 32
      %v869 = vpop.permute.xlu0 %868
      %870 = vrot.lane.b32.xlu0 %v776, 32
      %v871 = vpop.permute.xlu0 %870
      %872 = vrot.lane.b32.xlu0 %v777, 32
      %v873 = vpop.permute.xlu0 %872
      %922 = vrot.lane.b32.xlu0 %v778, 64
      %v923 = vpop.permute.xlu0 %922
      %924 = vrot.lane.b32.xlu0 %v779, 64
      %v925 = vpop.permute.xlu0 %924
      %926 = vrot.lane.b32.xlu0 %v780, 64
      %v927 = vpop.permute.xlu0 %926
      %928 = vrot.lane.b32.xlu0 %v781, 64
      %v929 = vpop.permute.xlu0 %928
      %930 = vrot.lane.b32.xlu0 %v782, 64
      %v931 = vpop.permute.xlu0 %930
      %932 = vrot.lane.b32.xlu0 %v783, 64
      %v933 = vpop.permute.xlu0 %932
      %934 = vrot.lane.b32.xlu0 %v784, 64
      %v935 = vpop.permute.xlu0 %934
      %936 = vrot.lane.b32.xlu0 %v785, 64
      %v937 = vpop.permute.xlu0 %936
      %938 = vrot.lane.b32.xlu0 %v786, 64
      %v939 = vpop.permute.xlu0 %938
      %940 = vrot.lane.b32.xlu0 %v787, 64
      %v941 = vpop.permute.xlu0 %940
      %942 = vrot.lane.b32.xlu0 %v788, 64
      %v943 = vpop.permute.xlu0 %942
      %944 = vrot.lane.b32.xlu0 %v789, 64
      %v945 = vpop.permute.xlu0 %944
      %946 = vrot.lane.b32.xlu0 %v790, 64
      %v947 = vpop.permute.xlu0 %946
      %948 = vrot.lane.b32.xlu0 %v791, 64
      %v949 = vpop.permute.xlu0 %948
      %950 = vrot.lane.b32.xlu0 %v792, 64
      %v951 = vpop.permute.xlu0 %950
      %952 = vrot.lane.b32.xlu0 %v793, 64
      %v953 = vpop.permute.xlu0 %952
      %954 = vrot.lane.b32.xlu0 %v794, 64
      %v955 = vpop.permute.xlu0 %954
      %956 = vrot.lane.b32.xlu0 %v795, 64
      %v957 = vpop.permute.xlu0 %956
      %958 = vrot.lane.b32.xlu0 %v796, 64
      %v959 = vpop.permute.xlu0 %958
      %960 = vrot.lane.b32.xlu0 %v797, 64
      %v961 = vpop.permute.xlu0 %960
      %962 = vrot.lane.b32.xlu0 %v798, 64
      %v963 = vpop.permute.xlu0 %962
      %964 = vrot.lane.b32.xlu0 %v799, 64
      %v965 = vpop.permute.xlu0 %964
      %966 = vrot.lane.b32.xlu0 %v800, 64
      %v967 = vpop.permute.xlu0 %966
      %968 = vrot.lane.b32.xlu0 %v801, 64
      %v969 = vpop.permute.xlu0 %968
      %v994 = vsel %vm632, %v730, %v827
      %v995 = vsel %vm632, %v731, %v829
      %v996 = vsel %vm632, %v732, %v831
      %v997 = vsel %vm632, %v733, %v833
      %v998 = vsel %vm632, %v734, %v835
      %v999 = vsel %vm632, %v735, %v837
      %v1000 = vsel %vm632, %v736, %v839
      %v1001 = vsel %vm632, %v737, %v841
      %v1002 = vsel %vm632, %v738, %v843
      %v1003 = vsel %vm632, %v739, %v845
      %v1004 = vsel %vm632, %v740, %v847
      %v1005 = vsel %vm632, %v741, %v849
      %v1006 = vsel %vm632, %v742, %v851
      %v1007 = vsel %vm632, %v743, %v853
      %v1008 = vsel %vm632, %v744, %v855
      %v1009 = vsel %vm632, %v745, %v857
      %v1010 = vsel %vm632, %v746, %v859
      %v1011 = vsel %vm632, %v747, %v861
      %v1012 = vsel %vm632, %v748, %v863
      %v1013 = vsel %vm632, %v749, %v865
      %v1014 = vsel %vm632, %v750, %v867
      %v1015 = vsel %vm632, %v751, %v869
      %v1016 = vsel %vm632, %v752, %v871
      %v1017 = vsel %vm632, %v753, %v873
      %vm1018 = vcmask 523264
      %v1019 = vsel %vm1018, %v994, %v923
      %v1020 = vsel %vm1018, %v995, %v925
      %v1021 = vsel %vm1018, %v996, %v927
      %v1022 = vsel %vm1018, %v997, %v929
      %v1023 = vsel %vm1018, %v998, %v931
      %v1024 = vsel %vm1018, %v999, %v933
      %v1025 = vsel %vm1018, %v1000, %v935
      %v1026 = vsel %vm1018, %v1001, %v937
      %v1027 = vsel %vm1018, %v1002, %v939
      %v1028 = vsel %vm1018, %v1003, %v941
      %v1029 = vsel %vm1018, %v1004, %v943
      %v1030 = vsel %vm1018, %v1005, %v945
      %v1031 = vsel %vm1018, %v1006, %v947
      %v1032 = vsel %vm1018, %v1007, %v949
      %v1033 = vsel %vm1018, %v1008, %v951
      %v1034 = vsel %vm1018, %v1009, %v953
      %v1035 = vsel %vm1018, %v1010, %v955
      %v1036 = vsel %vm1018, %v1011, %v957
      %v1037 = vsel %vm1018, %v1012, %v959
      %v1038 = vsel %vm1018, %v1013, %v961
      %v1039 = vsel %vm1018, %v1014, %v963
      %v1040 = vsel %vm1018, %v1015, %v965
      %v1041 = vsel %vm1018, %v1016, %v967
      %v1042 = vsel %vm1018, %v1017, %v969
      %v1043 = vld [vmem:[%s5] sm:$0xff]
      %v1044 = vld [vmem:[%s5 + $0x8] sm:$0xff]
      %v1045 = vld [vmem:[%s5 + $0x10] sm:$0xff]
      %v1046 = vld [vmem:[%s5 + $0x18] sm:$0xff]
      %v1047 = vld [vmem:[%s5 + $0x20] sm:$0xff]
      %v1048 = vld [vmem:[%s5 + $0x28] sm:$0xff]
      %v1049 = vld [vmem:[%s5 + $0x30] sm:$0xff]
      %v1050 = vld [vmem:[%s5 + $0x38] sm:$0xff]
      %v1051 = vld [vmem:[%s5 + $0x40] sm:$0xff]
      %v1052 = vld [vmem:[%s5 + $0x48] sm:$0xff]
      %v1053 = vld [vmem:[%s5 + $0x50] sm:$0xff]
      %v1054 = vld [vmem:[%s5 + $0x58] sm:$0xff]
      %s1055 = scalar_lea.vmem %s5, 96
      %v1056 = vld [vmem:[%s1055] sm:$0xff]
      %v1057 = vld [vmem:[%s1055 + $0x8] sm:$0xff]
      %v1058 = vld [vmem:[%s1055 + $0x10] sm:$0xff]
      %v1059 = vld [vmem:[%s1055 + $0x18] sm:$0xff]
      %v1060 = vld [vmem:[%s1055 + $0x20] sm:$0xff]
      %v1061 = vld [vmem:[%s1055 + $0x28] sm:$0xff]
      %v1062 = vld [vmem:[%s1055 + $0x30] sm:$0xff]
      %v1063 = vld [vmem:[%s1055 + $0x38] sm:$0xff]
      %v1064 = vld [vmem:[%s1055 + $0x40] sm:$0xff]
      %v1065 = vld [vmem:[%s1055 + $0x48] sm:$0xff]
      %v1066 = vld [vmem:[%s1055 + $0x50] sm:$0xff]
      %v1067 = vld [vmem:[%s1055 + $0x58] sm:$0xff]
      %vm1068 = vcmask 785408
      %v1070 = vsel %vm1068, %v1021, 0
      %v1073 = vsel %vm1068, %v1022, 0
      %v1076 = vsel %vm1068, %v1023, 0
      %v1079 = vsel %vm1068, %v1024, 0
      %v1082 = vsel %vm1068, %v1025, 0
      %v1085 = vsel %vm1068, %v1026, 0
      %v1088 = vsel %vm1068, %v1027, 0
      %v1091 = vsel %vm1068, %v1028, 0
      %v1094 = vsel %vm1068, %v1029, 0
      %v1097 = vsel %vm1068, %v1030, 0
      %v1100 = vsel %vm1068, %v1031, 0
      %v1103 = vsel %vm1068, %v1032, 0
      %v1106 = vsel %vm1068, %v1033, 0
      %v1109 = vsel %vm1068, %v1034, 0
      %v1112 = vsel %vm1068, %v1035, 0
      %v1115 = vsel %vm1068, %v1036, 0
      %v1118 = vsel %vm1068, %v1037, 0
      %v1121 = vsel %vm1068, %v1038, 0
      %v1124 = vsel %vm1068, %v1039, 0
      %v1127 = vsel %vm1068, %v1040, 0
      %1129 = vmatpush.msra.mxu0 0.0
      %1130 = vmatpush.msra.mxu0 0.0
      %1131 = vmatpush.msra.mxu0 0.0
      %1132 = vmatpush.msra.mxu0 0.0
      %1133 = vmatpush.msra.mxu0 %v1067
      %1134 = vmatpush.msra.mxu0 %v1066
      %1135 = vmatpush.msra.mxu0 %v1065
      %1136 = vmatpush.msra.mxu0 %v1064
      %1137 = vmatpush.msra.mxu0 %v1063
      %1138 = vmatpush.msra.mxu0 %v1062
      %1139 = vmatpush.msra.mxu0 %v1061
      %1140 = vmatpush.msra.mxu0 %v1060
      %1141 = vmatpush.msra.mxu0 %v1059
      %1142 = vmatpush.msra.mxu0 %v1058
      %1143 = vmatpush.msra.mxu0 %v1057
      %1144 = vmatpush.msra.mxu0 %v1056
      %1145 = vmatmul.f32.gmra.mxu0 %v1070
      %v1146 = vpop.f32.mrf.mxu0
      %v1147 = vadd.f32 0.0, %v1146
      %1148 = vmatmul.f32.gmra.mxu0 %v1073
      %v1149 = vpop.f32.mrf.mxu0
      %v1150 = vadd.f32 0.0, %v1149
      %1151 = vmatmul.f32.gmra.mxu0 %v1076
      %v1152 = vpop.f32.mrf.mxu0
      %v1153 = vadd.f32 0.0, %v1152
      %1154 = vmatmul.f32.gmra.mxu0 %v1079
      %v1155 = vpop.f32.mrf.mxu0
      %v1156 = vadd.f32 0.0, %v1155
      %1157 = vmatmul.f32.gmra.mxu0 %v1082
      %v1158 = vpop.f32.mrf.mxu0
      %v1159 = vadd.f32 0.0, %v1158
      %1160 = vmatmul.f32.gmra.mxu0 %v1085
      %v1161 = vpop.f32.mrf.mxu0
      %v1162 = vadd.f32 0.0, %v1161
      %1163 = vmatmul.f32.gmra.mxu0 %v1088
      %v1164 = vpop.f32.mrf.mxu0
      %v1165 = vadd.f32 0.0, %v1164
      %1166 = vmatmul.f32.gmra.mxu0 %v1091
      %v1167 = vpop.f32.mrf.mxu0
      %v1168 = vadd.f32 0.0, %v1167
      %1169 = vmatmul.f32.gmra.mxu0 %v1094
      %v1170 = vpop.f32.mrf.mxu0
      %v1171 = vadd.f32 0.0, %v1170
      %1172 = vmatmul.f32.gmra.mxu0 %v1097
      %v1173 = vpop.f32.mrf.mxu0
      %v1174 = vadd.f32 0.0, %v1173
      %1175 = vmatmul.f32.gmra.mxu0 %v1100
      %v1176 = vpop.f32.mrf.mxu0
      %v1177 = vadd.f32 0.0, %v1176
      %1178 = vmatmul.f32.gmra.mxu0 %v1103
      %v1179 = vpop.f32.mrf.mxu0
      %v1180 = vadd.f32 0.0, %v1179
      %1181 = vmatmul.f32.gmra.mxu0 %v1106
      %v1182 = vpop.f32.mrf.mxu0
      %v1183 = vadd.f32 0.0, %v1182
      %1184 = vmatmul.f32.gmra.mxu0 %v1109
      %v1185 = vpop.f32.mrf.mxu0
      %v1186 = vadd.f32 0.0, %v1185
      %1187 = vmatmul.f32.gmra.mxu0 %v1112
      %v1188 = vpop.f32.mrf.mxu0
      %v1189 = vadd.f32 0.0, %v1188
      %1190 = vmatmul.f32.gmra.mxu0 %v1115
      %v1191 = vpop.f32.mrf.mxu0
      %v1192 = vadd.f32 0.0, %v1191
      %1193 = vmatmul.f32.gmra.mxu0 %v1118
      %v1194 = vpop.f32.mrf.mxu0
      %v1195 = vadd.f32 0.0, %v1194
      %1196 = vmatmul.f32.gmra.mxu0 %v1121
      %v1197 = vpop.f32.mrf.mxu0
      %v1198 = vadd.f32 0.0, %v1197
      %1199 = vmatmul.f32.gmra.mxu0 %v1124
      %v1200 = vpop.f32.mrf.mxu0
      %v1201 = vadd.f32 0.0, %v1200
      %1202 = vmatmul.f32.gmra.mxu0 %v1127
      %v1203 = vpop.f32.mrf.mxu0
      %v1204 = vadd.f32 0.0, %v1203
      %1205 = vdwg.mxu0
      %v1207 = vsel %vm1068, %v1019, 0
      %v1210 = vsel %vm1068, %v1020, 0
      %1212 = vmatpush.msra.mxu0 0.0
      %1213 = vmatpush.msra.mxu0 0.0
      %1214 = vmatpush.msra.mxu0 0.0
      %1215 = vmatpush.msra.mxu0 0.0
      %1216 = vmatpush.msra.mxu0 %v1054
      %1217 = vmatpush.msra.mxu0 %v1053
      %1218 = vmatpush.msra.mxu0 %v1052
      %1219 = vmatpush.msra.mxu0 %v1051
      %1220 = vmatpush.msra.mxu0 %v1050
      %1221 = vmatpush.msra.mxu0 %v1049
      %1222 = vmatpush.msra.mxu0 %v1048
      %1223 = vmatpush.msra.mxu0 %v1047
      %1224 = vmatpush.msra.mxu0 %v1046
      %1225 = vmatpush.msra.mxu0 %v1045
      %1226 = vmatpush.msra.mxu0 %v1044
      %1227 = vmatpush.msra.mxu0 %v1043
      %1228 = vmatmul.f32.gmra.mxu0 %v1207
      %v1229 = vpop.f32.mrf.mxu0
      %v1230 = vadd.f32 %v1147, %v1229
      %1231 = vmatmul.f32.gmra.mxu0 %v1210
      %v1232 = vpop.f32.mrf.mxu0
      %v1233 = vadd.f32 %v1150, %v1232
      %1234 = vmatmul.f32.gmra.mxu0 %v1070
      %v1235 = vpop.f32.mrf.mxu0
      %v1236 = vadd.f32 %v1153, %v1235
      %1237 = vmatmul.f32.gmra.mxu0 %v1073
      %v1238 = vpop.f32.mrf.mxu0
      %v1239 = vadd.f32 %v1156, %v1238
      %1240 = vmatmul.f32.gmra.mxu0 %v1076
      %v1241 = vpop.f32.mrf.mxu0
      %v1242 = vadd.f32 %v1159, %v1241
      %1243 = vmatmul.f32.gmra.mxu0 %v1079
      %v1244 = vpop.f32.mrf.mxu0
      %v1245 = vadd.f32 %v1162, %v1244
      %1246 = vmatmul.f32.gmra.mxu0 %v1082
      %v1247 = vpop.f32.mrf.mxu0
      %v1248 = vadd.f32 %v1165, %v1247
      %1249 = vmatmul.f32.gmra.mxu0 %v1085
      %v1250 = vpop.f32.mrf.mxu0
      %v1251 = vadd.f32 %v1168, %v1250
      %1252 = vmatmul.f32.gmra.mxu0 %v1088
      %v1253 = vpop.f32.mrf.mxu0
      %v1254 = vadd.f32 %v1171, %v1253
      %1255 = vmatmul.f32.gmra.mxu0 %v1091
      %v1256 = vpop.f32.mrf.mxu0
      %v1257 = vadd.f32 %v1174, %v1256
      %1258 = vmatmul.f32.gmra.mxu0 %v1094
      %v1259 = vpop.f32.mrf.mxu0
      %v1260 = vadd.f32 %v1177, %v1259
      %1261 = vmatmul.f32.gmra.mxu0 %v1097
      %v1262 = vpop.f32.mrf.mxu0
      %v1263 = vadd.f32 %v1180, %v1262
      %1264 = vmatmul.f32.gmra.mxu0 %v1100
      %v1265 = vpop.f32.mrf.mxu0
      %v1266 = vadd.f32 %v1183, %v1265
      %1267 = vmatmul.f32.gmra.mxu0 %v1103
      %v1268 = vpop.f32.mrf.mxu0
      %v1269 = vadd.f32 %v1186, %v1268
      %1270 = vmatmul.f32.gmra.mxu0 %v1106
      %v1271 = vpop.f32.mrf.mxu0
      %v1272 = vadd.f32 %v1189, %v1271
      %1273 = vmatmul.f32.gmra.mxu0 %v1109
      %v1274 = vpop.f32.mrf.mxu0
      %v1275 = vadd.f32 %v1192, %v1274
      %1276 = vmatmul.f32.gmra.mxu0 %v1112
      %v1277 = vpop.f32.mrf.mxu0
      %v1278 = vadd.f32 %v1195, %v1277
      %1279 = vmatmul.f32.gmra.mxu0 %v1115
      %v1280 = vpop.f32.mrf.mxu0
      %v1281 = vadd.f32 %v1198, %v1280
      %1282 = vmatmul.f32.gmra.mxu0 %v1118
      %v1283 = vpop.f32.mrf.mxu0
      %v1284 = vadd.f32 %v1201, %v1283
      %1285 = vmatmul.f32.gmra.mxu0 %v1121
      %v1286 = vpop.f32.mrf.mxu0
      %v1287 = vadd.f32 %v1204, %v1286
      %1288 = vdwg.mxu0
      %s1289 = scalar_lea.vmem %s5, 192
      %v1290 = vld [vmem:[%s1289] sm:$0xff]
      %v1291 = vld [vmem:[%s1289 + $0x8] sm:$0xff]
      %v1292 = vld [vmem:[%s1289 + $0x10] sm:$0xff]
      %v1293 = vld [vmem:[%s1289 + $0x18] sm:$0xff]
      %v1294 = vld [vmem:[%s1289 + $0x20] sm:$0xff]
      %v1295 = vld [vmem:[%s1289 + $0x28] sm:$0xff]
      %v1296 = vld [vmem:[%s1289 + $0x30] sm:$0xff]
      %v1297 = vld [vmem:[%s1289 + $0x38] sm:$0xff]
      %v1298 = vld [vmem:[%s1289 + $0x40] sm:$0xff]
      %v1299 = vld [vmem:[%s1289 + $0x48] sm:$0xff]
      %v1300 = vld [vmem:[%s1289 + $0x50] sm:$0xff]
      %v1301 = vld [vmem:[%s1289 + $0x58] sm:$0xff]
      %v1303 = vsel %vm1068, %v1041, 0
      %v1306 = vsel %vm1068, %v1042, 0
      %1308 = vmatpush.msra.mxu0 0.0
      %1309 = vmatpush.msra.mxu0 0.0
      %1310 = vmatpush.msra.mxu0 0.0
      %1311 = vmatpush.msra.mxu0 0.0
      %1312 = vmatpush.msra.mxu0 %v1301
      %1313 = vmatpush.msra.mxu0 %v1300
      %1314 = vmatpush.msra.mxu0 %v1299
      %1315 = vmatpush.msra.mxu0 %v1298
      %1316 = vmatpush.msra.mxu0 %v1297
      %1317 = vmatpush.msra.mxu0 %v1296
      %1318 = vmatpush.msra.mxu0 %v1295
      %1319 = vmatpush.msra.mxu0 %v1294
      %1320 = vmatpush.msra.mxu0 %v1293
      %1321 = vmatpush.msra.mxu0 %v1292
      %1322 = vmatpush.msra.mxu0 %v1291
      %1323 = vmatpush.msra.mxu0 %v1290
      %1324 = vmatmul.f32.gmra.mxu0 %v1076
      %v1325 = vpop.f32.mrf.mxu0
      %v1326 = vadd.f32 0.0, %v1325
      %1327 = vmatmul.f32.gmra.mxu0 %v1079
      %v1328 = vpop.f32.mrf.mxu0
      %v1329 = vadd.f32 0.0, %v1328
      %1330 = vmatmul.f32.gmra.mxu0 %v1082
      %v1331 = vpop.f32.mrf.mxu0
      %v1332 = vadd.f32 0.0, %v1331
      %1333 = vmatmul.f32.gmra.mxu0 %v1085
      %v1334 = vpop.f32.mrf.mxu0
      %v1335 = vadd.f32 0.0, %v1334
      %1336 = vmatmul.f32.gmra.mxu0 %v1088
      %v1337 = vpop.f32.mrf.mxu0
      %v1338 = vadd.f32 0.0, %v1337
      %1339 = vmatmul.f32.gmra.mxu0 %v1091
      %v1340 = vpop.f32.mrf.mxu0
      %v1341 = vadd.f32 0.0, %v1340
      %1342 = vmatmul.f32.gmra.mxu0 %v1094
      %v1343 = vpop.f32.mrf.mxu0
      %v1344 = vadd.f32 0.0, %v1343
      %1345 = vmatmul.f32.gmra.mxu0 %v1097
      %v1346 = vpop.f32.mrf.mxu0
      %v1347 = vadd.f32 0.0, %v1346
      %1348 = vmatmul.f32.gmra.mxu0 %v1100
      %v1349 = vpop.f32.mrf.mxu0
      %v1350 = vadd.f32 0.0, %v1349
      %1351 = vmatmul.f32.gmra.mxu0 %v1103
      %v1352 = vpop.f32.mrf.mxu0
      %v1353 = vadd.f32 0.0, %v1352
      %1354 = vmatmul.f32.gmra.mxu0 %v1106
      %v1355 = vpop.f32.mrf.mxu0
      %v1356 = vadd.f32 0.0, %v1355
      %1357 = vmatmul.f32.gmra.mxu0 %v1109
      %v1358 = vpop.f32.mrf.mxu0
      %v1359 = vadd.f32 0.0, %v1358
      %1360 = vmatmul.f32.gmra.mxu0 %v1112
      %v1361 = vpop.f32.mrf.mxu0
      %v1362 = vadd.f32 0.0, %v1361
      %1363 = vmatmul.f32.gmra.mxu0 %v1115
      %v1364 = vpop.f32.mrf.mxu0
      %v1365 = vadd.f32 0.0, %v1364
      %1366 = vmatmul.f32.gmra.mxu0 %v1118
      %v1367 = vpop.f32.mrf.mxu0
      %v1368 = vadd.f32 0.0, %v1367
      %1369 = vmatmul.f32.gmra.mxu0 %v1121
      %v1370 = vpop.f32.mrf.mxu0
      %v1371 = vadd.f32 0.0, %v1370
      %1372 = vmatmul.f32.gmra.mxu0 %v1124
      %v1373 = vpop.f32.mrf.mxu0
      %v1374 = vadd.f32 0.0, %v1373
      %1375 = vmatmul.f32.gmra.mxu0 %v1127
      %v1376 = vpop.f32.mrf.mxu0
      %v1377 = vadd.f32 0.0, %v1376
      %1378 = vmatmul.f32.gmra.mxu0 %v1303
      %v1379 = vpop.f32.mrf.mxu0
      %v1380 = vadd.f32 0.0, %v1379
      %1381 = vmatmul.f32.gmra.mxu0 %v1306
      %v1382 = vpop.f32.mrf.mxu0
      %v1383 = vadd.f32 0.0, %v1382
      %1384 = vdwg.mxu0
      %v1385 = vadd.f32 %v1230, %v1326
      %v1386 = vadd.f32 %v1233, %v1329
      %v1387 = vadd.f32 %v1236, %v1332
      %v1388 = vadd.f32 %v1239, %v1335
      %v1389 = vadd.f32 %v1242, %v1338
      %v1390 = vadd.f32 %v1245, %v1341
      %v1391 = vadd.f32 %v1248, %v1344
      %v1392 = vadd.f32 %v1251, %v1347
      %v1393 = vadd.f32 %v1254, %v1350
      %v1394 = vadd.f32 %v1257, %v1353
      %v1395 = vadd.f32 %v1260, %v1356
      %v1396 = vadd.f32 %v1263, %v1359
      %v1397 = vadd.f32 %v1266, %v1362
      %v1398 = vadd.f32 %v1269, %v1365
      %v1399 = vadd.f32 %v1272, %v1368
      %v1400 = vadd.f32 %v1275, %v1371
      %v1401 = vadd.f32 %v1278, %v1374
      %v1402 = vadd.f32 %v1281, %v1377
      %v1403 = vadd.f32 %v1284, %v1380
      %v1404 = vadd.f32 %v1287, %v1383
      %v1405 = vld [vmem:[%s6] sm:$0x1]
      %v1407 = vperm.slane %v1405, 0
      %v1409 = vadd.f32 %v1385, %v1407
      %v1410 = vadd.f32 %v1386, %v1407
      %v1411 = vadd.f32 %v1387, %v1407
      %v1412 = vadd.f32 %v1388, %v1407
      %v1413 = vadd.f32 %v1389, %v1407
      %v1414 = vadd.f32 %v1390, %v1407
      %v1415 = vadd.f32 %v1391, %v1407
      %v1416 = vadd.f32 %v1392, %v1407
      %v1417 = vadd.f32 %v1393, %v1407
      %v1418 = vadd.f32 %v1394, %v1407
      %v1419 = vadd.f32 %v1395, %v1407
      %v1420 = vadd.f32 %v1396, %v1407
      %v1421 = vadd.f32 %v1397, %v1407
      %v1422 = vadd.f32 %v1398, %v1407
      %v1423 = vadd.f32 %v1399, %v1407
      %v1424 = vadd.f32 %v1400, %v1407
      %v1425 = vadd.f32 %v1401, %v1407
      %v1426 = vadd.f32 %v1402, %v1407
      %v1427 = vadd.f32 %v1403, %v1407
      %v1428 = vadd.f32 %v1404, %v1407
      %v1429 = vmax.f32 %v1409, 0.0
      %v1430 = vmax.f32 %v1410, 0.0
      %v1431 = vmax.f32 %v1411, 0.0
      %v1432 = vmax.f32 %v1412, 0.0
      %v1433 = vmax.f32 %v1413, 0.0
      %v1434 = vmax.f32 %v1414, 0.0
      %v1435 = vmax.f32 %v1415, 0.0
      %v1436 = vmax.f32 %v1416, 0.0
      %v1437 = vmax.f32 %v1417, 0.0
      %v1438 = vmax.f32 %v1418, 0.0
      %v1439 = vmax.f32 %v1419, 0.0
      %v1440 = vmax.f32 %v1420, 0.0
      %v1441 = vmax.f32 %v1421, 0.0
      %v1442 = vmax.f32 %v1422, 0.0
      %v1443 = vmax.f32 %v1423, 0.0
      %v1444 = vmax.f32 %v1424, 0.0
      %v1445 = vmax.f32 %v1425, 0.0
      %v1446 = vmax.f32 %v1426, 0.0
      %v1447 = vmax.f32 %v1427, 0.0
      %v1448 = vmax.f32 %v1428, 0.0
      %1449 = vst.msk [vmem:[#allocation3] sm:$0xff] %vm632, 0.0
      %1450 = vst.msk [vmem:[#allocation3 + $0x8] sm:$0xff] %vm632, 0.0
      %1451 = vst.msk [vmem:[#allocation3 + $0x10] sm:$0x3] %vm635, 0.0
      %1452 = vst.msk [vmem:[#allocation3 + $0x18] sm:$0xff] %vm632, 0.0
      %1453 = vst.msk [vmem:[#allocation3 + $0x20] sm:$0xff] %vm632, 0.0
      %1454 = vst.msk [vmem:[#allocation3 + $0x28] sm:$0x3] %vm635, 0.0
      %1455 = vst.msk [vmem:[#allocation3 + $0x30] sm:$0xff] %vm632, 0.0
      %1456 = vst.msk [vmem:[#allocation3 + $0x38] sm:$0xff] %vm632, 0.0
      %1457 = vst.msk [vmem:[#allocation3 + $0x40] sm:$0x3] %vm635, 0.0
      %1458 = vst.msk [vmem:[#allocation3 + $0x48] sm:$0xff] %vm632, 0.0
      %1459 = vst.msk [vmem:[#allocation3 + $0x50] sm:$0xff] %vm632, 0.0
      %1460 = vst.msk [vmem:[#allocation3 + $0x58] sm:$0x3] %vm635, 0.0
      %1461 = vst.msk [vmem:[#allocation3 + $0x60] sm:$0xff] %vm632, 0.0
      %1462 = vst.msk [vmem:[#allocation3 + $0x68] sm:$0xff] %vm632, 0.0
      %1463 = vst.msk [vmem:[#allocation3 + $0x70] sm:$0x3] %vm635, 0.0
      %1464 = vst.msk [vmem:[#allocation3 + $0x78] sm:$0xff] %vm632, 0.0
      %1465 = vst.msk [vmem:[#allocation3 + $0x80] sm:$0xff] %vm632, 0.0
      %1466 = vst.msk [vmem:[#allocation3 + $0x88] sm:$0x3] %vm635, 0.0
      %1467 = vst.msk [vmem:[#allocation3 + $0x90] sm:$0xff] %vm632, 0.0
      %1468 = vst.msk [vmem:[#allocation3 + $0x98] sm:$0xff] %vm632, 0.0
      %1469 = vst.msk [vmem:[#allocation3 + $0xa0] sm:$0x3] %vm635, 0.0
      %1470 = vst.msk [vmem:[#allocation3 + $0xa8] sm:$0xff] %vm632, 0.0
      %1471 = vst.msk [vmem:[#allocation3 + $0xb0] sm:$0xff] %vm632, 0.0
      %1472 = vst.msk [vmem:[#allocation3 + $0xb8] sm:$0x3] %vm635, 0.0
      %1473 = vst.msk [vmem:[#allocation3 + $0xc0] sm:$0xff] %vm632, 0.0
      %1474 = vst.msk [vmem:[#allocation3 + $0xc8] sm:$0xff] %vm632, 0.0
      %1475 = vst.msk [vmem:[#allocation3 + $0xd0] sm:$0x3] %vm635, 0.0
      %1476 = vst.msk [vmem:[#allocation3 + $0xd8] sm:$0xff] %vm632, 0.0
      %1477 = vst.msk [vmem:[#allocation3 + $0xe0] sm:$0xff] %vm632, 0.0
      %1478 = vst.msk [vmem:[#allocation3 + $0xe8] sm:$0x3] %vm635, 0.0
      %1479 = vst.msk [vmem:[#allocation3 + $0x1] sm:$0xff] %vm632, %v1429
      %1480 = vst.msk [vmem:[#allocation3 + $0x9] sm:$0xff] %vm632, %v1430
      %1481 = vst.msk [vmem:[#allocation3 + $0x19] sm:$0xff] %vm632, %v1431
      %1482 = vst.msk [vmem:[#allocation3 + $0x21] sm:$0xff] %vm632, %v1432
      %1483 = vst.msk [vmem:[#allocation3 + $0x31] sm:$0xff] %vm632, %v1433
      %1484 = vst.msk [vmem:[#allocation3 + $0x39] sm:$0xff] %vm632, %v1434
      %1485 = vst.msk [vmem:[#allocation3 + $0x49] sm:$0xff] %vm632, %v1435
      %1486 = vst.msk [vmem:[#allocation3 + $0x51] sm:$0xff] %vm632, %v1436
      %1487 = vst.msk [vmem:[#allocation3 + $0x61] sm:$0xff] %vm632, %v1437
      %1488 = vst.msk [vmem:[#allocation3 + $0x69] sm:$0xff] %vm632, %v1438
      %1489 = vst.msk [vmem:[#allocation3 + $0x79] sm:$0xff] %vm632, %v1439
      %1490 = vst.msk [vmem:[#allocation3 + $0x81] sm:$0xff] %vm632, %v1440
      %1491 = vst.msk [vmem:[#allocation3 + $0x91] sm:$0xff] %vm632, %v1441
      %1492 = vst.msk [vmem:[#allocation3 + $0x99] sm:$0xff] %vm632, %v1442
      %1493 = vst.msk [vmem:[#allocation3 + $0xa9] sm:$0xff] %vm632, %v1443
      %1494 = vst.msk [vmem:[#allocation3 + $0xb1] sm:$0xff] %vm632, %v1444
      %1495 = vst.msk [vmem:[#allocation3 + $0xc1] sm:$0xff] %vm632, %v1445
      %1496 = vst.msk [vmem:[#allocation3 + $0xc9] sm:$0xff] %vm632, %v1446
      %1497 = vst.msk [vmem:[#allocation3 + $0xd9] sm:$0xff] %vm632, %v1447
      %1498 = vst.msk [vmem:[#allocation3 + $0xe1] sm:$0xff] %vm632, %v1448
      %p1499 = scmp.eq.s32.totalorder %s25, 0
      // Predicated region
      $region65: #{residual_blocks_with_input_conv.4} parent=55 // pred_check
        %p1500 = pneg %p1499
      $region66: #{residual_blocks_with_input_conv.4} parent=55 // pred_check_branch
        %1502 = sbr.rel (%p1500) target = $region68
      $region67: #{residual_blocks_with_input_conv.4} parent=55 // pred_region
        %1503 = vst.msk [vmem:[#allocation3] sm:$0xff] %vm632, 0.0
        %1504 = vst.msk [vmem:[#allocation3 + $0x8] sm:$0xff] %vm632, 0.0
        %1505 = vst.msk [vmem:[#allocation3 + $0x10] sm:$0x3] %vm635, 0.0
      $region68: #{residual_blocks_with_input_conv.4} parent=55 // pred_fallthru
        _
      %p1506 = scmp.eq.s32.totalorder %s25, 1
      // Predicated region
      $region69: #{residual_blocks_with_input_conv.4} parent=55 // pred_check
        %p1507 = pneg %p1506
      $region70: #{residual_blocks_with_input_conv.4} parent=55 // pred_check_branch
        %1509 = sbr.rel (%p1507) target = $region72
      $region71: #{residual_blocks_with_input_conv.4} parent=55 // pred_region
        %s1510 = scalar_lea.vmem [#allocation3], 216
        %1511 = vst.msk [vmem:[%s1510] sm:$0xff] %vm632, 0.0
        %1512 = vst.msk [vmem:[%s1510 + $0x8] sm:$0xff] %vm632, 0.0
        %1513 = vst.msk [vmem:[%s1510 + $0x10] sm:$0x3] %vm635, 0.0
      $region72: #{residual_blocks_with_input_conv.4} parent=55 // pred_fallthru
        _
      %v1514 = vld [vmem:[#allocation3] sm:$0xff]
      %v1515 = vld [vmem:[#allocation3 + $0x8] sm:$0xff]
      %v1516 = vld [vmem:[#allocation3 + $0x18] sm:$0xff]
      %v1517 = vld [vmem:[#allocation3 + $0x20] sm:$0xff]
      %v1518 = vld [vmem:[#allocation3 + $0x30] sm:$0xff]
      %v1519 = vld [vmem:[#allocation3 + $0x38] sm:$0xff]
      %v1520 = vld [vmem:[#allocation3 + $0x48] sm:$0xff]
      %v1521 = vld [vmem:[#allocation3 + $0x50] sm:$0xff]
      %v1522 = vld [vmem:[#allocation3 + $0x60] sm:$0xff]
      %v1523 = vld [vmem:[#allocation3 + $0x68] sm:$0xff]
      %v1524 = vld [vmem:[#allocation3 + $0x78] sm:$0xff]
      %v1525 = vld [vmem:[#allocation3 + $0x80] sm:$0xff]
      %v1526 = vld [vmem:[#allocation3 + $0x90] sm:$0xff]
      %v1527 = vld [vmem:[#allocation3 + $0x98] sm:$0xff]
      %v1528 = vld [vmem:[#allocation3 + $0xa8] sm:$0xff]
      %v1529 = vld [vmem:[#allocation3 + $0xb0] sm:$0xff]
      %v1530 = vld [vmem:[#allocation3 + $0xc0] sm:$0xff]
      %v1531 = vld [vmem:[#allocation3 + $0xc8] sm:$0xff]
      %v1532 = vld [vmem:[#allocation3 + $0xd8] sm:$0xff]
      %v1533 = vld [vmem:[#allocation3 + $0xe0] sm:$0xff]
      %v1534 = vld [vmem:[#allocation3 + $0x1] sm:$0xff]
      %v1535 = vld [vmem:[#allocation3 + $0x9] sm:$0xff]
      %v1536 = vld [vmem:[#allocation3 + $0x19] sm:$0xff]
      %v1537 = vld [vmem:[#allocation3 + $0x21] sm:$0xff]
      %v1538 = vld [vmem:[#allocation3 + $0x31] sm:$0xff]
      %v1539 = vld [vmem:[#allocation3 + $0x39] sm:$0xff]
      %v1540 = vld [vmem:[#allocation3 + $0x49] sm:$0xff]
      %v1541 = vld [vmem:[#allocation3 + $0x51] sm:$0xff]
      %v1542 = vld [vmem:[#allocation3 + $0x61] sm:$0xff]
      %v1543 = vld [vmem:[#allocation3 + $0x69] sm:$0xff]
      %v1544 = vld [vmem:[#allocation3 + $0x79] sm:$0xff]
      %v1545 = vld [vmem:[#allocation3 + $0x81] sm:$0xff]
      %v1546 = vld [vmem:[#allocation3 + $0x91] sm:$0xff]
      %v1547 = vld [vmem:[#allocation3 + $0x99] sm:$0xff]
      %v1548 = vld [vmem:[#allocation3 + $0xa9] sm:$0xff]
      %v1549 = vld [vmem:[#allocation3 + $0xb1] sm:$0xff]
      %v1550 = vld [vmem:[#allocation3 + $0xc1] sm:$0xff]
      %v1551 = vld [vmem:[#allocation3 + $0xc9] sm:$0xff]
      %v1552 = vld [vmem:[#allocation3 + $0xd9] sm:$0xff]
      %v1553 = vld [vmem:[#allocation3 + $0xe1] sm:$0xff]
      %v1554 = vld [vmem:[#allocation3 + $0x2] sm:$0xff]
      %v1555 = vld [vmem:[#allocation3 + $0xa] sm:$0xff]
      %v1556 = vld [vmem:[#allocation3 + $0x1a] sm:$0xff]
      %v1557 = vld [vmem:[#allocation3 + $0x22] sm:$0xff]
      %v1558 = vld [vmem:[#allocation3 + $0x32] sm:$0xff]
      %v1559 = vld [vmem:[#allocation3 + $0x3a] sm:$0xff]
      %v1560 = vld [vmem:[#allocation3 + $0x4a] sm:$0xff]
      %v1561 = vld [vmem:[#allocation3 + $0x52] sm:$0xff]
      %v1562 = vld [vmem:[#allocation3 + $0x62] sm:$0xff]
      %v1563 = vld [vmem:[#allocation3 + $0x6a] sm:$0xff]
      %v1564 = vld [vmem:[#allocation3 + $0x7a] sm:$0xff]
      %v1565 = vld [vmem:[#allocation3 + $0x82] sm:$0xff]
      %v1566 = vld [vmem:[#allocation3 + $0x92] sm:$0xff]
      %v1567 = vld [vmem:[#allocation3 + $0x9a] sm:$0xff]
      %v1568 = vld [vmem:[#allocation3 + $0xaa] sm:$0xff]
      %v1569 = vld [vmem:[#allocation3 + $0xb2] sm:$0xff]
      %v1570 = vld [vmem:[#allocation3 + $0xc2] sm:$0xff]
      %v1571 = vld [vmem:[#allocation3 + $0xca] sm:$0xff]
      %v1572 = vld [vmem:[#allocation3 + $0xda] sm:$0xff]
      %v1573 = vld [vmem:[#allocation3 + $0xe2] sm:$0xff]
      %1594 = vrot.lane.b32.xlu0 %v1534, 32
      %v1595 = vpop.permute.xlu0 %1594
      %1596 = vrot.lane.b32.xlu0 %v1535, 32
      %v1597 = vpop.permute.xlu0 %1596
      %1598 = vrot.lane.b32.xlu0 %v1536, 32
      %v1599 = vpop.permute.xlu0 %1598
      %1600 = vrot.lane.b32.xlu0 %v1537, 32
      %v1601 = vpop.permute.xlu0 %1600
      %1602 = vrot.lane.b32.xlu0 %v1538, 32
      %v1603 = vpop.permute.xlu0 %1602
      %1604 = vrot.lane.b32.xlu0 %v1539, 32
      %v1605 = vpop.permute.xlu0 %1604
      %1606 = vrot.lane.b32.xlu0 %v1540, 32
      %v1607 = vpop.permute.xlu0 %1606
      %1608 = vrot.lane.b32.xlu0 %v1541, 32
      %v1609 = vpop.permute.xlu0 %1608
      %1610 = vrot.lane.b32.xlu0 %v1542, 32
      %v1611 = vpop.permute.xlu0 %1610
      %1612 = vrot.lane.b32.xlu0 %v1543, 32
      %v1613 = vpop.permute.xlu0 %1612
      %1614 = vrot.lane.b32.xlu0 %v1544, 32
      %v1615 = vpop.permute.xlu0 %1614
      %1616 = vrot.lane.b32.xlu0 %v1545, 32
      %v1617 = vpop.permute.xlu0 %1616
      %1618 = vrot.lane.b32.xlu0 %v1546, 32
      %v1619 = vpop.permute.xlu0 %1618
      %1620 = vrot.lane.b32.xlu0 %v1547, 32
      %v1621 = vpop.permute.xlu0 %1620
      %1622 = vrot.lane.b32.xlu0 %v1548, 32
      %v1623 = vpop.permute.xlu0 %1622
      %1624 = vrot.lane.b32.xlu0 %v1549, 32
      %v1625 = vpop.permute.xlu0 %1624
      %1626 = vrot.lane.b32.xlu0 %v1550, 32
      %v1627 = vpop.permute.xlu0 %1626
      %1628 = vrot.lane.b32.xlu0 %v1551, 32
      %v1629 = vpop.permute.xlu0 %1628
      %1630 = vrot.lane.b32.xlu0 %v1552, 32
      %v1631 = vpop.permute.xlu0 %1630
      %1632 = vrot.lane.b32.xlu0 %v1553, 32
      %v1633 = vpop.permute.xlu0 %1632
      %1674 = vrot.lane.b32.xlu0 %v1554, 64
      %v1675 = vpop.permute.xlu0 %1674
      %1676 = vrot.lane.b32.xlu0 %v1555, 64
      %v1677 = vpop.permute.xlu0 %1676
      %1678 = vrot.lane.b32.xlu0 %v1556, 64
      %v1679 = vpop.permute.xlu0 %1678
      %1680 = vrot.lane.b32.xlu0 %v1557, 64
      %v1681 = vpop.permute.xlu0 %1680
      %1682 = vrot.lane.b32.xlu0 %v1558, 64
      %v1683 = vpop.permute.xlu0 %1682
      %1684 = vrot.lane.b32.xlu0 %v1559, 64
      %v1685 = vpop.permute.xlu0 %1684
      %1686 = vrot.lane.b32.xlu0 %v1560, 64
      %v1687 = vpop.permute.xlu0 %1686
      %1688 = vrot.lane.b32.xlu0 %v1561, 64
      %v1689 = vpop.permute.xlu0 %1688
      %1690 = vrot.lane.b32.xlu0 %v1562, 64
      %v1691 = vpop.permute.xlu0 %1690
      %1692 = vrot.lane.b32.xlu0 %v1563, 64
      %v1693 = vpop.permute.xlu0 %1692
      %1694 = vrot.lane.b32.xlu0 %v1564, 64
      %v1695 = vpop.permute.xlu0 %1694
      %1696 = vrot.lane.b32.xlu0 %v1565, 64
      %v1697 = vpop.permute.xlu0 %1696
      %1698 = vrot.lane.b32.xlu0 %v1566, 64
      %v1699 = vpop.permute.xlu0 %1698
      %1700 = vrot.lane.b32.xlu0 %v1567, 64
      %v1701 = vpop.permute.xlu0 %1700
      %1702 = vrot.lane.b32.xlu0 %v1568, 64
      %v1703 = vpop.permute.xlu0 %1702
      %1704 = vrot.lane.b32.xlu0 %v1569, 64
      %v1705 = vpop.permute.xlu0 %1704
      %1706 = vrot.lane.b32.xlu0 %v1570, 64
      %v1707 = vpop.permute.xlu0 %1706
      %1708 = vrot.lane.b32.xlu0 %v1571, 64
      %v1709 = vpop.permute.xlu0 %1708
      %1710 = vrot.lane.b32.xlu0 %v1572, 64
      %v1711 = vpop.permute.xlu0 %1710
      %1712 = vrot.lane.b32.xlu0 %v1573, 64
      %v1713 = vpop.permute.xlu0 %1712
      %v1734 = vsel %vm632, %v1514, %v1595
      %v1735 = vsel %vm632, %v1515, %v1597
      %v1736 = vsel %vm632, %v1516, %v1599
      %v1737 = vsel %vm632, %v1517, %v1601
      %v1738 = vsel %vm632, %v1518, %v1603
      %v1739 = vsel %vm632, %v1519, %v1605
      %v1740 = vsel %vm632, %v1520, %v1607
      %v1741 = vsel %vm632, %v1521, %v1609
      %v1742 = vsel %vm632, %v1522, %v1611
      %v1743 = vsel %vm632, %v1523, %v1613
      %v1744 = vsel %vm632, %v1524, %v1615
      %v1745 = vsel %vm632, %v1525, %v1617
      %v1746 = vsel %vm632, %v1526, %v1619
      %v1747 = vsel %vm632, %v1527, %v1621
      %v1748 = vsel %vm632, %v1528, %v1623
      %v1749 = vsel %vm632, %v1529, %v1625
      %v1750 = vsel %vm632, %v1530, %v1627
      %v1751 = vsel %vm632, %v1531, %v1629
      %v1752 = vsel %vm632, %v1532, %v1631
      %v1753 = vsel %vm632, %v1533, %v1633
      %v1754 = vsel %vm1018, %v1734, %v1675
      %v1755 = vsel %vm1018, %v1735, %v1677
      %v1756 = vsel %vm1018, %v1736, %v1679
      %v1757 = vsel %vm1018, %v1737, %v1681
      %v1758 = vsel %vm1018, %v1738, %v1683
      %v1759 = vsel %vm1018, %v1739, %v1685
      %v1760 = vsel %vm1018, %v1740, %v1687
      %v1761 = vsel %vm1018, %v1741, %v1689
      %v1762 = vsel %vm1018, %v1742, %v1691
      %v1763 = vsel %vm1018, %v1743, %v1693
      %v1764 = vsel %vm1018, %v1744, %v1695
      %v1765 = vsel %vm1018, %v1745, %v1697
      %v1766 = vsel %vm1018, %v1746, %v1699
      %v1767 = vsel %vm1018, %v1747, %v1701
      %v1768 = vsel %vm1018, %v1748, %v1703
      %v1769 = vsel %vm1018, %v1749, %v1705
      %v1770 = vsel %vm1018, %v1750, %v1707
      %v1771 = vsel %vm1018, %v1751, %v1709
      %v1772 = vsel %vm1018, %v1752, %v1711
      %v1773 = vsel %vm1018, %v1753, %v1713
      %v1774 = vld [vmem:[%s7] sm:$0xff]
      %v1775 = vld [vmem:[%s7 + $0x8] sm:$0xff]
      %v1776 = vld [vmem:[%s7 + $0x10] sm:$0xff]
      %v1777 = vld [vmem:[%s7 + $0x18] sm:$0xff]
      %v1778 = vld [vmem:[%s7 + $0x20] sm:$0xff]
      %v1779 = vld [vmem:[%s7 + $0x28] sm:$0xff]
      %v1780 = vld [vmem:[%s7 + $0x30] sm:$0xff]
      %v1781 = vld [vmem:[%s7 + $0x38] sm:$0xff]
      %v1782 = vld [vmem:[%s7 + $0x40] sm:$0xff]
      %v1783 = vld [vmem:[%s7 + $0x48] sm:$0xff]
      %v1784 = vld [vmem:[%s7 + $0x50] sm:$0xff]
      %v1785 = vld [vmem:[%s7 + $0x58] sm:$0xff]
      %s1786 = scalar_lea.vmem %s7, 96
      %v1787 = vld [vmem:[%s1786] sm:$0xff]
      %v1788 = vld [vmem:[%s1786 + $0x8] sm:$0xff]
      %v1789 = vld [vmem:[%s1786 + $0x10] sm:$0xff]
      %v1790 = vld [vmem:[%s1786 + $0x18] sm:$0xff]
      %v1791 = vld [vmem:[%s1786 + $0x20] sm:$0xff]
      %v1792 = vld [vmem:[%s1786 + $0x28] sm:$0xff]
      %v1793 = vld [vmem:[%s1786 + $0x30] sm:$0xff]
      %v1794 = vld [vmem:[%s1786 + $0x38] sm:$0xff]
      %v1795 = vld [vmem:[%s1786 + $0x40] sm:$0xff]
      %v1796 = vld [vmem:[%s1786 + $0x48] sm:$0xff]
      %v1797 = vld [vmem:[%s1786 + $0x50] sm:$0xff]
      %v1798 = vld [vmem:[%s1786 + $0x58] sm:$0xff]
      %v1800 = vsel %vm1068, %v1756, 0
      %v1803 = vsel %vm1068, %v1757, 0
      %v1806 = vsel %vm1068, %v1758, 0
      %v1809 = vsel %vm1068, %v1759, 0
      %v1812 = vsel %vm1068, %v1760, 0
      %v1815 = vsel %vm1068, %v1761, 0
      %v1818 = vsel %vm1068, %v1762, 0
      %v1821 = vsel %vm1068, %v1763, 0
      %v1824 = vsel %vm1068, %v1764, 0
      %v1827 = vsel %vm1068, %v1765, 0
      %v1830 = vsel %vm1068, %v1766, 0
      %v1833 = vsel %vm1068, %v1767, 0
      %v1836 = vsel %vm1068, %v1768, 0
      %v1839 = vsel %vm1068, %v1769, 0
      %v1842 = vsel %vm1068, %v1770, 0
      %v1845 = vsel %vm1068, %v1771, 0
      %1847 = vmatpush.msra.mxu0 0.0
      %1848 = vmatpush.msra.mxu0 0.0
      %1849 = vmatpush.msra.mxu0 0.0
      %1850 = vmatpush.msra.mxu0 0.0
      %1851 = vmatpush.msra.mxu0 %v1798
      %1852 = vmatpush.msra.mxu0 %v1797
      %1853 = vmatpush.msra.mxu0 %v1796
      %1854 = vmatpush.msra.mxu0 %v1795
      %1855 = vmatpush.msra.mxu0 %v1794
      %1856 = vmatpush.msra.mxu0 %v1793
      %1857 = vmatpush.msra.mxu0 %v1792
      %1858 = vmatpush.msra.mxu0 %v1791
      %1859 = vmatpush.msra.mxu0 %v1790
      %1860 = vmatpush.msra.mxu0 %v1789
      %1861 = vmatpush.msra.mxu0 %v1788
      %1862 = vmatpush.msra.mxu0 %v1787
      %1863 = vmatmul.f32.gmra.mxu0 %v1800
      %v1864 = vpop.f32.mrf.mxu0
      %v1865 = vadd.f32 0.0, %v1864
      %1866 = vmatmul.f32.gmra.mxu0 %v1803
      %v1867 = vpop.f32.mrf.mxu0
      %v1868 = vadd.f32 0.0, %v1867
      %1869 = vmatmul.f32.gmra.mxu0 %v1806
      %v1870 = vpop.f32.mrf.mxu0
      %v1871 = vadd.f32 0.0, %v1870
      %1872 = vmatmul.f32.gmra.mxu0 %v1809
      %v1873 = vpop.f32.mrf.mxu0
      %v1874 = vadd.f32 0.0, %v1873
      %1875 = vmatmul.f32.gmra.mxu0 %v1812
      %v1876 = vpop.f32.mrf.mxu0
      %v1877 = vadd.f32 0.0, %v1876
      %1878 = vmatmul.f32.gmra.mxu0 %v1815
      %v1879 = vpop.f32.mrf.mxu0
      %v1880 = vadd.f32 0.0, %v1879
      %1881 = vmatmul.f32.gmra.mxu0 %v1818
      %v1882 = vpop.f32.mrf.mxu0
      %v1883 = vadd.f32 0.0, %v1882
      %1884 = vmatmul.f32.gmra.mxu0 %v1821
      %v1885 = vpop.f32.mrf.mxu0
      %v1886 = vadd.f32 0.0, %v1885
      %1887 = vmatmul.f32.gmra.mxu0 %v1824
      %v1888 = vpop.f32.mrf.mxu0
      %v1889 = vadd.f32 0.0, %v1888
      %1890 = vmatmul.f32.gmra.mxu0 %v1827
      %v1891 = vpop.f32.mrf.mxu0
      %v1892 = vadd.f32 0.0, %v1891
      %1893 = vmatmul.f32.gmra.mxu0 %v1830
      %v1894 = vpop.f32.mrf.mxu0
      %v1895 = vadd.f32 0.0, %v1894
      %1896 = vmatmul.f32.gmra.mxu0 %v1833
      %v1897 = vpop.f32.mrf.mxu0
      %v1898 = vadd.f32 0.0, %v1897
      %1899 = vmatmul.f32.gmra.mxu0 %v1836
      %v1900 = vpop.f32.mrf.mxu0
      %v1901 = vadd.f32 0.0, %v1900
      %1902 = vmatmul.f32.gmra.mxu0 %v1839
      %v1903 = vpop.f32.mrf.mxu0
      %v1904 = vadd.f32 0.0, %v1903
      %1905 = vmatmul.f32.gmra.mxu0 %v1842
      %v1906 = vpop.f32.mrf.mxu0
      %v1907 = vadd.f32 0.0, %v1906
      %1908 = vmatmul.f32.gmra.mxu0 %v1845
      %v1909 = vpop.f32.mrf.mxu0
      %v1910 = vadd.f32 0.0, %v1909
      %1911 = vdwg.mxu0
      %v1913 = vsel %vm1068, %v1754, 0
      %v1916 = vsel %vm1068, %v1755, 0
      %1918 = vmatpush.msra.mxu0 0.0
      %1919 = vmatpush.msra.mxu0 0.0
      %1920 = vmatpush.msra.mxu0 0.0
      %1921 = vmatpush.msra.mxu0 0.0
      %1922 = vmatpush.msra.mxu0 %v1785
      %1923 = vmatpush.msra.mxu0 %v1784
      %1924 = vmatpush.msra.mxu0 %v1783
      %1925 = vmatpush.msra.mxu0 %v1782
      %1926 = vmatpush.msra.mxu0 %v1781
      %1927 = vmatpush.msra.mxu0 %v1780
      %1928 = vmatpush.msra.mxu0 %v1779
      %1929 = vmatpush.msra.mxu0 %v1778
      %1930 = vmatpush.msra.mxu0 %v1777
      %1931 = vmatpush.msra.mxu0 %v1776
      %1932 = vmatpush.msra.mxu0 %v1775
      %1933 = vmatpush.msra.mxu0 %v1774
      %1934 = vmatmul.f32.gmra.mxu0 %v1913
      %v1935 = vpop.f32.mrf.mxu0
      %v1936 = vadd.f32 %v1865, %v1935
      %1937 = vmatmul.f32.gmra.mxu0 %v1916
      %v1938 = vpop.f32.mrf.mxu0
      %v1939 = vadd.f32 %v1868, %v1938
      %1940 = vmatmul.f32.gmra.mxu0 %v1800
      %v1941 = vpop.f32.mrf.mxu0
      %v1942 = vadd.f32 %v1871, %v1941
      %1943 = vmatmul.f32.gmra.mxu0 %v1803
      %v1944 = vpop.f32.mrf.mxu0
      %v1945 = vadd.f32 %v1874, %v1944
      %1946 = vmatmul.f32.gmra.mxu0 %v1806
      %v1947 = vpop.f32.mrf.mxu0
      %v1948 = vadd.f32 %v1877, %v1947
      %1949 = vmatmul.f32.gmra.mxu0 %v1809
      %v1950 = vpop.f32.mrf.mxu0
      %v1951 = vadd.f32 %v1880, %v1950
      %1952 = vmatmul.f32.gmra.mxu0 %v1812
      %v1953 = vpop.f32.mrf.mxu0
      %v1954 = vadd.f32 %v1883, %v1953
      %1955 = vmatmul.f32.gmra.mxu0 %v1815
      %v1956 = vpop.f32.mrf.mxu0
      %v1957 = vadd.f32 %v1886, %v1956
      %1958 = vmatmul.f32.gmra.mxu0 %v1818
      %v1959 = vpop.f32.mrf.mxu0
      %v1960 = vadd.f32 %v1889, %v1959
      %1961 = vmatmul.f32.gmra.mxu0 %v1821
      %v1962 = vpop.f32.mrf.mxu0
      %v1963 = vadd.f32 %v1892, %v1962
      %1964 = vmatmul.f32.gmra.mxu0 %v1824
      %v1965 = vpop.f32.mrf.mxu0
      %v1966 = vadd.f32 %v1895, %v1965
      %1967 = vmatmul.f32.gmra.mxu0 %v1827
      %v1968 = vpop.f32.mrf.mxu0
      %v1969 = vadd.f32 %v1898, %v1968
      %1970 = vmatmul.f32.gmra.mxu0 %v1830
      %v1971 = vpop.f32.mrf.mxu0
      %v1972 = vadd.f32 %v1901, %v1971
      %1973 = vmatmul.f32.gmra.mxu0 %v1833
      %v1974 = vpop.f32.mrf.mxu0
      %v1975 = vadd.f32 %v1904, %v1974
      %1976 = vmatmul.f32.gmra.mxu0 %v1836
      %v1977 = vpop.f32.mrf.mxu0
      %v1978 = vadd.f32 %v1907, %v1977
      %1979 = vmatmul.f32.gmra.mxu0 %v1839
      %v1980 = vpop.f32.mrf.mxu0
      %v1981 = vadd.f32 %v1910, %v1980
      %1982 = vdwg.mxu0
      %s1983 = scalar_lea.vmem %s7, 192
      %v1984 = vld [vmem:[%s1983] sm:$0xff]
      %v1985 = vld [vmem:[%s1983 + $0x8] sm:$0xff]
      %v1986 = vld [vmem:[%s1983 + $0x10] sm:$0xff]
      %v1987 = vld [vmem:[%s1983 + $0x18] sm:$0xff]
      %v1988 = vld [vmem:[%s1983 + $0x20] sm:$0xff]
      %v1989 = vld [vmem:[%s1983 + $0x28] sm:$0xff]
      %v1990 = vld [vmem:[%s1983 + $0x30] sm:$0xff]
      %v1991 = vld [vmem:[%s1983 + $0x38] sm:$0xff]
      %v1992 = vld [vmem:[%s1983 + $0x40] sm:$0xff]
      %v1993 = vld [vmem:[%s1983 + $0x48] sm:$0xff]
      %v1994 = vld [vmem:[%s1983 + $0x50] sm:$0xff]
      %v1995 = vld [vmem:[%s1983 + $0x58] sm:$0xff]
      %v1997 = vsel %vm1068, %v1772, 0
      %v2000 = vsel %vm1068, %v1773, 0
      %2002 = vmatpush.msra.mxu0 0.0
      %2003 = vmatpush.msra.mxu0 0.0
      %2004 = vmatpush.msra.mxu0 0.0
      %2005 = vmatpush.msra.mxu0 0.0
      %2006 = vmatpush.msra.mxu0 %v1995
      %2007 = vmatpush.msra.mxu0 %v1994
      %2008 = vmatpush.msra.mxu0 %v1993
      %2009 = vmatpush.msra.mxu0 %v1992
      %2010 = vmatpush.msra.mxu0 %v1991
      %2011 = vmatpush.msra.mxu0 %v1990
      %2012 = vmatpush.msra.mxu0 %v1989
      %2013 = vmatpush.msra.mxu0 %v1988
      %2014 = vmatpush.msra.mxu0 %v1987
      %2015 = vmatpush.msra.mxu0 %v1986
      %2016 = vmatpush.msra.mxu0 %v1985
      %2017 = vmatpush.msra.mxu0 %v1984
      %2018 = vmatmul.f32.gmra.mxu0 %v1806
      %v2019 = vpop.f32.mrf.mxu0
      %v2020 = vadd.f32 0.0, %v2019
      %2021 = vmatmul.f32.gmra.mxu0 %v1809
      %v2022 = vpop.f32.mrf.mxu0
      %v2023 = vadd.f32 0.0, %v2022
      %2024 = vmatmul.f32.gmra.mxu0 %v1812
      %v2025 = vpop.f32.mrf.mxu0
      %v2026 = vadd.f32 0.0, %v2025
      %2027 = vmatmul.f32.gmra.mxu0 %v1815
      %v2028 = vpop.f32.mrf.mxu0
      %v2029 = vadd.f32 0.0, %v2028
      %2030 = vmatmul.f32.gmra.mxu0 %v1818
      %v2031 = vpop.f32.mrf.mxu0
      %v2032 = vadd.f32 0.0, %v2031
      %2033 = vmatmul.f32.gmra.mxu0 %v1821
      %v2034 = vpop.f32.mrf.mxu0
      %v2035 = vadd.f32 0.0, %v2034
      %2036 = vmatmul.f32.gmra.mxu0 %v1824
      %v2037 = vpop.f32.mrf.mxu0
      %v2038 = vadd.f32 0.0, %v2037
      %2039 = vmatmul.f32.gmra.mxu0 %v1827
      %v2040 = vpop.f32.mrf.mxu0
      %v2041 = vadd.f32 0.0, %v2040
      %2042 = vmatmul.f32.gmra.mxu0 %v1830
      %v2043 = vpop.f32.mrf.mxu0
      %v2044 = vadd.f32 0.0, %v2043
      %2045 = vmatmul.f32.gmra.mxu0 %v1833
      %v2046 = vpop.f32.mrf.mxu0
      %v2047 = vadd.f32 0.0, %v2046
      %2048 = vmatmul.f32.gmra.mxu0 %v1836
      %v2049 = vpop.f32.mrf.mxu0
      %v2050 = vadd.f32 0.0, %v2049
      %2051 = vmatmul.f32.gmra.mxu0 %v1839
      %v2052 = vpop.f32.mrf.mxu0
      %v2053 = vadd.f32 0.0, %v2052
      %2054 = vmatmul.f32.gmra.mxu0 %v1842
      %v2055 = vpop.f32.mrf.mxu0
      %v2056 = vadd.f32 0.0, %v2055
      %2057 = vmatmul.f32.gmra.mxu0 %v1845
      %v2058 = vpop.f32.mrf.mxu0
      %v2059 = vadd.f32 0.0, %v2058
      %2060 = vmatmul.f32.gmra.mxu0 %v1997
      %v2061 = vpop.f32.mrf.mxu0
      %v2062 = vadd.f32 0.0, %v2061
      %2063 = vmatmul.f32.gmra.mxu0 %v2000
      %v2064 = vpop.f32.mrf.mxu0
      %v2065 = vadd.f32 0.0, %v2064
      %2066 = vdwg.mxu0
      %v2067 = vadd.f32 %v1936, %v2020
      %v2068 = vadd.f32 %v1939, %v2023
      %v2069 = vadd.f32 %v1942, %v2026
      %v2070 = vadd.f32 %v1945, %v2029
      %v2071 = vadd.f32 %v1948, %v2032
      %v2072 = vadd.f32 %v1951, %v2035
      %v2073 = vadd.f32 %v1954, %v2038
      %v2074 = vadd.f32 %v1957, %v2041
      %v2075 = vadd.f32 %v1960, %v2044
      %v2076 = vadd.f32 %v1963, %v2047
      %v2077 = vadd.f32 %v1966, %v2050
      %v2078 = vadd.f32 %v1969, %v2053
      %v2079 = vadd.f32 %v1972, %v2056
      %v2080 = vadd.f32 %v1975, %v2059
      %v2081 = vadd.f32 %v1978, %v2062
      %v2082 = vadd.f32 %v1981, %v2065
      %v2083 = vld [vmem:[%s8] sm:$0x1]
      %v2085 = vperm.slane %v2083, 0
      %v2087 = vadd.f32 %v2067, %v2085
      %v2088 = vadd.f32 %v2068, %v2085
      %v2089 = vadd.f32 %v2069, %v2085
      %v2090 = vadd.f32 %v2070, %v2085
      %v2091 = vadd.f32 %v2071, %v2085
      %v2092 = vadd.f32 %v2072, %v2085
      %v2093 = vadd.f32 %v2073, %v2085
      %v2094 = vadd.f32 %v2074, %v2085
      %v2095 = vadd.f32 %v2075, %v2085
      %v2096 = vadd.f32 %v2076, %v2085
      %v2097 = vadd.f32 %v2077, %v2085
      %v2098 = vadd.f32 %v2078, %v2085
      %v2099 = vadd.f32 %v2079, %v2085
      %v2100 = vadd.f32 %v2080, %v2085
      %v2101 = vadd.f32 %v2081, %v2085
      %v2102 = vadd.f32 %v2082, %v2085
      %v2103 = vld [vmem:[%s549] sm:$0xff]
      %v2104 = vld [vmem:[%s549 + $0x8] sm:$0xff]
      %v2105 = vld [vmem:[%s549 + $0x10] sm:$0xff]
      %v2106 = vld [vmem:[%s549 + $0x18] sm:$0xff]
      %v2107 = vld [vmem:[%s549 + $0x20] sm:$0xff]
      %v2108 = vld [vmem:[%s549 + $0x28] sm:$0xff]
      %v2109 = vld [vmem:[%s549 + $0x30] sm:$0xff]
      %v2110 = vld [vmem:[%s549 + $0x38] sm:$0xff]
      %v2111 = vld [vmem:[%s549 + $0x40] sm:$0xff]
      %v2112 = vld [vmem:[%s549 + $0x48] sm:$0xff]
      %v2113 = vld [vmem:[%s549 + $0x50] sm:$0xff]
      %v2114 = vld [vmem:[%s549 + $0x58] sm:$0xff]
      %v2115 = vld [vmem:[%s549 + $0x60] sm:$0xff]
      %v2116 = vld [vmem:[%s549 + $0x68] sm:$0xff]
      %v2117 = vld [vmem:[%s549 + $0x70] sm:$0xff]
      %v2118 = vld [vmem:[%s549 + $0x78] sm:$0xff]
      %v2119 = vadd.f32 %v2103, %v2087
      %v2120 = vadd.f32 %v2104, %v2088
      %v2121 = vadd.f32 %v2105, %v2089
      %v2122 = vadd.f32 %v2106, %v2090
      %v2123 = vadd.f32 %v2107, %v2091
      %v2124 = vadd.f32 %v2108, %v2092
      %v2125 = vadd.f32 %v2109, %v2093
      %v2126 = vadd.f32 %v2110, %v2094
      %v2127 = vadd.f32 %v2111, %v2095
      %v2128 = vadd.f32 %v2112, %v2096
      %v2129 = vadd.f32 %v2113, %v2097
      %v2130 = vadd.f32 %v2114, %v2098
      %v2131 = vadd.f32 %v2115, %v2099
      %v2132 = vadd.f32 %v2116, %v2100
      %v2133 = vadd.f32 %v2117, %v2101
      %v2134 = vadd.f32 %v2118, %v2102
      %2135 = vst.msk [vmem:[%s630] sm:$0xff] %vm632, %v2119
      %2136 = vst.msk [vmem:[%s630 + $0x8] sm:$0xff] %vm632, %v2120
      %2137 = vst.msk [vmem:[%s630 + $0x10] sm:$0xff] %vm632, %v2121
      %2138 = vst.msk [vmem:[%s630 + $0x18] sm:$0xff] %vm632, %v2122
      %2139 = vst.msk [vmem:[%s630 + $0x20] sm:$0xff] %vm632, %v2123
      %2140 = vst.msk [vmem:[%s630 + $0x28] sm:$0xff] %vm632, %v2124
      %2141 = vst.msk [vmem:[%s630 + $0x30] sm:$0xff] %vm632, %v2125
      %2142 = vst.msk [vmem:[%s630 + $0x38] sm:$0xff] %vm632, %v2126
      %2143 = vst.msk [vmem:[%s630 + $0x40] sm:$0xff] %vm632, %v2127
      %2144 = vst.msk [vmem:[%s630 + $0x48] sm:$0xff] %vm632, %v2128
      %2145 = vst.msk [vmem:[%s630 + $0x50] sm:$0xff] %vm632, %v2129
      %2146 = vst.msk [vmem:[%s630 + $0x58] sm:$0xff] %vm632, %v2130
      %2147 = vst.msk [vmem:[%s630 + $0x60] sm:$0xff] %vm632, %v2131
      %2148 = vst.msk [vmem:[%s630 + $0x68] sm:$0xff] %vm632, %v2132
      %2149 = vst.msk [vmem:[%s630 + $0x70] sm:$0xff] %vm632, %v2133
      %2150 = vst.msk [vmem:[%s630 + $0x78] sm:$0xff] %vm632, %v2134
      %s2151 = smul.u32 8, %s25
      %p2152 = scmp.lt.s32.totalorder %s24, 1
      %s2153 = scalar_select %p2152, %s24, 1
      %p2154 = scmp.lt.s32.totalorder %s2151, 15
      %s2155 = scalar_select %p2154, %s2151, 15
      %s2156 = smul.addr %s2155, 2
      %s2157 = smul.addr %s2153, 32
      %s2158 = sadd.s32 %s2156, %s2157
      %s2159 = smul.addr %s2158, 8
      %s2160 = scalar_lea.vmem %s9, %s2159
      // Predicated region
      $region73: #{residual_blocks_with_input_conv.4} parent=55 // pred_check
        %p2161 = pneg %p310
      $region74: #{residual_blocks_with_input_conv.4} parent=55 // pred_check_branch
        %2163 = sbr.rel (%p2161) target = $region76
      $region75: #{residual_blocks_with_input_conv.4} parent=55 // pred_region
        %s2164 = smul.u32 8, %s25
      $region76: #{residual_blocks_with_input_conv.4} parent=55 // pred_fallthru
        _
    $region56: #{residual_blocks_with_input_conv.4} parent=5 // pred_fallthru
      _
    %p2165 = scmp.le.s32.totalorder 2, %s15
    // Predicated region
    $region77: #{residual_blocks_with_input_conv.4} parent=5 // pred_check
      %p2166 = pneg %p2165
    $region78: #{residual_blocks_with_input_conv.4} parent=5 // pred_check_branch
      %2168 = sbr.rel (%p2166) target = $region80
    $region79: #{residual_blocks_with_input_conv.4} parent=5 // pred_region
      %s2169 = ssub.s32 %s15, 2
      // Predicated region
      $region81: #{residual_blocks_with_input_conv.4} parent=79 // pred_check
        %p2170 = pneg %p316
      $region82: #{residual_blocks_with_input_conv.4} parent=79 // pred_check_branch
        %2172 = sbr.rel (%p2170) target = $region84
      $region83: #{residual_blocks_with_input_conv.4} parent=79 // pred_region
        %s2173 = smul.u32 8, %s27
        %p2174 = scmp.lt.s32.totalorder %s26, 1
        %s2175 = scalar_select %p2174, %s26, 1
        %p2176 = scmp.lt.s32.totalorder %s2173, 15
        %s2177 = scalar_select %p2176, %s2173, 15
        %s2178 = smul.addr %s2177, 2
        %s2179 = smul.addr %s2175, 32
        %s2180 = sadd.s32 %s2178, %s2179
        %s2181 = smul.addr %s2180, 8
        %s2182 = scalar_lea.vmem %s9, %s2181
      $region84: #{residual_blocks_with_input_conv.4} parent=79 // pred_fallthru
        _
    $region80: #{residual_blocks_with_input_conv.4} parent=5 // pred_fallthru
      _
  $region6: #{residual_blocks_with_input_conv.4} parent=0 // loop_footer
    %s19 = sadd.s32 1, %s15
  $region7: #{residual_blocks_with_input_conv.4} parent=0 // loop_footer_branch
    %14 = sbr.rel target = $region3
  $region8: #{residual_blocks_with_input_conv.4} parent=0 // loop_exit
    _

// kernel: residual_blocks_with_input_conv.5
$region0: #{residual_blocks_with_input_conv.5}
  #allocation0 [shape = 'u32[]', space=smem, size = 0x4, offset = 0x4, fixed_abs, tag = 'smem constant byte address 0x4 - core index']
  #allocation1 [shape = 'u32[72,128]{1,0:T(1,128)}', space=vmem, size = 0x9000, scoped, tag = 'internal scratch']
  #allocation2 [shape = 'f32[12,18,32]{2,1,0:T(8,128)}', space=vmem, size = 0x24000, scoped, tag = 'scratch operand']
  #allocation3 [shape = 'f32[10,18,32]{2,1,0:T(8,128)}', space=vmem, size = 0x1e000, scoped, tag = 'scratch operand']
  %s0 = inlined_call_operand.vmem [shape: f32[2,16,16,32], index: 0, kind: input, shape index: {}, may-alias: {0,1,2,3,4}]
  %s1 = inlined_call_operand.vmem [shape: f32[2,16,16,32], index: 1, kind: input, shape index: {}, may-alias: {0,1,2,3,4}]
  %s2 = inlined_call_operand.vmem [shape: f32[2,16,16,32], index: 2, kind: input, shape index: {}, may-alias: {0,1,2,3,4}]
  %s3 = inlined_call_operand.vmem [shape: f32[2,16,16,32], index: 3, kind: input, shape index: {}, may-alias: {0,1,2,3,4}]
  %s4 = inlined_call_operand.vmem [shape: f32[2,16,16,32], index: 4, kind: input, shape index: {}, may-alias: {0,1,2,3,4}]
  %s5 = inlined_call_operand.vmem [shape: f32[3,96,32], index: 5, kind: input, shape index: {}]
  %s6 = inlined_call_operand.vmem [shape: f32[1,32], index: 6, kind: input, shape index: {}]
  %s7 = inlined_call_operand.vmem [shape: f32[3,96,32], index: 7, kind: input, shape index: {}]
  %s8 = inlined_call_operand.vmem [shape: f32[1,32], index: 8, kind: input, shape index: {}]
  %s9 = inlined_call_operand.hbm [shape: f32[2,16,16,32], index: 9, kind: output, shape index: {}]
  %s10 = sld [smem:[#allocation0]]
  $region85: #{residual_blocks_with_input_conv.5} parent=0
    _
  %s12 = ssub.s32 1, %s10
  %s13 = scalar_select 0, %s12, %s10
  $region1: #{residual_blocks_with_input_conv.5} parent=0
    #allocation4 [shape = 'u8[131072]{0}', space=vmem, size = 0x20000, scoped, tag = 'output window, operand 0']
    #allocation5 [shape = 's32[2]{0}', space=sflag, size = 0x8, scoped, tag = 'scoped memory for residual_blocks_with_input_conv.5']
    %14 = vsyncpa [#allocation5], 0
    %s15 = scalar_lea.sflag [#allocation5], 1
    %16 = vsyncpa %s15, 0
    loop: start=0, step=1, limit=6
    $region2: #{residual_blocks_with_input_conv.5} parent=1 // loop_pre_header
      _
    $region3: #{residual_blocks_with_input_conv.5} parent=1 // loop_header
      %s18 = sphi 0, %s22
      %p19 = scmp.ge.s32.totalorder %s18, 6
      %s25 = sphi 0, %s37
      %s26 = sphi 0, %s33
      %s27 = sphi 0, %s25
      %s28 = sphi 0, %s26
      %s29 = sphi 0, %s27
      %s30 = sphi 0, %s28
      %s42 = sphi 0, %s44
      %s45 = sphi 0, %s42
      %s46 = sphi 0, %s45
      %s62 = sphi 0, %s46
      %s78 = sphi 0, %s80
      %s81 = sphi 0, %s78
      %s82 = sphi 0, %s81
      %s98 = sphi 0, %s82
      %s114 = sphi 0, %s116
      %s117 = sphi 0, %s114
      %s118 = sphi 0, %s117
      %s134 = sphi 0, %s118
      %s150 = sphi 0, %s152
      %s153 = sphi 0, %s150
      %s154 = sphi 0, %s153
      %s170 = sphi 0, %s154
      %s188 = sphi 0, %s190
      %s191 = sphi 0, %s188
      %s192 = sphi 0, %s191
      %s208 = sphi 0, %s192
      %s212 = sphi 0, %s212
      %s214 = sphi 0, %s212
      %s215 = sphi 0, %s214
      %s229 = sphi 0, %s215
      %s233 = sphi 0, %s233
      %s235 = sphi 0, %s233
      %s236 = sphi 0, %s235
      %s250 = sphi 0, %s236
      %s254 = sphi 0, %s254
      %s256 = sphi 0, %s254
      %s257 = sphi 0, %s256
      %s271 = sphi 0, %s257
      %s275 = sphi 0, %s275
      %s277 = sphi 0, %s275
      %s278 = sphi 0, %s277
      %s292 = sphi 0, %s278
      %s300 = sphi 0, %s302
      %s303 = sphi 0, %s300
      %s304 = sphi 0, %s303
      %s320 = sphi 0, %s304
    $region4: #{residual_blocks_with_input_conv.5} parent=1 // loop_header_branch
      %21 = sbr.rel (%p19) target = $region8
    $region5: #{residual_blocks_with_input_conv.5} parent=1 // loop_body
      %s23 = ssub.s32 %s18, 1
      %s24 = ssub.s32 %s18, 2
      %s31 = sadd.s32 1, %s26
      %p32 = scmp.ge.s32.totalorder %s31, 2
      %s33 = scalar_select %p32, 0, %s31
      %s34 = sadd.s32 1, %s25
      %s35 = scalar_select %p32, %s34, %s25
      %p36 = scmp.ge.s32.totalorder %s35, 2
      %s37 = scalar_select %p36, 0, %s35
      %s38 = ssub.s32 %s25, %s37
      %s39 = ssub.s32 %s26, %s33
      %s40 = sor.u32 %s38, %s39
      %p41 = scmp.eq.s32.totalorder %s40, 0
      %s43 = sadd.s32 %s42, 1
      %s44 = scalar_select %p41, %s42, %s43
      %p47 = pneg %p41
      %p48 = scmp.eq.s32.totalorder %s18, 3
      %p49 = por %p47, %p48
      %p50 = scmp.ne.s32.totalorder %s42, %s45
      %p51 = scmp.eq.s32.totalorder %s18, 0
      %p52 = por %p50, %p51
      %p53 = scmp.ne.s32.totalorder %s42, %s45
      %p54 = scmp.eq.s32.totalorder %s23, 3
      %p55 = por %p53, %p54
      %p56 = scmp.ne.s32.totalorder %s45, %s46
      %p57 = scmp.eq.s32.totalorder %s23, 0
      %p58 = por %p56, %p57
      %p59 = scmp.ne.s32.totalorder %s45, %s46
      %p60 = scmp.eq.s32.totalorder %s24, 3
      %p61 = por %p59, %p60
      %p63 = scmp.ne.s32.totalorder %s46, %s62
      %p64 = scmp.eq.s32.totalorder %s24, 0
      %p65 = por %p63, %p64
      %s66 = smul.u32 %s26, 8
      %s67 = ssub.s32 %s66, 2
      %p68 = scmp.gt.s32.totalorder %s67, 0
      %s69 = scalar_select %p68, %s67, 0
      %s70 = smul.u32 %s33, 8
      %s71 = ssub.s32 %s70, 2
      %p72 = scmp.gt.s32.totalorder %s71, 0
      %s73 = scalar_select %p72, %s71, 0
      %s74 = ssub.s32 %s25, %s37
      %s75 = ssub.s32 %s69, %s73
      %s76 = sor.u32 %s74, %s75
      %p77 = scmp.eq.s32.totalorder %s76, 0
      %s79 = sadd.s32 %s78, 1
      %s80 = scalar_select %p77, %s78, %s79
      %p83 = pneg %p77
      %p84 = scmp.eq.s32.totalorder %s18, 3
      %p85 = por %p83, %p84
      %p86 = scmp.ne.s32.totalorder %s78, %s81
      %p87 = scmp.eq.s32.totalorder %s18, 0
      %p88 = por %p86, %p87
      %p89 = scmp.ne.s32.totalorder %s78, %s81
      %p90 = scmp.eq.s32.totalorder %s23, 3
      %p91 = por %p89, %p90
      %p92 = scmp.ne.s32.totalorder %s81, %s82
      %p93 = scmp.eq.s32.totalorder %s23, 0
      %p94 = por %p92, %p93
      %p95 = scmp.ne.s32.totalorder %s81, %s82
      %p96 = scmp.eq.s32.totalorder %s24, 3
      %p97 = por %p95, %p96
      %p99 = scmp.ne.s32.totalorder %s82, %s98
      %p100 = scmp.eq.s32.totalorder %s24, 0
      %p101 = por %p99, %p100
      %s102 = smul.u32 %s26, 8
      %s103 = ssub.s32 %s102, 1
      %p104 = scmp.gt.s32.totalorder %s103, 0
      %s105 = scalar_select %p104, %s103, 0
      %s106 = smul.u32 %s33, 8
      %s107 = ssub.s32 %s106, 1
      %p108 = scmp.gt.s32.totalorder %s107, 0
      %s109 = scalar_select %p108, %s107, 0
      %s110 = ssub.s32 %s25, %s37
      %s111 = ssub.s32 %s105, %s109
      %s112 = sor.u32 %s110, %s111
      %p113 = scmp.eq.s32.totalorder %s112, 0
      %s115 = sadd.s32 %s114, 1
      %s116 = scalar_select %p113, %s114, %s115
      %p119 = pneg %p113
      %p120 = scmp.eq.s32.totalorder %s18, 3
      %p121 = por %p119, %p120
      %p122 = scmp.ne.s32.totalorder %s114, %s117
      %p123 = scmp.eq.s32.totalorder %s18, 0
      %p124 = por %p122, %p123
      %p125 = scmp.ne.s32.totalorder %s114, %s117
      %p126 = scmp.eq.s32.totalorder %s23, 3
      %p127 = por %p125, %p126
      %p128 = scmp.ne.s32.totalorder %s117, %s118
      %p129 = scmp.eq.s32.totalorder %s23, 0
      %p130 = por %p128, %p129
      %p131 = scmp.ne.s32.totalorder %s117, %s118
      %p132 = scmp.eq.s32.totalorder %s24, 3
      %p133 = por %p131, %p132
      %p135 = scmp.ne.s32.totalorder %s118, %s134
      %p136 = scmp.eq.s32.totalorder %s24, 0
      %p137 = por %p135, %p136
      %s138 = sadd.s32 %s26, 1
      %s139 = smul.u32 %s138, 8
      %p140 = scmp.lt.s32.totalorder %s139, 15
      %s141 = scalar_select %p140, %s139, 15
      %s142 = sadd.s32 %s33, 1
      %s143 = smul.u32 %s142, 8
      %p144 = scmp.lt.s32.totalorder %s143, 15
      %s145 = scalar_select %p144, %s143, 15
      %s146 = ssub.s32 %s25, %s37
      %s147 = ssub.s32 %s141, %s145
      %s148 = sor.u32 %s146, %s147
      %p149 = scmp.eq.s32.totalorder %s148, 0
      %s151 = sadd.s32 %s150, 1
      %s152 = scalar_select %p149, %s150, %s151
      %p155 = pneg %p149
      %p156 = scmp.eq.s32.totalorder %s18, 3
      %p157 = por %p155, %p156
      %p158 = scmp.ne.s32.totalorder %s150, %s153
      %p159 = scmp.eq.s32.totalorder %s18, 0
      %p160 = por %p158, %p159
      %p161 = scmp.ne.s32.totalorder %s150, %s153
      %p162 = scmp.eq.s32.totalorder %s23, 3
      %p163 = por %p161, %p162
      %p164 = scmp.ne.s32.totalorder %s153, %s154
      %p165 = scmp.eq.s32.totalorder %s23, 0
      %p166 = por %p164, %p165
      %p167 = scmp.ne.s32.totalorder %s153, %s154
      %p168 = scmp.eq.s32.totalorder %s24, 3
      %p169 = por %p167, %p168
      %p171 = scmp.ne.s32.totalorder %s154, %s170
      %p172 = scmp.eq.s32.totalorder %s24, 0
      %p173 = por %p171, %p172
      %s174 = sadd.s32 %s26, 1
      %s175 = smul.u32 %s174, 8
      %s176 = sadd.s32 %s175, 1
      %p177 = scmp.lt.s32.totalorder %s176, 15
      %s178 = scalar_select %p177, %s176, 15
      %s179 = sadd.s32 %s33, 1
      %s180 = smul.u32 %s179, 8
      %s181 = sadd.s32 %s180, 1
      %p182 = scmp.lt.s32.totalorder %s181, 15
      %s183 = scalar_select %p182, %s181, 15
      %s184 = ssub.s32 %s25, %s37
      %s185 = ssub.s32 %s178, %s183
      %s186 = sor.u32 %s184, %s185
      %p187 = scmp.eq.s32.totalorder %s186, 0
      %s189 = sadd.s32 %s188, 1
      %s190 = scalar_select %p187, %s188, %s189
      %p193 = pneg %p187
      %p194 = scmp.eq.s32.totalorder %s18, 3
      %p195 = por %p193, %p194
      %p196 = scmp.ne.s32.totalorder %s188, %s191
      %p197 = scmp.eq.s32.totalorder %s18, 0
      %p198 = por %p196, %p197
      %p199 = scmp.ne.s32.totalorder %s188, %s191
      %p200 = scmp.eq.s32.totalorder %s23, 3
      %p201 = por %p199, %p200
      %p202 = scmp.ne.s32.totalorder %s191, %s192
      %p203 = scmp.eq.s32.totalorder %s23, 0
      %p204 = por %p202, %p203
      %p205 = scmp.ne.s32.totalorder %s191, %s192
      %p206 = scmp.eq.s32.totalorder %s24, 3
      %p207 = por %p205, %p206
      %p209 = scmp.ne.s32.totalorder %s192, %s208
      %p210 = scmp.eq.s32.totalorder %s24, 0
      %p211 = por %p209, %p210
      %s213 = sadd.s32 %s212, 1
      %p216 = scmp.eq.s32.totalorder %s18, 3
      %p217 = scmp.ne.s32.totalorder %s212, %s214
      %p218 = scmp.eq.s32.totalorder %s18, 0
      %p219 = por %p217, %p218
      %p220 = scmp.ne.s32.totalorder %s212, %s214
      %p221 = scmp.eq.s32.totalorder %s23, 3
      %p222 = por %p220, %p221
      %p223 = scmp.ne.s32.totalorder %s214, %s215
      %p224 = scmp.eq.s32.totalorder %s23, 0
      %p225 = por %p223, %p224
      %p226 = scmp.ne.s32.totalorder %s214, %s215
      %p227 = scmp.eq.s32.totalorder %s24, 3
      %p228 = por %p226, %p227
      %p230 = scmp.ne.s32.totalorder %s215, %s229
      %p231 = scmp.eq.s32.totalorder %s24, 0
      %p232 = por %p230, %p231
      %s234 = sadd.s32 %s233, 1
      %p237 = scmp.eq.s32.totalorder %s18, 3
      %p238 = scmp.ne.s32.totalorder %s233, %s235
      %p239 = scmp.eq.s32.totalorder %s18, 0
      %p240 = por %p238, %p239
      %p241 = scmp.ne.s32.totalorder %s233, %s235
      %p242 = scmp.eq.s32.totalorder %s23, 3
      %p243 = por %p241, %p242
      %p244 = scmp.ne.s32.totalorder %s235, %s236
      %p245 = scmp.eq.s32.totalorder %s23, 0
      %p246 = por %p244, %p245
      %p247 = scmp.ne.s32.totalorder %s235, %s236
      %p248 = scmp.eq.s32.totalorder %s24, 3
      %p249 = por %p247, %p248
      %p251 = scmp.ne.s32.totalorder %s236, %s250
      %p252 = scmp.eq.s32.totalorder %s24, 0
      %p253 = por %p251, %p252
      %s255 = sadd.s32 %s254, 1
      %p258 = scmp.eq.s32.totalorder %s18, 3
      %p259 = scmp.ne.s32.totalorder %s254, %s256
      %p260 = scmp.eq.s32.totalorder %s18, 0
      %p261 = por %p259, %p260
      %p262 = scmp.ne.s32.totalorder %s254, %s256
      %p263 = scmp.eq.s32.totalorder %s23, 3
      %p264 = por %p262, %p263
      %p265 = scmp.ne.s32.totalorder %s256, %s257
      %p266 = scmp.eq.s32.totalorder %s23, 0
      %p267 = por %p265, %p266
      %p268 = scmp.ne.s32.totalorder %s256, %s257
      %p269 = scmp.eq.s32.totalorder %s24, 3
      %p270 = por %p268, %p269
      %p272 = scmp.ne.s32.totalorder %s257, %s271
      %p273 = scmp.eq.s32.totalorder %s24, 0
      %p274 = por %p272, %p273
      %s276 = sadd.s32 %s275, 1
      %p279 = scmp.eq.s32.totalorder %s18, 3
      %p280 = scmp.ne.s32.totalorder %s275, %s277
      %p281 = scmp.eq.s32.totalorder %s18, 0
      %p282 = por %p280, %p281
      %p283 = scmp.ne.s32.totalorder %s275, %s277
      %p284 = scmp.eq.s32.totalorder %s23, 3
      %p285 = por %p283, %p284
      %p286 = scmp.ne.s32.totalorder %s277, %s278
      %p287 = scmp.eq.s32.totalorder %s23, 0
      %p288 = por %p286, %p287
      %p289 = scmp.ne.s32.totalorder %s277, %s278
      %p290 = scmp.eq.s32.totalorder %s24, 3
      %p291 = por %p289, %p290
      %p293 = scmp.ne.s32.totalorder %s278, %s292
      %p294 = scmp.eq.s32.totalorder %s24, 0
      %p295 = por %p293, %p294
      %s296 = ssub.s32 %s25, %s37
      %s297 = ssub.s32 %s26, %s33
      %s298 = sor.u32 %s296, %s297
      %p299 = scmp.eq.s32.totalorder %s298, 0
      %s301 = sadd.s32 %s300, 1
      %s302 = scalar_select %p299, %s300, %s301
      %p305 = pneg %p299
      %p306 = scmp.eq.s32.totalorder %s18, 3
      %p307 = por %p305, %p306
      %p308 = scmp.ne.s32.totalorder %s300, %s303
      %p309 = scmp.eq.s32.totalorder %s18, 0
      %p310 = por %p308, %p309
      %p311 = scmp.ne.s32.totalorder %s300, %s303
      %p312 = scmp.eq.s32.totalorder %s23, 3
      %p313 = por %p311, %p312
      %p314 = scmp.ne.s32.totalorder %s303, %s304
      %p315 = scmp.eq.s32.totalorder %s23, 0
      %p316 = por %p314, %p315
      %p317 = scmp.ne.s32.totalorder %s303, %s304
      %p318 = scmp.eq.s32.totalorder %s24, 3
      %p319 = por %p317, %p318
      %p321 = scmp.ne.s32.totalorder %s304, %s320
      %p322 = scmp.eq.s32.totalorder %s24, 0
      %p323 = por %p321, %p322
      %p324 = scmp.le.s32.totalorder 1, %s18
      %p325 = scmp.lt.s32.totalorder %s18, 5
      %p326 = pnand %p324, %p325
      %p327 = pneg %p326
      // Predicated region
      $region9: #{residual_blocks_with_input_conv.5} parent=5 // pred_check
        _
      $region10: #{residual_blocks_with_input_conv.5} parent=5 // pred_check_branch
        %329 = sbr.rel (%p326) target = $region12
      $region11: #{residual_blocks_with_input_conv.5} parent=5 // pred_region
        %s330 = ssub.s32 %s18, 1
        // Predicated region
        $region13: #{residual_blocks_with_input_conv.5} parent=11 // pred_check
          %p331 = pneg %p225
        $region14: #{residual_blocks_with_input_conv.5} parent=11 // pred_check_branch
          %333 = sbr.rel (%p331) target = $region16
        $region15: #{residual_blocks_with_input_conv.5} parent=11 // pred_region
          _
        $region16: #{residual_blocks_with_input_conv.5} parent=11 // pred_fallthru
          _
        // Predicated region
        $region17: #{residual_blocks_with_input_conv.5} parent=11 // pred_check
          %p334 = pneg %p246
        $region18: #{residual_blocks_with_input_conv.5} parent=11 // pred_check_branch
          %336 = sbr.rel (%p334) target = $region20
        $region19: #{residual_blocks_with_input_conv.5} parent=11 // pred_region
          _
        $region20: #{residual_blocks_with_input_conv.5} parent=11 // pred_fallthru
          _
        // Predicated region
        $region21: #{residual_blocks_with_input_conv.5} parent=11 // pred_check
          %p337 = pneg %p267
        $region22: #{residual_blocks_with_input_conv.5} parent=11 // pred_check_branch
          %339 = sbr.rel (%p337) target = $region24
        $region23: #{residual_blocks_with_input_conv.5} parent=11 // pred_region
          _
        $region24: #{residual_blocks_with_input_conv.5} parent=11 // pred_fallthru
          _
        // Predicated region
        $region25: #{residual_blocks_with_input_conv.5} parent=11 // pred_check
          %p340 = pneg %p288
        $region26: #{residual_blocks_with_input_conv.5} parent=11 // pred_check_branch
          %342 = sbr.rel (%p340) target = $region28
        $region27: #{residual_blocks_with_input_conv.5} parent=11 // pred_region
          _
        $region28: #{residual_blocks_with_input_conv.5} parent=11 // pred_fallthru
          _
      $region12: #{residual_blocks_with_input_conv.5} parent=5 // pred_fallthru
        _
      %p343 = scmp.lt.s32.totalorder %s18, 4
      // Predicated region
      $region29: #{residual_blocks_with_input_conv.5} parent=5 // pred_check
        %p344 = pneg %p343
      $region30: #{residual_blocks_with_input_conv.5} parent=5 // pred_check_branch
        %346 = sbr.rel (%p344) target = $region32
      $region31: #{residual_blocks_with_input_conv.5} parent=5 // pred_region
        // Predicated region
        $region33: #{residual_blocks_with_input_conv.5} parent=31 // pred_check
          %p347 = pneg %p52
        $region34: #{residual_blocks_with_input_conv.5} parent=31 // pred_check_branch
          %349 = sbr.rel (%p347) target = $region36
        $region35: #{residual_blocks_with_input_conv.5} parent=31 // pred_region
          %s350 = smul.u32 8, %s26
          %p351 = scmp.lt.s32.totalorder %s25, 1
          %s352 = scalar_select %p351, %s25, 1
          %p353 = scmp.lt.s32.totalorder %s350, 15
          %s354 = scalar_select %p353, %s350, 15
          %s355 = smul.addr %s354, 2
          %s356 = smul.addr %s352, 32
          %s357 = sadd.s32 %s355, %s356
          %s358 = smul.addr %s357, 8
          %s359 = scalar_lea.vmem %s0, %s358
          %s360 = smul.u32 8, %s26
        $region36: #{residual_blocks_with_input_conv.5} parent=31 // pred_fallthru
          _
        // Predicated region
        $region37: #{residual_blocks_with_input_conv.5} parent=31 // pred_check
          %p361 = pneg %p88
        $region38: #{residual_blocks_with_input_conv.5} parent=31 // pred_check_branch
          %363 = sbr.rel (%p361) target = $region40
        $region39: #{residual_blocks_with_input_conv.5} parent=31 // pred_region
          %s364 = smul.u32 %s26, 8
          %s365 = ssub.s32 %s364, 2
          %p366 = scmp.gt.s32.totalorder %s365, 0
          %s367 = scalar_select %p366, %s365, 0
          %p368 = scmp.lt.s32.totalorder %s25, 1
          %s369 = scalar_select %p368, %s25, 1
          %p370 = scmp.lt.s32.totalorder %s367, 15
          %s371 = scalar_select %p370, %s367, 15
          %s372 = smul.addr %s371, 2
          %s373 = smul.addr %s369, 32
          %s374 = sadd.s32 %s372, %s373
          %s375 = smul.addr %s374, 8
          %s376 = scalar_lea.vmem %s1, %s375
          %s377 = smul.u32 %s26, 8
          %s378 = ssub.s32 %s377, 2
          %p379 = scmp.gt.s32.totalorder %s378, 0
          %s380 = scalar_select %p379, %s378, 0
        $region40: #{residual_blocks_with_input_conv.5} parent=31 // pred_fallthru
          _
        // Predicated region
        $region41: #{residual_blocks_with_input_conv.5} parent=31 // pred_check
          %p381 = pneg %p124
        $region42: #{residual_blocks_with_input_conv.5} parent=31 // pred_check_branch
          %383 = sbr.rel (%p381) target = $region44
        $region43: #{residual_blocks_with_input_conv.5} parent=31 // pred_region
          %s384 = smul.u32 %s26, 8
          %s385 = ssub.s32 %s384, 1
          %p386 = scmp.gt.s32.totalorder %s385, 0
          %s387 = scalar_select %p386, %s385, 0
          %p388 = scmp.lt.s32.totalorder %s25, 1
          %s389 = scalar_select %p388, %s25, 1
          %p390 = scmp.lt.s32.totalorder %s387, 15
          %s391 = scalar_select %p390, %s387, 15
          %s392 = smul.addr %s391, 2
          %s393 = smul.addr %s389, 32
          %s394 = sadd.s32 %s392, %s393
          %s395 = smul.addr %s394, 8
          %s396 = scalar_lea.vmem %s2, %s395
          %s397 = smul.u32 %s26, 8
          %s398 = ssub.s32 %s397, 1
          %p399 = scmp.gt.s32.totalorder %s398, 0
          %s400 = scalar_select %p399, %s398, 0
        $region44: #{residual_blocks_with_input_conv.5} parent=31 // pred_fallthru
          _
        // Predicated region
        $region45: #{residual_blocks_with_input_conv.5} parent=31 // pred_check
          %p401 = pneg %p160
        $region46: #{residual_blocks_with_input_conv.5} parent=31 // pred_check_branch
          %403 = sbr.rel (%p401) target = $region48
        $region47: #{residual_blocks_with_input_conv.5} parent=31 // pred_region
          %s404 = sadd.s32 %s26, 1
          %s405 = smul.u32 %s404, 8
          %p406 = scmp.lt.s32.totalorder %s405, 15
          %s407 = scalar_select %p406, %s405, 15
          %p408 = scmp.lt.s32.totalorder %s25, 1
          %s409 = scalar_select %p408, %s25, 1
          %p410 = scmp.lt.s32.totalorder %s407, 15
          %s411 = scalar_select %p410, %s407, 15
          %s412 = smul.addr %s411, 2
          %s413 = smul.addr %s409, 32
          %s414 = sadd.s32 %s412, %s413
          %s415 = smul.addr %s414, 8
          %s416 = scalar_lea.vmem %s3, %s415
          %s417 = sadd.s32 %s26, 1
          %s418 = smul.u32 %s417, 8
          %p419 = scmp.lt.s32.totalorder %s418, 15
          %s420 = scalar_select %p419, %s418, 15
        $region48: #{residual_blocks_with_input_conv.5} parent=31 // pred_fallthru
          _
        // Predicated region
        $region49: #{residual_blocks_with_input_conv.5} parent=31 // pred_check
          %p421 = pneg %p198
        $region50: #{residual_blocks_with_input_conv.5} parent=31 // pred_check_branch
          %423 = sbr.rel (%p421) target = $region52
        $region51: #{residual_blocks_with_input_conv.5} parent=31 // pred_region
          %s424 = sadd.s32 %s26, 1
          %s425 = smul.u32 %s424, 8
          %s426 = sadd.s32 %s425, 1
          %p427 = scmp.lt.s32.totalorder %s426, 15
          %s428 = scalar_select %p427, %s426, 15
          %p429 = scmp.lt.s32.totalorder %s25, 1
          %s430 = scalar_select %p429, %s25, 1
          %p431 = scmp.lt.s32.totalorder %s428, 15
          %s432 = scalar_select %p431, %s428, 15
          %s433 = smul.addr %s432, 2
          %s434 = smul.addr %s430, 32
          %s435 = sadd.s32 %s433, %s434
          %s436 = smul.addr %s435, 8
          %s437 = scalar_lea.vmem %s4, %s436
          %s438 = sadd.s32 %s26, 1
          %s439 = smul.u32 %s438, 8
          %s440 = sadd.s32 %s439, 1
          %p441 = scmp.lt.s32.totalorder %s440, 15
          %s442 = scalar_select %p441, %s440, 15
        $region52: #{residual_blocks_with_input_conv.5} parent=31 // pred_fallthru
          _
      $region32: #{residual_blocks_with_input_conv.5} parent=5 // pred_fallthru
        _
      %p443 = scmp.le.s32.totalorder 1, %s18
      %p444 = scmp.lt.s32.totalorder %s18, 5
      %p445 = pnand %p443, %p444
      %p446 = pneg %p445
      // Predicated region
      $region53: #{residual_blocks_with_input_conv.5} parent=5 // pred_check
        _
      $region54: #{residual_blocks_with_input_conv.5} parent=5 // pred_check_branch
        %448 = sbr.rel (%p445) target = $region56
      $region55: #{residual_blocks_with_input_conv.5} parent=5 // pred_region
        %s449 = ssub.s32 %s18, 1
        %s450 = smul.u32 8, %s28
        %p451 = scmp.lt.s32.totalorder %s27, 1
        %s452 = scalar_select %p451, %s27, 1
        %p453 = scmp.lt.s32.totalorder %s450, 15
        %s454 = scalar_select %p453, %s450, 15
        %s455 = smul.addr %s454, 2
        %s456 = smul.addr %s452, 32
        %s457 = sadd.s32 %s455, %s456
        %s458 = smul.addr %s457, 8
        %s459 = scalar_lea.vmem %s0, %s458
        %p460 = pneg %p58
        %p461 = pneg %p55
        %s462 = smul.u32 %s28, 8
        %s463 = ssub.s32 %s462, 2
        %p464 = scmp.gt.s32.totalorder %s463, 0
        %s465 = scalar_select %p464, %s463, 0
        %p466 = scmp.lt.s32.totalorder %s27, 1
        %s467 = scalar_select %p466, %s27, 1
        %p468 = scmp.lt.s32.totalorder %s465, 15
        %s469 = scalar_select %p468, %s465, 15
        %s470 = smul.addr %s469, 2
        %s471 = smul.addr %s467, 32
        %s472 = sadd.s32 %s470, %s471
        %s473 = smul.addr %s472, 8
        %s474 = scalar_lea.vmem %s1, %s473
        %p475 = pneg %p94
        %p476 = pneg %p91
        %s477 = smul.u32 %s28, 8
        %s478 = ssub.s32 %s477, 1
        %p479 = scmp.gt.s32.totalorder %s478, 0
        %s480 = scalar_select %p479, %s478, 0
        %p481 = scmp.lt.s32.totalorder %s27, 1
        %s482 = scalar_select %p481, %s27, 1
        %p483 = scmp.lt.s32.totalorder %s480, 15
        %s484 = scalar_select %p483, %s480, 15
        %s485 = smul.addr %s484, 2
        %s486 = smul.addr %s482, 32
        %s487 = sadd.s32 %s485, %s486
        %s488 = smul.addr %s487, 8
        %s489 = scalar_lea.vmem %s2, %s488
        %p490 = pneg %p130
        %p491 = pneg %p127
        %s492 = sadd.s32 %s28, 1
        %s493 = smul.u32 %s492, 8
        %p494 = scmp.lt.s32.totalorder %s493, 15
        %s495 = scalar_select %p494, %s493, 15
        %p496 = scmp.lt.s32.totalorder %s27, 1
        %s497 = scalar_select %p496, %s27, 1
        %p498 = scmp.lt.s32.totalorder %s495, 15
        %s499 = scalar_select %p498, %s495, 15
        %s500 = smul.addr %s499, 2
        %s501 = smul.addr %s497, 32
        %s502 = sadd.s32 %s500, %s501
        %s503 = smul.addr %s502, 8
        %s504 = scalar_lea.vmem %s3, %s503
        %p505 = pneg %p166
        %p506 = pneg %p163
        %s507 = sadd.s32 %s28, 1
        %s508 = smul.u32 %s507, 8
        %s509 = sadd.s32 %s508, 1
        %p510 = scmp.lt.s32.totalorder %s509, 15
        %s511 = scalar_select %p510, %s509, 15
        %p512 = scmp.lt.s32.totalorder %s27, 1
        %s513 = scalar_select %p512, %s27, 1
        %p514 = scmp.lt.s32.totalorder %s511, 15
        %s515 = scalar_select %p514, %s511, 15
        %s516 = smul.addr %s515, 2
        %s517 = smul.addr %s513, 32
        %s518 = sadd.s32 %s516, %s517
        %s519 = smul.addr %s518, 8
        %s520 = scalar_lea.vmem %s4, %s519
        %p521 = pneg %p204
        %p522 = pneg %p201
        %p523 = pneg %p225
        %p524 = pneg %p222
        %p525 = pneg %p246
        %p526 = pneg %p243
        %p527 = pneg %p267
        %p528 = pneg %p264
        %p529 = pneg %p288
        %p530 = pneg %p285
        %p531 = pneg %p316
        %p532 = pneg %p313
        %s533 = sand.u32 %s303, 1
        %s534 = scalar_lea.sflag [#allocation5], %s533
        %s535 = sand.u32 %s303, 1
        %s536 = smul.addr %s535, 128
        %s537 = scalar_lea.vmem [#allocation4], %s536
        %s538 = smul.u32 8, %s28
        %p539 = scmp.lt.s32.totalorder %s27, 1
        %s540 = scalar_select %p539, %s27, 1
        %p541 = scmp.lt.s32.totalorder %s538, 15
        %s542 = scalar_select %p541, %s538, 15
        %s543 = smul.addr %s542, 2
        %s544 = smul.addr %s540, 32
        %s545 = sadd.s32 %s543, %s544
        %s546 = smul.addr %s545, 8
        %s547 = scalar_lea.vmem %s0, %s546
        %s548 = smul.u32 8, %s28
        %s549 = smul.u32 %s28, 8
        %s550 = ssub.s32 %s549, 2
        %p551 = scmp.gt.s32.totalorder %s550, 0
        %s552 = scalar_select %p551, %s550, 0
        %p553 = scmp.lt.s32.totalorder %s27, 1
        %s554 = scalar_select %p553, %s27, 1
        %p555 = scmp.lt.s32.totalorder %s552, 15
        %s556 = scalar_select %p555, %s552, 15
        %s557 = smul.addr %s556, 2
        %s558 = smul.addr %s554, 32
        %s559 = sadd.s32 %s557, %s558
        %s560 = smul.addr %s559, 8
        %s561 = scalar_lea.vmem %s1, %s560
        %s562 = smul.u32 %s28, 8
        %s563 = ssub.s32 %s562, 2
        %p564 = scmp.gt.s32.totalorder %s563, 0
        %s565 = scalar_select %p564, %s563, 0
        %s566 = smul.u32 %s28, 8
        %s567 = ssub.s32 %s566, 1
        %p568 = scmp.gt.s32.totalorder %s567, 0
        %s569 = scalar_select %p568, %s567, 0
        %p570 = scmp.lt.s32.totalorder %s27, 1
        %s571 = scalar_select %p570, %s27, 1
        %p572 = scmp.lt.s32.totalorder %s569, 15
        %s573 = scalar_select %p572, %s569, 15
        %s574 = smul.addr %s573, 2
        %s575 = smul.addr %s571, 32
        %s576 = sadd.s32 %s574, %s575
        %s577 = smul.addr %s576, 8
        %s578 = scalar_lea.vmem %s2, %s577
        %s579 = smul.u32 %s28, 8
        %s580 = ssub.s32 %s579, 1
        %p581 = scmp.gt.s32.totalorder %s580, 0
        %s582 = scalar_select %p581, %s580, 0
        %s583 = sadd.s32 %s28, 1
        %s584 = smul.u32 %s583, 8
        %p585 = scmp.lt.s32.totalorder %s584, 15
        %s586 = scalar_select %p585, %s584, 15
        %p587 = scmp.lt.s32.totalorder %s27, 1
        %s588 = scalar_select %p587, %s27, 1
        %p589 = scmp.lt.s32.totalorder %s586, 15
        %s590 = scalar_select %p589, %s586, 15
        %s591 = smul.addr %s590, 2
        %s592 = smul.addr %s588, 32
        %s593 = sadd.s32 %s591, %s592
        %s594 = smul.addr %s593, 8
        %s595 = scalar_lea.vmem %s3, %s594
        %s596 = sadd.s32 %s28, 1
        %s597 = smul.u32 %s596, 8
        %p598 = scmp.lt.s32.totalorder %s597, 15
        %s599 = scalar_select %p598, %s597, 15
        %s600 = sadd.s32 %s28, 1
        %s601 = smul.u32 %s600, 8
        %s602 = sadd.s32 %s601, 1
        %p603 = scmp.lt.s32.totalorder %s602, 15
        %s604 = scalar_select %p603, %s602, 15
        %p605 = scmp.lt.s32.totalorder %s27, 1
        %s606 = scalar_select %p605, %s27, 1
        %p607 = scmp.lt.s32.totalorder %s604, 15
        %s608 = scalar_select %p607, %s604, 15
        %s609 = smul.addr %s608, 2
        %s610 = smul.addr %s606, 32
        %s611 = sadd.s32 %s609, %s610
        %s612 = smul.addr %s611, 8
        %s613 = scalar_lea.vmem %s4, %s612
        %s614 = sadd.s32 %s28, 1
        %s615 = smul.u32 %s614, 8
        %s616 = sadd.s32 %s615, 1
        %p617 = scmp.lt.s32.totalorder %s616, 15
        %s618 = scalar_select %p617, %s616, 15
        %s619 = smul.u32 8, %s28
        %vm620 = vcmask 261120
        %621 = vst.msk [vmem:[#allocation2] sm:$0xff] %vm620, 0.0
        %622 = vst.msk [vmem:[#allocation2 + $0x8] sm:$0xff] %vm620, 0.0
        %vm623 = vcmask 254976
        %624 = vst.msk [vmem:[#allocation2 + $0x10] sm:$0x3] %vm623, 0.0
        %625 = vst.msk [vmem:[#allocation2 + $0x18] sm:$0xff] %vm620, 0.0
        %626 = vst.msk [vmem:[#allocation2 + $0x20] sm:$0xff] %vm620, 0.0
        %627 = vst.msk [vmem:[#allocation2 + $0x28] sm:$0x3] %vm623, 0.0
        %628 = vst.msk [vmem:[#allocation2 + $0x30] sm:$0xff] %vm620, 0.0
        %629 = vst.msk [vmem:[#allocation2 + $0x38] sm:$0xff] %vm620, 0.0
        %630 = vst.msk [vmem:[#allocation2 + $0x40] sm:$0x3] %vm623, 0.0
        %631 = vst.msk [vmem:[#allocation2 + $0x48] sm:$0xff] %vm620, 0.0
        %632 = vst.msk [vmem:[#allocation2 + $0x50] sm:$0xff] %vm620, 0.0
        %633 = vst.msk [vmem:[#allocation2 + $0x58] sm:$0x3] %vm623, 0.0
        %634 = vst.msk [vmem:[#allocation2 + $0x60] sm:$0xff] %vm620, 0.0
        %635 = vst.msk [vmem:[#allocation2 + $0x68] sm:$0xff] %vm620, 0.0
        %636 = vst.msk [vmem:[#allocation2 + $0x70] sm:$0x3] %vm623, 0.0
        %637 = vst.msk [vmem:[#allocation2 + $0x78] sm:$0xff] %vm620, 0.0
        %638 = vst.msk [vmem:[#allocation2 + $0x80] sm:$0xff] %vm620, 0.0
        %639 = vst.msk [vmem:[#allocation2 + $0x88] sm:$0x3] %vm623, 0.0
        %640 = vst.msk [vmem:[#allocation2 + $0x90] sm:$0xff] %vm620, 0.0
        %641 = vst.msk [vmem:[#allocation2 + $0x98] sm:$0xff] %vm620, 0.0
        %642 = vst.msk [vmem:[#allocation2 + $0xa0] sm:$0x3] %vm623, 0.0
        %643 = vst.msk [vmem:[#allocation2 + $0xa8] sm:$0xff] %vm620, 0.0
        %644 = vst.msk [vmem:[#allocation2 + $0xb0] sm:$0xff] %vm620, 0.0
        %645 = vst.msk [vmem:[#allocation2 + $0xb8] sm:$0x3] %vm623, 0.0
        %646 = vst.msk [vmem:[#allocation2 + $0xc0] sm:$0xff] %vm620, 0.0
        %647 = vst.msk [vmem:[#allocation2 + $0xc8] sm:$0xff] %vm620, 0.0
        %648 = vst.msk [vmem:[#allocation2 + $0xd0] sm:$0x3] %vm623, 0.0
        %649 = vst.msk [vmem:[#allocation2 + $0xd8] sm:$0xff] %vm620, 0.0
        %650 = vst.msk [vmem:[#allocation2 + $0xe0] sm:$0xff] %vm620, 0.0
        %651 = vst.msk [vmem:[#allocation2 + $0xe8] sm:$0x3] %vm623, 0.0
        %652 = vst.msk [vmem:[#allocation2 + $0xf0] sm:$0xff] %vm620, 0.0
        %653 = vst.msk [vmem:[#allocation2 + $0xf8] sm:$0xff] %vm620, 0.0
        %654 = vst.msk [vmem:[#allocation2 + $0x100] sm:$0x3] %vm623, 0.0
        %655 = vst.msk [vmem:[#allocation2 + $0x108] sm:$0xff] %vm620, 0.0
        %656 = vst.msk [vmem:[#allocation2 + $0x110] sm:$0xff] %vm620, 0.0
        %657 = vst.msk [vmem:[#allocation2 + $0x118] sm:$0x3] %vm623, 0.0
        %v658 = vld [vmem:[%s547] sm:$0xff]
        %v659 = vld [vmem:[%s547 + $0x8] sm:$0xff]
        %v660 = vld [vmem:[%s547 + $0x10] sm:$0xff]
        %v661 = vld [vmem:[%s547 + $0x18] sm:$0xff]
        %v662 = vld [vmem:[%s547 + $0x20] sm:$0xff]
        %v663 = vld [vmem:[%s547 + $0x28] sm:$0xff]
        %v664 = vld [vmem:[%s547 + $0x30] sm:$0xff]
        %v665 = vld [vmem:[%s547 + $0x38] sm:$0xff]
        %v666 = vld [vmem:[%s547 + $0x40] sm:$0xff]
        %v667 = vld [vmem:[%s547 + $0x48] sm:$0xff]
        %v668 = vld [vmem:[%s547 + $0x50] sm:$0xff]
        %v669 = vld [vmem:[%s547 + $0x58] sm:$0xff]
        %v670 = vld [vmem:[%s547 + $0x60] sm:$0xff]
        %v671 = vld [vmem:[%s547 + $0x68] sm:$0xff]
        %v672 = vld [vmem:[%s547 + $0x70] sm:$0xff]
        %v673 = vld [vmem:[%s547 + $0x78] sm:$0xff]
        %s674 = scalar_lea.vmem [#allocation2], 48
        %675 = vst.msk [vmem:[%s674 + $0x1] sm:$0xff] %vm620, %v658
        %676 = vst.msk [vmem:[%s674 + $0x9] sm:$0xff] %vm620, %v659
        %677 = vst.msk [vmem:[%s674 + $0x19] sm:$0xff] %vm620, %v660
        %678 = vst.msk [vmem:[%s674 + $0x21] sm:$0xff] %vm620, %v661
        %679 = vst.msk [vmem:[%s674 + $0x31] sm:$0xff] %vm620, %v662
        %680 = vst.msk [vmem:[%s674 + $0x39] sm:$0xff] %vm620, %v663
        %681 = vst.msk [vmem:[%s674 + $0x49] sm:$0xff] %vm620, %v664
        %682 = vst.msk [vmem:[%s674 + $0x51] sm:$0xff] %vm620, %v665
        %683 = vst.msk [vmem:[%s674 + $0x61] sm:$0xff] %vm620, %v666
        %684 = vst.msk [vmem:[%s674 + $0x69] sm:$0xff] %vm620, %v667
        %685 = vst.msk [vmem:[%s674 + $0x79] sm:$0xff] %vm620, %v668
        %686 = vst.msk [vmem:[%s674 + $0x81] sm:$0xff] %vm620, %v669
        %687 = vst.msk [vmem:[%s674 + $0x91] sm:$0xff] %vm620, %v670
        %688 = vst.msk [vmem:[%s674 + $0x99] sm:$0xff] %vm620, %v671
        %689 = vst.msk [vmem:[%s674 + $0xa9] sm:$0xff] %vm620, %v672
        %690 = vst.msk [vmem:[%s674 + $0xb1] sm:$0xff] %vm620, %v673
        %p691 = scmp.gt.s32.totalorder %s28, 0
        // Predicated region
        $region57: #{residual_blocks_with_input_conv.5} parent=55 // pred_check
          %p692 = pneg %p691
        $region58: #{residual_blocks_with_input_conv.5} parent=55 // pred_check_branch
          %694 = sbr.rel (%p692) target = $region60
        $region59: #{residual_blocks_with_input_conv.5} parent=55 // pred_region
          %v695 = vld [vmem:[%s561] sm:$0xff]
          %v696 = vld [vmem:[%s561 + $0x8] sm:$0xff]
          %697 = vst.msk [vmem:[#allocation2 + $0x1] sm:$0xff] %vm620, %v695
          %698 = vst.msk [vmem:[#allocation2 + $0x9] sm:$0xff] %vm620, %v696
          %v699 = vld [vmem:[%s578] sm:$0xff]
          %v700 = vld [vmem:[%s578 + $0x8] sm:$0xff]
          %s701 = scalar_lea.vmem [#allocation2], 24
          %702 = vst.msk [vmem:[%s701 + $0x1] sm:$0xff] %vm620, %v699
          %703 = vst.msk [vmem:[%s701 + $0x9] sm:$0xff] %vm620, %v700
        $region60: #{residual_blocks_with_input_conv.5} parent=55 // pred_fallthru
          _
        %p704 = scmp.lt.s32.totalorder %s28, 1
        // Predicated region
        $region61: #{residual_blocks_with_input_conv.5} parent=55 // pred_check
          %p705 = pneg %p704
        $region62: #{residual_blocks_with_input_conv.5} parent=55 // pred_check_branch
          %707 = sbr.rel (%p705) target = $region64
        $region63: #{residual_blocks_with_input_conv.5} parent=55 // pred_region
          %v708 = vld [vmem:[%s595] sm:$0xff]
          %v709 = vld [vmem:[%s595 + $0x8] sm:$0xff]
          %s710 = scalar_lea.vmem [#allocation2], 240
          %711 = vst.msk [vmem:[%s710 + $0x1] sm:$0xff] %vm620, %v708
          %712 = vst.msk [vmem:[%s710 + $0x9] sm:$0xff] %vm620, %v709
          %v713 = vld [vmem:[%s613] sm:$0xff]
          %v714 = vld [vmem:[%s613 + $0x8] sm:$0xff]
          %s715 = scalar_lea.vmem [#allocation2], 264
          %716 = vst.msk [vmem:[%s715 + $0x1] sm:$0xff] %vm620, %v713
          %717 = vst.msk [vmem:[%s715 + $0x9] sm:$0xff] %vm620, %v714
        $region64: #{residual_blocks_with_input_conv.5} parent=55 // pred_fallthru
          _
        %v718 = vld [vmem:[#allocation2] sm:$0xff]
        %v719 = vld [vmem:[#allocation2 + $0x8] sm:$0xff]
        %v720 = vld [vmem:[#allocation2 + $0x18] sm:$0xff]
        %v721 = vld [vmem:[#allocation2 + $0x20] sm:$0xff]
        %v722 = vld [vmem:[#allocation2 + $0x30] sm:$0xff]
        %v723 = vld [vmem:[#allocation2 + $0x38] sm:$0xff]
        %v724 = vld [vmem:[#allocation2 + $0x48] sm:$0xff]
        %v725 = vld [vmem:[#allocation2 + $0x50] sm:$0xff]
        %v726 = vld [vmem:[#allocation2 + $0x60] sm:$0xff]
        %v727 = vld [vmem:[#allocation2 + $0x68] sm:$0xff]
        %v728 = vld [vmem:[#allocation2 + $0x78] sm:$0xff]
        %v729 = vld [vmem:[#allocation2 + $0x80] sm:$0xff]
        %v730 = vld [vmem:[#allocation2 + $0x90] sm:$0xff]
        %v731 = vld [vmem:[#allocation2 + $0x98] sm:$0xff]
        %v732 = vld [vmem:[#allocation2 + $0xa8] sm:$0xff]
        %v733 = vld [vmem:[#allocation2 + $0xb0] sm:$0xff]
        %v734 = vld [vmem:[#allocation2 + $0xc0] sm:$0xff]
        %v735 = vld [vmem:[#allocation2 + $0xc8] sm:$0xff]
        %v736 = vld [vmem:[#allocation2 + $0xd8] sm:$0xff]
        %v737 = vld [vmem:[#allocation2 + $0xe0] sm:$0xff]
        %v738 = vld [vmem:[#allocation2 + $0xf0] sm:$0xff]
        %v739 = vld [vmem:[#allocation2 + $0xf8] sm:$0xff]
        %v740 = vld [vmem:[#allocation2 + $0x108] sm:$0xff]
        %v741 = vld [vmem:[#allocation2 + $0x110] sm:$0xff]
        %v742 = vld [vmem:[#allocation2 + $0x1] sm:$0xff]
        %v743 = vld [vmem:[#allocation2 + $0x9] sm:$0xff]
        %v744 = vld [vmem:[#allocation2 + $0x19] sm:$0xff]
        %v745 = vld [vmem:[#allocation2 + $0x21] sm:$0xff]
        %v746 = vld [vmem:[#allocation2 + $0x31] sm:$0xff]
        %v747 = vld [vmem:[#allocation2 + $0x39] sm:$0xff]
        %v748 = vld [vmem:[#allocation2 + $0x49] sm:$0xff]
        %v749 = vld [vmem:[#allocation2 + $0x51] sm:$0xff]
        %v750 = vld [vmem:[#allocation2 + $0x61] sm:$0xff]
        %v751 = vld [vmem:[#allocation2 + $0x69] sm:$0xff]
        %v752 = vld [vmem:[#allocation2 + $0x79] sm:$0xff]
        %v753 = vld [vmem:[#allocation2 + $0x81] sm:$0xff]
        %v754 = vld [vmem:[#allocation2 + $0x91] sm:$0xff]
        %v755 = vld [vmem:[#allocation2 + $0x99] sm:$0xff]
        %v756 = vld [vmem:[#allocation2 + $0xa9] sm:$0xff]
        %v757 = vld [vmem:[#allocation2 + $0xb1] sm:$0xff]
        %v758 = vld [vmem:[#allocation2 + $0xc1] sm:$0xff]
        %v759 = vld [vmem:[#allocation2 + $0xc9] sm:$0xff]
        %v760 = vld [vmem:[#allocation2 + $0xd9] sm:$0xff]
        %v761 = vld [vmem:[#allocation2 + $0xe1] sm:$0xff]
        %v762 = vld [vmem:[#allocation2 + $0xf1] sm:$0xff]
        %v763 = vld [vmem:[#allocation2 + $0xf9] sm:$0xff]
        %v764 = vld [vmem:[#allocation2 + $0x109] sm:$0xff]
        %v765 = vld [vmem:[#allocation2 + $0x111] sm:$0xff]
        %v766 = vld [vmem:[#allocation2 + $0x2] sm:$0xff]
        %v767 = vld [vmem:[#allocation2 + $0xa] sm:$0xff]
        %v768 = vld [vmem:[#allocation2 + $0x1a] sm:$0xff]
        %v769 = vld [vmem:[#allocation2 + $0x22] sm:$0xff]
        %v770 = vld [vmem:[#allocation2 + $0x32] sm:$0xff]
        %v771 = vld [vmem:[#allocation2 + $0x3a] sm:$0xff]
        %v772 = vld [vmem:[#allocation2 + $0x4a] sm:$0xff]
        %v773 = vld [vmem:[#allocation2 + $0x52] sm:$0xff]
        %v774 = vld [vmem:[#allocation2 + $0x62] sm:$0xff]
        %v775 = vld [vmem:[#allocation2 + $0x6a] sm:$0xff]
        %v776 = vld [vmem:[#allocation2 + $0x7a] sm:$0xff]
        %v777 = vld [vmem:[#allocation2 + $0x82] sm:$0xff]
        %v778 = vld [vmem:[#allocation2 + $0x92] sm:$0xff]
        %v779 = vld [vmem:[#allocation2 + $0x9a] sm:$0xff]
        %v780 = vld [vmem:[#allocation2 + $0xaa] sm:$0xff]
        %v781 = vld [vmem:[#allocation2 + $0xb2] sm:$0xff]
        %v782 = vld [vmem:[#allocation2 + $0xc2] sm:$0xff]
        %v783 = vld [vmem:[#allocation2 + $0xca] sm:$0xff]
        %v784 = vld [vmem:[#allocation2 + $0xda] sm:$0xff]
        %v785 = vld [vmem:[#allocation2 + $0xe2] sm:$0xff]
        %v786 = vld [vmem:[#allocation2 + $0xf2] sm:$0xff]
        %v787 = vld [vmem:[#allocation2 + $0xfa] sm:$0xff]
        %v788 = vld [vmem:[#allocation2 + $0x10a] sm:$0xff]
        %v789 = vld [vmem:[#allocation2 + $0x112] sm:$0xff]
        %814 = vrot.lane.b32.xlu0 %v742, 32
        %v815 = vpop.permute.xlu0 %814
        %816 = vrot.lane.b32.xlu0 %v743, 32
        %v817 = vpop.permute.xlu0 %816
        %818 = vrot.lane.b32.xlu0 %v744, 32
        %v819 = vpop.permute.xlu0 %818
        %820 = vrot.lane.b32.xlu0 %v745, 32
        %v821 = vpop.permute.xlu0 %820
        %822 = vrot.lane.b32.xlu0 %v746, 32
        %v823 = vpop.permute.xlu0 %822
        %824 = vrot.lane.b32.xlu0 %v747, 32
        %v825 = vpop.permute.xlu0 %824
        %826 = vrot.lane.b32.xlu0 %v748, 32
        %v827 = vpop.permute.xlu0 %826
        %828 = vrot.lane.b32.xlu0 %v749, 32
        %v829 = vpop.permute.xlu0 %828
        %830 = vrot.lane.b32.xlu0 %v750, 32
        %v831 = vpop.permute.xlu0 %830
        %832 = vrot.lane.b32.xlu0 %v751, 32
        %v833 = vpop.permute.xlu0 %832
        %834 = vrot.lane.b32.xlu0 %v752, 32
        %v835 = vpop.permute.xlu0 %834
        %836 = vrot.lane.b32.xlu0 %v753, 32
        %v837 = vpop.permute.xlu0 %836
        %838 = vrot.lane.b32.xlu0 %v754, 32
        %v839 = vpop.permute.xlu0 %838
        %840 = vrot.lane.b32.xlu0 %v755, 32
        %v841 = vpop.permute.xlu0 %840
        %842 = vrot.lane.b32.xlu0 %v756, 32
        %v843 = vpop.permute.xlu0 %842
        %844 = vrot.lane.b32.xlu0 %v757, 32
        %v845 = vpop.permute.xlu0 %844
        %846 = vrot.lane.b32.xlu0 %v758, 32
        %v847 = vpop.permute.xlu0 %846
        %848 = vrot.lane.b32.xlu0 %v759, 32
        %v849 = vpop.permute.xlu0 %848
        %850 = vrot.lane.b32.xlu0 %v760, 32
        %v851 = vpop.permute.xlu0 %850
        %852 = vrot.lane.b32.xlu0 %v761, 32
        %v853 = vpop.permute.xlu0 %852
        %854 = vrot.lane.b32.xlu0 %v762, 32
        %v855 = vpop.permute.xlu0 %854
        %856 = vrot.lane.b32.xlu0 %v763, 32
        %v857 = vpop.permute.xlu0 %856
        %858 = vrot.lane.b32.xlu0 %v764, 32
        %v859 = vpop.permute.xlu0 %858
        %860 = vrot.lane.b32.xlu0 %v765, 32
        %v861 = vpop.permute.xlu0 %860
        %910 = vrot.lane.b32.xlu0 %v766, 64
        %v911 = vpop.permute.xlu0 %910
        %912 = vrot.lane.b32.xlu0 %v767, 64
        %v913 = vpop.permute.xlu0 %912
        %914 = vrot.lane.b32.xlu0 %v768, 64
        %v915 = vpop.permute.xlu0 %914
        %916 = vrot.lane.b32.xlu0 %v769, 64
        %v917 = vpop.permute.xlu0 %916
        %918 = vrot.lane.b32.xlu0 %v770, 64
        %v919 = vpop.permute.xlu0 %918
        %920 = vrot.lane.b32.xlu0 %v771, 64
        %v921 = vpop.permute.xlu0 %920
        %922 = vrot.lane.b32.xlu0 %v772, 64
        %v923 = vpop.permute.xlu0 %922
        %924 = vrot.lane.b32.xlu0 %v773, 64
        %v925 = vpop.permute.xlu0 %924
        %926 = vrot.lane.b32.xlu0 %v774, 64
        %v927 = vpop.permute.xlu0 %926
        %928 = vrot.lane.b32.xlu0 %v775, 64
        %v929 = vpop.permute.xlu0 %928
        %930 = vrot.lane.b32.xlu0 %v776, 64
        %v931 = vpop.permute.xlu0 %930
        %932 = vrot.lane.b32.xlu0 %v777, 64
        %v933 = vpop.permute.xlu0 %932
        %934 = vrot.lane.b32.xlu0 %v778, 64
        %v935 = vpop.permute.xlu0 %934
        %936 = vrot.lane.b32.xlu0 %v779, 64
        %v937 = vpop.permute.xlu0 %936
        %938 = vrot.lane.b32.xlu0 %v780, 64
        %v939 = vpop.permute.xlu0 %938
        %940 = vrot.lane.b32.xlu0 %v781, 64
        %v941 = vpop.permute.xlu0 %940
        %942 = vrot.lane.b32.xlu0 %v782, 64
        %v943 = vpop.permute.xlu0 %942
        %944 = vrot.lane.b32.xlu0 %v783, 64
        %v945 = vpop.permute.xlu0 %944
        %946 = vrot.lane.b32.xlu0 %v784, 64
        %v947 = vpop.permute.xlu0 %946
        %948 = vrot.lane.b32.xlu0 %v785, 64
        %v949 = vpop.permute.xlu0 %948
        %950 = vrot.lane.b32.xlu0 %v786, 64
        %v951 = vpop.permute.xlu0 %950
        %952 = vrot.lane.b32.xlu0 %v787, 64
        %v953 = vpop.permute.xlu0 %952
        %954 = vrot.lane.b32.xlu0 %v788, 64
        %v955 = vpop.permute.xlu0 %954
        %956 = vrot.lane.b32.xlu0 %v789, 64
        %v957 = vpop.permute.xlu0 %956
        %v982 = vsel %vm620, %v718, %v815
        %v983 = vsel %vm620, %v719, %v817
        %v984 = vsel %vm620, %v720, %v819
        %v985 = vsel %vm620, %v721, %v821
        %v986 = vsel %vm620, %v722, %v823
        %v987 = vsel %vm620, %v723, %v825
        %v988 = vsel %vm620, %v724, %v827
        %v989 = vsel %vm620, %v725, %v829
        %v990 = vsel %vm620, %v726, %v831
        %v991 = vsel %vm620, %v727, %v833
        %v992 = vsel %vm620, %v728, %v835
        %v993 = vsel %vm620, %v729, %v837
        %v994 = vsel %vm620, %v730, %v839
        %v995 = vsel %vm620, %v731, %v841
        %v996 = vsel %vm620, %v732, %v843
        %v997 = vsel %vm620, %v733, %v845
        %v998 = vsel %vm620, %v734, %v847
        %v999 = vsel %vm620, %v735, %v849
        %v1000 = vsel %vm620, %v736, %v851
        %v1001 = vsel %vm620, %v737, %v853
        %v1002 = vsel %vm620, %v738, %v855
        %v1003 = vsel %vm620, %v739, %v857
        %v1004 = vsel %vm620, %v740, %v859
        %v1005 = vsel %vm620, %v741, %v861
        %vm1006 = vcmask 523264
        %v1007 = vsel %vm1006, %v982, %v911
        %v1008 = vsel %vm1006, %v983, %v913
        %v1009 = vsel %vm1006, %v984, %v915
        %v1010 = vsel %vm1006, %v985, %v917
        %v1011 = vsel %vm1006, %v986, %v919
        %v1012 = vsel %vm1006, %v987, %v921
        %v1013 = vsel %vm1006, %v988, %v923
        %v1014 = vsel %vm1006, %v989, %v925
        %v1015 = vsel %vm1006, %v990, %v927
        %v1016 = vsel %vm1006, %v991, %v929
        %v1017 = vsel %vm1006, %v992, %v931
        %v1018 = vsel %vm1006, %v993, %v933
        %v1019 = vsel %vm1006, %v994, %v935
        %v1020 = vsel %vm1006, %v995, %v937
        %v1021 = vsel %vm1006, %v996, %v939
        %v1022 = vsel %vm1006, %v997, %v941
        %v1023 = vsel %vm1006, %v998, %v943
        %v1024 = vsel %vm1006, %v999, %v945
        %v1025 = vsel %vm1006, %v1000, %v947
        %v1026 = vsel %vm1006, %v1001, %v949
        %v1027 = vsel %vm1006, %v1002, %v951
        %v1028 = vsel %vm1006, %v1003, %v953
        %v1029 = vsel %vm1006, %v1004, %v955
        %v1030 = vsel %vm1006, %v1005, %v957
        %v1031 = vld [vmem:[%s5] sm:$0xff]
        %v1032 = vld [vmem:[%s5 + $0x8] sm:$0xff]
        %v1033 = vld [vmem:[%s5 + $0x10] sm:$0xff]
        %v1034 = vld [vmem:[%s5 + $0x18] sm:$0xff]
        %v1035 = vld [vmem:[%s5 + $0x20] sm:$0xff]
        %v1036 = vld [vmem:[%s5 + $0x28] sm:$0xff]
        %v1037 = vld [vmem:[%s5 + $0x30] sm:$0xff]
        %v1038 = vld [vmem:[%s5 + $0x38] sm:$0xff]
        %v1039 = vld [vmem:[%s5 + $0x40] sm:$0xff]
        %v1040 = vld [vmem:[%s5 + $0x48] sm:$0xff]
        %v1041 = vld [vmem:[%s5 + $0x50] sm:$0xff]
        %v1042 = vld [vmem:[%s5 + $0x58] sm:$0xff]
        %s1043 = scalar_lea.vmem %s5, 96
        %v1044 = vld [vmem:[%s1043] sm:$0xff]
        %v1045 = vld [vmem:[%s1043 + $0x8] sm:$0xff]
        %v1046 = vld [vmem:[%s1043 + $0x10] sm:$0xff]
        %v1047 = vld [vmem:[%s1043 + $0x18] sm:$0xff]
        %v1048 = vld [vmem:[%s1043 + $0x20] sm:$0xff]
        %v1049 = vld [vmem:[%s1043 + $0x28] sm:$0xff]
        %v1050 = vld [vmem:[%s1043 + $0x30] sm:$0xff]
        %v1051 = vld [vmem:[%s1043 + $0x38] sm:$0xff]
        %v1052 = vld [vmem:[%s1043 + $0x40] sm:$0xff]
        %v1053 = vld [vmem:[%s1043 + $0x48] sm:$0xff]
        %v1054 = vld [vmem:[%s1043 + $0x50] sm:$0xff]
        %v1055 = vld [vmem:[%s1043 + $0x58] sm:$0xff]
        %vm1056 = vcmask 785408
        %v1058 = vsel %vm1056, %v1009, 0
        %v1061 = vsel %vm1056, %v1010, 0
        %v1064 = vsel %vm1056, %v1011, 0
        %v1067 = vsel %vm1056, %v1012, 0
        %v1070 = vsel %vm1056, %v1013, 0
        %v1073 = vsel %vm1056, %v1014, 0
        %v1076 = vsel %vm1056, %v1015, 0
        %v1079 = vsel %vm1056, %v1016, 0
        %v1082 = vsel %vm1056, %v1017, 0
        %v1085 = vsel %vm1056, %v1018, 0
        %v1088 = vsel %vm1056, %v1019, 0
        %v1091 = vsel %vm1056, %v1020, 0
        %v1094 = vsel %vm1056, %v1021, 0
        %v1097 = vsel %vm1056, %v1022, 0
        %v1100 = vsel %vm1056, %v1023, 0
        %v1103 = vsel %vm1056, %v1024, 0
        %v1106 = vsel %vm1056, %v1025, 0
        %v1109 = vsel %vm1056, %v1026, 0
        %v1112 = vsel %vm1056, %v1027, 0
        %v1115 = vsel %vm1056, %v1028, 0
        %1117 = vmatpush.msra.mxu0 0.0
        %1118 = vmatpush.msra.mxu0 0.0
        %1119 = vmatpush.msra.mxu0 0.0
        %1120 = vmatpush.msra.mxu0 0.0
        %1121 = vmatpush.msra.mxu0 %v1055
        %1122 = vmatpush.msra.mxu0 %v1054
        %1123 = vmatpush.msra.mxu0 %v1053
        %1124 = vmatpush.msra.mxu0 %v1052
        %1125 = vmatpush.msra.mxu0 %v1051
        %1126 = vmatpush.msra.mxu0 %v1050
        %1127 = vmatpush.msra.mxu0 %v1049
        %1128 = vmatpush.msra.mxu0 %v1048
        %1129 = vmatpush.msra.mxu0 %v1047
        %1130 = vmatpush.msra.mxu0 %v1046
        %1131 = vmatpush.msra.mxu0 %v1045
        %1132 = vmatpush.msra.mxu0 %v1044
        %1133 = vmatmul.f32.gmra.mxu0 %v1058
        %v1134 = vpop.f32.mrf.mxu0
        %v1135 = vadd.f32 0.0, %v1134
        %1136 = vmatmul.f32.gmra.mxu0 %v1061
        %v1137 = vpop.f32.mrf.mxu0
        %v1138 = vadd.f32 0.0, %v1137
        %1139 = vmatmul.f32.gmra.mxu0 %v1064
        %v1140 = vpop.f32.mrf.mxu0
        %v1141 = vadd.f32 0.0, %v1140
        %1142 = vmatmul.f32.gmra.mxu0 %v1067
        %v1143 = vpop.f32.mrf.mxu0
        %v1144 = vadd.f32 0.0, %v1143
        %1145 = vmatmul.f32.gmra.mxu0 %v1070
        %v1146 = vpop.f32.mrf.mxu0
        %v1147 = vadd.f32 0.0, %v1146
        %1148 = vmatmul.f32.gmra.mxu0 %v1073
        %v1149 = vpop.f32.mrf.mxu0
        %v1150 = vadd.f32 0.0, %v1149
        %1151 = vmatmul.f32.gmra.mxu0 %v1076
        %v1152 = vpop.f32.mrf.mxu0
        %v1153 = vadd.f32 0.0, %v1152
        %1154 = vmatmul.f32.gmra.mxu0 %v1079
        %v1155 = vpop.f32.mrf.mxu0
        %v1156 = vadd.f32 0.0, %v1155
        %1157 = vmatmul.f32.gmra.mxu0 %v1082
        %v1158 = vpop.f32.mrf.mxu0
        %v1159 = vadd.f32 0.0, %v1158
        %1160 = vmatmul.f32.gmra.mxu0 %v1085
        %v1161 = vpop.f32.mrf.mxu0
        %v1162 = vadd.f32 0.0, %v1161
        %1163 = vmatmul.f32.gmra.mxu0 %v1088
        %v1164 = vpop.f32.mrf.mxu0
        %v1165 = vadd.f32 0.0, %v1164
        %1166 = vmatmul.f32.gmra.mxu0 %v1091
        %v1167 = vpop.f32.mrf.mxu0
        %v1168 = vadd.f32 0.0, %v1167
        %1169 = vmatmul.f32.gmra.mxu0 %v1094
        %v1170 = vpop.f32.mrf.mxu0
        %v1171 = vadd.f32 0.0, %v1170
        %1172 = vmatmul.f32.gmra.mxu0 %v1097
        %v1173 = vpop.f32.mrf.mxu0
        %v1174 = vadd.f32 0.0, %v1173
        %1175 = vmatmul.f32.gmra.mxu0 %v1100
        %v1176 = vpop.f32.mrf.mxu0
        %v1177 = vadd.f32 0.0, %v1176
        %1178 = vmatmul.f32.gmra.mxu0 %v1103
        %v1179 = vpop.f32.mrf.mxu0
        %v1180 = vadd.f32 0.0, %v1179
        %1181 = vmatmul.f32.gmra.mxu0 %v1106
        %v1182 = vpop.f32.mrf.mxu0
        %v1183 = vadd.f32 0.0, %v1182
        %1184 = vmatmul.f32.gmra.mxu0 %v1109
        %v1185 = vpop.f32.mrf.mxu0
        %v1186 = vadd.f32 0.0, %v1185
        %1187 = vmatmul.f32.gmra.mxu0 %v1112
        %v1188 = vpop.f32.mrf.mxu0
        %v1189 = vadd.f32 0.0, %v1188
        %1190 = vmatmul.f32.gmra.mxu0 %v1115
        %v1191 = vpop.f32.mrf.mxu0
        %v1192 = vadd.f32 0.0, %v1191
        %1193 = vdwg.mxu0
        %v1195 = vsel %vm1056, %v1007, 0
        %v1198 = vsel %vm1056, %v1008, 0
        %1200 = vmatpush.msra.mxu0 0.0
        %1201 = vmatpush.msra.mxu0 0.0
        %1202 = vmatpush.msra.mxu0 0.0
        %1203 = vmatpush.msra.mxu0 0.0
        %1204 = vmatpush.msra.mxu0 %v1042
        %1205 = vmatpush.msra.mxu0 %v1041
        %1206 = vmatpush.msra.mxu0 %v1040
        %1207 = vmatpush.msra.mxu0 %v1039
        %1208 = vmatpush.msra.mxu0 %v1038
        %1209 = vmatpush.msra.mxu0 %v1037
        %1210 = vmatpush.msra.mxu0 %v1036
        %1211 = vmatpush.msra.mxu0 %v1035
        %1212 = vmatpush.msra.mxu0 %v1034
        %1213 = vmatpush.msra.mxu0 %v1033
        %1214 = vmatpush.msra.mxu0 %v1032
        %1215 = vmatpush.msra.mxu0 %v1031
        %1216 = vmatmul.f32.gmra.mxu0 %v1195
        %v1217 = vpop.f32.mrf.mxu0
        %v1218 = vadd.f32 %v1135, %v1217
        %1219 = vmatmul.f32.gmra.mxu0 %v1198
        %v1220 = vpop.f32.mrf.mxu0
        %v1221 = vadd.f32 %v1138, %v1220
        %1222 = vmatmul.f32.gmra.mxu0 %v1058
        %v1223 = vpop.f32.mrf.mxu0
        %v1224 = vadd.f32 %v1141, %v1223
        %1225 = vmatmul.f32.gmra.mxu0 %v1061
        %v1226 = vpop.f32.mrf.mxu0
        %v1227 = vadd.f32 %v1144, %v1226
        %1228 = vmatmul.f32.gmra.mxu0 %v1064
        %v1229 = vpop.f32.mrf.mxu0
        %v1230 = vadd.f32 %v1147, %v1229
        %1231 = vmatmul.f32.gmra.mxu0 %v1067
        %v1232 = vpop.f32.mrf.mxu0
        %v1233 = vadd.f32 %v1150, %v1232
        %1234 = vmatmul.f32.gmra.mxu0 %v1070
        %v1235 = vpop.f32.mrf.mxu0
        %v1236 = vadd.f32 %v1153, %v1235
        %1237 = vmatmul.f32.gmra.mxu0 %v1073
        %v1238 = vpop.f32.mrf.mxu0
        %v1239 = vadd.f32 %v1156, %v1238
        %1240 = vmatmul.f32.gmra.mxu0 %v1076
        %v1241 = vpop.f32.mrf.mxu0
        %v1242 = vadd.f32 %v1159, %v1241
        %1243 = vmatmul.f32.gmra.mxu0 %v1079
        %v1244 = vpop.f32.mrf.mxu0
        %v1245 = vadd.f32 %v1162, %v1244
        %1246 = vmatmul.f32.gmra.mxu0 %v1082
        %v1247 = vpop.f32.mrf.mxu0
        %v1248 = vadd.f32 %v1165, %v1247
        %1249 = vmatmul.f32.gmra.mxu0 %v1085
        %v1250 = vpop.f32.mrf.mxu0
        %v1251 = vadd.f32 %v1168, %v1250
        %1252 = vmatmul.f32.gmra.mxu0 %v1088
        %v1253 = vpop.f32.mrf.mxu0
        %v1254 = vadd.f32 %v1171, %v1253
        %1255 = vmatmul.f32.gmra.mxu0 %v1091
        %v1256 = vpop.f32.mrf.mxu0
        %v1257 = vadd.f32 %v1174, %v1256
        %1258 = vmatmul.f32.gmra.mxu0 %v1094
        %v1259 = vpop.f32.mrf.mxu0
        %v1260 = vadd.f32 %v1177, %v1259
        %1261 = vmatmul.f32.gmra.mxu0 %v1097
        %v1262 = vpop.f32.mrf.mxu0
        %v1263 = vadd.f32 %v1180, %v1262
        %1264 = vmatmul.f32.gmra.mxu0 %v1100
        %v1265 = vpop.f32.mrf.mxu0
        %v1266 = vadd.f32 %v1183, %v1265
        %1267 = vmatmul.f32.gmra.mxu0 %v1103
        %v1268 = vpop.f32.mrf.mxu0
        %v1269 = vadd.f32 %v1186, %v1268
        %1270 = vmatmul.f32.gmra.mxu0 %v1106
        %v1271 = vpop.f32.mrf.mxu0
        %v1272 = vadd.f32 %v1189, %v1271
        %1273 = vmatmul.f32.gmra.mxu0 %v1109
        %v1274 = vpop.f32.mrf.mxu0
        %v1275 = vadd.f32 %v1192, %v1274
        %1276 = vdwg.mxu0
        %s1277 = scalar_lea.vmem %s5, 192
        %v1278 = vld [vmem:[%s1277] sm:$0xff]
        %v1279 = vld [vmem:[%s1277 + $0x8] sm:$0xff]
        %v1280 = vld [vmem:[%s1277 + $0x10] sm:$0xff]
        %v1281 = vld [vmem:[%s1277 + $0x18] sm:$0xff]
        %v1282 = vld [vmem:[%s1277 + $0x20] sm:$0xff]
        %v1283 = vld [vmem:[%s1277 + $0x28] sm:$0xff]
        %v1284 = vld [vmem:[%s1277 + $0x30] sm:$0xff]
        %v1285 = vld [vmem:[%s1277 + $0x38] sm:$0xff]
        %v1286 = vld [vmem:[%s1277 + $0x40] sm:$0xff]
        %v1287 = vld [vmem:[%s1277 + $0x48] sm:$0xff]
        %v1288 = vld [vmem:[%s1277 + $0x50] sm:$0xff]
        %v1289 = vld [vmem:[%s1277 + $0x58] sm:$0xff]
        %v1291 = vsel %vm1056, %v1029, 0
        %v1294 = vsel %vm1056, %v1030, 0
        %1296 = vmatpush.msra.mxu0 0.0
        %1297 = vmatpush.msra.mxu0 0.0
        %1298 = vmatpush.msra.mxu0 0.0
        %1299 = vmatpush.msra.mxu0 0.0
        %1300 = vmatpush.msra.mxu0 %v1289
        %1301 = vmatpush.msra.mxu0 %v1288
        %1302 = vmatpush.msra.mxu0 %v1287
        %1303 = vmatpush.msra.mxu0 %v1286
        %1304 = vmatpush.msra.mxu0 %v1285
        %1305 = vmatpush.msra.mxu0 %v1284
        %1306 = vmatpush.msra.mxu0 %v1283
        %1307 = vmatpush.msra.mxu0 %v1282
        %1308 = vmatpush.msra.mxu0 %v1281
        %1309 = vmatpush.msra.mxu0 %v1280
        %1310 = vmatpush.msra.mxu0 %v1279
        %1311 = vmatpush.msra.mxu0 %v1278
        %1312 = vmatmul.f32.gmra.mxu0 %v1064
        %v1313 = vpop.f32.mrf.mxu0
        %v1314 = vadd.f32 0.0, %v1313
        %1315 = vmatmul.f32.gmra.mxu0 %v1067
        %v1316 = vpop.f32.mrf.mxu0
        %v1317 = vadd.f32 0.0, %v1316
        %1318 = vmatmul.f32.gmra.mxu0 %v1070
        %v1319 = vpop.f32.mrf.mxu0
        %v1320 = vadd.f32 0.0, %v1319
        %1321 = vmatmul.f32.gmra.mxu0 %v1073
        %v1322 = vpop.f32.mrf.mxu0
        %v1323 = vadd.f32 0.0, %v1322
        %1324 = vmatmul.f32.gmra.mxu0 %v1076
        %v1325 = vpop.f32.mrf.mxu0
        %v1326 = vadd.f32 0.0, %v1325
        %1327 = vmatmul.f32.gmra.mxu0 %v1079
        %v1328 = vpop.f32.mrf.mxu0
        %v1329 = vadd.f32 0.0, %v1328
        %1330 = vmatmul.f32.gmra.mxu0 %v1082
        %v1331 = vpop.f32.mrf.mxu0
        %v1332 = vadd.f32 0.0, %v1331
        %1333 = vmatmul.f32.gmra.mxu0 %v1085
        %v1334 = vpop.f32.mrf.mxu0
        %v1335 = vadd.f32 0.0, %v1334
        %1336 = vmatmul.f32.gmra.mxu0 %v1088
        %v1337 = vpop.f32.mrf.mxu0
        %v1338 = vadd.f32 0.0, %v1337
        %1339 = vmatmul.f32.gmra.mxu0 %v1091
        %v1340 = vpop.f32.mrf.mxu0
        %v1341 = vadd.f32 0.0, %v1340
        %1342 = vmatmul.f32.gmra.mxu0 %v1094
        %v1343 = vpop.f32.mrf.mxu0
        %v1344 = vadd.f32 0.0, %v1343
        %1345 = vmatmul.f32.gmra.mxu0 %v1097
        %v1346 = vpop.f32.mrf.mxu0
        %v1347 = vadd.f32 0.0, %v1346
        %1348 = vmatmul.f32.gmra.mxu0 %v1100
        %v1349 = vpop.f32.mrf.mxu0
        %v1350 = vadd.f32 0.0, %v1349
        %1351 = vmatmul.f32.gmra.mxu0 %v1103
        %v1352 = vpop.f32.mrf.mxu0
        %v1353 = vadd.f32 0.0, %v1352
        %1354 = vmatmul.f32.gmra.mxu0 %v1106
        %v1355 = vpop.f32.mrf.mxu0
        %v1356 = vadd.f32 0.0, %v1355
        %1357 = vmatmul.f32.gmra.mxu0 %v1109
        %v1358 = vpop.f32.mrf.mxu0
        %v1359 = vadd.f32 0.0, %v1358
        %1360 = vmatmul.f32.gmra.mxu0 %v1112
        %v1361 = vpop.f32.mrf.mxu0
        %v1362 = vadd.f32 0.0, %v1361
        %1363 = vmatmul.f32.gmra.mxu0 %v1115
        %v1364 = vpop.f32.mrf.mxu0
        %v1365 = vadd.f32 0.0, %v1364
        %1366 = vmatmul.f32.gmra.mxu0 %v1291
        %v1367 = vpop.f32.mrf.mxu0
        %v1368 = vadd.f32 0.0, %v1367
        %1369 = vmatmul.f32.gmra.mxu0 %v1294
        %v1370 = vpop.f32.mrf.mxu0
        %v1371 = vadd.f32 0.0, %v1370
        %1372 = vdwg.mxu0
        %v1373 = vadd.f32 %v1218, %v1314
        %v1374 = vadd.f32 %v1221, %v1317
        %v1375 = vadd.f32 %v1224, %v1320
        %v1376 = vadd.f32 %v1227, %v1323
        %v1377 = vadd.f32 %v1230, %v1326
        %v1378 = vadd.f32 %v1233, %v1329
        %v1379 = vadd.f32 %v1236, %v1332
        %v1380 = vadd.f32 %v1239, %v1335
        %v1381 = vadd.f32 %v1242, %v1338
        %v1382 = vadd.f32 %v1245, %v1341
        %v1383 = vadd.f32 %v1248, %v1344
        %v1384 = vadd.f32 %v1251, %v1347
        %v1385 = vadd.f32 %v1254, %v1350
        %v1386 = vadd.f32 %v1257, %v1353
        %v1387 = vadd.f32 %v1260, %v1356
        %v1388 = vadd.f32 %v1263, %v1359
        %v1389 = vadd.f32 %v1266, %v1362
        %v1390 = vadd.f32 %v1269, %v1365
        %v1391 = vadd.f32 %v1272, %v1368
        %v1392 = vadd.f32 %v1275, %v1371
        %v1393 = vld [vmem:[%s6] sm:$0x1]
        %v1395 = vperm.slane %v1393, 0
        %v1397 = vadd.f32 %v1373, %v1395
        %v1398 = vadd.f32 %v1374, %v1395
        %v1399 = vadd.f32 %v1375, %v1395
        %v1400 = vadd.f32 %v1376, %v1395
        %v1401 = vadd.f32 %v1377, %v1395
        %v1402 = vadd.f32 %v1378, %v1395
        %v1403 = vadd.f32 %v1379, %v1395
        %v1404 = vadd.f32 %v1380, %v1395
        %v1405 = vadd.f32 %v1381, %v1395
        %v1406 = vadd.f32 %v1382, %v1395
        %v1407 = vadd.f32 %v1383, %v1395
        %v1408 = vadd.f32 %v1384, %v1395
        %v1409 = vadd.f32 %v1385, %v1395
        %v1410 = vadd.f32 %v1386, %v1395
        %v1411 = vadd.f32 %v1387, %v1395
        %v1412 = vadd.f32 %v1388, %v1395
        %v1413 = vadd.f32 %v1389, %v1395
        %v1414 = vadd.f32 %v1390, %v1395
        %v1415 = vadd.f32 %v1391, %v1395
        %v1416 = vadd.f32 %v1392, %v1395
        %v1417 = vmax.f32 %v1397, 0.0
        %v1418 = vmax.f32 %v1398, 0.0
        %v1419 = vmax.f32 %v1399, 0.0
        %v1420 = vmax.f32 %v1400, 0.0
        %v1421 = vmax.f32 %v1401, 0.0
        %v1422 = vmax.f32 %v1402, 0.0
        %v1423 = vmax.f32 %v1403, 0.0
        %v1424 = vmax.f32 %v1404, 0.0
        %v1425 = vmax.f32 %v1405, 0.0
        %v1426 = vmax.f32 %v1406, 0.0
        %v1427 = vmax.f32 %v1407, 0.0
        %v1428 = vmax.f32 %v1408, 0.0
        %v1429 = vmax.f32 %v1409, 0.0
        %v1430 = vmax.f32 %v1410, 0.0
        %v1431 = vmax.f32 %v1411, 0.0
        %v1432 = vmax.f32 %v1412, 0.0
        %v1433 = vmax.f32 %v1413, 0.0
        %v1434 = vmax.f32 %v1414, 0.0
        %v1435 = vmax.f32 %v1415, 0.0
        %v1436 = vmax.f32 %v1416, 0.0
        %1437 = vst.msk [vmem:[#allocation3] sm:$0xff] %vm620, 0.0
        %1438 = vst.msk [vmem:[#allocation3 + $0x8] sm:$0xff] %vm620, 0.0
        %1439 = vst.msk [vmem:[#allocation3 + $0x10] sm:$0x3] %vm623, 0.0
        %1440 = vst.msk [vmem:[#allocation3 + $0x18] sm:$0xff] %vm620, 0.0
        %1441 = vst.msk [vmem:[#allocation3 + $0x20] sm:$0xff] %vm620, 0.0
        %1442 = vst.msk [vmem:[#allocation3 + $0x28] sm:$0x3] %vm623, 0.0
        %1443 = vst.msk [vmem:[#allocation3 + $0x30] sm:$0xff] %vm620, 0.0
        %1444 = vst.msk [vmem:[#allocation3 + $0x38] sm:$0xff] %vm620, 0.0
        %1445 = vst.msk [vmem:[#allocation3 + $0x40] sm:$0x3] %vm623, 0.0
        %1446 = vst.msk [vmem:[#allocation3 + $0x48] sm:$0xff] %vm620, 0.0
        %1447 = vst.msk [vmem:[#allocation3 + $0x50] sm:$0xff] %vm620, 0.0
        %1448 = vst.msk [vmem:[#allocation3 + $0x58] sm:$0x3] %vm623, 0.0
        %1449 = vst.msk [vmem:[#allocation3 + $0x60] sm:$0xff] %vm620, 0.0
        %1450 = vst.msk [vmem:[#allocation3 + $0x68] sm:$0xff] %vm620, 0.0
        %1451 = vst.msk [vmem:[#allocation3 + $0x70] sm:$0x3] %vm623, 0.0
        %1452 = vst.msk [vmem:[#allocation3 + $0x78] sm:$0xff] %vm620, 0.0
        %1453 = vst.msk [vmem:[#allocation3 + $0x80] sm:$0xff] %vm620, 0.0
        %1454 = vst.msk [vmem:[#allocation3 + $0x88] sm:$0x3] %vm623, 0.0
        %1455 = vst.msk [vmem:[#allocation3 + $0x90] sm:$0xff] %vm620, 0.0
        %1456 = vst.msk [vmem:[#allocation3 + $0x98] sm:$0xff] %vm620, 0.0
        %1457 = vst.msk [vmem:[#allocation3 + $0xa0] sm:$0x3] %vm623, 0.0
        %1458 = vst.msk [vmem:[#allocation3 + $0xa8] sm:$0xff] %vm620, 0.0
        %1459 = vst.msk [vmem:[#allocation3 + $0xb0] sm:$0xff] %vm620, 0.0
        %1460 = vst.msk [vmem:[#allocation3 + $0xb8] sm:$0x3] %vm623, 0.0
        %1461 = vst.msk [vmem:[#allocation3 + $0xc0] sm:$0xff] %vm620, 0.0
        %1462 = vst.msk [vmem:[#allocation3 + $0xc8] sm:$0xff] %vm620, 0.0
        %1463 = vst.msk [vmem:[#allocation3 + $0xd0] sm:$0x3] %vm623, 0.0
        %1464 = vst.msk [vmem:[#allocation3 + $0xd8] sm:$0xff] %vm620, 0.0
        %1465 = vst.msk [vmem:[#allocation3 + $0xe0] sm:$0xff] %vm620, 0.0
        %1466 = vst.msk [vmem:[#allocation3 + $0xe8] sm:$0x3] %vm623, 0.0
        %1467 = vst.msk [vmem:[#allocation3 + $0x1] sm:$0xff] %vm620, %v1417
        %1468 = vst.msk [vmem:[#allocation3 + $0x9] sm:$0xff] %vm620, %v1418
        %1469 = vst.msk [vmem:[#allocation3 + $0x19] sm:$0xff] %vm620, %v1419
        %1470 = vst.msk [vmem:[#allocation3 + $0x21] sm:$0xff] %vm620, %v1420
        %1471 = vst.msk [vmem:[#allocation3 + $0x31] sm:$0xff] %vm620, %v1421
        %1472 = vst.msk [vmem:[#allocation3 + $0x39] sm:$0xff] %vm620, %v1422
        %1473 = vst.msk [vmem:[#allocation3 + $0x49] sm:$0xff] %vm620, %v1423
        %1474 = vst.msk [vmem:[#allocation3 + $0x51] sm:$0xff] %vm620, %v1424
        %1475 = vst.msk [vmem:[#allocation3 + $0x61] sm:$0xff] %vm620, %v1425
        %1476 = vst.msk [vmem:[#allocation3 + $0x69] sm:$0xff] %vm620, %v1426
        %1477 = vst.msk [vmem:[#allocation3 + $0x79] sm:$0xff] %vm620, %v1427
        %1478 = vst.msk [vmem:[#allocation3 + $0x81] sm:$0xff] %vm620, %v1428
        %1479 = vst.msk [vmem:[#allocation3 + $0x91] sm:$0xff] %vm620, %v1429
        %1480 = vst.msk [vmem:[#allocation3 + $0x99] sm:$0xff] %vm620, %v1430
        %1481 = vst.msk [vmem:[#allocation3 + $0xa9] sm:$0xff] %vm620, %v1431
        %1482 = vst.msk [vmem:[#allocation3 + $0xb1] sm:$0xff] %vm620, %v1432
        %1483 = vst.msk [vmem:[#allocation3 + $0xc1] sm:$0xff] %vm620, %v1433
        %1484 = vst.msk [vmem:[#allocation3 + $0xc9] sm:$0xff] %vm620, %v1434
        %1485 = vst.msk [vmem:[#allocation3 + $0xd9] sm:$0xff] %vm620, %v1435
        %1486 = vst.msk [vmem:[#allocation3 + $0xe1] sm:$0xff] %vm620, %v1436
        %p1487 = scmp.eq.s32.totalorder %s28, 0
        // Predicated region
        $region65: #{residual_blocks_with_input_conv.5} parent=55 // pred_check
          %p1488 = pneg %p1487
        $region66: #{residual_blocks_with_input_conv.5} parent=55 // pred_check_branch
          %1490 = sbr.rel (%p1488) target = $region68
        $region67: #{residual_blocks_with_input_conv.5} parent=55 // pred_region
          %1491 = vst.msk [vmem:[#allocation3] sm:$0xff] %vm620, 0.0
          %1492 = vst.msk [vmem:[#allocation3 + $0x8] sm:$0xff] %vm620, 0.0
          %1493 = vst.msk [vmem:[#allocation3 + $0x10] sm:$0x3] %vm623, 0.0
        $region68: #{residual_blocks_with_input_conv.5} parent=55 // pred_fallthru
          _
        %p1494 = scmp.eq.s32.totalorder %s28, 1
        // Predicated region
        $region69: #{residual_blocks_with_input_conv.5} parent=55 // pred_check
          %p1495 = pneg %p1494
        $region70: #{residual_blocks_with_input_conv.5} parent=55 // pred_check_branch
          %1497 = sbr.rel (%p1495) target = $region72
        $region71: #{residual_blocks_with_input_conv.5} parent=55 // pred_region
          %s1498 = scalar_lea.vmem [#allocation3], 216
          %1499 = vst.msk [vmem:[%s1498] sm:$0xff] %vm620, 0.0
          %1500 = vst.msk [vmem:[%s1498 + $0x8] sm:$0xff] %vm620, 0.0
          %1501 = vst.msk [vmem:[%s1498 + $0x10] sm:$0x3] %vm623, 0.0
        $region72: #{residual_blocks_with_input_conv.5} parent=55 // pred_fallthru
          _
        %v1502 = vld [vmem:[#allocation3] sm:$0xff]
        %v1503 = vld [vmem:[#allocation3 + $0x8] sm:$0xff]
        %v1504 = vld [vmem:[#allocation3 + $0x18] sm:$0xff]
        %v1505 = vld [vmem:[#allocation3 + $0x20] sm:$0xff]
        %v1506 = vld [vmem:[#allocation3 + $0x30] sm:$0xff]
        %v1507 = vld [vmem:[#allocation3 + $0x38] sm:$0xff]
        %v1508 = vld [vmem:[#allocation3 + $0x48] sm:$0xff]
        %v1509 = vld [vmem:[#allocation3 + $0x50] sm:$0xff]
        %v1510 = vld [vmem:[#allocation3 + $0x60] sm:$0xff]
        %v1511 = vld [vmem:[#allocation3 + $0x68] sm:$0xff]
        %v1512 = vld [vmem:[#allocation3 + $0x78] sm:$0xff]
        %v1513 = vld [vmem:[#allocation3 + $0x80] sm:$0xff]
        %v1514 = vld [vmem:[#allocation3 + $0x90] sm:$0xff]
        %v1515 = vld [vmem:[#allocation3 + $0x98] sm:$0xff]
        %v1516 = vld [vmem:[#allocation3 + $0xa8] sm:$0xff]
        %v1517 = vld [vmem:[#allocation3 + $0xb0] sm:$0xff]
        %v1518 = vld [vmem:[#allocation3 + $0xc0] sm:$0xff]
        %v1519 = vld [vmem:[#allocation3 + $0xc8] sm:$0xff]
        %v1520 = vld [vmem:[#allocation3 + $0xd8] sm:$0xff]
        %v1521 = vld [vmem:[#allocation3 + $0xe0] sm:$0xff]
        %v1522 = vld [vmem:[#allocation3 + $0x1] sm:$0xff]
        %v1523 = vld [vmem:[#allocation3 + $0x9] sm:$0xff]
        %v1524 = vld [vmem:[#allocation3 + $0x19] sm:$0xff]
        %v1525 = vld [vmem:[#allocation3 + $0x21] sm:$0xff]
        %v1526 = vld [vmem:[#allocation3 + $0x31] sm:$0xff]
        %v1527 = vld [vmem:[#allocation3 + $0x39] sm:$0xff]
        %v1528 = vld [vmem:[#allocation3 + $0x49] sm:$0xff]
        %v1529 = vld [vmem:[#allocation3 + $0x51] sm:$0xff]
        %v1530 = vld [vmem:[#allocation3 + $0x61] sm:$0xff]
        %v1531 = vld [vmem:[#allocation3 + $0x69] sm:$0xff]
        %v1532 = vld [vmem:[#allocation3 + $0x79] sm:$0xff]
        %v1533 = vld [vmem:[#allocation3 + $0x81] sm:$0xff]
        %v1534 = vld [vmem:[#allocation3 + $0x91] sm:$0xff]
        %v1535 = vld [vmem:[#allocation3 + $0x99] sm:$0xff]
        %v1536 = vld [vmem:[#allocation3 + $0xa9] sm:$0xff]
        %v1537 = vld [vmem:[#allocation3 + $0xb1] sm:$0xff]
        %v1538 = vld [vmem:[#allocation3 + $0xc1] sm:$0xff]
        %v1539 = vld [vmem:[#allocation3 + $0xc9] sm:$0xff]
        %v1540 = vld [vmem:[#allocation3 + $0xd9] sm:$0xff]
        %v1541 = vld [vmem:[#allocation3 + $0xe1] sm:$0xff]
        %v1542 = vld [vmem:[#allocation3 + $0x2] sm:$0xff]
        %v1543 = vld [vmem:[#allocation3 + $0xa] sm:$0xff]
        %v1544 = vld [vmem:[#allocation3 + $0x1a] sm:$0xff]
        %v1545 = vld [vmem:[#allocation3 + $0x22] sm:$0xff]
        %v1546 = vld [vmem:[#allocation3 + $0x32] sm:$0xff]
        %v1547 = vld [vmem:[#allocation3 + $0x3a] sm:$0xff]
        %v1548 = vld [vmem:[#allocation3 + $0x4a] sm:$0xff]
        %v1549 = vld [vmem:[#allocation3 + $0x52] sm:$0xff]
        %v1550 = vld [vmem:[#allocation3 + $0x62] sm:$0xff]
        %v1551 = vld [vmem:[#allocation3 + $0x6a] sm:$0xff]
        %v1552 = vld [vmem:[#allocation3 + $0x7a] sm:$0xff]
        %v1553 = vld [vmem:[#allocation3 + $0x82] sm:$0xff]
        %v1554 = vld [vmem:[#allocation3 + $0x92] sm:$0xff]
        %v1555 = vld [vmem:[#allocation3 + $0x9a] sm:$0xff]
        %v1556 = vld [vmem:[#allocation3 + $0xaa] sm:$0xff]
        %v1557 = vld [vmem:[#allocation3 + $0xb2] sm:$0xff]
        %v1558 = vld [vmem:[#allocation3 + $0xc2] sm:$0xff]
        %v1559 = vld [vmem:[#allocation3 + $0xca] sm:$0xff]
        %v1560 = vld [vmem:[#allocation3 + $0xda] sm:$0xff]
        %v1561 = vld [vmem:[#allocation3 + $0xe2] sm:$0xff]
        %1582 = vrot.lane.b32.xlu0 %v1522, 32
        %v1583 = vpop.permute.xlu0 %1582
        %1584 = vrot.lane.b32.xlu0 %v1523, 32
        %v1585 = vpop.permute.xlu0 %1584
        %1586 = vrot.lane.b32.xlu0 %v1524, 32
        %v1587 = vpop.permute.xlu0 %1586
        %1588 = vrot.lane.b32.xlu0 %v1525, 32
        %v1589 = vpop.permute.xlu0 %1588
        %1590 = vrot.lane.b32.xlu0 %v1526, 32
        %v1591 = vpop.permute.xlu0 %1590
        %1592 = vrot.lane.b32.xlu0 %v1527, 32
        %v1593 = vpop.permute.xlu0 %1592
        %1594 = vrot.lane.b32.xlu0 %v1528, 32
        %v1595 = vpop.permute.xlu0 %1594
        %1596 = vrot.lane.b32.xlu0 %v1529, 32
        %v1597 = vpop.permute.xlu0 %1596
        %1598 = vrot.lane.b32.xlu0 %v1530, 32
        %v1599 = vpop.permute.xlu0 %1598
        %1600 = vrot.lane.b32.xlu0 %v1531, 32
        %v1601 = vpop.permute.xlu0 %1600
        %1602 = vrot.lane.b32.xlu0 %v1532, 32
        %v1603 = vpop.permute.xlu0 %1602
        %1604 = vrot.lane.b32.xlu0 %v1533, 32
        %v1605 = vpop.permute.xlu0 %1604
        %1606 = vrot.lane.b32.xlu0 %v1534, 32
        %v1607 = vpop.permute.xlu0 %1606
        %1608 = vrot.lane.b32.xlu0 %v1535, 32
        %v1609 = vpop.permute.xlu0 %1608
        %1610 = vrot.lane.b32.xlu0 %v1536, 32
        %v1611 = vpop.permute.xlu0 %1610
        %1612 = vrot.lane.b32.xlu0 %v1537, 32
        %v1613 = vpop.permute.xlu0 %1612
        %1614 = vrot.lane.b32.xlu0 %v1538, 32
        %v1615 = vpop.permute.xlu0 %1614
        %1616 = vrot.lane.b32.xlu0 %v1539, 32
        %v1617 = vpop.permute.xlu0 %1616
        %1618 = vrot.lane.b32.xlu0 %v1540, 32
        %v1619 = vpop.permute.xlu0 %1618
        %1620 = vrot.lane.b32.xlu0 %v1541, 32
        %v1621 = vpop.permute.xlu0 %1620
        %1662 = vrot.lane.b32.xlu0 %v1542, 64
        %v1663 = vpop.permute.xlu0 %1662
        %1664 = vrot.lane.b32.xlu0 %v1543, 64
        %v1665 = vpop.permute.xlu0 %1664
        %1666 = vrot.lane.b32.xlu0 %v1544, 64
        %v1667 = vpop.permute.xlu0 %1666
        %1668 = vrot.lane.b32.xlu0 %v1545, 64
        %v1669 = vpop.permute.xlu0 %1668
        %1670 = vrot.lane.b32.xlu0 %v1546, 64
        %v1671 = vpop.permute.xlu0 %1670
        %1672 = vrot.lane.b32.xlu0 %v1547, 64
        %v1673 = vpop.permute.xlu0 %1672
        %1674 = vrot.lane.b32.xlu0 %v1548, 64
        %v1675 = vpop.permute.xlu0 %1674
        %1676 = vrot.lane.b32.xlu0 %v1549, 64
        %v1677 = vpop.permute.xlu0 %1676
        %1678 = vrot.lane.b32.xlu0 %v1550, 64
        %v1679 = vpop.permute.xlu0 %1678
        %1680 = vrot.lane.b32.xlu0 %v1551, 64
        %v1681 = vpop.permute.xlu0 %1680
        %1682 = vrot.lane.b32.xlu0 %v1552, 64
        %v1683 = vpop.permute.xlu0 %1682
        %1684 = vrot.lane.b32.xlu0 %v1553, 64
        %v1685 = vpop.permute.xlu0 %1684
        %1686 = vrot.lane.b32.xlu0 %v1554, 64
        %v1687 = vpop.permute.xlu0 %1686
        %1688 = vrot.lane.b32.xlu0 %v1555, 64
        %v1689 = vpop.permute.xlu0 %1688
        %1690 = vrot.lane.b32.xlu0 %v1556, 64
        %v1691 = vpop.permute.xlu0 %1690
        %1692 = vrot.lane.b32.xlu0 %v1557, 64
        %v1693 = vpop.permute.xlu0 %1692
        %1694 = vrot.lane.b32.xlu0 %v1558, 64
        %v1695 = vpop.permute.xlu0 %1694
        %1696 = vrot.lane.b32.xlu0 %v1559, 64
        %v1697 = vpop.permute.xlu0 %1696
        %1698 = vrot.lane.b32.xlu0 %v1560, 64
        %v1699 = vpop.permute.xlu0 %1698
        %1700 = vrot.lane.b32.xlu0 %v1561, 64
        %v1701 = vpop.permute.xlu0 %1700
        %v1722 = vsel %vm620, %v1502, %v1583
        %v1723 = vsel %vm620, %v1503, %v1585
        %v1724 = vsel %vm620, %v1504, %v1587
        %v1725 = vsel %vm620, %v1505, %v1589
        %v1726 = vsel %vm620, %v1506, %v1591
        %v1727 = vsel %vm620, %v1507, %v1593
        %v1728 = vsel %vm620, %v1508, %v1595
        %v1729 = vsel %vm620, %v1509, %v1597
        %v1730 = vsel %vm620, %v1510, %v1599
        %v1731 = vsel %vm620, %v1511, %v1601
        %v1732 = vsel %vm620, %v1512, %v1603
        %v1733 = vsel %vm620, %v1513, %v1605
        %v1734 = vsel %vm620, %v1514, %v1607
        %v1735 = vsel %vm620, %v1515, %v1609
        %v1736 = vsel %vm620, %v1516, %v1611
        %v1737 = vsel %vm620, %v1517, %v1613
        %v1738 = vsel %vm620, %v1518, %v1615
        %v1739 = vsel %vm620, %v1519, %v1617
        %v1740 = vsel %vm620, %v1520, %v1619
        %v1741 = vsel %vm620, %v1521, %v1621
        %v1742 = vsel %vm1006, %v1722, %v1663
        %v1743 = vsel %vm1006, %v1723, %v1665
        %v1744 = vsel %vm1006, %v1724, %v1667
        %v1745 = vsel %vm1006, %v1725, %v1669
        %v1746 = vsel %vm1006, %v1726, %v1671
        %v1747 = vsel %vm1006, %v1727, %v1673
        %v1748 = vsel %vm1006, %v1728, %v1675
        %v1749 = vsel %vm1006, %v1729, %v1677
        %v1750 = vsel %vm1006, %v1730, %v1679
        %v1751 = vsel %vm1006, %v1731, %v1681
        %v1752 = vsel %vm1006, %v1732, %v1683
        %v1753 = vsel %vm1006, %v1733, %v1685
        %v1754 = vsel %vm1006, %v1734, %v1687
        %v1755 = vsel %vm1006, %v1735, %v1689
        %v1756 = vsel %vm1006, %v1736, %v1691
        %v1757 = vsel %vm1006, %v1737, %v1693
        %v1758 = vsel %vm1006, %v1738, %v1695
        %v1759 = vsel %vm1006, %v1739, %v1697
        %v1760 = vsel %vm1006, %v1740, %v1699
        %v1761 = vsel %vm1006, %v1741, %v1701
        %v1762 = vld [vmem:[%s7] sm:$0xff]
        %v1763 = vld [vmem:[%s7 + $0x8] sm:$0xff]
        %v1764 = vld [vmem:[%s7 + $0x10] sm:$0xff]
        %v1765 = vld [vmem:[%s7 + $0x18] sm:$0xff]
        %v1766 = vld [vmem:[%s7 + $0x20] sm:$0xff]
        %v1767 = vld [vmem:[%s7 + $0x28] sm:$0xff]
        %v1768 = vld [vmem:[%s7 + $0x30] sm:$0xff]
        %v1769 = vld [vmem:[%s7 + $0x38] sm:$0xff]
        %v1770 = vld [vmem:[%s7 + $0x40] sm:$0xff]
        %v1771 = vld [vmem:[%s7 + $0x48] sm:$0xff]
        %v1772 = vld [vmem:[%s7 + $0x50] sm:$0xff]
        %v1773 = vld [vmem:[%s7 + $0x58] sm:$0xff]
        %s1774 = scalar_lea.vmem %s7, 96
        %v1775 = vld [vmem:[%s1774] sm:$0xff]
        %v1776 = vld [vmem:[%s1774 + $0x8] sm:$0xff]
        %v1777 = vld [vmem:[%s1774 + $0x10] sm:$0xff]
        %v1778 = vld [vmem:[%s1774 + $0x18] sm:$0xff]
        %v1779 = vld [vmem:[%s1774 + $0x20] sm:$0xff]
        %v1780 = vld [vmem:[%s1774 + $0x28] sm:$0xff]
        %v1781 = vld [vmem:[%s1774 + $0x30] sm:$0xff]
        %v1782 = vld [vmem:[%s1774 + $0x38] sm:$0xff]
        %v1783 = vld [vmem:[%s1774 + $0x40] sm:$0xff]
        %v1784 = vld [vmem:[%s1774 + $0x48] sm:$0xff]
        %v1785 = vld [vmem:[%s1774 + $0x50] sm:$0xff]
        %v1786 = vld [vmem:[%s1774 + $0x58] sm:$0xff]
        %v1788 = vsel %vm1056, %v1744, 0
        %v1791 = vsel %vm1056, %v1745, 0
        %v1794 = vsel %vm1056, %v1746, 0
        %v1797 = vsel %vm1056, %v1747, 0
        %v1800 = vsel %vm1056, %v1748, 0
        %v1803 = vsel %vm1056, %v1749, 0
        %v1806 = vsel %vm1056, %v1750, 0
        %v1809 = vsel %vm1056, %v1751, 0
        %v1812 = vsel %vm1056, %v1752, 0
        %v1815 = vsel %vm1056, %v1753, 0
        %v1818 = vsel %vm1056, %v1754, 0
        %v1821 = vsel %vm1056, %v1755, 0
        %v1824 = vsel %vm1056, %v1756, 0
        %v1827 = vsel %vm1056, %v1757, 0
        %v1830 = vsel %vm1056, %v1758, 0
        %v1833 = vsel %vm1056, %v1759, 0
        %1835 = vmatpush.msra.mxu0 0.0
        %1836 = vmatpush.msra.mxu0 0.0
        %1837 = vmatpush.msra.mxu0 0.0
        %1838 = vmatpush.msra.mxu0 0.0
        %1839 = vmatpush.msra.mxu0 %v1786
        %1840 = vmatpush.msra.mxu0 %v1785
        %1841 = vmatpush.msra.mxu0 %v1784
        %1842 = vmatpush.msra.mxu0 %v1783
        %1843 = vmatpush.msra.mxu0 %v1782
        %1844 = vmatpush.msra.mxu0 %v1781
        %1845 = vmatpush.msra.mxu0 %v1780
        %1846 = vmatpush.msra.mxu0 %v1779
        %1847 = vmatpush.msra.mxu0 %v1778
        %1848 = vmatpush.msra.mxu0 %v1777
        %1849 = vmatpush.msra.mxu0 %v1776
        %1850 = vmatpush.msra.mxu0 %v1775
        %1851 = vmatmul.f32.gmra.mxu0 %v1788
        %v1852 = vpop.f32.mrf.mxu0
        %v1853 = vadd.f32 0.0, %v1852
        %1854 = vmatmul.f32.gmra.mxu0 %v1791
        %v1855 = vpop.f32.mrf.mxu0
        %v1856 = vadd.f32 0.0, %v1855
        %1857 = vmatmul.f32.gmra.mxu0 %v1794
        %v1858 = vpop.f32.mrf.mxu0
        %v1859 = vadd.f32 0.0, %v1858
        %1860 = vmatmul.f32.gmra.mxu0 %v1797
        %v1861 = vpop.f32.mrf.mxu0
        %v1862 = vadd.f32 0.0, %v1861
        %1863 = vmatmul.f32.gmra.mxu0 %v1800
        %v1864 = vpop.f32.mrf.mxu0
        %v1865 = vadd.f32 0.0, %v1864
        %1866 = vmatmul.f32.gmra.mxu0 %v1803
        %v1867 = vpop.f32.mrf.mxu0
        %v1868 = vadd.f32 0.0, %v1867
        %1869 = vmatmul.f32.gmra.mxu0 %v1806
        %v1870 = vpop.f32.mrf.mxu0
        %v1871 = vadd.f32 0.0, %v1870
        %1872 = vmatmul.f32.gmra.mxu0 %v1809
        %v1873 = vpop.f32.mrf.mxu0
        %v1874 = vadd.f32 0.0, %v1873
        %1875 = vmatmul.f32.gmra.mxu0 %v1812
        %v1876 = vpop.f32.mrf.mxu0
        %v1877 = vadd.f32 0.0, %v1876
        %1878 = vmatmul.f32.gmra.mxu0 %v1815
        %v1879 = vpop.f32.mrf.mxu0
        %v1880 = vadd.f32 0.0, %v1879
        %1881 = vmatmul.f32.gmra.mxu0 %v1818
        %v1882 = vpop.f32.mrf.mxu0
        %v1883 = vadd.f32 0.0, %v1882
        %1884 = vmatmul.f32.gmra.mxu0 %v1821
        %v1885 = vpop.f32.mrf.mxu0
        %v1886 = vadd.f32 0.0, %v1885
        %1887 = vmatmul.f32.gmra.mxu0 %v1824
        %v1888 = vpop.f32.mrf.mxu0
        %v1889 = vadd.f32 0.0, %v1888
        %1890 = vmatmul.f32.gmra.mxu0 %v1827
        %v1891 = vpop.f32.mrf.mxu0
        %v1892 = vadd.f32 0.0, %v1891
        %1893 = vmatmul.f32.gmra.mxu0 %v1830
        %v1894 = vpop.f32.mrf.mxu0
        %v1895 = vadd.f32 0.0, %v1894
        %1896 = vmatmul.f32.gmra.mxu0 %v1833
        %v1897 = vpop.f32.mrf.mxu0
        %v1898 = vadd.f32 0.0, %v1897
        %1899 = vdwg.mxu0
        %v1901 = vsel %vm1056, %v1742, 0
        %v1904 = vsel %vm1056, %v1743, 0
        %1906 = vmatpush.msra.mxu0 0.0
        %1907 = vmatpush.msra.mxu0 0.0
        %1908 = vmatpush.msra.mxu0 0.0
        %1909 = vmatpush.msra.mxu0 0.0
        %1910 = vmatpush.msra.mxu0 %v1773
        %1911 = vmatpush.msra.mxu0 %v1772
        %1912 = vmatpush.msra.mxu0 %v1771
        %1913 = vmatpush.msra.mxu0 %v1770
        %1914 = vmatpush.msra.mxu0 %v1769
        %1915 = vmatpush.msra.mxu0 %v1768
        %1916 = vmatpush.msra.mxu0 %v1767
        %1917 = vmatpush.msra.mxu0 %v1766
        %1918 = vmatpush.msra.mxu0 %v1765
        %1919 = vmatpush.msra.mxu0 %v1764
        %1920 = vmatpush.msra.mxu0 %v1763
        %1921 = vmatpush.msra.mxu0 %v1762
        %1922 = vmatmul.f32.gmra.mxu0 %v1901
        %v1923 = vpop.f32.mrf.mxu0
        %v1924 = vadd.f32 %v1853, %v1923
        %1925 = vmatmul.f32.gmra.mxu0 %v1904
        %v1926 = vpop.f32.mrf.mxu0
        %v1927 = vadd.f32 %v1856, %v1926
        %1928 = vmatmul.f32.gmra.mxu0 %v1788
        %v1929 = vpop.f32.mrf.mxu0
        %v1930 = vadd.f32 %v1859, %v1929
        %1931 = vmatmul.f32.gmra.mxu0 %v1791
        %v1932 = vpop.f32.mrf.mxu0
        %v1933 = vadd.f32 %v1862, %v1932
        %1934 = vmatmul.f32.gmra.mxu0 %v1794
        %v1935 = vpop.f32.mrf.mxu0
        %v1936 = vadd.f32 %v1865, %v1935
        %1937 = vmatmul.f32.gmra.mxu0 %v1797
        %v1938 = vpop.f32.mrf.mxu0
        %v1939 = vadd.f32 %v1868, %v1938
        %1940 = vmatmul.f32.gmra.mxu0 %v1800
        %v1941 = vpop.f32.mrf.mxu0
        %v1942 = vadd.f32 %v1871, %v1941
        %1943 = vmatmul.f32.gmra.mxu0 %v1803
        %v1944 = vpop.f32.mrf.mxu0
        %v1945 = vadd.f32 %v1874, %v1944
        %1946 = vmatmul.f32.gmra.mxu0 %v1806
        %v1947 = vpop.f32.mrf.mxu0
        %v1948 = vadd.f32 %v1877, %v1947
        %1949 = vmatmul.f32.gmra.mxu0 %v1809
        %v1950 = vpop.f32.mrf.mxu0
        %v1951 = vadd.f32 %v1880, %v1950
        %1952 = vmatmul.f32.gmra.mxu0 %v1812
        %v1953 = vpop.f32.mrf.mxu0
        %v1954 = vadd.f32 %v1883, %v1953
        %1955 = vmatmul.f32.gmra.mxu0 %v1815
        %v1956 = vpop.f32.mrf.mxu0
        %v1957 = vadd.f32 %v1886, %v1956
        %1958 = vmatmul.f32.gmra.mxu0 %v1818
        %v1959 = vpop.f32.mrf.mxu0
        %v1960 = vadd.f32 %v1889, %v1959
        %1961 = vmatmul.f32.gmra.mxu0 %v1821
        %v1962 = vpop.f32.mrf.mxu0
        %v1963 = vadd.f32 %v1892, %v1962
        %1964 = vmatmul.f32.gmra.mxu0 %v1824
        %v1965 = vpop.f32.mrf.mxu0
        %v1966 = vadd.f32 %v1895, %v1965
        %1967 = vmatmul.f32.gmra.mxu0 %v1827
        %v1968 = vpop.f32.mrf.mxu0
        %v1969 = vadd.f32 %v1898, %v1968
        %1970 = vdwg.mxu0
        %s1971 = scalar_lea.vmem %s7, 192
        %v1972 = vld [vmem:[%s1971] sm:$0xff]
        %v1973 = vld [vmem:[%s1971 + $0x8] sm:$0xff]
        %v1974 = vld [vmem:[%s1971 + $0x10] sm:$0xff]
        %v1975 = vld [vmem:[%s1971 + $0x18] sm:$0xff]
        %v1976 = vld [vmem:[%s1971 + $0x20] sm:$0xff]
        %v1977 = vld [vmem:[%s1971 + $0x28] sm:$0xff]
        %v1978 = vld [vmem:[%s1971 + $0x30] sm:$0xff]
        %v1979 = vld [vmem:[%s1971 + $0x38] sm:$0xff]
        %v1980 = vld [vmem:[%s1971 + $0x40] sm:$0xff]
        %v1981 = vld [vmem:[%s1971 + $0x48] sm:$0xff]
        %v1982 = vld [vmem:[%s1971 + $0x50] sm:$0xff]
        %v1983 = vld [vmem:[%s1971 + $0x58] sm:$0xff]
        %v1985 = vsel %vm1056, %v1760, 0
        %v1988 = vsel %vm1056, %v1761, 0
        %1990 = vmatpush.msra.mxu0 0.0
        %1991 = vmatpush.msra.mxu0 0.0
        %1992 = vmatpush.msra.mxu0 0.0
        %1993 = vmatpush.msra.mxu0 0.0
        %1994 = vmatpush.msra.mxu0 %v1983
        %1995 = vmatpush.msra.mxu0 %v1982
        %1996 = vmatpush.msra.mxu0 %v1981
        %1997 = vmatpush.msra.mxu0 %v1980
        %1998 = vmatpush.msra.mxu0 %v1979
        %1999 = vmatpush.msra.mxu0 %v1978
        %2000 = vmatpush.msra.mxu0 %v1977
        %2001 = vmatpush.msra.mxu0 %v1976
        %2002 = vmatpush.msra.mxu0 %v1975
        %2003 = vmatpush.msra.mxu0 %v1974
        %2004 = vmatpush.msra.mxu0 %v1973
        %2005 = vmatpush.msra.mxu0 %v1972
        %2006 = vmatmul.f32.gmra.mxu0 %v1794
        %v2007 = vpop.f32.mrf.mxu0
        %v2008 = vadd.f32 0.0, %v2007
        %2009 = vmatmul.f32.gmra.mxu0 %v1797
        %v2010 = vpop.f32.mrf.mxu0
        %v2011 = vadd.f32 0.0, %v2010
        %2012 = vmatmul.f32.gmra.mxu0 %v1800
        %v2013 = vpop.f32.mrf.mxu0
        %v2014 = vadd.f32 0.0, %v2013
        %2015 = vmatmul.f32.gmra.mxu0 %v1803
        %v2016 = vpop.f32.mrf.mxu0
        %v2017 = vadd.f32 0.0, %v2016
        %2018 = vmatmul.f32.gmra.mxu0 %v1806
        %v2019 = vpop.f32.mrf.mxu0
        %v2020 = vadd.f32 0.0, %v2019
        %2021 = vmatmul.f32.gmra.mxu0 %v1809
        %v2022 = vpop.f32.mrf.mxu0
        %v2023 = vadd.f32 0.0, %v2022
        %2024 = vmatmul.f32.gmra.mxu0 %v1812
        %v2025 = vpop.f32.mrf.mxu0
        %v2026 = vadd.f32 0.0, %v2025
        %2027 = vmatmul.f32.gmra.mxu0 %v1815
        %v2028 = vpop.f32.mrf.mxu0
        %v2029 = vadd.f32 0.0, %v2028
        %2030 = vmatmul.f32.gmra.mxu0 %v1818
        %v2031 = vpop.f32.mrf.mxu0
        %v2032 = vadd.f32 0.0, %v2031
        %2033 = vmatmul.f32.gmra.mxu0 %v1821
        %v2034 = vpop.f32.mrf.mxu0
        %v2035 = vadd.f32 0.0, %v2034
        %2036 = vmatmul.f32.gmra.mxu0 %v1824
        %v2037 = vpop.f32.mrf.mxu0
        %v2038 = vadd.f32 0.0, %v2037
        %2039 = vmatmul.f32.gmra.mxu0 %v1827
        %v2040 = vpop.f32.mrf.mxu0
        %v2041 = vadd.f32 0.0, %v2040
        %2042 = vmatmul.f32.gmra.mxu0 %v1830
        %v2043 = vpop.f32.mrf.mxu0
        %v2044 = vadd.f32 0.0, %v2043
        %2045 = vmatmul.f32.gmra.mxu0 %v1833
        %v2046 = vpop.f32.mrf.mxu0
        %v2047 = vadd.f32 0.0, %v2046
        %2048 = vmatmul.f32.gmra.mxu0 %v1985
        %v2049 = vpop.f32.mrf.mxu0
        %v2050 = vadd.f32 0.0, %v2049
        %2051 = vmatmul.f32.gmra.mxu0 %v1988
        %v2052 = vpop.f32.mrf.mxu0
        %v2053 = vadd.f32 0.0, %v2052
        %2054 = vdwg.mxu0
        %v2055 = vadd.f32 %v1924, %v2008
        %v2056 = vadd.f32 %v1927, %v2011
        %v2057 = vadd.f32 %v1930, %v2014
        %v2058 = vadd.f32 %v1933, %v2017
        %v2059 = vadd.f32 %v1936, %v2020
        %v2060 = vadd.f32 %v1939, %v2023
        %v2061 = vadd.f32 %v1942, %v2026
        %v2062 = vadd.f32 %v1945, %v2029
        %v2063 = vadd.f32 %v1948, %v2032
        %v2064 = vadd.f32 %v1951, %v2035
        %v2065 = vadd.f32 %v1954, %v2038
        %v2066 = vadd.f32 %v1957, %v2041
        %v2067 = vadd.f32 %v1960, %v2044
        %v2068 = vadd.f32 %v1963, %v2047
        %v2069 = vadd.f32 %v1966, %v2050
        %v2070 = vadd.f32 %v1969, %v2053
        %v2071 = vld [vmem:[%s8] sm:$0x1]
        %v2073 = vperm.slane %v2071, 0
        %v2075 = vadd.f32 %v2055, %v2073
        %v2076 = vadd.f32 %v2056, %v2073
        %v2077 = vadd.f32 %v2057, %v2073
        %v2078 = vadd.f32 %v2058, %v2073
        %v2079 = vadd.f32 %v2059, %v2073
        %v2080 = vadd.f32 %v2060, %v2073
        %v2081 = vadd.f32 %v2061, %v2073
        %v2082 = vadd.f32 %v2062, %v2073
        %v2083 = vadd.f32 %v2063, %v2073
        %v2084 = vadd.f32 %v2064, %v2073
        %v2085 = vadd.f32 %v2065, %v2073
        %v2086 = vadd.f32 %v2066, %v2073
        %v2087 = vadd.f32 %v2067, %v2073
        %v2088 = vadd.f32 %v2068, %v2073
        %v2089 = vadd.f32 %v2069, %v2073
        %v2090 = vadd.f32 %v2070, %v2073
        %v2091 = vld [vmem:[%s547] sm:$0xff]
        %v2092 = vld [vmem:[%s547 + $0x8] sm:$0xff]
        %v2093 = vld [vmem:[%s547 + $0x10] sm:$0xff]
        %v2094 = vld [vmem:[%s547 + $0x18] sm:$0xff]
        %v2095 = vld [vmem:[%s547 + $0x20] sm:$0xff]
        %v2096 = vld [vmem:[%s547 + $0x28] sm:$0xff]
        %v2097 = vld [vmem:[%s547 + $0x30] sm:$0xff]
        %v2098 = vld [vmem:[%s547 + $0x38] sm:$0xff]
        %v2099 = vld [vmem:[%s547 + $0x40] sm:$0xff]
        %v2100 = vld [vmem:[%s547 + $0x48] sm:$0xff]
        %v2101 = vld [vmem:[%s547 + $0x50] sm:$0xff]
        %v2102 = vld [vmem:[%s547 + $0x58] sm:$0xff]
        %v2103 = vld [vmem:[%s547 + $0x60] sm:$0xff]
        %v2104 = vld [vmem:[%s547 + $0x68] sm:$0xff]
        %v2105 = vld [vmem:[%s547 + $0x70] sm:$0xff]
        %v2106 = vld [vmem:[%s547 + $0x78] sm:$0xff]
        %v2107 = vadd.f32 %v2091, %v2075
        %v2108 = vadd.f32 %v2092, %v2076
        %v2109 = vadd.f32 %v2093, %v2077
        %v2110 = vadd.f32 %v2094, %v2078
        %v2111 = vadd.f32 %v2095, %v2079
        %v2112 = vadd.f32 %v2096, %v2080
        %v2113 = vadd.f32 %v2097, %v2081
        %v2114 = vadd.f32 %v2098, %v2082
        %v2115 = vadd.f32 %v2099, %v2083
        %v2116 = vadd.f32 %v2100, %v2084
        %v2117 = vadd.f32 %v2101, %v2085
        %v2118 = vadd.f32 %v2102, %v2086
        %v2119 = vadd.f32 %v2103, %v2087
        %v2120 = vadd.f32 %v2104, %v2088
        %v2121 = vadd.f32 %v2105, %v2089
        %v2122 = vadd.f32 %v2106, %v2090
        %2123 = vst.msk [vmem:[%s537] sm:$0xff] %vm620, %v2107
        %2124 = vst.msk [vmem:[%s537 + $0x8] sm:$0xff] %vm620, %v2108
        %2125 = vst.msk [vmem:[%s537 + $0x10] sm:$0xff] %vm620, %v2109
        %2126 = vst.msk [vmem:[%s537 + $0x18] sm:$0xff] %vm620, %v2110
        %2127 = vst.msk [vmem:[%s537 + $0x20] sm:$0xff] %vm620, %v2111
        %2128 = vst.msk [vmem:[%s537 + $0x28] sm:$0xff] %vm620, %v2112
        %2129 = vst.msk [vmem:[%s537 + $0x30] sm:$0xff] %vm620, %v2113
        %2130 = vst.msk [vmem:[%s537 + $0x38] sm:$0xff] %vm620, %v2114
        %2131 = vst.msk [vmem:[%s537 + $0x40] sm:$0xff] %vm620, %v2115
        %2132 = vst.msk [vmem:[%s537 + $0x48] sm:$0xff] %vm620, %v2116
        %2133 = vst.msk [vmem:[%s537 + $0x50] sm:$0xff] %vm620, %v2117
        %2134 = vst.msk [vmem:[%s537 + $0x58] sm:$0xff] %vm620, %v2118
        %2135 = vst.msk [vmem:[%s537 + $0x60] sm:$0xff] %vm620, %v2119
        %2136 = vst.msk [vmem:[%s537 + $0x68] sm:$0xff] %vm620, %v2120
        %2137 = vst.msk [vmem:[%s537 + $0x70] sm:$0xff] %vm620, %v2121
        %2138 = vst.msk [vmem:[%s537 + $0x78] sm:$0xff] %vm620, %v2122
        %s2139 = sand.u32 %s303, 1
        %s2140 = scalar_lea.sflag [#allocation5], %s2139
        %s2141 = sand.u32 %s303, 1
        %s2142 = smul.addr %s2141, 128
        %s2143 = scalar_lea.vmem [#allocation4], %s2142
        // Predicated region
        $region73: #{residual_blocks_with_input_conv.5} parent=55 // pred_check
          %p2144 = pneg %p313
        $region74: #{residual_blocks_with_input_conv.5} parent=55 // pred_check_branch
          %2146 = sbr.rel (%p2144) target = $region76
        $region75: #{residual_blocks_with_input_conv.5} parent=55 // pred_region
          %s2147 = smul.u32 8, %s28
          %2149 = vsyncadd %s2140, 0
          %s2150 = smul.addr %s2147, 2
          %s2151 = smul.addr %s27, 32
          %s2152 = sadd.s32 %s2150, %s2151
          %s2153 = smul.addr %s2152, 8
          %s2154 = scalar_lea.hbm %s9, %s2153
          %s2155 = sshll.u32 %s2143, 4
          %s2156 = int_to_ptr.vmem [resolvable:$true] %s2155
          %s2157 = sshll.u32 %s2154, 4
          %s2158 = int_to_ptr.hbm [resolvable:$true] %s2157
          %2163 = dma.vmem_to_hbm [thread:$0]  %s2156, 2048, %s2158, %s2140, 128, 128, 8
        $region76: #{residual_blocks_with_input_conv.5} parent=55 // pred_fallthru
          _
      $region56: #{residual_blocks_with_input_conv.5} parent=5 // pred_fallthru
        _
      %p2164 = scmp.le.s32.totalorder 2, %s18
      // Predicated region
      $region77: #{residual_blocks_with_input_conv.5} parent=5 // pred_check
        %p2165 = pneg %p2164
      $region78: #{residual_blocks_with_input_conv.5} parent=5 // pred_check_branch
        %2167 = sbr.rel (%p2165) target = $region80
      $region79: #{residual_blocks_with_input_conv.5} parent=5 // pred_region
        %s2168 = ssub.s32 %s18, 2
        // Predicated region
        $region81: #{residual_blocks_with_input_conv.5} parent=79 // pred_check
          %p2169 = pneg %p319
        $region82: #{residual_blocks_with_input_conv.5} parent=79 // pred_check_branch
          %2171 = sbr.rel (%p2169) target = $region84
        $region83: #{residual_blocks_with_input_conv.5} parent=79 // pred_region
          %s2172 = sand.u32 %s304, 1
          %s2173 = scalar_lea.sflag [#allocation5], %s2172
          %s2174 = sand.u32 %s304, 1
          %s2175 = smul.addr %s2174, 128
          %s2176 = scalar_lea.vmem [#allocation4], %s2175
          %2178 = dma.done %s2173, 2048
        $region84: #{residual_blocks_with_input_conv.5} parent=79 // pred_fallthru
          _
      $region80: #{residual_blocks_with_input_conv.5} parent=5 // pred_fallthru
        _
    $region6: #{residual_blocks_with_input_conv.5} parent=1 // loop_footer
      %s22 = sadd.s32 1, %s18
    $region7: #{residual_blocks_with_input_conv.5} parent=1 // loop_footer_branch
      %17 = sbr.rel target = $region3
    $region8: #{residual_blocks_with_input_conv.5} parent=1 // loop_exit
      _
    %2179 = vsyncpa [#allocation5], 1
    %s2180 = scalar_lea.sflag [#allocation5], 1
    %2181 = vsyncpa %s2180, 1

</llo_original>
